<compile_context>
chip_gen: v7x
topology: tpu7x:2x2x1
jax: 0.10.0
libtpu: 0.0.40
codegen_flags: <defaults>
</compile_context>

<pallas_src>
import jax
import jax.numpy as jnp
from jax import lax
from jax.experimental import pallas as pl
from jax.experimental.pallas import tpu as pltpu


def _ceil8(n):
    return -(-n // 8) * 8


# ----------------------------------------------------------------------------
# Pallas kernel factory: one batch element per grid step; subsets & time unrolled.
# ----------------------------------------------------------------------------
def make_unit_gcn_kernel(S, R, O, T, V):
    f32 = jnp.float32
    SR, SO, TV = S * R, S * O, T * V
    slot = _ceil8(SR)                       # 8-aligned row slots inside the slabs
    off_bg, off_ba = 0, slot
    off_b3 = 2 * slot
    off_bnb = off_b3 + _ceil8(SO)

    def dot(a, b):
        return jnp.dot(a, b, preferred_element_type=f32)

    def kernel(x_ref, wc_ref, wrf_ref, wo_ref, bias_ref, pa_ref,
               pt_ref, pv_ref, et_ref, euv_ref, sh_ref,
               fold_ref, rs_ref, msk_ref,
               y_ref):
        xfa = x_ref[0]                                     # (C+1, TV), last row = 1
        P_T, P_V, E_T = pt_ref[...], pv_ref[...], et_ref[...]
        E_U, E_V = euv_ref[0], euv_ref[1]
        sh_m1, sh_p1 = sh_ref[0], sh_ref[1]
        Fold, RS = fold_ref[...], rs_ref[...]

        # ---- stacked front end (all subsets in one shot) ---------------------
        # 1x1 convs commute with the temporal mean; conv biases folded via ones row.
        xmT = dot(xfa, P_T)                                # (C+1, V)  mean over T
        x1_all = dot(wc_ref[0:SR, :], xmT)                 # (S*R, V)  conv1 + b1
        x2_all = dot(wc_ref[slot:slot + SR, :], xmT)       # (S*R, V)  conv2 + b2
        X5 = dot(wc_ref[2 * slot:2 * slot + SR, :], xfa)   # (S*R, TV) conv5 + b5

        # RouteFuncMLP (block-diagonal across subsets; its BN folded into Wa/ba)
        p = dot(X5, P_V)                                   # (S*R, T)  mean over V
        gp = jnp.mean(p, axis=1, keepdims=True)            # (S*R, 1)  global mean
        s = p + dot(wrf_ref[0], gp) + bias_ref[off_bg:off_bg + SR, :]

        def tconv3(k0, h, bias):
            # temporal conv, kernel 3, zero padding 1 (shift matrices, 0/1 consts)
            h_m1 = dot(h, sh_m1)                           # h[:, t-1]
            h_p1 = dot(h, sh_p1)                           # h[:, t+1]
            out = (dot(wrf_ref[k0], h_m1) + dot(wrf_ref[k0 + 1], h)
                   + dot(wrf_ref[k0 + 2], h_p1))
            return out if bias is None else out + bias

        h = jnp.maximum(tconv3(1, s, bias_ref[off_ba:off_ba + SR, :]), 0.0)
        rf = tconv3(4, h, None) + 1.0                      # (S*R, T)
        rf_wide = dot(rf, E_T)                             # (S*R, TV)

        # conv3 on the calibrated conv5 output (unit_gcn BN scale folded into W3/b3)
        X3s = dot(wo_ref[0:SO, :], X5 * rf_wide) + bias_ref[off_b3:off_b3 + SO, :]

        # dynamic-adjacency input tanh(x1_u - x2_v), stacked across subsets
        d_all = jnp.tanh(dot(x1_all, E_U) - dot(x2_all, E_V))   # (S*R, V*V)

        # ---- per-subset adjacency + lane-dense contraction -------------------
        # z[c, t*V+u] = sum_v a1[c, u*V+v] * x3[c, t*V+v]; accumulator in registers.
        acc = None
        for i in range(S):
            a1 = dot(wo_ref[SO + i * O:SO + (i + 1) * O, :], d_all) + pa_ref[i]
            x3 = X3s[i * O:(i + 1) * O, :]                 # (O, TV), free row slice
            for t in range(T):
                m_t = msk_ref[t]                           # (1, TV) lane mask, block t
                xtw = dot(x3 * m_t, Fold)                  # (O, V*V): x3[c,t,v] bcast over u
                zp = dot(a1 * xtw, RS) * m_t               # (O, TV):  z[c,t,:] placed at t*V+u
                acc = zp if acc is None else acc + zp

        # ---- final BN shift + identity residual + ReLU, one lane-dense store --
        y = acc + bias_ref[off_bnb:off_bnb + O, :] + xfa[0:O, :]
        y_ref[0] = jnp.maximum(y, 0.0).astype(y_ref.dtype)

    return kernel


# ----------------------------------------------------------------------------
# Wrapper: weight stacking / folding, packed constant slabs, BlockSpecs, grid.
# ----------------------------------------------------------------------------
def unit_gcn_pallas(x, params):
    N, C, T, V = x.shape
    S = params['PA'].shape[0]
    O = params['W3'].shape[1]
    R = params['W1'].shape[1]
    assert C == O, "identity residual path assumes in_channels == out_channels"
    TV, VV, SR, SO = T * V, V * V, S * R, S * O
    C1 = C + 1
    f32 = jnp.float32
    slot = _ceil8(SR)

    # input with an appended ones-row (folds the conv1/conv2/conv5 biases)
    x_flat = x.reshape(N, C, TV).astype(f32)
    xfa = jnp.concatenate([x_flat, jnp.ones((N, 1, TV), f32)], axis=1)   # (N, C+1, TV)

    alpha = params['alpha'].astype(f32)
    bn_s = params['bn_s'].astype(f32)

    def pad_rows(a, rows):
        return jnp.pad(a, ((0, rows - a.shape[0]), (0, 0)))

    def block_diag(mats):                 # (S, a, b) -> (S*a, S*b)
        Sq, a, b = mats.shape
        out = jnp.zeros((Sq * a, Sq * b), f32)
        for i in range(Sq):
            out = out.at[i * a:(i + 1) * a, i * b:(i + 1) * b].set(mats[i])
        return out

    def aug(W, b):                        # (S, out, C), (S, out) -> (S*out, C+1)
        return jnp.concatenate([W.reshape(-1, C), b.reshape(-1, 1)],
                               axis=1).astype(f32)

    # weight slab acting on the augmented input / pooled input (8-aligned slots)
    wc = jnp.concatenate([pad_rows(aug(params['W1'], params['b1']), slot),
                          pad_rows(aug(params['W2'], params['b2']), slot),
                          pad_rows(aug(params['W5'], params['b5']), slot)],
                         axis=0)                                         # (3*slot, C+1)

    # RouteFunc weights, block-diagonal across subsets; its BN folded into Wa/ba
    bna_s = params['bna_s'].reshape(SR).astype(f32)
    bna_b = params['bna_b'].reshape(SR).astype(f32)
    Wg_bd = block_diag(params['Wg'].astype(f32))
    Wa_bd = [bna_s[:, None] * block_diag(params['Wa'][:, k].astype(f32))
             for k in range(3)]
    Wb_bd = [block_diag(params['Wb'][:, k].astype(f32)) for k in range(3)]
    wrf = jnp.stack([Wg_bd] + Wa_bd + Wb_bd, axis=0)                     # (7, SR, SR)

    # output-side weights: bn scale folded into W3/b3, alpha folded into W4/b4
    W3_bd = block_diag((bn_s[None, :, None] * params['W3']).astype(f32)) # (SO, SR)
    W4_bd = block_diag((alpha * params['W4']).astype(f32))               # (SO, SR)
    wo = jnp.concatenate([W3_bd, W4_bd], axis=0)                         # (2*SO, SR)

    # remaining biases packed into one slab (8-aligned slots)
    bg = params['bg'].reshape(SR, 1).astype(f32)
    ba_p = (bna_s * params['ba'].reshape(SR).astype(f32) + bna_b).reshape(SR, 1)
    b3_p = (bn_s[None, :] * params['b3'].astype(f32)).reshape(SO, 1)
    bn_b = params['bn_b'].reshape(O, 1).astype(f32)
    bias = jnp.concatenate([pad_rows(bg, slot), pad_rows(ba_p, slot),
                            pad_rows(b3_p, _ceil8(SO)), pad_rows(bn_b, _ceil8(O))],
                           axis=0)

    # static adjacency + alpha*conv4-bias, broadcast over output channels
    pa_rep = (params['PA'].reshape(S, 1, VV).astype(f32)
              + (alpha * params['b4'].astype(f32))[:, :, None])          # (S, O, VV)

    # constant pooling / expansion / shift / contraction matrices (0/1 valued)
    j = jnp.arange(TV)
    k = jnp.arange(VV)
    vI = jnp.arange(V)
    tI = jnp.arange(T)
    P_T = ((j % V)[:, None] == vI[None, :]).astype(f32) / T              # (TV, V)
    P_V = ((j // V)[:, None] == tI[None, :]).astype(f32) / V             # (TV, T)
    E_T = ((j // V)[None, :] == tI[:, None]).astype(f32)                 # (T, TV)
    E_U = ((k // V)[None, :] == vI[:, None]).astype(f32)                 # (V, VV)
    E_V = ((k % V)[None, :] == vI[:, None]).astype(f32)                  # (V, VV)
    euv = jnp.stack([E_U, E_V], axis=0)                                  # (2, V, VV)
    sh_m1 = (tI[None, :] == tI[:, None] + 1).astype(f32)                 # picks h[:, t-1]
    sh_p1 = (tI[:, None] == tI[None, :] + 1).astype(f32)                 # picks h[:, t+1]
    shifts = jnp.stack([sh_m1, sh_p1], axis=0)                           # (2, T, T)
    fold = ((j[:, None] % V) == (k[None, :] % V)).astype(f32)            # (TV, VV)
    rs_const = ((k[:, None] // V) == (j[None, :] % V)).astype(f32)       # (VV, TV)
    masks = ((j[None, None, :] // V) == tI[:, None, None]).astype(f32)   # (T, 1, TV)

    inputs = [xfa, wc, wrf, wo, bias, pa_rep,
              P_T, P_V, E_T, euv, shifts, fold, rs_const, masks]

    def full_spec(a):
        nd = a.ndim
        return pl.BlockSpec(a.shape, lambda n, _nd=nd: (0,) * _nd)

    in_specs = ([pl.BlockSpec((1, C1, TV), lambda n: (n, 0, 0))]
                + [full_spec(a) for a in inputs[1:]])

    grid_spec = pltpu.PrefetchScalarGridSpec(
        num_scalar_prefetch=0,
        grid=(N,),
        in_specs=in_specs,
        out_specs=pl.BlockSpec((1, O, TV), lambda n: (n, 0, 0)),
    )

    y_flat = pl.pallas_call(
        make_unit_gcn_kernel(S, R, O, T, V),
        out_shape=jax.ShapeDtypeStruct((N, O, TV), f32),
        grid_spec=grid_spec,
        compiler_params=pltpu.CompilerParams(
            dimension_semantics=("parallel",)),
    )(*inputs)
    return y_flat.reshape(N, O, T, V)


# ----------------------------------------------------------------------------
# Pure-JAX reference (literal transcription of the PyTorch forward).
# ----------------------------------------------------------------------------
def _conv1x1(x, W, b=None):
    y = jnp.einsum('oc,nc...->no...', W, x, precision=lax.Precision.HIGHEST)
    if b is not None:
        y = y + b.reshape((1, -1) + (1,) * (y.ndim - 2))
    return y


def _tconv3(x_nit, W3tap, bias=None):
    T = x_nit.shape[2]
    xp = jnp.pad(x_nit, ((0, 0), (0, 0), (1, 1)))
    y = sum(jnp.einsum('oi,nit->not', W3tap[k], xp[:, :, k:k + T],
                       precision=lax.Precision.HIGHEST) for k in range(3))
    if bias is not None:
        y = y + bias.reshape(1, -1, 1)
    return y


def _route_func(x3, sp):
    g = jnp.mean(x3, axis=(2, 3), keepdims=True)
    xa = jnp.mean(x3, axis=3)
    gg = _conv1x1(g, sp['Wg'], sp['bg'])[..., 0, 0]
    h = xa + gg[..., None]
    h = _tconv3(h, sp['Wa'], sp['ba'])
    h = sp['bna_s'].reshape(1, -1, 1) * h + sp['bna_b'].reshape(1, -1, 1)
    h = jnp.maximum(h, 0.0)
    h = _tconv3(h, sp['Wb']) + 1.0
    return h[..., None]


def _ctrgc(x, A, alpha, sp):
    x1 = jnp.mean(_conv1x1(x, sp['W1'], sp['b1']), axis=2)
    x2 = jnp.mean(_conv1x1(x, sp['W2'], sp['b2']), axis=2)
    x3 = _conv1x1(x, sp['W5'], sp['b5'])
    x3 = x3 * _route_func(x3, sp)
    x3 = _conv1x1(x3, sp['W3'], sp['b3'])
    d = jnp.tanh(x1[..., :, None] - x2[..., None, :])
    a1 = _conv1x1(d, sp['W4'], sp['b4']) * alpha + A[None, None]
    return jnp.einsum('ncuv,nctv->nctu', a1, x3, precision=lax.Precision.HIGHEST)


def unit_gcn_ref(x, params):
    S = params['PA'].shape[0]
    keys = ('W1', 'b1', 'W2', 'b2', 'W5', 'b5', 'Wg', 'bg', 'Wa', 'ba',
            'bna_s', 'bna_b', 'Wb', 'W3', 'b3', 'W4', 'b4')
    y = None
    for i in range(S):
        sp = {k: params[k][i] for k in keys}
        z = _ctrgc(x, params['PA'][i], params['alpha'], sp)
        y = z if y is None else y + z
    y = params['bn_s'].reshape(1, -1, 1, 1) * y + params['bn_b'].reshape(1, -1, 1, 1)
    y = y + x
    return jnp.maximum(y, 0.0)


# ----------------------------------------------------------------------------
# Deterministic parameter construction (shapes per unit_gcn / CTRGC __init__).
# ----------------------------------------------------------------------------
def init_params(key, *, C, O, R, S, V):
    keys = jax.random.split(key, 32)
    it = iter(keys)

    def rnd(shape, scale=0.2):
        return scale * jax.random.normal(next(it), shape, dtype=jnp.float32)

    eps = 1e-5
    gamma_a = 1.0 + rnd((S, R), 0.1)
    beta_a = rnd((S, R), 0.1)
    mean_a = rnd((S, R), 0.1)
    var_a = 1.0 + jnp.abs(rnd((S, R), 0.1))
    bna_s = gamma_a / jnp.sqrt(var_a + eps)
    bna_b = beta_a - mean_a * bna_s

    gamma = 1.0 + rnd((O,), 0.1)
    beta = rnd((O,), 0.1)
    mean = rnd((O,), 0.1)
    var = 1.0 + jnp.abs(rnd((O,), 0.1))
    bn_s = gamma / jnp.sqrt(var + eps)
    bn_b = beta - mean * bn_s

    return {
        'W1': rnd((S, R, C)), 'b1': rnd((S, R), 0.05),
        'W2': rnd((S, R, C)), 'b2': rnd((S, R), 0.05),
        'W5': rnd((S, R, C)), 'b5': rnd((S, R), 0.05),
        'Wg': rnd((S, R, R)), 'bg': rnd((S, R), 0.05),
        'Wa': rnd((S, 3, R, R)), 'ba': rnd((S, R), 0.05),
        'bna_s': bna_s, 'bna_b': bna_b,
        'Wb': rnd((S, 3, R, R)),
        'W3': rnd((S, O, R)), 'b3': rnd((S, O), 0.05),
        'W4': rnd((S, O, R)), 'b4': rnd((S, O), 0.05),
        'PA': rnd((S, V, V), 0.1),
        'alpha': jnp.array(0.7, dtype=jnp.float32),
        'bn_s': bn_s, 'bn_b': bn_b,
    }


if __name__ == "__main__":
    # Small shapes consistent with the module: (N, C_in, T, V) skeleton data.
    # T*V = 128 so the flattened lane axis is exactly one full vreg row.
    N, C, T, V = 2, 32, 8, 16
    O = C                # out_channels == in_channels -> identity residual
    S = 3                # num_subset (A.shape[0])
    R = C // 8           # rel_channels (rel_reduction = 8)

    key = jax.random.PRNGKey(0)
    params = init_params(key, C=C, O=O, R=R, S=S, V=V)
    x = jax.random.normal(jax.random.fold_in(key, 123), (N, C, T, V),
                          dtype=jnp.float32)

    y = unit_gcn_pallas(x, params)
    y = jax.block_until_ready(y)

    y_ref = unit_gcn_ref(x, params)
    if not bool(jnp.allclose(y, y_ref, rtol=1e-2, atol=1e-2)):
        max_err = float(jnp.max(jnp.abs(y - y_ref)))
        raise AssertionError(f"Pallas kernel mismatch vs reference, max abs err {max_err}")

    print("KERNEL_OK")
</pallas_src>

<mosaic_0001>
module attributes {stable_mosaic.version = 11 : i64} {
  func.func @kernel(%arg0: i32, %arg1: memref<1x33x128xf32, #tpu.memory_space<vmem>>, %arg2: memref<48x33xf32, #tpu.memory_space<vmem>>, %arg3: memref<7x12x12xf32, #tpu.memory_space<vmem>>, %arg4: memref<192x12xf32, #tpu.memory_space<vmem>>, %arg5: memref<160x1xf32, #tpu.memory_space<vmem>>, %arg6: memref<3x32x256xf32, #tpu.memory_space<vmem>>, %arg7: memref<128x16xf32, #tpu.memory_space<vmem>>, %arg8: memref<128x8xf32, #tpu.memory_space<vmem>>, %arg9: memref<8x128xf32, #tpu.memory_space<vmem>>, %arg10: memref<2x16x256xf32, #tpu.memory_space<vmem>>, %arg11: memref<2x8x8xf32, #tpu.memory_space<vmem>>, %arg12: memref<128x256xf32, #tpu.memory_space<vmem>>, %arg13: memref<256x128xf32, #tpu.memory_space<vmem>>, %arg14: memref<8x1x128xf32, #tpu.memory_space<vmem>>, %arg15: memref<1x32x128xf32, #tpu.memory_space<vmem>>) attributes {dimension_semantics = [#tpu.dimension_semantics<parallel>], iteration_bounds = array<i64: 2>, scalar_prefetch = 0 : i64, scratch_operands = 0 : i64, tpu.core_type = #tpu.core_type<tc>, window_params = [{transform_indices = @transform_0, window_bounds = array<i64: 1, 33, 128>}, {pipeline_mode = #tpu.pipeline_mode<synchronous>, transform_indices = @transform_1, window_bounds = array<i64: 48, 33>}, {pipeline_mode = #tpu.pipeline_mode<synchronous>, transform_indices = @transform_2, window_bounds = array<i64: 7, 12, 12>}, {pipeline_mode = #tpu.pipeline_mode<synchronous>, transform_indices = @transform_3, window_bounds = array<i64: 192, 12>}, {pipeline_mode = #tpu.pipeline_mode<synchronous>, transform_indices = @transform_4, window_bounds = array<i64: 160, 1>}, {pipeline_mode = #tpu.pipeline_mode<synchronous>, transform_indices = @transform_5, window_bounds = array<i64: 3, 32, 256>}, {pipeline_mode = #tpu.pipeline_mode<synchronous>, transform_indices = @transform_6, window_bounds = array<i64: 128, 16>}, {pipeline_mode = #tpu.pipeline_mode<synchronous>, transform_indices = @transform_7, window_bounds = array<i64: 128, 8>}, {pipeline_mode = #tpu.pipeline_mode<synchronous>, transform_indices = @transform_8, window_bounds = array<i64: 8, 128>}, {pipeline_mode = #tpu.pipeline_mode<synchronous>, transform_indices = @transform_9, window_bounds = array<i64: 2, 16, 256>}, {pipeline_mode = #tpu.pipeline_mode<synchronous>, transform_indices = @transform_10, window_bounds = array<i64: 2, 8, 8>}, {pipeline_mode = #tpu.pipeline_mode<synchronous>, transform_indices = @transform_11, window_bounds = array<i64: 128, 256>}, {pipeline_mode = #tpu.pipeline_mode<synchronous>, transform_indices = @transform_12, window_bounds = array<i64: 256, 128>}, {pipeline_mode = #tpu.pipeline_mode<synchronous>, transform_indices = @transform_13, window_bounds = array<i64: 8, 1, 128>}, {transform_indices = @transform_14, window_bounds = array<i64: 1, 32, 128>}]} {
    %c0 = arith.constant 0 : index
    %c0_0 = arith.constant 0 : index
    %c0_1 = arith.constant 0 : index
    %0 = vector.load %arg1[%c0, %c0_0, %c0_1] : memref<1x33x128xf32, #tpu.memory_space<vmem>>, vector<1x33x128xf32>
    %1 = vector.shape_cast %0 : vector<1x33x128xf32> to vector<33x128xf32>
    %c0_2 = arith.constant 0 : index
    %c0_3 = arith.constant 0 : index
    %2 = vector.load %arg7[%c0_2, %c0_3] : memref<128x16xf32, #tpu.memory_space<vmem>>, vector<128x16xf32>
    %c0_4 = arith.constant 0 : index
    %c0_5 = arith.constant 0 : index
    %3 = vector.load %arg8[%c0_4, %c0_5] : memref<128x8xf32, #tpu.memory_space<vmem>>, vector<128x8xf32>
    %c0_6 = arith.constant 0 : index
    %c0_7 = arith.constant 0 : index
    %4 = vector.load %arg9[%c0_6, %c0_7] : memref<8x128xf32, #tpu.memory_space<vmem>>, vector<8x128xf32>
    %c0_8 = arith.constant 0 : index
    %c0_9 = arith.constant 0 : index
    %c0_10 = arith.constant 0 : index
    %5 = vector.load %arg10[%c0_8, %c0_9, %c0_10] : memref<2x16x256xf32, #tpu.memory_space<vmem>>, vector<1x16x256xf32>
    %6 = vector.shape_cast %5 : vector<1x16x256xf32> to vector<16x256xf32>
    %c1 = arith.constant 1 : index
    %c0_11 = arith.constant 0 : index
    %c0_12 = arith.constant 0 : index
    %7 = vector.load %arg10[%c1, %c0_11, %c0_12] : memref<2x16x256xf32, #tpu.memory_space<vmem>>, vector<1x16x256xf32>
    %8 = vector.shape_cast %7 : vector<1x16x256xf32> to vector<16x256xf32>
    %c0_13 = arith.constant 0 : index
    %c0_14 = arith.constant 0 : index
    %c0_15 = arith.constant 0 : index
    %9 = vector.load %arg11[%c0_13, %c0_14, %c0_15] : memref<2x8x8xf32, #tpu.memory_space<vmem>>, vector<1x8x8xf32>
    %10 = vector.shape_cast %9 : vector<1x8x8xf32> to vector<8x8xf32>
    %c1_16 = arith.constant 1 : index
    %c0_17 = arith.constant 0 : index
    %c0_18 = arith.constant 0 : index
    %11 = vector.load %arg11[%c1_16, %c0_17, %c0_18] : memref<2x8x8xf32, #tpu.memory_space<vmem>>, vector<1x8x8xf32>
    %12 = vector.shape_cast %11 : vector<1x8x8xf32> to vector<8x8xf32>
    %c0_19 = arith.constant 0 : index
    %c0_20 = arith.constant 0 : index
    %13 = vector.load %arg12[%c0_19, %c0_20] : memref<128x256xf32, #tpu.memory_space<vmem>>, vector<128x256xf32>
    %c0_21 = arith.constant 0 : index
    %c0_22 = arith.constant 0 : index
    %14 = vector.load %arg13[%c0_21, %c0_22] : memref<256x128xf32, #tpu.memory_space<vmem>>, vector<256x128xf32>
    %cst = arith.constant dense<0.000000e+00> : vector<33x16xf32>
    %15 = tpu.matmul %1, %2, %cst {dimension_numbers = #tpu.dot_dimension_numbers<[1], [0], [0], [1], [0, 0, 1, 1], [], []>} : vector<33x128xf32>, vector<128x16xf32>, vector<33x16xf32> -> vector<33x16xf32>
    %c0_23 = arith.constant 0 : index
    %c0_24 = arith.constant 0 : index
    %16 = vector.load %arg2[%c0_23, %c0_24] : memref<48x33xf32, #tpu.memory_space<vmem>>, vector<12x33xf32>
    %cst_25 = arith.constant dense<0.000000e+00> : vector<12x16xf32>
    %17 = tpu.matmul %16, %15, %cst_25 {dimension_numbers = #tpu.dot_dimension_numbers<[1], [0], [0], [1], [0, 0, 1, 1], [], []>} : vector<12x33xf32>, vector<33x16xf32>, vector<12x16xf32> -> vector<12x16xf32>
    %c16 = arith.constant 16 : index
    %c0_26 = arith.constant 0 : index
    %18 = vector.load %arg2[%c16, %c0_26] : memref<48x33xf32, #tpu.memory_space<vmem>>, vector<12x33xf32>
    %cst_27 = arith.constant dense<0.000000e+00> : vector<12x16xf32>
    %19 = tpu.matmul %18, %15, %cst_27 {dimension_numbers = #tpu.dot_dimension_numbers<[1], [0], [0], [1], [0, 0, 1, 1], [], []>} : vector<12x33xf32>, vector<33x16xf32>, vector<12x16xf32> -> vector<12x16xf32>
    %c32 = arith.constant 32 : index
    %c0_28 = arith.constant 0 : index
    %20 = vector.load %arg2[%c32, %c0_28] : memref<48x33xf32, #tpu.memory_space<vmem>>, vector<12x33xf32>
    %cst_29 = arith.constant dense<0.000000e+00> : vector<12x128xf32>
    %21 = tpu.matmul %20, %1, %cst_29 {dimension_numbers = #tpu.dot_dimension_numbers<[1], [0], [0], [1], [0, 0, 1, 1], [], []>} : vector<12x33xf32>, vector<33x128xf32>, vector<12x128xf32> -> vector<12x128xf32>
    %cst_30 = arith.constant dense<0.000000e+00> : vector<12x8xf32>
    %22 = tpu.matmul %21, %3, %cst_30 {dimension_numbers = #tpu.dot_dimension_numbers<[1], [0], [0], [1], [0, 0, 1, 1], [], []>} : vector<12x128xf32>, vector<128x8xf32>, vector<12x8xf32> -> vector<12x8xf32>
    %cst_31 = arith.constant dense<0.000000e+00> : vector<12xf32>
    %23 = vector.multi_reduction <add>, %22, %cst_31 [1] : vector<12x8xf32> to vector<12xf32>
    %24 = vector.shape_cast %23 : vector<12xf32> to vector<12x1xf32>
    %cst_32 = arith.constant 8.000000e+00 : f32
    %25 = vector.broadcast %cst_32 : f32 to vector<12x1xf32>
    %26 = arith.divf %24, %25 : vector<12x1xf32>
    %c0_33 = arith.constant 0 : index
    %c0_34 = arith.constant 0 : index
    %c0_35 = arith.constant 0 : index
    %27 = vector.load %arg3[%c0_33, %c0_34, %c0_35] : memref<7x12x12xf32, #tpu.memory_space<vmem>>, vector<1x12x12xf32>
    %28 = vector.shape_cast %27 : vector<1x12x12xf32> to vector<12x12xf32>
    %cst_36 = arith.constant dense<0.000000e+00> : vector<12x1xf32>
    %29 = tpu.matmul %28, %26, %cst_36 {dimension_numbers = #tpu.dot_dimension_numbers<[1], [0], [0], [1], [0, 0, 1, 1], [], []>} : vector<12x12xf32>, vector<12x1xf32>, vector<12x1xf32> -> vector<12x1xf32>
    %30 = vector.broadcast %29 : vector<12x1xf32> to vector<12x8xf32>
    %31 = arith.addf %22, %30 : vector<12x8xf32>
    %c0_37 = arith.constant 0 : index
    %c0_38 = arith.constant 0 : index
    %32 = vector.load %arg5[%c0_37, %c0_38] : memref<160x1xf32, #tpu.memory_space<vmem>>, vector<12x1xf32>
    %33 = vector.broadcast %32 : vector<12x1xf32> to vector<12x8xf32>
    %34 = arith.addf %31, %33 : vector<12x8xf32>
    %c16_39 = arith.constant 16 : index
    %c0_40 = arith.constant 0 : index
    %35 = vector.load %arg5[%c16_39, %c0_40] : memref<160x1xf32, #tpu.memory_space<vmem>>, vector<12x1xf32>
    %cst_41 = arith.constant dense<0.000000e+00> : vector<12x8xf32>
    %36 = tpu.matmul %34, %10, %cst_41 {dimension_numbers = #tpu.dot_dimension_numbers<[1], [0], [0], [1], [0, 0, 1, 1], [], []>} : vector<12x8xf32>, vector<8x8xf32>, vector<12x8xf32> -> vector<12x8xf32>
    %cst_42 = arith.constant dense<0.000000e+00> : vector<12x8xf32>
    %37 = tpu.matmul %34, %12, %cst_42 {dimension_numbers = #tpu.dot_dimension_numbers<[1], [0], [0], [1], [0, 0, 1, 1], [], []>} : vector<12x8xf32>, vector<8x8xf32>, vector<12x8xf32> -> vector<12x8xf32>
    %c1_43 = arith.constant 1 : index
    %c0_44 = arith.constant 0 : index
    %c0_45 = arith.constant 0 : index
    %38 = vector.load %arg3[%c1_43, %c0_44, %c0_45] : memref<7x12x12xf32, #tpu.memory_space<vmem>>, vector<1x12x12xf32>
    %39 = vector.shape_cast %38 : vector<1x12x12xf32> to vector<12x12xf32>
    %cst_46 = arith.constant dense<0.000000e+00> : vector<12x8xf32>
    %40 = tpu.matmul %39, %36, %cst_46 {dimension_numbers = #tpu.dot_dimension_numbers<[1], [0], [0], [1], [0, 0, 1, 1], [], []>} : vector<12x12xf32>, vector<12x8xf32>, vector<12x8xf32> -> vector<12x8xf32>
    %c2 = arith.constant 2 : index
    %c0_47 = arith.constant 0 : index
    %c0_48 = arith.constant 0 : index
    %41 = vector.load %arg3[%c2, %c0_47, %c0_48] : memref<7x12x12xf32, #tpu.memory_space<vmem>>, vector<1x12x12xf32>
    %42 = vector.shape_cast %41 : vector<1x12x12xf32> to vector<12x12xf32>
    %cst_49 = arith.constant dense<0.000000e+00> : vector<12x8xf32>
    %43 = tpu.matmul %42, %34, %cst_49 {dimension_numbers = #tpu.dot_dimension_numbers<[1], [0], [0], [1], [0, 0, 1, 1], [], []>} : vector<12x12xf32>, vector<12x8xf32>, vector<12x8xf32> -> vector<12x8xf32>
    %44 = arith.addf %40, %43 : vector<12x8xf32>
    %c3 = arith.constant 3 : index
    %c0_50 = arith.constant 0 : index
    %c0_51 = arith.constant 0 : index
    %45 = vector.load %arg3[%c3, %c0_50, %c0_51] : memref<7x12x12xf32, #tpu.memory_space<vmem>>, vector<1x12x12xf32>
    %46 = vector.shape_cast %45 : vector<1x12x12xf32> to vector<12x12xf32>
    %cst_52 = arith.constant dense<0.000000e+00> : vector<12x8xf32>
    %47 = tpu.matmul %46, %37, %cst_52 {dimension_numbers = #tpu.dot_dimension_numbers<[1], [0], [0], [1], [0, 0, 1, 1], [], []>} : vector<12x12xf32>, vector<12x8xf32>, vector<12x8xf32> -> vector<12x8xf32>
    %48 = arith.addf %44, %47 : vector<12x8xf32>
    %49 = vector.broadcast %35 : vector<12x1xf32> to vector<12x8xf32>
    %50 = arith.addf %48, %49 : vector<12x8xf32>
    %cst_53 = arith.constant 0.000000e+00 : f32
    %51 = vector.broadcast %cst_53 : f32 to vector<12x8xf32>
    %52 = arith.maximumf %50, %51 : vector<12x8xf32>
    %cst_54 = arith.constant dense<0.000000e+00> : vector<12x8xf32>
    %53 = tpu.matmul %52, %10, %cst_54 {dimension_numbers = #tpu.dot_dimension_numbers<[1], [0], [0], [1], [0, 0, 1, 1], [], []>} : vector<12x8xf32>, vector<8x8xf32>, vector<12x8xf32> -> vector<12x8xf32>
    %cst_55 = arith.constant dense<0.000000e+00> : vector<12x8xf32>
    %54 = tpu.matmul %52, %12, %cst_55 {dimension_numbers = #tpu.dot_dimension_numbers<[1], [0], [0], [1], [0, 0, 1, 1], [], []>} : vector<12x8xf32>, vector<8x8xf32>, vector<12x8xf32> -> vector<12x8xf32>
    %c4 = arith.constant 4 : index
    %c0_56 = arith.constant 0 : index
    %c0_57 = arith.constant 0 : index
    %55 = vector.load %arg3[%c4, %c0_56, %c0_57] : memref<7x12x12xf32, #tpu.memory_space<vmem>>, vector<1x12x12xf32>
    %56 = vector.shape_cast %55 : vector<1x12x12xf32> to vector<12x12xf32>
    %cst_58 = arith.constant dense<0.000000e+00> : vector<12x8xf32>
    %57 = tpu.matmul %56, %53, %cst_58 {dimension_numbers = #tpu.dot_dimension_numbers<[1], [0], [0], [1], [0, 0, 1, 1], [], []>} : vector<12x12xf32>, vector<12x8xf32>, vector<12x8xf32> -> vector<12x8xf32>
    %c5 = arith.constant 5 : index
    %c0_59 = arith.constant 0 : index
    %c0_60 = arith.constant 0 : index
    %58 = vector.load %arg3[%c5, %c0_59, %c0_60] : memref<7x12x12xf32, #tpu.memory_space<vmem>>, vector<1x12x12xf32>
    %59 = vector.shape_cast %58 : vector<1x12x12xf32> to vector<12x12xf32>
    %cst_61 = arith.constant dense<0.000000e+00> : vector<12x8xf32>
    %60 = tpu.matmul %59, %52, %cst_61 {dimension_numbers = #tpu.dot_dimension_numbers<[1], [0], [0], [1], [0, 0, 1, 1], [], []>} : vector<12x12xf32>, vector<12x8xf32>, vector<12x8xf32> -> vector<12x8xf32>
    %61 = arith.addf %57, %60 : vector<12x8xf32>
    %c6 = arith.constant 6 : index
    %c0_62 = arith.constant 0 : index
    %c0_63 = arith.constant 0 : index
    %62 = vector.load %arg3[%c6, %c0_62, %c0_63] : memref<7x12x12xf32, #tpu.memory_space<vmem>>, vector<1x12x12xf32>
    %63 = vector.shape_cast %62 : vector<1x12x12xf32> to vector<12x12xf32>
    %cst_64 = arith.constant dense<0.000000e+00> : vector<12x8xf32>
    %64 = tpu.matmul %63, %54, %cst_64 {dimension_numbers = #tpu.dot_dimension_numbers<[1], [0], [0], [1], [0, 0, 1, 1], [], []>} : vector<12x12xf32>, vector<12x8xf32>, vector<12x8xf32> -> vector<12x8xf32>
    %65 = arith.addf %61, %64 : vector<12x8xf32>
    %cst_65 = arith.constant 1.000000e+00 : f32
    %66 = vector.broadcast %cst_65 : f32 to vector<12x8xf32>
    %67 = arith.addf %65, %66 : vector<12x8xf32>
    %cst_66 = arith.constant dense<0.000000e+00> : vector<12x128xf32>
    %68 = tpu.matmul %67, %4, %cst_66 {dimension_numbers = #tpu.dot_dimension_numbers<[1], [0], [0], [1], [0, 0, 1, 1], [], []>} : vector<12x8xf32>, vector<8x128xf32>, vector<12x128xf32> -> vector<12x128xf32>
    %c0_67 = arith.constant 0 : index
    %c0_68 = arith.constant 0 : index
    %69 = vector.load %arg4[%c0_67, %c0_68] : memref<192x12xf32, #tpu.memory_space<vmem>>, vector<96x12xf32>
    %70 = arith.mulf %21, %68 : vector<12x128xf32>
    %cst_69 = arith.constant dense<0.000000e+00> : vector<96x128xf32>
    %71 = tpu.matmul %69, %70, %cst_69 {dimension_numbers = #tpu.dot_dimension_numbers<[1], [0], [0], [1], [0, 0, 1, 1], [], []>} : vector<96x12xf32>, vector<12x128xf32>, vector<96x128xf32> -> vector<96x128xf32>
    %c32_70 = arith.constant 32 : index
    %c0_71 = arith.constant 0 : index
    %72 = vector.load %arg5[%c32_70, %c0_71] : memref<160x1xf32, #tpu.memory_space<vmem>>, vector<96x1xf32>
    %73 = vector.broadcast %72 : vector<96x1xf32> to vector<96x128xf32>
    %74 = arith.addf %71, %73 : vector<96x128xf32>
    %cst_72 = arith.constant dense<0.000000e+00> : vector<12x256xf32>
    %75 = tpu.matmul %17, %6, %cst_72 {dimension_numbers = #tpu.dot_dimension_numbers<[1], [0], [0], [1], [0, 0, 1, 1], [], []>} : vector<12x16xf32>, vector<16x256xf32>, vector<12x256xf32> -> vector<12x256xf32>
    %cst_73 = arith.constant dense<0.000000e+00> : vector<12x256xf32>
    %76 = tpu.matmul %19, %8, %cst_73 {dimension_numbers = #tpu.dot_dimension_numbers<[1], [0], [0], [1], [0, 0, 1, 1], [], []>} : vector<12x16xf32>, vector<16x256xf32>, vector<12x256xf32> -> vector<12x256xf32>
    %77 = arith.subf %75, %76 : vector<12x256xf32>
    %78 = math.tanh %77 : vector<12x256xf32>
    %c96 = arith.constant 96 : index
    %c0_74 = arith.constant 0 : index
    %79 = vector.load %arg4[%c96, %c0_74] : memref<192x12xf32, #tpu.memory_space<vmem>>, vector<32x12xf32>
    %cst_75 = arith.constant dense<0.000000e+00> : vector<32x256xf32>
    %80 = tpu.matmul %79, %78, %cst_75 {dimension_numbers = #tpu.dot_dimension_numbers<[1], [0], [0], [1], [0, 0, 1, 1], [], []>} : vector<32x12xf32>, vector<12x256xf32>, vector<32x256xf32> -> vector<32x256xf32>
    %c0_76 = arith.constant 0 : index
    %c0_77 = arith.constant 0 : index
    %c0_78 = arith.constant 0 : index
    %81 = vector.load %arg6[%c0_76, %c0_77, %c0_78] : memref<3x32x256xf32, #tpu.memory_space<vmem>>, vector<1x32x256xf32>
    %82 = vector.shape_cast %81 : vector<1x32x256xf32> to vector<32x256xf32>
    %83 = arith.addf %80, %82 : vector<32x256xf32>
    %84 = vector.extract_strided_slice %74 {offsets = [0, 0], sizes = [32, 128], strides = [1, 1]} : vector<96x128xf32> to vector<32x128xf32>
    %c0_79 = arith.constant 0 : index
    %c0_80 = arith.constant 0 : index
    %c0_81 = arith.constant 0 : index
    %85 = vector.load %arg14[%c0_79, %c0_80, %c0_81] : memref<8x1x128xf32, #tpu.memory_space<vmem>>, vector<1x1x128xf32>
    %86 = vector.shape_cast %85 : vector<1x1x128xf32> to vector<1x128xf32>
    %87 = vector.broadcast %86 : vector<1x128xf32> to vector<32x128xf32>
    %88 = arith.mulf %84, %87 : vector<32x128xf32>
    %cst_82 = arith.constant dense<0.000000e+00> : vector<32x256xf32>
    %89 = tpu.matmul %88, %13, %cst_82 {dimension_numbers = #tpu.dot_dimension_numbers<[1], [0], [0], [1], [0, 0, 1, 1], [], []>} : vector<32x128xf32>, vector<128x256xf32>, vector<32x256xf32> -> vector<32x256xf32>
    %90 = arith.mulf %83, %89 : vector<32x256xf32>
    %cst_83 = arith.constant dense<0.000000e+00> : vector<32x128xf32>
    %91 = tpu.matmul %90, %14, %cst_83 {dimension_numbers = #tpu.dot_dimension_numbers<[1], [0], [0], [1], [0, 0, 1, 1], [], []>} : vector<32x256xf32>, vector<256x128xf32>, vector<32x128xf32> -> vector<32x128xf32>
    %92 = vector.broadcast %86 : vector<1x128xf32> to vector<32x128xf32>
    %93 = arith.mulf %91, %92 : vector<32x128xf32>
    %c1_84 = arith.constant 1 : index
    %c0_85 = arith.constant 0 : index
    %c0_86 = arith.constant 0 : index
    %94 = vector.load %arg14[%c1_84, %c0_85, %c0_86] : memref<8x1x128xf32, #tpu.memory_space<vmem>>, vector<1x1x128xf32>
    %95 = vector.shape_cast %94 : vector<1x1x128xf32> to vector<1x128xf32>
    %96 = vector.broadcast %95 : vector<1x128xf32> to vector<32x128xf32>
    %97 = arith.mulf %84, %96 : vector<32x128xf32>
    %cst_87 = arith.constant dense<0.000000e+00> : vector<32x256xf32>
    %98 = tpu.matmul %97, %13, %cst_87 {dimension_numbers = #tpu.dot_dimension_numbers<[1], [0], [0], [1], [0, 0, 1, 1], [], []>} : vector<32x128xf32>, vector<128x256xf32>, vector<32x256xf32> -> vector<32x256xf32>
    %99 = arith.mulf %83, %98 : vector<32x256xf32>
    %cst_88 = arith.constant dense<0.000000e+00> : vector<32x128xf32>
    %100 = tpu.matmul %99, %14, %cst_88 {dimension_numbers = #tpu.dot_dimension_numbers<[1], [0], [0], [1], [0, 0, 1, 1], [], []>} : vector<32x256xf32>, vector<256x128xf32>, vector<32x128xf32> -> vector<32x128xf32>
    %101 = vector.broadcast %95 : vector<1x128xf32> to vector<32x128xf32>
    %102 = arith.mulf %100, %101 : vector<32x128xf32>
    %103 = arith.addf %93, %102 : vector<32x128xf32>
    %c2_89 = arith.constant 2 : index
    %c0_90 = arith.constant 0 : index
    %c0_91 = arith.constant 0 : index
    %104 = vector.load %arg14[%c2_89, %c0_90, %c0_91] : memref<8x1x128xf32, #tpu.memory_space<vmem>>, vector<1x1x128xf32>
    %105 = vector.shape_cast %104 : vector<1x1x128xf32> to vector<1x128xf32>
    %106 = vector.broadcast %105 : vector<1x128xf32> to vector<32x128xf32>
    %107 = arith.mulf %84, %106 : vector<32x128xf32>
    %cst_92 = arith.constant dense<0.000000e+00> : vector<32x256xf32>
    %108 = tpu.matmul %107, %13, %cst_92 {dimension_numbers = #tpu.dot_dimension_numbers<[1], [0], [0], [1], [0, 0, 1, 1], [], []>} : vector<32x128xf32>, vector<128x256xf32>, vector<32x256xf32> -> vector<32x256xf32>
    %109 = arith.mulf %83, %108 : vector<32x256xf32>
    %cst_93 = arith.constant dense<0.000000e+00> : vector<32x128xf32>
    %110 = tpu.matmul %109, %14, %cst_93 {dimension_numbers = #tpu.dot_dimension_numbers<[1], [0], [0], [1], [0, 0, 1, 1], [], []>} : vector<32x256xf32>, vector<256x128xf32>, vector<32x128xf32> -> vector<32x128xf32>
    %111 = vector.broadcast %105 : vector<1x128xf32> to vector<32x128xf32>
    %112 = arith.mulf %110, %111 : vector<32x128xf32>
    %113 = arith.addf %103, %112 : vector<32x128xf32>
    %c3_94 = arith.constant 3 : index
    %c0_95 = arith.constant 0 : index
    %c0_96 = arith.constant 0 : index
    %114 = vector.load %arg14[%c3_94, %c0_95, %c0_96] : memref<8x1x128xf32, #tpu.memory_space<vmem>>, vector<1x1x128xf32>
    %115 = vector.shape_cast %114 : vector<1x1x128xf32> to vector<1x128xf32>
    %116 = vector.broadcast %115 : vector<1x128xf32> to vector<32x128xf32>
    %117 = arith.mulf %84, %116 : vector<32x128xf32>
    %cst_97 = arith.constant dense<0.000000e+00> : vector<32x256xf32>
    %118 = tpu.matmul %117, %13, %cst_97 {dimension_numbers = #tpu.dot_dimension_numbers<[1], [0], [0], [1], [0, 0, 1, 1], [], []>} : vector<32x128xf32>, vector<128x256xf32>, vector<32x256xf32> -> vector<32x256xf32>
    %119 = arith.mulf %83, %118 : vector<32x256xf32>
    %cst_98 = arith.constant dense<0.000000e+00> : vector<32x128xf32>
    %120 = tpu.matmul %119, %14, %cst_98 {dimension_numbers = #tpu.dot_dimension_numbers<[1], [0], [0], [1], [0, 0, 1, 1], [], []>} : vector<32x256xf32>, vector<256x128xf32>, vector<32x128xf32> -> vector<32x128xf32>
    %121 = vector.broadcast %115 : vector<1x128xf32> to vector<32x128xf32>
    %122 = arith.mulf %120, %121 : vector<32x128xf32>
    %123 = arith.addf %113, %122 : vector<32x128xf32>
    %c4_99 = arith.constant 4 : index
    %c0_100 = arith.constant 0 : index
    %c0_101 = arith.constant 0 : index
    %124 = vector.load %arg14[%c4_99, %c0_100, %c0_101] : memref<8x1x128xf32, #tpu.memory_space<vmem>>, vector<1x1x128xf32>
    %125 = vector.shape_cast %124 : vector<1x1x128xf32> to vector<1x128xf32>
    %126 = vector.broadcast %125 : vector<1x128xf32> to vector<32x128xf32>
    %127 = arith.mulf %84, %126 : vector<32x128xf32>
    %cst_102 = arith.constant dense<0.000000e+00> : vector<32x256xf32>
    %128 = tpu.matmul %127, %13, %cst_102 {dimension_numbers = #tpu.dot_dimension_numbers<[1], [0], [0], [1], [0, 0, 1, 1], [], []>} : vector<32x128xf32>, vector<128x256xf32>, vector<32x256xf32> -> vector<32x256xf32>
    %129 = arith.mulf %83, %128 : vector<32x256xf32>
    %cst_103 = arith.constant dense<0.000000e+00> : vector<32x128xf32>
    %130 = tpu.matmul %129, %14, %cst_103 {dimension_numbers = #tpu.dot_dimension_numbers<[1], [0], [0], [1], [0, 0, 1, 1], [], []>} : vector<32x256xf32>, vector<256x128xf32>, vector<32x128xf32> -> vector<32x128xf32>
    %131 = vector.broadcast %125 : vector<1x128xf32> to vector<32x128xf32>
    %132 = arith.mulf %130, %131 : vector<32x128xf32>
    %133 = arith.addf %123, %132 : vector<32x128xf32>
    %c5_104 = arith.constant 5 : index
    %c0_105 = arith.constant 0 : index
    %c0_106 = arith.constant 0 : index
    %134 = vector.load %arg14[%c5_104, %c0_105, %c0_106] : memref<8x1x128xf32, #tpu.memory_space<vmem>>, vector<1x1x128xf32>
    %135 = vector.shape_cast %134 : vector<1x1x128xf32> to vector<1x128xf32>
    %136 = vector.broadcast %135 : vector<1x128xf32> to vector<32x128xf32>
    %137 = arith.mulf %84, %136 : vector<32x128xf32>
    %cst_107 = arith.constant dense<0.000000e+00> : vector<32x256xf32>
    %138 = tpu.matmul %137, %13, %cst_107 {dimension_numbers = #tpu.dot_dimension_numbers<[1], [0], [0], [1], [0, 0, 1, 1], [], []>} : vector<32x128xf32>, vector<128x256xf32>, vector<32x256xf32> -> vector<32x256xf32>
    %139 = arith.mulf %83, %138 : vector<32x256xf32>
    %cst_108 = arith.constant dense<0.000000e+00> : vector<32x128xf32>
    %140 = tpu.matmul %139, %14, %cst_108 {dimension_numbers = #tpu.dot_dimension_numbers<[1], [0], [0], [1], [0, 0, 1, 1], [], []>} : vector<32x256xf32>, vector<256x128xf32>, vector<32x128xf32> -> vector<32x128xf32>
    %141 = vector.broadcast %135 : vector<1x128xf32> to vector<32x128xf32>
    %142 = arith.mulf %140, %141 : vector<32x128xf32>
    %143 = arith.addf %133, %142 : vector<32x128xf32>
    %c6_109 = arith.constant 6 : index
    %c0_110 = arith.constant 0 : index
    %c0_111 = arith.constant 0 : index
    %144 = vector.load %arg14[%c6_109, %c0_110, %c0_111] : memref<8x1x128xf32, #tpu.memory_space<vmem>>, vector<1x1x128xf32>
    %145 = vector.shape_cast %144 : vector<1x1x128xf32> to vector<1x128xf32>
    %146 = vector.broadcast %145 : vector<1x128xf32> to vector<32x128xf32>
    %147 = arith.mulf %84, %146 : vector<32x128xf32>
    %cst_112 = arith.constant dense<0.000000e+00> : vector<32x256xf32>
    %148 = tpu.matmul %147, %13, %cst_112 {dimension_numbers = #tpu.dot_dimension_numbers<[1], [0], [0], [1], [0, 0, 1, 1], [], []>} : vector<32x128xf32>, vector<128x256xf32>, vector<32x256xf32> -> vector<32x256xf32>
    %149 = arith.mulf %83, %148 : vector<32x256xf32>
    %cst_113 = arith.constant dense<0.000000e+00> : vector<32x128xf32>
    %150 = tpu.matmul %149, %14, %cst_113 {dimension_numbers = #tpu.dot_dimension_numbers<[1], [0], [0], [1], [0, 0, 1, 1], [], []>} : vector<32x256xf32>, vector<256x128xf32>, vector<32x128xf32> -> vector<32x128xf32>
    %151 = vector.broadcast %145 : vector<1x128xf32> to vector<32x128xf32>
    %152 = arith.mulf %150, %151 : vector<32x128xf32>
    %153 = arith.addf %143, %152 : vector<32x128xf32>
    %c7 = arith.constant 7 : index
    %c0_114 = arith.constant 0 : index
    %c0_115 = arith.constant 0 : index
    %154 = vector.load %arg14[%c7, %c0_114, %c0_115] : memref<8x1x128xf32, #tpu.memory_space<vmem>>, vector<1x1x128xf32>
    %155 = vector.shape_cast %154 : vector<1x1x128xf32> to vector<1x128xf32>
    %156 = vector.broadcast %155 : vector<1x128xf32> to vector<32x128xf32>
    %157 = arith.mulf %84, %156 : vector<32x128xf32>
    %cst_116 = arith.constant dense<0.000000e+00> : vector<32x256xf32>
    %158 = tpu.matmul %157, %13, %cst_116 {dimension_numbers = #tpu.dot_dimension_numbers<[1], [0], [0], [1], [0, 0, 1, 1], [], []>} : vector<32x128xf32>, vector<128x256xf32>, vector<32x256xf32> -> vector<32x256xf32>
    %159 = arith.mulf %83, %158 : vector<32x256xf32>
    %cst_117 = arith.constant dense<0.000000e+00> : vector<32x128xf32>
    %160 = tpu.matmul %159, %14, %cst_117 {dimension_numbers = #tpu.dot_dimension_numbers<[1], [0], [0], [1], [0, 0, 1, 1], [], []>} : vector<32x256xf32>, vector<256x128xf32>, vector<32x128xf32> -> vector<32x128xf32>
    %161 = vector.broadcast %155 : vector<1x128xf32> to vector<32x128xf32>
    %162 = arith.mulf %160, %161 : vector<32x128xf32>
    %163 = arith.addf %153, %162 : vector<32x128xf32>
    %c128 = arith.constant 128 : index
    %c0_118 = arith.constant 0 : index
    %164 = vector.load %arg4[%c128, %c0_118] : memref<192x12xf32, #tpu.memory_space<vmem>>, vector<32x12xf32>
    %cst_119 = arith.constant dense<0.000000e+00> : vector<32x256xf32>
    %165 = tpu.matmul %164, %78, %cst_119 {dimension_numbers = #tpu.dot_dimension_numbers<[1], [0], [0], [1], [0, 0, 1, 1], [], []>} : vector<32x12xf32>, vector<12x256xf32>, vector<32x256xf32> -> vector<32x256xf32>
    %c1_120 = arith.constant 1 : index
    %c0_121 = arith.constant 0 : index
    %c0_122 = arith.constant 0 : index
    %166 = vector.load %arg6[%c1_120, %c0_121, %c0_122] : memref<3x32x256xf32, #tpu.memory_space<vmem>>, vector<1x32x256xf32>
    %167 = vector.shape_cast %166 : vector<1x32x256xf32> to vector<32x256xf32>
    %168 = arith.addf %165, %167 : vector<32x256xf32>
    %169 = vector.extract_strided_slice %74 {offsets = [32, 0], sizes = [32, 128], strides = [1, 1]} : vector<96x128xf32> to vector<32x128xf32>
    %c0_123 = arith.constant 0 : index
    %c0_124 = arith.constant 0 : index
    %c0_125 = arith.constant 0 : index
    %170 = vector.load %arg14[%c0_123, %c0_124, %c0_125] : memref<8x1x128xf32, #tpu.memory_space<vmem>>, vector<1x1x128xf32>
    %171 = vector.shape_cast %170 : vector<1x1x128xf32> to vector<1x128xf32>
    %172 = vector.broadcast %171 : vector<1x128xf32> to vector<32x128xf32>
    %173 = arith.mulf %169, %172 : vector<32x128xf32>
    %cst_126 = arith.constant dense<0.000000e+00> : vector<32x256xf32>
    %174 = tpu.matmul %173, %13, %cst_126 {dimension_numbers = #tpu.dot_dimension_numbers<[1], [0], [0], [1], [0, 0, 1, 1], [], []>} : vector<32x128xf32>, vector<128x256xf32>, vector<32x256xf32> -> vector<32x256xf32>
    %175 = arith.mulf %168, %174 : vector<32x256xf32>
    %cst_127 = arith.constant dense<0.000000e+00> : vector<32x128xf32>
    %176 = tpu.matmul %175, %14, %cst_127 {dimension_numbers = #tpu.dot_dimension_numbers<[1], [0], [0], [1], [0, 0, 1, 1], [], []>} : vector<32x256xf32>, vector<256x128xf32>, vector<32x128xf32> -> vector<32x128xf32>
    %177 = vector.broadcast %171 : vector<1x128xf32> to vector<32x128xf32>
    %178 = arith.mulf %176, %177 : vector<32x128xf32>
    %179 = arith.addf %163, %178 : vector<32x128xf32>
    %c1_128 = arith.constant 1 : index
    %c0_129 = arith.constant 0 : index
    %c0_130 = arith.constant 0 : index
    %180 = vector.load %arg14[%c1_128, %c0_129, %c0_130] : memref<8x1x128xf32, #tpu.memory_space<vmem>>, vector<1x1x128xf32>
    %181 = vector.shape_cast %180 : vector<1x1x128xf32> to vector<1x128xf32>
    %182 = vector.broadcast %181 : vector<1x128xf32> to vector<32x128xf32>
    %183 = arith.mulf %169, %182 : vector<32x128xf32>
    %cst_131 = arith.constant dense<0.000000e+00> : vector<32x256xf32>
    %184 = tpu.matmul %183, %13, %cst_131 {dimension_numbers = #tpu.dot_dimension_numbers<[1], [0], [0], [1], [0, 0, 1, 1], [], []>} : vector<32x128xf32>, vector<128x256xf32>, vector<32x256xf32> -> vector<32x256xf32>
    %185 = arith.mulf %168, %184 : vector<32x256xf32>
    %cst_132 = arith.constant dense<0.000000e+00> : vector<32x128xf32>
    %186 = tpu.matmul %185, %14, %cst_132 {dimension_numbers = #tpu.dot_dimension_numbers<[1], [0], [0], [1], [0, 0, 1, 1], [], []>} : vector<32x256xf32>, vector<256x128xf32>, vector<32x128xf32> -> vector<32x128xf32>
    %187 = vector.broadcast %181 : vector<1x128xf32> to vector<32x128xf32>
    %188 = arith.mulf %186, %187 : vector<32x128xf32>
    %189 = arith.addf %179, %188 : vector<32x128xf32>
    %c2_133 = arith.constant 2 : index
    %c0_134 = arith.constant 0 : index
    %c0_135 = arith.constant 0 : index
    %190 = vector.load %arg14[%c2_133, %c0_134, %c0_135] : memref<8x1x128xf32, #tpu.memory_space<vmem>>, vector<1x1x128xf32>
    %191 = vector.shape_cast %190 : vector<1x1x128xf32> to vector<1x128xf32>
    %192 = vector.broadcast %191 : vector<1x128xf32> to vector<32x128xf32>
    %193 = arith.mulf %169, %192 : vector<32x128xf32>
    %cst_136 = arith.constant dense<0.000000e+00> : vector<32x256xf32>
    %194 = tpu.matmul %193, %13, %cst_136 {dimension_numbers = #tpu.dot_dimension_numbers<[1], [0], [0], [1], [0, 0, 1, 1], [], []>} : vector<32x128xf32>, vector<128x256xf32>, vector<32x256xf32> -> vector<32x256xf32>
    %195 = arith.mulf %168, %194 : vector<32x256xf32>
    %cst_137 = arith.constant dense<0.000000e+00> : vector<32x128xf32>
    %196 = tpu.matmul %195, %14, %cst_137 {dimension_numbers = #tpu.dot_dimension_numbers<[1], [0], [0], [1], [0, 0, 1, 1], [], []>} : vector<32x256xf32>, vector<256x128xf32>, vector<32x128xf32> -> vector<32x128xf32>
    %197 = vector.broadcast %191 : vector<1x128xf32> to vector<32x128xf32>
    %198 = arith.mulf %196, %197 : vector<32x128xf32>
    %199 = arith.addf %189, %198 : vector<32x128xf32>
    %c3_138 = arith.constant 3 : index
    %c0_139 = arith.constant 0 : index
    %c0_140 = arith.constant 0 : index
    %200 = vector.load %arg14[%c3_138, %c0_139, %c0_140] : memref<8x1x128xf32, #tpu.memory_space<vmem>>, vector<1x1x128xf32>
    %201 = vector.shape_cast %200 : vector<1x1x128xf32> to vector<1x128xf32>
    %202 = vector.broadcast %201 : vector<1x128xf32> to vector<32x128xf32>
    %203 = arith.mulf %169, %202 : vector<32x128xf32>
    %cst_141 = arith.constant dense<0.000000e+00> : vector<32x256xf32>
    %204 = tpu.matmul %203, %13, %cst_141 {dimension_numbers = #tpu.dot_dimension_numbers<[1], [0], [0], [1], [0, 0, 1, 1], [], []>} : vector<32x128xf32>, vector<128x256xf32>, vector<32x256xf32> -> vector<32x256xf32>
    %205 = arith.mulf %168, %204 : vector<32x256xf32>
    %cst_142 = arith.constant dense<0.000000e+00> : vector<32x128xf32>
    %206 = tpu.matmul %205, %14, %cst_142 {dimension_numbers = #tpu.dot_dimension_numbers<[1], [0], [0], [1], [0, 0, 1, 1], [], []>} : vector<32x256xf32>, vector<256x128xf32>, vector<32x128xf32> -> vector<32x128xf32>
    %207 = vector.broadcast %201 : vector<1x128xf32> to vector<32x128xf32>
    %208 = arith.mulf %206, %207 : vector<32x128xf32>
    %209 = arith.addf %199, %208 : vector<32x128xf32>
    %c4_143 = arith.constant 4 : index
    %c0_144 = arith.constant 0 : index
    %c0_145 = arith.constant 0 : index
    %210 = vector.load %arg14[%c4_143, %c0_144, %c0_145] : memref<8x1x128xf32, #tpu.memory_space<vmem>>, vector<1x1x128xf32>
    %211 = vector.shape_cast %210 : vector<1x1x128xf32> to vector<1x128xf32>
    %212 = vector.broadcast %211 : vector<1x128xf32> to vector<32x128xf32>
    %213 = arith.mulf %169, %212 : vector<32x128xf32>
    %cst_146 = arith.constant dense<0.000000e+00> : vector<32x256xf32>
    %214 = tpu.matmul %213, %13, %cst_146 {dimension_numbers = #tpu.dot_dimension_numbers<[1], [0], [0], [1], [0, 0, 1, 1], [], []>} : vector<32x128xf32>, vector<128x256xf32>, vector<32x256xf32> -> vector<32x256xf32>
    %215 = arith.mulf %168, %214 : vector<32x256xf32>
    %cst_147 = arith.constant dense<0.000000e+00> : vector<32x128xf32>
    %216 = tpu.matmul %215, %14, %cst_147 {dimension_numbers = #tpu.dot_dimension_numbers<[1], [0], [0], [1], [0, 0, 1, 1], [], []>} : vector<32x256xf32>, vector<256x128xf32>, vector<32x128xf32> -> vector<32x128xf32>
    %217 = vector.broadcast %211 : vector<1x128xf32> to vector<32x128xf32>
    %218 = arith.mulf %216, %217 : vector<32x128xf32>
    %219 = arith.addf %209, %218 : vector<32x128xf32>
    %c5_148 = arith.constant 5 : index
    %c0_149 = arith.constant 0 : index
    %c0_150 = arith.constant 0 : index
    %220 = vector.load %arg14[%c5_148, %c0_149, %c0_150] : memref<8x1x128xf32, #tpu.memory_space<vmem>>, vector<1x1x128xf32>
    %221 = vector.shape_cast %220 : vector<1x1x128xf32> to vector<1x128xf32>
    %222 = vector.broadcast %221 : vector<1x128xf32> to vector<32x128xf32>
    %223 = arith.mulf %169, %222 : vector<32x128xf32>
    %cst_151 = arith.constant dense<0.000000e+00> : vector<32x256xf32>
    %224 = tpu.matmul %223, %13, %cst_151 {dimension_numbers = #tpu.dot_dimension_numbers<[1], [0], [0], [1], [0, 0, 1, 1], [], []>} : vector<32x128xf32>, vector<128x256xf32>, vector<32x256xf32> -> vector<32x256xf32>
    %225 = arith.mulf %168, %224 : vector<32x256xf32>
    %cst_152 = arith.constant dense<0.000000e+00> : vector<32x128xf32>
    %226 = tpu.matmul %225, %14, %cst_152 {dimension_numbers = #tpu.dot_dimension_numbers<[1], [0], [0], [1], [0, 0, 1, 1], [], []>} : vector<32x256xf32>, vector<256x128xf32>, vector<32x128xf32> -> vector<32x128xf32>
    %227 = vector.broadcast %221 : vector<1x128xf32> to vector<32x128xf32>
    %228 = arith.mulf %226, %227 : vector<32x128xf32>
    %229 = arith.addf %219, %228 : vector<32x128xf32>
    %c6_153 = arith.constant 6 : index
    %c0_154 = arith.constant 0 : index
    %c0_155 = arith.constant 0 : index
    %230 = vector.load %arg14[%c6_153, %c0_154, %c0_155] : memref<8x1x128xf32, #tpu.memory_space<vmem>>, vector<1x1x128xf32>
    %231 = vector.shape_cast %230 : vector<1x1x128xf32> to vector<1x128xf32>
    %232 = vector.broadcast %231 : vector<1x128xf32> to vector<32x128xf32>
    %233 = arith.mulf %169, %232 : vector<32x128xf32>
    %cst_156 = arith.constant dense<0.000000e+00> : vector<32x256xf32>
    %234 = tpu.matmul %233, %13, %cst_156 {dimension_numbers = #tpu.dot_dimension_numbers<[1], [0], [0], [1], [0, 0, 1, 1], [], []>} : vector<32x128xf32>, vector<128x256xf32>, vector<32x256xf32> -> vector<32x256xf32>
    %235 = arith.mulf %168, %234 : vector<32x256xf32>
    %cst_157 = arith.constant dense<0.000000e+00> : vector<32x128xf32>
    %236 = tpu.matmul %235, %14, %cst_157 {dimension_numbers = #tpu.dot_dimension_numbers<[1], [0], [0], [1], [0, 0, 1, 1], [], []>} : vector<32x256xf32>, vector<256x128xf32>, vector<32x128xf32> -> vector<32x128xf32>
    %237 = vector.broadcast %231 : vector<1x128xf32> to vector<32x128xf32>
    %238 = arith.mulf %236, %237 : vector<32x128xf32>
    %239 = arith.addf %229, %238 : vector<32x128xf32>
    %c7_158 = arith.constant 7 : index
    %c0_159 = arith.constant 0 : index
    %c0_160 = arith.constant 0 : index
    %240 = vector.load %arg14[%c7_158, %c0_159, %c0_160] : memref<8x1x128xf32, #tpu.memory_space<vmem>>, vector<1x1x128xf32>
    %241 = vector.shape_cast %240 : vector<1x1x128xf32> to vector<1x128xf32>
    %242 = vector.broadcast %241 : vector<1x128xf32> to vector<32x128xf32>
    %243 = arith.mulf %169, %242 : vector<32x128xf32>
    %cst_161 = arith.constant dense<0.000000e+00> : vector<32x256xf32>
    %244 = tpu.matmul %243, %13, %cst_161 {dimension_numbers = #tpu.dot_dimension_numbers<[1], [0], [0], [1], [0, 0, 1, 1], [], []>} : vector<32x128xf32>, vector<128x256xf32>, vector<32x256xf32> -> vector<32x256xf32>
    %245 = arith.mulf %168, %244 : vector<32x256xf32>
    %cst_162 = arith.constant dense<0.000000e+00> : vector<32x128xf32>
    %246 = tpu.matmul %245, %14, %cst_162 {dimension_numbers = #tpu.dot_dimension_numbers<[1], [0], [0], [1], [0, 0, 1, 1], [], []>} : vector<32x256xf32>, vector<256x128xf32>, vector<32x128xf32> -> vector<32x128xf32>
    %247 = vector.broadcast %241 : vector<1x128xf32> to vector<32x128xf32>
    %248 = arith.mulf %246, %247 : vector<32x128xf32>
    %249 = arith.addf %239, %248 : vector<32x128xf32>
    %c160 = arith.constant 160 : index
    %c0_163 = arith.constant 0 : index
    %250 = vector.load %arg4[%c160, %c0_163] : memref<192x12xf32, #tpu.memory_space<vmem>>, vector<32x12xf32>
    %cst_164 = arith.constant dense<0.000000e+00> : vector<32x256xf32>
    %251 = tpu.matmul %250, %78, %cst_164 {dimension_numbers = #tpu.dot_dimension_numbers<[1], [0], [0], [1], [0, 0, 1, 1], [], []>} : vector<32x12xf32>, vector<12x256xf32>, vector<32x256xf32> -> vector<32x256xf32>
    %c2_165 = arith.constant 2 : index
    %c0_166 = arith.constant 0 : index
    %c0_167 = arith.constant 0 : index
    %252 = vector.load %arg6[%c2_165, %c0_166, %c0_167] : memref<3x32x256xf32, #tpu.memory_space<vmem>>, vector<1x32x256xf32>
    %253 = vector.shape_cast %252 : vector<1x32x256xf32> to vector<32x256xf32>
    %254 = arith.addf %251, %253 : vector<32x256xf32>
    %255 = vector.extract_strided_slice %74 {offsets = [64, 0], sizes = [32, 128], strides = [1, 1]} : vector<96x128xf32> to vector<32x128xf32>
    %c0_168 = arith.constant 0 : index
    %c0_169 = arith.constant 0 : index
    %c0_170 = arith.constant 0 : index
    %256 = vector.load %arg14[%c0_168, %c0_169, %c0_170] : memref<8x1x128xf32, #tpu.memory_space<vmem>>, vector<1x1x128xf32>
    %257 = vector.shape_cast %256 : vector<1x1x128xf32> to vector<1x128xf32>
    %258 = vector.broadcast %257 : vector<1x128xf32> to vector<32x128xf32>
    %259 = arith.mulf %255, %258 : vector<32x128xf32>
    %cst_171 = arith.constant dense<0.000000e+00> : vector<32x256xf32>
    %260 = tpu.matmul %259, %13, %cst_171 {dimension_numbers = #tpu.dot_dimension_numbers<[1], [0], [0], [1], [0, 0, 1, 1], [], []>} : vector<32x128xf32>, vector<128x256xf32>, vector<32x256xf32> -> vector<32x256xf32>
    %261 = arith.mulf %254, %260 : vector<32x256xf32>
    %cst_172 = arith.constant dense<0.000000e+00> : vector<32x128xf32>
    %262 = tpu.matmul %261, %14, %cst_172 {dimension_numbers = #tpu.dot_dimension_numbers<[1], [0], [0], [1], [0, 0, 1, 1], [], []>} : vector<32x256xf32>, vector<256x128xf32>, vector<32x128xf32> -> vector<32x128xf32>
    %263 = vector.broadcast %257 : vector<1x128xf32> to vector<32x128xf32>
    %264 = arith.mulf %262, %263 : vector<32x128xf32>
    %265 = arith.addf %249, %264 : vector<32x128xf32>
    %c1_173 = arith.constant 1 : index
    %c0_174 = arith.constant 0 : index
    %c0_175 = arith.constant 0 : index
    %266 = vector.load %arg14[%c1_173, %c0_174, %c0_175] : memref<8x1x128xf32, #tpu.memory_space<vmem>>, vector<1x1x128xf32>
    %267 = vector.shape_cast %266 : vector<1x1x128xf32> to vector<1x128xf32>
    %268 = vector.broadcast %267 : vector<1x128xf32> to vector<32x128xf32>
    %269 = arith.mulf %255, %268 : vector<32x128xf32>
    %cst_176 = arith.constant dense<0.000000e+00> : vector<32x256xf32>
    %270 = tpu.matmul %269, %13, %cst_176 {dimension_numbers = #tpu.dot_dimension_numbers<[1], [0], [0], [1], [0, 0, 1, 1], [], []>} : vector<32x128xf32>, vector<128x256xf32>, vector<32x256xf32> -> vector<32x256xf32>
    %271 = arith.mulf %254, %270 : vector<32x256xf32>
    %cst_177 = arith.constant dense<0.000000e+00> : vector<32x128xf32>
    %272 = tpu.matmul %271, %14, %cst_177 {dimension_numbers = #tpu.dot_dimension_numbers<[1], [0], [0], [1], [0, 0, 1, 1], [], []>} : vector<32x256xf32>, vector<256x128xf32>, vector<32x128xf32> -> vector<32x128xf32>
    %273 = vector.broadcast %267 : vector<1x128xf32> to vector<32x128xf32>
    %274 = arith.mulf %272, %273 : vector<32x128xf32>
    %275 = arith.addf %265, %274 : vector<32x128xf32>
    %c2_178 = arith.constant 2 : index
    %c0_179 = arith.constant 0 : index
    %c0_180 = arith.constant 0 : index
    %276 = vector.load %arg14[%c2_178, %c0_179, %c0_180] : memref<8x1x128xf32, #tpu.memory_space<vmem>>, vector<1x1x128xf32>
    %277 = vector.shape_cast %276 : vector<1x1x128xf32> to vector<1x128xf32>
    %278 = vector.broadcast %277 : vector<1x128xf32> to vector<32x128xf32>
    %279 = arith.mulf %255, %278 : vector<32x128xf32>
    %cst_181 = arith.constant dense<0.000000e+00> : vector<32x256xf32>
    %280 = tpu.matmul %279, %13, %cst_181 {dimension_numbers = #tpu.dot_dimension_numbers<[1], [0], [0], [1], [0, 0, 1, 1], [], []>} : vector<32x128xf32>, vector<128x256xf32>, vector<32x256xf32> -> vector<32x256xf32>
    %281 = arith.mulf %254, %280 : vector<32x256xf32>
    %cst_182 = arith.constant dense<0.000000e+00> : vector<32x128xf32>
    %282 = tpu.matmul %281, %14, %cst_182 {dimension_numbers = #tpu.dot_dimension_numbers<[1], [0], [0], [1], [0, 0, 1, 1], [], []>} : vector<32x256xf32>, vector<256x128xf32>, vector<32x128xf32> -> vector<32x128xf32>
    %283 = vector.broadcast %277 : vector<1x128xf32> to vector<32x128xf32>
    %284 = arith.mulf %282, %283 : vector<32x128xf32>
    %285 = arith.addf %275, %284 : vector<32x128xf32>
    %c3_183 = arith.constant 3 : index
    %c0_184 = arith.constant 0 : index
    %c0_185 = arith.constant 0 : index
    %286 = vector.load %arg14[%c3_183, %c0_184, %c0_185] : memref<8x1x128xf32, #tpu.memory_space<vmem>>, vector<1x1x128xf32>
    %287 = vector.shape_cast %286 : vector<1x1x128xf32> to vector<1x128xf32>
    %288 = vector.broadcast %287 : vector<1x128xf32> to vector<32x128xf32>
    %289 = arith.mulf %255, %288 : vector<32x128xf32>
    %cst_186 = arith.constant dense<0.000000e+00> : vector<32x256xf32>
    %290 = tpu.matmul %289, %13, %cst_186 {dimension_numbers = #tpu.dot_dimension_numbers<[1], [0], [0], [1], [0, 0, 1, 1], [], []>} : vector<32x128xf32>, vector<128x256xf32>, vector<32x256xf32> -> vector<32x256xf32>
    %291 = arith.mulf %254, %290 : vector<32x256xf32>
    %cst_187 = arith.constant dense<0.000000e+00> : vector<32x128xf32>
    %292 = tpu.matmul %291, %14, %cst_187 {dimension_numbers = #tpu.dot_dimension_numbers<[1], [0], [0], [1], [0, 0, 1, 1], [], []>} : vector<32x256xf32>, vector<256x128xf32>, vector<32x128xf32> -> vector<32x128xf32>
    %293 = vector.broadcast %287 : vector<1x128xf32> to vector<32x128xf32>
    %294 = arith.mulf %292, %293 : vector<32x128xf32>
    %295 = arith.addf %285, %294 : vector<32x128xf32>
    %c4_188 = arith.constant 4 : index
    %c0_189 = arith.constant 0 : index
    %c0_190 = arith.constant 0 : index
    %296 = vector.load %arg14[%c4_188, %c0_189, %c0_190] : memref<8x1x128xf32, #tpu.memory_space<vmem>>, vector<1x1x128xf32>
    %297 = vector.shape_cast %296 : vector<1x1x128xf32> to vector<1x128xf32>
    %298 = vector.broadcast %297 : vector<1x128xf32> to vector<32x128xf32>
    %299 = arith.mulf %255, %298 : vector<32x128xf32>
    %cst_191 = arith.constant dense<0.000000e+00> : vector<32x256xf32>
    %300 = tpu.matmul %299, %13, %cst_191 {dimension_numbers = #tpu.dot_dimension_numbers<[1], [0], [0], [1], [0, 0, 1, 1], [], []>} : vector<32x128xf32>, vector<128x256xf32>, vector<32x256xf32> -> vector<32x256xf32>
    %301 = arith.mulf %254, %300 : vector<32x256xf32>
    %cst_192 = arith.constant dense<0.000000e+00> : vector<32x128xf32>
    %302 = tpu.matmul %301, %14, %cst_192 {dimension_numbers = #tpu.dot_dimension_numbers<[1], [0], [0], [1], [0, 0, 1, 1], [], []>} : vector<32x256xf32>, vector<256x128xf32>, vector<32x128xf32> -> vector<32x128xf32>
    %303 = vector.broadcast %297 : vector<1x128xf32> to vector<32x128xf32>
    %304 = arith.mulf %302, %303 : vector<32x128xf32>
    %305 = arith.addf %295, %304 : vector<32x128xf32>
    %c5_193 = arith.constant 5 : index
    %c0_194 = arith.constant 0 : index
    %c0_195 = arith.constant 0 : index
    %306 = vector.load %arg14[%c5_193, %c0_194, %c0_195] : memref<8x1x128xf32, #tpu.memory_space<vmem>>, vector<1x1x128xf32>
    %307 = vector.shape_cast %306 : vector<1x1x128xf32> to vector<1x128xf32>
    %308 = vector.broadcast %307 : vector<1x128xf32> to vector<32x128xf32>
    %309 = arith.mulf %255, %308 : vector<32x128xf32>
    %cst_196 = arith.constant dense<0.000000e+00> : vector<32x256xf32>
    %310 = tpu.matmul %309, %13, %cst_196 {dimension_numbers = #tpu.dot_dimension_numbers<[1], [0], [0], [1], [0, 0, 1, 1], [], []>} : vector<32x128xf32>, vector<128x256xf32>, vector<32x256xf32> -> vector<32x256xf32>
    %311 = arith.mulf %254, %310 : vector<32x256xf32>
    %cst_197 = arith.constant dense<0.000000e+00> : vector<32x128xf32>
    %312 = tpu.matmul %311, %14, %cst_197 {dimension_numbers = #tpu.dot_dimension_numbers<[1], [0], [0], [1], [0, 0, 1, 1], [], []>} : vector<32x256xf32>, vector<256x128xf32>, vector<32x128xf32> -> vector<32x128xf32>
    %313 = vector.broadcast %307 : vector<1x128xf32> to vector<32x128xf32>
    %314 = arith.mulf %312, %313 : vector<32x128xf32>
    %315 = arith.addf %305, %314 : vector<32x128xf32>
    %c6_198 = arith.constant 6 : index
    %c0_199 = arith.constant 0 : index
    %c0_200 = arith.constant 0 : index
    %316 = vector.load %arg14[%c6_198, %c0_199, %c0_200] : memref<8x1x128xf32, #tpu.memory_space<vmem>>, vector<1x1x128xf32>
    %317 = vector.shape_cast %316 : vector<1x1x128xf32> to vector<1x128xf32>
    %318 = vector.broadcast %317 : vector<1x128xf32> to vector<32x128xf32>
    %319 = arith.mulf %255, %318 : vector<32x128xf32>
    %cst_201 = arith.constant dense<0.000000e+00> : vector<32x256xf32>
    %320 = tpu.matmul %319, %13, %cst_201 {dimension_numbers = #tpu.dot_dimension_numbers<[1], [0], [0], [1], [0, 0, 1, 1], [], []>} : vector<32x128xf32>, vector<128x256xf32>, vector<32x256xf32> -> vector<32x256xf32>
    %321 = arith.mulf %254, %320 : vector<32x256xf32>
    %cst_202 = arith.constant dense<0.000000e+00> : vector<32x128xf32>
    %322 = tpu.matmul %321, %14, %cst_202 {dimension_numbers = #tpu.dot_dimension_numbers<[1], [0], [0], [1], [0, 0, 1, 1], [], []>} : vector<32x256xf32>, vector<256x128xf32>, vector<32x128xf32> -> vector<32x128xf32>
    %323 = vector.broadcast %317 : vector<1x128xf32> to vector<32x128xf32>
    %324 = arith.mulf %322, %323 : vector<32x128xf32>
    %325 = arith.addf %315, %324 : vector<32x128xf32>
    %c7_203 = arith.constant 7 : index
    %c0_204 = arith.constant 0 : index
    %c0_205 = arith.constant 0 : index
    %326 = vector.load %arg14[%c7_203, %c0_204, %c0_205] : memref<8x1x128xf32, #tpu.memory_space<vmem>>, vector<1x1x128xf32>
    %327 = vector.shape_cast %326 : vector<1x1x128xf32> to vector<1x128xf32>
    %328 = vector.broadcast %327 : vector<1x128xf32> to vector<32x128xf32>
    %329 = arith.mulf %255, %328 : vector<32x128xf32>
    %cst_206 = arith.constant dense<0.000000e+00> : vector<32x256xf32>
    %330 = tpu.matmul %329, %13, %cst_206 {dimension_numbers = #tpu.dot_dimension_numbers<[1], [0], [0], [1], [0, 0, 1, 1], [], []>} : vector<32x128xf32>, vector<128x256xf32>, vector<32x256xf32> -> vector<32x256xf32>
    %331 = arith.mulf %254, %330 : vector<32x256xf32>
    %cst_207 = arith.constant dense<0.000000e+00> : vector<32x128xf32>
    %332 = tpu.matmul %331, %14, %cst_207 {dimension_numbers = #tpu.dot_dimension_numbers<[1], [0], [0], [1], [0, 0, 1, 1], [], []>} : vector<32x256xf32>, vector<256x128xf32>, vector<32x128xf32> -> vector<32x128xf32>
    %333 = vector.broadcast %327 : vector<1x128xf32> to vector<32x128xf32>
    %334 = arith.mulf %332, %333 : vector<32x128xf32>
    %335 = arith.addf %325, %334 : vector<32x128xf32>
    %c128_208 = arith.constant 128 : index
    %c0_209 = arith.constant 0 : index
    %336 = vector.load %arg5[%c128_208, %c0_209] : memref<160x1xf32, #tpu.memory_space<vmem>>, vector<32x1xf32>
    %337 = vector.broadcast %336 : vector<32x1xf32> to vector<32x128xf32>
    %338 = arith.addf %335, %337 : vector<32x128xf32>
    %339 = vector.extract_strided_slice %1 {offsets = [0, 0], sizes = [32, 128], strides = [1, 1]} : vector<33x128xf32> to vector<32x128xf32>
    %340 = arith.addf %338, %339 : vector<32x128xf32>
    %cst_210 = arith.constant 0.000000e+00 : f32
    %341 = vector.broadcast %cst_210 : f32 to vector<32x128xf32>
    %342 = arith.maximumf %340, %341 : vector<32x128xf32>
    %c0_211 = arith.constant 0 : index
    %c0_212 = arith.constant 0 : index
    %c0_213 = arith.constant 0 : index
    %343 = vector.load %arg15[%c0_211, %c0_212, %c0_213] : memref<1x32x128xf32, #tpu.memory_space<vmem>>, vector<1x32x128xf32>
    %344 = vector.shape_cast %343 : vector<1x32x128xf32> to vector<32x128xf32>
    %345 = vector.shape_cast %342 : vector<32x128xf32> to vector<1x32x128xf32>
    tpu.vector_store %arg15[%c0_211, %c0_212, %c0_213], %345 {strides = array<i32>} : memref<1x32x128xf32, #tpu.memory_space<vmem>>, vector<1x32x128xf32>,
    return
  }
  func.func @transform_0(%arg0: i32) -> (i32, i32, i32) {
    %c0_i32 = arith.constant 0 : i32
    %c0_i32_0 = arith.constant 0 : i32
    %c0_i32_1 = arith.constant 0 : i32
    return %arg0, %c0_i32, %c0_i32_0 : i32, i32, i32
  }
  func.func @transform_1(%arg0: i32) -> (i32, i32) {
    %c0_i32 = arith.constant 0 : i32
    %c0_i32_0 = arith.constant 0 : i32
    %c0_i32_1 = arith.constant 0 : i32
    return %c0_i32, %c0_i32_0 : i32, i32
  }
  func.func @transform_2(%arg0: i32) -> (i32, i32, i32) {
    %c0_i32 = arith.constant 0 : i32
    %c0_i32_0 = arith.constant 0 : i32
    %c0_i32_1 = arith.constant 0 : i32
    %c0_i32_2 = arith.constant 0 : i32
    return %c0_i32, %c0_i32_0, %c0_i32_1 : i32, i32, i32
  }
  func.func @transform_3(%arg0: i32) -> (i32, i32) {
    %c0_i32 = arith.constant 0 : i32
    %c0_i32_0 = arith.constant 0 : i32
    %c0_i32_1 = arith.constant 0 : i32
    return %c0_i32, %c0_i32_0 : i32, i32
  }
  func.func @transform_4(%arg0: i32) -> (i32, i32) {
    %c0_i32 = arith.constant 0 : i32
    %c0_i32_0 = arith.constant 0 : i32
    %c0_i32_1 = arith.constant 0 : i32
    return %c0_i32, %c0_i32_0 : i32, i32
  }
  func.func @transform_5(%arg0: i32) -> (i32, i32, i32) {
    %c0_i32 = arith.constant 0 : i32
    %c0_i32_0 = arith.constant 0 : i32
    %c0_i32_1 = arith.constant 0 : i32
    %c0_i32_2 = arith.constant 0 : i32
    return %c0_i32, %c0_i32_0, %c0_i32_1 : i32, i32, i32
  }
  func.func @transform_6(%arg0: i32) -> (i32, i32) {
    %c0_i32 = arith.constant 0 : i32
    %c0_i32_0 = arith.constant 0 : i32
    %c0_i32_1 = arith.constant 0 : i32
    return %c0_i32, %c0_i32_0 : i32, i32
  }
  func.func @transform_7(%arg0: i32) -> (i32, i32) {
    %c0_i32 = arith.constant 0 : i32
    %c0_i32_0 = arith.constant 0 : i32
    %c0_i32_1 = arith.constant 0 : i32
    return %c0_i32, %c0_i32_0 : i32, i32
  }
  func.func @transform_8(%arg0: i32) -> (i32, i32) {
    %c0_i32 = arith.constant 0 : i32
    %c0_i32_0 = arith.constant 0 : i32
    %c0_i32_1 = arith.constant 0 : i32
    return %c0_i32, %c0_i32_0 : i32, i32
  }
  func.func @transform_9(%arg0: i32) -> (i32, i32, i32) {
    %c0_i32 = arith.constant 0 : i32
    %c0_i32_0 = arith.constant 0 : i32
    %c0_i32_1 = arith.constant 0 : i32
    %c0_i32_2 = arith.constant 0 : i32
    return %c0_i32, %c0_i32_0, %c0_i32_1 : i32, i32, i32
  }
  func.func @transform_10(%arg0: i32) -> (i32, i32, i32) {
    %c0_i32 = arith.constant 0 : i32
    %c0_i32_0 = arith.constant 0 : i32
    %c0_i32_1 = arith.constant 0 : i32
    %c0_i32_2 = arith.constant 0 : i32
    return %c0_i32, %c0_i32_0, %c0_i32_1 : i32, i32, i32
  }
  func.func @transform_11(%arg0: i32) -> (i32, i32) {
    %c0_i32 = arith.constant 0 : i32
    %c0_i32_0 = arith.constant 0 : i32
    %c0_i32_1 = arith.constant 0 : i32
    return %c0_i32, %c0_i32_0 : i32, i32
  }
  func.func @transform_12(%arg0: i32) -> (i32, i32) {
    %c0_i32 = arith.constant 0 : i32
    %c0_i32_0 = arith.constant 0 : i32
    %c0_i32_1 = arith.constant 0 : i32
    return %c0_i32, %c0_i32_0 : i32, i32
  }
  func.func @transform_13(%arg0: i32) -> (i32, i32, i32) {
    %c0_i32 = arith.constant 0 : i32
    %c0_i32_0 = arith.constant 0 : i32
    %c0_i32_1 = arith.constant 0 : i32
    %c0_i32_2 = arith.constant 0 : i32
    return %c0_i32, %c0_i32_0, %c0_i32_1 : i32, i32, i32
  }
  func.func @transform_14(%arg0: i32) -> (i32, i32, i32) {
    %c0_i32 = arith.constant 0 : i32
    %c0_i32_0 = arith.constant 0 : i32
    %c0_i32_1 = arith.constant 0 : i32
    return %arg0, %c0_i32, %c0_i32_0 : i32, i32, i32
  }
}

</mosaic_0001>

<llo_original>
// kernel: tpu_custom_call.1
$region0: #{tpu_custom_call.1}
  #allocation0 [shape = 'u32[]', space=smem, size = 0x4, offset = 0x4, fixed_abs, tag = 'smem constant byte address 0x4 - core index']
  #allocation1 [shape = 'u32[144,128]{1,0:T(1,128)}', space=vmem, size = 0x12000, scoped, tag = 'internal scratch']
  %s0 = inlined_call_operand.vmem [shape: f32[2,33,128], index: 0, kind: input, shape index: {}]
  %s1 = inlined_call_operand.vmem [shape: f32[48,33], index: 1, kind: input, shape index: {}]
  %s2 = inlined_call_operand.vmem [shape: f32[7,12,12], index: 2, kind: input, shape index: {}]
  %s3 = inlined_call_operand.vmem [shape: f32[192,12], index: 3, kind: input, shape index: {}]
  %s4 = inlined_call_operand.vmem [shape: f32[160,1], index: 4, kind: input, shape index: {}]
  %s5 = inlined_call_operand.vmem [shape: f32[3,32,256], index: 5, kind: input, shape index: {}]
  %s6 = inlined_call_operand.vmem [shape: f32[128,16], index: 6, kind: input, shape index: {}]
  %s7 = inlined_call_operand.vmem [shape: f32[128,8], index: 7, kind: input, shape index: {}]
  %s8 = inlined_call_operand.vmem [shape: f32[8,128], index: 8, kind: input, shape index: {}]
  %s9 = inlined_call_operand.vmem [shape: f32[2,16,256], index: 9, kind: input, shape index: {}]
  %s10 = inlined_call_operand.vmem [shape: f32[2,8,8], index: 10, kind: input, shape index: {}]
  %s11 = inlined_call_operand.vmem [shape: f32[128,256], index: 11, kind: input, shape index: {}]
  %s12 = inlined_call_operand.vmem [shape: f32[256,128], index: 12, kind: input, shape index: {}]
  %s13 = inlined_call_operand.vmem [shape: f32[8,1,128], index: 13, kind: input, shape index: {}]
  %s14 = inlined_call_operand.hbm [shape: f32[2,32,128], index: 14, kind: output, shape index: {}]
  %s15 = sld [smem:[#allocation0]]
  $region89: #{tpu_custom_call.1} parent=0
    _
  %s17 = ssub.s32 1, %s15
  %s18 = scalar_select 0, %s17, %s15
  $region1: #{tpu_custom_call.1} parent=0
    #allocation2 [shape = 'u8[32768]{0}', space=vmem, size = 0x8000, scoped, tag = 'output window, operand 0']
    #allocation3 [shape = 's32[2]{0}', space=sflag, size = 0x8, scoped, tag = 'scoped memory for tpu_custom_call.1']
    %19 = vsyncpa [#allocation3], 0
    %s20 = scalar_lea.sflag [#allocation3], 1
    %21 = vsyncpa %s20, 0
    loop: start=0, step=1, limit=4
    $region2: #{tpu_custom_call.1} parent=1 // loop_pre_header
      _
    $region3: #{tpu_custom_call.1} parent=1 // loop_header
      %s23 = sphi 0, %s27
      %p24 = scmp.ge.s32.totalorder %s23, 4
      %s33 = sphi 0, %s35
      %s36 = sphi 0, %s33
      %s37 = sphi 0, %s36
      %s53 = sphi 0, %s37
      %s57 = sphi 0, %s57
      %s59 = sphi 0, %s57
      %s60 = sphi 0, %s59
      %s74 = sphi 0, %s60
      %s78 = sphi 0, %s78
      %s80 = sphi 0, %s78
      %s81 = sphi 0, %s80
      %s95 = sphi 0, %s81
      %s99 = sphi 0, %s99
      %s101 = sphi 0, %s99
      %s102 = sphi 0, %s101
      %s116 = sphi 0, %s102
      %s120 = sphi 0, %s120
      %s122 = sphi 0, %s120
      %s123 = sphi 0, %s122
      %s137 = sphi 0, %s123
      %s141 = sphi 0, %s141
      %s143 = sphi 0, %s141
      %s144 = sphi 0, %s143
      %s158 = sphi 0, %s144
      %s162 = sphi 0, %s162
      %s164 = sphi 0, %s162
      %s165 = sphi 0, %s164
      %s179 = sphi 0, %s165
      %s183 = sphi 0, %s183
      %s185 = sphi 0, %s183
      %s186 = sphi 0, %s185
      %s200 = sphi 0, %s186
      %s204 = sphi 0, %s204
      %s206 = sphi 0, %s204
      %s207 = sphi 0, %s206
      %s221 = sphi 0, %s207
      %s225 = sphi 0, %s225
      %s227 = sphi 0, %s225
      %s228 = sphi 0, %s227
      %s242 = sphi 0, %s228
      %s246 = sphi 0, %s246
      %s248 = sphi 0, %s246
      %s249 = sphi 0, %s248
      %s263 = sphi 0, %s249
      %s267 = sphi 0, %s267
      %s269 = sphi 0, %s267
      %s270 = sphi 0, %s269
      %s284 = sphi 0, %s270
      %s288 = sphi 0, %s288
      %s290 = sphi 0, %s288
      %s291 = sphi 0, %s290
      %s305 = sphi 0, %s291
      %s309 = sphi 0, %s309
      %s311 = sphi 0, %s309
      %s312 = sphi 0, %s311
      %s326 = sphi 0, %s312
      %s332 = sphi 0, %s334
      %s335 = sphi 0, %s332
      %s336 = sphi 0, %s335
      %s352 = sphi 0, %s336
    $region4: #{tpu_custom_call.1} parent=1 // loop_header_branch
      %26 = sbr.rel (%p24) target = $region8
    $region5: #{tpu_custom_call.1} parent=1 // loop_body
      %s28 = ssub.s32 %s23, 1
      %s29 = ssub.s32 %s23, 2
      %s30 = sadd.s32 %s23, 1
      %s31 = ssub.s32 %s23, %s30
      %p32 = scmp.eq.s32.totalorder %s31, 0
      %s34 = sadd.s32 %s33, 1
      %s35 = scalar_select %p32, %s33, %s34
      %p38 = pneg %p32
      %p39 = scmp.eq.s32.totalorder %s23, 1
      %p40 = por %p38, %p39
      %p41 = scmp.ne.s32.totalorder %s33, %s36
      %p42 = scmp.eq.s32.totalorder %s23, 0
      %p43 = por %p41, %p42
      %p44 = scmp.ne.s32.totalorder %s33, %s36
      %p45 = scmp.eq.s32.totalorder %s28, 1
      %p46 = por %p44, %p45
      %p47 = scmp.ne.s32.totalorder %s36, %s37
      %p48 = scmp.eq.s32.totalorder %s28, 0
      %p49 = por %p47, %p48
      %p50 = scmp.ne.s32.totalorder %s36, %s37
      %p51 = scmp.eq.s32.totalorder %s29, 1
      %p52 = por %p50, %p51
      %p54 = scmp.ne.s32.totalorder %s37, %s53
      %p55 = scmp.eq.s32.totalorder %s29, 0
      %p56 = por %p54, %p55
      %s58 = sadd.s32 %s57, 1
      %p61 = scmp.eq.s32.totalorder %s23, 1
      %p62 = scmp.ne.s32.totalorder %s57, %s59
      %p63 = scmp.eq.s32.totalorder %s23, 0
      %p64 = por %p62, %p63
      %p65 = scmp.ne.s32.totalorder %s57, %s59
      %p66 = scmp.eq.s32.totalorder %s28, 1
      %p67 = por %p65, %p66
      %p68 = scmp.ne.s32.totalorder %s59, %s60
      %p69 = scmp.eq.s32.totalorder %s28, 0
      %p70 = por %p68, %p69
      %p71 = scmp.ne.s32.totalorder %s59, %s60
      %p72 = scmp.eq.s32.totalorder %s29, 1
      %p73 = por %p71, %p72
      %p75 = scmp.ne.s32.totalorder %s60, %s74
      %p76 = scmp.eq.s32.totalorder %s29, 0
      %p77 = por %p75, %p76
      %s79 = sadd.s32 %s78, 1
      %p82 = scmp.eq.s32.totalorder %s23, 1
      %p83 = scmp.ne.s32.totalorder %s78, %s80
      %p84 = scmp.eq.s32.totalorder %s23, 0
      %p85 = por %p83, %p84
      %p86 = scmp.ne.s32.totalorder %s78, %s80
      %p87 = scmp.eq.s32.totalorder %s28, 1
      %p88 = por %p86, %p87
      %p89 = scmp.ne.s32.totalorder %s80, %s81
      %p90 = scmp.eq.s32.totalorder %s28, 0
      %p91 = por %p89, %p90
      %p92 = scmp.ne.s32.totalorder %s80, %s81
      %p93 = scmp.eq.s32.totalorder %s29, 1
      %p94 = por %p92, %p93
      %p96 = scmp.ne.s32.totalorder %s81, %s95
      %p97 = scmp.eq.s32.totalorder %s29, 0
      %p98 = por %p96, %p97
      %s100 = sadd.s32 %s99, 1
      %p103 = scmp.eq.s32.totalorder %s23, 1
      %p104 = scmp.ne.s32.totalorder %s99, %s101
      %p105 = scmp.eq.s32.totalorder %s23, 0
      %p106 = por %p104, %p105
      %p107 = scmp.ne.s32.totalorder %s99, %s101
      %p108 = scmp.eq.s32.totalorder %s28, 1
      %p109 = por %p107, %p108
      %p110 = scmp.ne.s32.totalorder %s101, %s102
      %p111 = scmp.eq.s32.totalorder %s28, 0
      %p112 = por %p110, %p111
      %p113 = scmp.ne.s32.totalorder %s101, %s102
      %p114 = scmp.eq.s32.totalorder %s29, 1
      %p115 = por %p113, %p114
      %p117 = scmp.ne.s32.totalorder %s102, %s116
      %p118 = scmp.eq.s32.totalorder %s29, 0
      %p119 = por %p117, %p118
      %s121 = sadd.s32 %s120, 1
      %p124 = scmp.eq.s32.totalorder %s23, 1
      %p125 = scmp.ne.s32.totalorder %s120, %s122
      %p126 = scmp.eq.s32.totalorder %s23, 0
      %p127 = por %p125, %p126
      %p128 = scmp.ne.s32.totalorder %s120, %s122
      %p129 = scmp.eq.s32.totalorder %s28, 1
      %p130 = por %p128, %p129
      %p131 = scmp.ne.s32.totalorder %s122, %s123
      %p132 = scmp.eq.s32.totalorder %s28, 0
      %p133 = por %p131, %p132
      %p134 = scmp.ne.s32.totalorder %s122, %s123
      %p135 = scmp.eq.s32.totalorder %s29, 1
      %p136 = por %p134, %p135
      %p138 = scmp.ne.s32.totalorder %s123, %s137
      %p139 = scmp.eq.s32.totalorder %s29, 0
      %p140 = por %p138, %p139
      %s142 = sadd.s32 %s141, 1
      %p145 = scmp.eq.s32.totalorder %s23, 1
      %p146 = scmp.ne.s32.totalorder %s141, %s143
      %p147 = scmp.eq.s32.totalorder %s23, 0
      %p148 = por %p146, %p147
      %p149 = scmp.ne.s32.totalorder %s141, %s143
      %p150 = scmp.eq.s32.totalorder %s28, 1
      %p151 = por %p149, %p150
      %p152 = scmp.ne.s32.totalorder %s143, %s144
      %p153 = scmp.eq.s32.totalorder %s28, 0
      %p154 = por %p152, %p153
      %p155 = scmp.ne.s32.totalorder %s143, %s144
      %p156 = scmp.eq.s32.totalorder %s29, 1
      %p157 = por %p155, %p156
      %p159 = scmp.ne.s32.totalorder %s144, %s158
      %p160 = scmp.eq.s32.totalorder %s29, 0
      %p161 = por %p159, %p160
      %s163 = sadd.s32 %s162, 1
      %p166 = scmp.eq.s32.totalorder %s23, 1
      %p167 = scmp.ne.s32.totalorder %s162, %s164
      %p168 = scmp.eq.s32.totalorder %s23, 0
      %p169 = por %p167, %p168
      %p170 = scmp.ne.s32.totalorder %s162, %s164
      %p171 = scmp.eq.s32.totalorder %s28, 1
      %p172 = por %p170, %p171
      %p173 = scmp.ne.s32.totalorder %s164, %s165
      %p174 = scmp.eq.s32.totalorder %s28, 0
      %p175 = por %p173, %p174
      %p176 = scmp.ne.s32.totalorder %s164, %s165
      %p177 = scmp.eq.s32.totalorder %s29, 1
      %p178 = por %p176, %p177
      %p180 = scmp.ne.s32.totalorder %s165, %s179
      %p181 = scmp.eq.s32.totalorder %s29, 0
      %p182 = por %p180, %p181
      %s184 = sadd.s32 %s183, 1
      %p187 = scmp.eq.s32.totalorder %s23, 1
      %p188 = scmp.ne.s32.totalorder %s183, %s185
      %p189 = scmp.eq.s32.totalorder %s23, 0
      %p190 = por %p188, %p189
      %p191 = scmp.ne.s32.totalorder %s183, %s185
      %p192 = scmp.eq.s32.totalorder %s28, 1
      %p193 = por %p191, %p192
      %p194 = scmp.ne.s32.totalorder %s185, %s186
      %p195 = scmp.eq.s32.totalorder %s28, 0
      %p196 = por %p194, %p195
      %p197 = scmp.ne.s32.totalorder %s185, %s186
      %p198 = scmp.eq.s32.totalorder %s29, 1
      %p199 = por %p197, %p198
      %p201 = scmp.ne.s32.totalorder %s186, %s200
      %p202 = scmp.eq.s32.totalorder %s29, 0
      %p203 = por %p201, %p202
      %s205 = sadd.s32 %s204, 1
      %p208 = scmp.eq.s32.totalorder %s23, 1
      %p209 = scmp.ne.s32.totalorder %s204, %s206
      %p210 = scmp.eq.s32.totalorder %s23, 0
      %p211 = por %p209, %p210
      %p212 = scmp.ne.s32.totalorder %s204, %s206
      %p213 = scmp.eq.s32.totalorder %s28, 1
      %p214 = por %p212, %p213
      %p215 = scmp.ne.s32.totalorder %s206, %s207
      %p216 = scmp.eq.s32.totalorder %s28, 0
      %p217 = por %p215, %p216
      %p218 = scmp.ne.s32.totalorder %s206, %s207
      %p219 = scmp.eq.s32.totalorder %s29, 1
      %p220 = por %p218, %p219
      %p222 = scmp.ne.s32.totalorder %s207, %s221
      %p223 = scmp.eq.s32.totalorder %s29, 0
      %p224 = por %p222, %p223
      %s226 = sadd.s32 %s225, 1
      %p229 = scmp.eq.s32.totalorder %s23, 1
      %p230 = scmp.ne.s32.totalorder %s225, %s227
      %p231 = scmp.eq.s32.totalorder %s23, 0
      %p232 = por %p230, %p231
      %p233 = scmp.ne.s32.totalorder %s225, %s227
      %p234 = scmp.eq.s32.totalorder %s28, 1
      %p235 = por %p233, %p234
      %p236 = scmp.ne.s32.totalorder %s227, %s228
      %p237 = scmp.eq.s32.totalorder %s28, 0
      %p238 = por %p236, %p237
      %p239 = scmp.ne.s32.totalorder %s227, %s228
      %p240 = scmp.eq.s32.totalorder %s29, 1
      %p241 = por %p239, %p240
      %p243 = scmp.ne.s32.totalorder %s228, %s242
      %p244 = scmp.eq.s32.totalorder %s29, 0
      %p245 = por %p243, %p244
      %s247 = sadd.s32 %s246, 1
      %p250 = scmp.eq.s32.totalorder %s23, 1
      %p251 = scmp.ne.s32.totalorder %s246, %s248
      %p252 = scmp.eq.s32.totalorder %s23, 0
      %p253 = por %p251, %p252
      %p254 = scmp.ne.s32.totalorder %s246, %s248
      %p255 = scmp.eq.s32.totalorder %s28, 1
      %p256 = por %p254, %p255
      %p257 = scmp.ne.s32.totalorder %s248, %s249
      %p258 = scmp.eq.s32.totalorder %s28, 0
      %p259 = por %p257, %p258
      %p260 = scmp.ne.s32.totalorder %s248, %s249
      %p261 = scmp.eq.s32.totalorder %s29, 1
      %p262 = por %p260, %p261
      %p264 = scmp.ne.s32.totalorder %s249, %s263
      %p265 = scmp.eq.s32.totalorder %s29, 0
      %p266 = por %p264, %p265
      %s268 = sadd.s32 %s267, 1
      %p271 = scmp.eq.s32.totalorder %s23, 1
      %p272 = scmp.ne.s32.totalorder %s267, %s269
      %p273 = scmp.eq.s32.totalorder %s23, 0
      %p274 = por %p272, %p273
      %p275 = scmp.ne.s32.totalorder %s267, %s269
      %p276 = scmp.eq.s32.totalorder %s28, 1
      %p277 = por %p275, %p276
      %p278 = scmp.ne.s32.totalorder %s269, %s270
      %p279 = scmp.eq.s32.totalorder %s28, 0
      %p280 = por %p278, %p279
      %p281 = scmp.ne.s32.totalorder %s269, %s270
      %p282 = scmp.eq.s32.totalorder %s29, 1
      %p283 = por %p281, %p282
      %p285 = scmp.ne.s32.totalorder %s270, %s284
      %p286 = scmp.eq.s32.totalorder %s29, 0
      %p287 = por %p285, %p286
      %s289 = sadd.s32 %s288, 1
      %p292 = scmp.eq.s32.totalorder %s23, 1
      %p293 = scmp.ne.s32.totalorder %s288, %s290
      %p294 = scmp.eq.s32.totalorder %s23, 0
      %p295 = por %p293, %p294
      %p296 = scmp.ne.s32.totalorder %s288, %s290
      %p297 = scmp.eq.s32.totalorder %s28, 1
      %p298 = por %p296, %p297
      %p299 = scmp.ne.s32.totalorder %s290, %s291
      %p300 = scmp.eq.s32.totalorder %s28, 0
      %p301 = por %p299, %p300
      %p302 = scmp.ne.s32.totalorder %s290, %s291
      %p303 = scmp.eq.s32.totalorder %s29, 1
      %p304 = por %p302, %p303
      %p306 = scmp.ne.s32.totalorder %s291, %s305
      %p307 = scmp.eq.s32.totalorder %s29, 0
      %p308 = por %p306, %p307
      %s310 = sadd.s32 %s309, 1
      %p313 = scmp.eq.s32.totalorder %s23, 1
      %p314 = scmp.ne.s32.totalorder %s309, %s311
      %p315 = scmp.eq.s32.totalorder %s23, 0
      %p316 = por %p314, %p315
      %p317 = scmp.ne.s32.totalorder %s309, %s311
      %p318 = scmp.eq.s32.totalorder %s28, 1
      %p319 = por %p317, %p318
      %p320 = scmp.ne.s32.totalorder %s311, %s312
      %p321 = scmp.eq.s32.totalorder %s28, 0
      %p322 = por %p320, %p321
      %p323 = scmp.ne.s32.totalorder %s311, %s312
      %p324 = scmp.eq.s32.totalorder %s29, 1
      %p325 = por %p323, %p324
      %p327 = scmp.ne.s32.totalorder %s312, %s326
      %p328 = scmp.eq.s32.totalorder %s29, 0
      %p329 = por %p327, %p328
      %s330 = ssub.s32 %s23, %s30
      %p331 = scmp.eq.s32.totalorder %s330, 0
      %s333 = sadd.s32 %s332, 1
      %s334 = scalar_select %p331, %s332, %s333
      %p337 = pneg %p331
      %p338 = scmp.eq.s32.totalorder %s23, 1
      %p339 = por %p337, %p338
      %p340 = scmp.ne.s32.totalorder %s332, %s335
      %p341 = scmp.eq.s32.totalorder %s23, 0
      %p342 = por %p340, %p341
      %p343 = scmp.ne.s32.totalorder %s332, %s335
      %p344 = scmp.eq.s32.totalorder %s28, 1
      %p345 = por %p343, %p344
      %p346 = scmp.ne.s32.totalorder %s335, %s336
      %p347 = scmp.eq.s32.totalorder %s28, 0
      %p348 = por %p346, %p347
      %p349 = scmp.ne.s32.totalorder %s335, %s336
      %p350 = scmp.eq.s32.totalorder %s29, 1
      %p351 = por %p349, %p350
      %p353 = scmp.ne.s32.totalorder %s336, %s352
      %p354 = scmp.eq.s32.totalorder %s29, 0
      %p355 = por %p353, %p354
      %p356 = scmp.le.s32.totalorder 1, %s23
      %p357 = scmp.lt.s32.totalorder %s23, 3
      %p358 = pnand %p356, %p357
      %p359 = pneg %p358
      // Predicated region
      $region9: #{tpu_custom_call.1} parent=5 // pred_check
        _
      $region10: #{tpu_custom_call.1} parent=5 // pred_check_branch
        %361 = sbr.rel (%p358) target = $region12
      $region11: #{tpu_custom_call.1} parent=5 // pred_region
        %s362 = ssub.s32 %s23, 1
        // Predicated region
        $region13: #{tpu_custom_call.1} parent=11 // pred_check
          %p363 = pneg %p70
        $region14: #{tpu_custom_call.1} parent=11 // pred_check_branch
          %365 = sbr.rel (%p363) target = $region16
        $region15: #{tpu_custom_call.1} parent=11 // pred_region
          _
        $region16: #{tpu_custom_call.1} parent=11 // pred_fallthru
          _
        // Predicated region
        $region17: #{tpu_custom_call.1} parent=11 // pred_check
          %p366 = pneg %p91
        $region18: #{tpu_custom_call.1} parent=11 // pred_check_branch
          %368 = sbr.rel (%p366) target = $region20
        $region19: #{tpu_custom_call.1} parent=11 // pred_region
          _
        $region20: #{tpu_custom_call.1} parent=11 // pred_fallthru
          _
        // Predicated region
        $region21: #{tpu_custom_call.1} parent=11 // pred_check
          %p369 = pneg %p112
        $region22: #{tpu_custom_call.1} parent=11 // pred_check_branch
          %371 = sbr.rel (%p369) target = $region24
        $region23: #{tpu_custom_call.1} parent=11 // pred_region
          _
        $region24: #{tpu_custom_call.1} parent=11 // pred_fallthru
          _
        // Predicated region
        $region25: #{tpu_custom_call.1} parent=11 // pred_check
          %p372 = pneg %p133
        $region26: #{tpu_custom_call.1} parent=11 // pred_check_branch
          %374 = sbr.rel (%p372) target = $region28
        $region27: #{tpu_custom_call.1} parent=11 // pred_region
          _
        $region28: #{tpu_custom_call.1} parent=11 // pred_fallthru
          _
        // Predicated region
        $region29: #{tpu_custom_call.1} parent=11 // pred_check
          %p375 = pneg %p154
        $region30: #{tpu_custom_call.1} parent=11 // pred_check_branch
          %377 = sbr.rel (%p375) target = $region32
        $region31: #{tpu_custom_call.1} parent=11 // pred_region
          _
        $region32: #{tpu_custom_call.1} parent=11 // pred_fallthru
          _
        // Predicated region
        $region33: #{tpu_custom_call.1} parent=11 // pred_check
          %p378 = pneg %p175
        $region34: #{tpu_custom_call.1} parent=11 // pred_check_branch
          %380 = sbr.rel (%p378) target = $region36
        $region35: #{tpu_custom_call.1} parent=11 // pred_region
          _
        $region36: #{tpu_custom_call.1} parent=11 // pred_fallthru
          _
        // Predicated region
        $region37: #{tpu_custom_call.1} parent=11 // pred_check
          %p381 = pneg %p196
        $region38: #{tpu_custom_call.1} parent=11 // pred_check_branch
          %383 = sbr.rel (%p381) target = $region40
        $region39: #{tpu_custom_call.1} parent=11 // pred_region
          _
        $region40: #{tpu_custom_call.1} parent=11 // pred_fallthru
          _
        // Predicated region
        $region41: #{tpu_custom_call.1} parent=11 // pred_check
          %p384 = pneg %p217
        $region42: #{tpu_custom_call.1} parent=11 // pred_check_branch
          %386 = sbr.rel (%p384) target = $region44
        $region43: #{tpu_custom_call.1} parent=11 // pred_region
          _
        $region44: #{tpu_custom_call.1} parent=11 // pred_fallthru
          _
        // Predicated region
        $region45: #{tpu_custom_call.1} parent=11 // pred_check
          %p387 = pneg %p238
        $region46: #{tpu_custom_call.1} parent=11 // pred_check_branch
          %389 = sbr.rel (%p387) target = $region48
        $region47: #{tpu_custom_call.1} parent=11 // pred_region
          _
        $region48: #{tpu_custom_call.1} parent=11 // pred_fallthru
          _
        // Predicated region
        $region49: #{tpu_custom_call.1} parent=11 // pred_check
          %p390 = pneg %p259
        $region50: #{tpu_custom_call.1} parent=11 // pred_check_branch
          %392 = sbr.rel (%p390) target = $region52
        $region51: #{tpu_custom_call.1} parent=11 // pred_region
          _
        $region52: #{tpu_custom_call.1} parent=11 // pred_fallthru
          _
        // Predicated region
        $region53: #{tpu_custom_call.1} parent=11 // pred_check
          %p393 = pneg %p280
        $region54: #{tpu_custom_call.1} parent=11 // pred_check_branch
          %395 = sbr.rel (%p393) target = $region56
        $region55: #{tpu_custom_call.1} parent=11 // pred_region
          _
        $region56: #{tpu_custom_call.1} parent=11 // pred_fallthru
          _
        // Predicated region
        $region57: #{tpu_custom_call.1} parent=11 // pred_check
          %p396 = pneg %p301
        $region58: #{tpu_custom_call.1} parent=11 // pred_check_branch
          %398 = sbr.rel (%p396) target = $region60
        $region59: #{tpu_custom_call.1} parent=11 // pred_region
          _
        $region60: #{tpu_custom_call.1} parent=11 // pred_fallthru
          _
        // Predicated region
        $region61: #{tpu_custom_call.1} parent=11 // pred_check
          %p399 = pneg %p322
        $region62: #{tpu_custom_call.1} parent=11 // pred_check_branch
          %401 = sbr.rel (%p399) target = $region64
        $region63: #{tpu_custom_call.1} parent=11 // pred_region
          _
        $region64: #{tpu_custom_call.1} parent=11 // pred_fallthru
          _
      $region12: #{tpu_custom_call.1} parent=5 // pred_fallthru
        _
      %p402 = scmp.lt.s32.totalorder %s23, 2
      // Predicated region
      $region65: #{tpu_custom_call.1} parent=5 // pred_check
        %p403 = pneg %p402
      $region66: #{tpu_custom_call.1} parent=5 // pred_check_branch
        %405 = sbr.rel (%p403) target = $region68
      $region67: #{tpu_custom_call.1} parent=5 // pred_region
        // Predicated region
        $region69: #{tpu_custom_call.1} parent=67 // pred_check
          %p406 = pneg %p43
        $region70: #{tpu_custom_call.1} parent=67 // pred_check_branch
          %408 = sbr.rel (%p406) target = $region72
        $region71: #{tpu_custom_call.1} parent=67 // pred_region
          %p409 = scmp.lt.s32.totalorder %s23, 1
          %s410 = scalar_select %p409, %s23, 1
          %s411 = smul.addr %s410, 5
          %s412 = smul.addr %s411, 8
          %s413 = scalar_lea.vmem %s0, %s412
        $region72: #{tpu_custom_call.1} parent=67 // pred_fallthru
          _
      $region68: #{tpu_custom_call.1} parent=5 // pred_fallthru
        _
      %p414 = scmp.le.s32.totalorder 1, %s23
      %p415 = scmp.lt.s32.totalorder %s23, 3
      %p416 = pnand %p414, %p415
      %p417 = pneg %p416
      // Predicated region
      $region73: #{tpu_custom_call.1} parent=5 // pred_check
        _
      $region74: #{tpu_custom_call.1} parent=5 // pred_check_branch
        %419 = sbr.rel (%p416) target = $region76
      $region75: #{tpu_custom_call.1} parent=5 // pred_region
        %s420 = ssub.s32 %s23, 1
        %p421 = scmp.lt.s32.totalorder %s28, 1
        %s422 = scalar_select %p421, %s28, 1
        %s423 = smul.addr %s422, 5
        %s424 = smul.addr %s423, 8
        %s425 = scalar_lea.vmem %s0, %s424
        %p426 = pneg %p49
        %p427 = pneg %p46
        %p428 = pneg %p70
        %p429 = pneg %p67
        %p430 = pneg %p91
        %p431 = pneg %p88
        %p432 = pneg %p112
        %p433 = pneg %p109
        %p434 = pneg %p133
        %p435 = pneg %p130
        %p436 = pneg %p154
        %p437 = pneg %p151
        %p438 = pneg %p175
        %p439 = pneg %p172
        %p440 = pneg %p196
        %p441 = pneg %p193
        %p442 = pneg %p217
        %p443 = pneg %p214
        %p444 = pneg %p238
        %p445 = pneg %p235
        %p446 = pneg %p259
        %p447 = pneg %p256
        %p448 = pneg %p280
        %p449 = pneg %p277
        %p450 = pneg %p301
        %p451 = pneg %p298
        %p452 = pneg %p322
        %p453 = pneg %p319
        %p454 = pneg %p348
        %p455 = pneg %p345
        %s456 = sand.u32 %s335, 1
        %s457 = scalar_lea.sflag [#allocation3], %s456
        %s458 = sand.u32 %s335, 1
        %s459 = smul.addr %s458, 32
        %s460 = scalar_lea.vmem [#allocation2], %s459
        %p461 = scmp.lt.s32.totalorder %s28, 1
        %s462 = scalar_select %p461, %s28, 1
        %s463 = smul.addr %s462, 5
        %s464 = smul.addr %s463, 8
        %s465 = scalar_lea.vmem %s0, %s464
        %v466 = vld [vmem:[%s465] sm:$0xff]
        %v467 = vld [vmem:[%s465 + $0x8] sm:$0xff]
        %v468 = vld [vmem:[%s465 + $0x10] sm:$0xff]
        %v469 = vld [vmem:[%s465 + $0x18] sm:$0xff]
        %v470 = vld [vmem:[%s465 + $0x20] sm:$0x1]
        %v471 = vld [vmem:[%s6] sm:$0xff]
        %v472 = vld [vmem:[%s6 + $0x8] sm:$0xff]
        %v473 = vld [vmem:[%s6 + $0x10] sm:$0xff]
        %v474 = vld [vmem:[%s6 + $0x18] sm:$0xff]
        %v475 = vld [vmem:[%s6 + $0x20] sm:$0xff]
        %v476 = vld [vmem:[%s6 + $0x28] sm:$0xff]
        %v477 = vld [vmem:[%s6 + $0x30] sm:$0xff]
        %v478 = vld [vmem:[%s6 + $0x38] sm:$0xff]
        %v479 = vld [vmem:[%s6 + $0x40] sm:$0xff]
        %v480 = vld [vmem:[%s6 + $0x48] sm:$0xff]
        %v481 = vld [vmem:[%s6 + $0x50] sm:$0xff]
        %v482 = vld [vmem:[%s6 + $0x58] sm:$0xff]
        %v483 = vld [vmem:[%s6 + $0x60] sm:$0xff]
        %v484 = vld [vmem:[%s6 + $0x68] sm:$0xff]
        %v485 = vld [vmem:[%s6 + $0x70] sm:$0xff]
        %v486 = vld [vmem:[%s6 + $0x78] sm:$0xff]
        %v487 = vld [vmem:[%s7] sm:$0xff]
        %v488 = vld [vmem:[%s7 + $0x8] sm:$0xff]
        %v489 = vld [vmem:[%s7 + $0x10] sm:$0xff]
        %v490 = vld [vmem:[%s7 + $0x18] sm:$0xff]
        %v491 = vld [vmem:[%s7 + $0x20] sm:$0xff]
        %v492 = vld [vmem:[%s7 + $0x28] sm:$0xff]
        %v493 = vld [vmem:[%s7 + $0x30] sm:$0xff]
        %v494 = vld [vmem:[%s7 + $0x38] sm:$0xff]
        %v495 = vld [vmem:[%s7 + $0x40] sm:$0xff]
        %v496 = vld [vmem:[%s7 + $0x48] sm:$0xff]
        %v497 = vld [vmem:[%s7 + $0x50] sm:$0xff]
        %v498 = vld [vmem:[%s7 + $0x58] sm:$0xff]
        %v499 = vld [vmem:[%s7 + $0x60] sm:$0xff]
        %v500 = vld [vmem:[%s7 + $0x68] sm:$0xff]
        %v501 = vld [vmem:[%s7 + $0x70] sm:$0xff]
        %v502 = vld [vmem:[%s7 + $0x78] sm:$0xff]
        %v503 = vld [vmem:[%s8] sm:$0xff]
        %v504 = vld [vmem:[%s9] sm:$0xff]
        %v505 = vld [vmem:[%s9 + $0x8] sm:$0xff]
        %v506 = vld [vmem:[%s9 + $0x10] sm:$0xff]
        %v507 = vld [vmem:[%s9 + $0x18] sm:$0xff]
        %s508 = scalar_lea.vmem %s9, 32
        %v509 = vld [vmem:[%s508] sm:$0xff]
        %v510 = vld [vmem:[%s508 + $0x8] sm:$0xff]
        %v511 = vld [vmem:[%s508 + $0x10] sm:$0xff]
        %v512 = vld [vmem:[%s508 + $0x18] sm:$0xff]
        %v513 = vld [vmem:[%s10] sm:$0xff]
        %s514 = scalar_lea.vmem %s10, 8
        %v515 = vld [vmem:[%s514] sm:$0xff]
        %v516 = vld [vmem:[%s11] sm:$0xff]
        %v517 = vld [vmem:[%s11 + $0x8] sm:$0xff]
        %v518 = vld [vmem:[%s11 + $0x10] sm:$0xff]
        %v519 = vld [vmem:[%s11 + $0x18] sm:$0xff]
        %v520 = vld [vmem:[%s11 + $0x20] sm:$0xff]
        %v521 = vld [vmem:[%s11 + $0x28] sm:$0xff]
        %v522 = vld [vmem:[%s11 + $0x30] sm:$0xff]
        %v523 = vld [vmem:[%s11 + $0x38] sm:$0xff]
        %v524 = vld [vmem:[%s11 + $0x40] sm:$0xff]
        %v525 = vld [vmem:[%s11 + $0x48] sm:$0xff]
        %v526 = vld [vmem:[%s11 + $0x50] sm:$0xff]
        %v527 = vld [vmem:[%s11 + $0x58] sm:$0xff]
        %v528 = vld [vmem:[%s11 + $0x60] sm:$0xff]
        %v529 = vld [vmem:[%s11 + $0x68] sm:$0xff]
        %v530 = vld [vmem:[%s11 + $0x70] sm:$0xff]
        %v531 = vld [vmem:[%s11 + $0x78] sm:$0xff]
        %v532 = vld [vmem:[%s11 + $0x80] sm:$0xff]
        %v533 = vld [vmem:[%s11 + $0x88] sm:$0xff]
        %v534 = vld [vmem:[%s11 + $0x90] sm:$0xff]
        %v535 = vld [vmem:[%s11 + $0x98] sm:$0xff]
        %v536 = vld [vmem:[%s11 + $0xa0] sm:$0xff]
        %v537 = vld [vmem:[%s11 + $0xa8] sm:$0xff]
        %v538 = vld [vmem:[%s11 + $0xb0] sm:$0xff]
        %v539 = vld [vmem:[%s11 + $0xb8] sm:$0xff]
        %v540 = vld [vmem:[%s11 + $0xc0] sm:$0xff]
        %v541 = vld [vmem:[%s11 + $0xc8] sm:$0xff]
        %v542 = vld [vmem:[%s11 + $0xd0] sm:$0xff]
        %v543 = vld [vmem:[%s11 + $0xd8] sm:$0xff]
        %v544 = vld [vmem:[%s11 + $0xe0] sm:$0xff]
        %v545 = vld [vmem:[%s11 + $0xe8] sm:$0xff]
        %v546 = vld [vmem:[%s11 + $0xf0] sm:$0xff]
        %v547 = vld [vmem:[%s11 + $0xf8] sm:$0xff]
        %v548 = vld [vmem:[%s12] sm:$0xff]
        %v549 = vld [vmem:[%s12 + $0x8] sm:$0xff]
        %v550 = vld [vmem:[%s12 + $0x10] sm:$0xff]
        %v551 = vld [vmem:[%s12 + $0x18] sm:$0xff]
        %v552 = vld [vmem:[%s12 + $0x20] sm:$0xff]
        %v553 = vld [vmem:[%s12 + $0x28] sm:$0xff]
        %v554 = vld [vmem:[%s12 + $0x30] sm:$0xff]
        %v555 = vld [vmem:[%s12 + $0x38] sm:$0xff]
        %v556 = vld [vmem:[%s12 + $0x40] sm:$0xff]
        %v557 = vld [vmem:[%s12 + $0x48] sm:$0xff]
        %v558 = vld [vmem:[%s12 + $0x50] sm:$0xff]
        %v559 = vld [vmem:[%s12 + $0x58] sm:$0xff]
        %v560 = vld [vmem:[%s12 + $0x60] sm:$0xff]
        %v561 = vld [vmem:[%s12 + $0x68] sm:$0xff]
        %v562 = vld [vmem:[%s12 + $0x70] sm:$0xff]
        %v563 = vld [vmem:[%s12 + $0x78] sm:$0xff]
        %v564 = vld [vmem:[%s12 + $0x80] sm:$0xff]
        %v565 = vld [vmem:[%s12 + $0x88] sm:$0xff]
        %v566 = vld [vmem:[%s12 + $0x90] sm:$0xff]
        %v567 = vld [vmem:[%s12 + $0x98] sm:$0xff]
        %v568 = vld [vmem:[%s12 + $0xa0] sm:$0xff]
        %v569 = vld [vmem:[%s12 + $0xa8] sm:$0xff]
        %v570 = vld [vmem:[%s12 + $0xb0] sm:$0xff]
        %v571 = vld [vmem:[%s12 + $0xb8] sm:$0xff]
        %v572 = vld [vmem:[%s12 + $0xc0] sm:$0xff]
        %v573 = vld [vmem:[%s12 + $0xc8] sm:$0xff]
        %v574 = vld [vmem:[%s12 + $0xd0] sm:$0xff]
        %v575 = vld [vmem:[%s12 + $0xd8] sm:$0xff]
        %v576 = vld [vmem:[%s12 + $0xe0] sm:$0xff]
        %v577 = vld [vmem:[%s12 + $0xe8] sm:$0xff]
        %v578 = vld [vmem:[%s12 + $0xf0] sm:$0xff]
        %v579 = vld [vmem:[%s12 + $0xf8] sm:$0xff]
        %580 = vmatprep.subr.mxu0 0.0
        %581 = vmatpush1.msra.mxu0 %v471
        %582 = vmatprep.subr.mxu0 0.0
        %583 = vmatpush1.msra.mxu0 %v472
        %584 = vmatprep.subr.mxu0 0.0
        %585 = vmatpush1.msra.mxu0 %v473
        %586 = vmatprep.subr.mxu0 0.0
        %587 = vmatpush1.msra.mxu0 %v474
        %588 = vmatprep.subr.mxu0 0.0
        %589 = vmatpush1.msra.mxu0 %v475
        %590 = vmatprep.subr.mxu0 0.0
        %591 = vmatpush1.msra.mxu0 %v476
        %592 = vmatprep.subr.mxu0 0.0
        %593 = vmatpush1.msra.mxu0 %v477
        %594 = vmatprep.subr.mxu0 0.0
        %595 = vmatpush1.msra.mxu0 %v478
        %596 = vmatprep.subr.mxu0 0.0
        %597 = vmatpush1.msra.mxu0 %v479
        %598 = vmatprep.subr.mxu0 0.0
        %599 = vmatpush1.msra.mxu0 %v480
        %600 = vmatprep.subr.mxu0 0.0
        %601 = vmatpush1.msra.mxu0 %v481
        %602 = vmatprep.subr.mxu0 0.0
        %603 = vmatpush1.msra.mxu0 %v482
        %604 = vmatprep.subr.mxu0 0.0
        %605 = vmatpush1.msra.mxu0 %v483
        %606 = vmatprep.subr.mxu0 0.0
        %607 = vmatpush1.msra.mxu0 %v484
        %608 = vmatprep.subr.mxu0 0.0
        %609 = vmatpush1.msra.mxu0 %v485
        %610 = vmatprep.subr.mxu0 0.0
        %611 = vmatpush1.msra.mxu0 %v486
        %612 = vmatprep.subr.mxu0 0.0
        %613 = vmatpush1.msra.mxu0 0.0
        %614 = vmatprep.subr.mxu0 0.0
        %615 = vmatpush1.msra.mxu0 0.0
        %616 = vmatprep.subr.mxu0 0.0
        %617 = vmatpush1.msra.mxu0 0.0
        %618 = vmatprep.subr.mxu0 0.0
        %619 = vmatpush1.msra.mxu0 0.0
        %620 = vmatprep.subr.mxu0 0.0
        %621 = vmatpush1.msra.mxu0 0.0
        %622 = vmatprep.subr.mxu0 0.0
        %623 = vmatpush1.msra.mxu0 0.0
        %624 = vmatprep.subr.mxu0 0.0
        %625 = vmatpush1.msra.mxu0 0.0
        %626 = vmatprep.subr.mxu0 0.0
        %627 = vmatpush1.msra.mxu0 0.0
        %628 = vmatprep.subr.mxu0 0.0
        %629 = vmatpush1.msra.mxu0 0.0
        %630 = vmatprep.subr.mxu0 0.0
        %631 = vmatpush1.msra.mxu0 0.0
        %632 = vmatprep.subr.mxu0 0.0
        %633 = vmatpush1.msra.mxu0 0.0
        %634 = vmatprep.subr.mxu0 0.0
        %635 = vmatpush1.msra.mxu0 0.0
        %636 = vmatprep.subr.mxu0 0.0
        %637 = vmatpush1.msra.mxu0 0.0
        %638 = vmatprep.subr.mxu0 0.0
        %639 = vmatpush1.msra.mxu0 0.0
        %640 = vmatprep.subr.mxu0 0.0
        %641 = vmatpush1.msra.mxu0 0.0
        %642 = vmatprep.subr.mxu0 0.0
        %643 = vmatpush1.msra.mxu0 0.0
        %644 = vmatprep.mubr.f32.mxu0 0.0
        %645 = vmatmul.mubr.f32.gmra.mrb[0].mxu0 %v466
        %v646 = vpop.f32.mrb[0].mxu0
        %v647 = vadd.f32 0.0, %v646
        %v648 = vpop.f32.mrb[0].mxu0
        %649 = vmatprep.mubr.f32.mxu0 0.0
        %650 = vmatmul.mubr.f32.gmra.mrb[0].mxu0 %v467
        %v651 = vpop.f32.mrb[0].mxu0
        %v652 = vadd.f32 0.0, %v651
        %v653 = vpop.f32.mrb[0].mxu0
        %654 = vmatprep.mubr.f32.mxu0 0.0
        %655 = vmatmul.mubr.f32.gmra.mrb[0].mxu0 %v468
        %v656 = vpop.f32.mrb[0].mxu0
        %v657 = vadd.f32 0.0, %v656
        %v658 = vpop.f32.mrb[0].mxu0
        %659 = vmatprep.mubr.f32.mxu0 0.0
        %660 = vmatmul.mubr.f32.gmra.mrb[0].mxu0 %v469
        %v661 = vpop.f32.mrb[0].mxu0
        %v662 = vadd.f32 0.0, %v661
        %v663 = vpop.f32.mrb[0].mxu0
        %664 = vmatprep.mubr.f32.mxu0 0.0
        %665 = vmatmul.mubr.f32.gmra.mrb[0].mxu0 %v470
        %v666 = vpop.f32.mrb[0].mxu0
        %v667 = vadd.f32 0.0, %v666
        %v668 = vpop.f32.mrb[0].mxu0
        %669 = vdwg.mxu0
        %v670 = vld [vmem:[%s1] sm:$0xff]
        %v671 = vld [vmem:[%s1 + $0x8] sm:$0xf]
        %vm672 = vcmask 269312
        %v674 = vsel %vm672, %v670, 0
        %v677 = vsel %vm672, %v671, 0
        %vm679 = vcmask 1040384
        %v681 = vsel %vm679, %v667, 0
        %683 = vmatprep.subr.mxu0 0.0
        %684 = vmatpush1.msra.mxu0 %v647
        %685 = vmatprep.subr.mxu0 0.0
        %686 = vmatpush1.msra.mxu0 %v652
        %687 = vmatprep.subr.mxu0 0.0
        %688 = vmatpush1.msra.mxu0 %v657
        %689 = vmatprep.subr.mxu0 0.0
        %690 = vmatpush1.msra.mxu0 %v662
        %691 = vmatprep.subr.mxu0 0.0
        %692 = vmatpush1.msra.mxu0 %v681
        %693 = vmatprep.subr.mxu0 0.0
        %694 = vmatpush1.msra.mxu0 0.0
        %695 = vmatprep.subr.mxu0 0.0
        %696 = vmatpush1.msra.mxu0 0.0
        %697 = vmatprep.subr.mxu0 0.0
        %698 = vmatpush1.msra.mxu0 0.0
        %699 = vmatprep.subr.mxu0 0.0
        %700 = vmatpush1.msra.mxu0 0.0
        %701 = vmatprep.subr.mxu0 0.0
        %702 = vmatpush1.msra.mxu0 0.0
        %703 = vmatprep.subr.mxu0 0.0
        %704 = vmatpush1.msra.mxu0 0.0
        %705 = vmatprep.subr.mxu0 0.0
        %706 = vmatpush1.msra.mxu0 0.0
        %707 = vmatprep.subr.mxu0 0.0
        %708 = vmatpush1.msra.mxu0 0.0
        %709 = vmatprep.subr.mxu0 0.0
        %710 = vmatpush1.msra.mxu0 0.0
        %711 = vmatprep.subr.mxu0 0.0
        %712 = vmatpush1.msra.mxu0 0.0
        %713 = vmatprep.subr.mxu0 0.0
        %714 = vmatpush1.msra.mxu0 0.0
        %715 = vmatprep.subr.mxu0 0.0
        %716 = vmatpush1.msra.mxu0 0.0
        %717 = vmatprep.subr.mxu0 0.0
        %718 = vmatpush1.msra.mxu0 0.0
        %719 = vmatprep.subr.mxu0 0.0
        %720 = vmatpush1.msra.mxu0 0.0
        %721 = vmatprep.subr.mxu0 0.0
        %722 = vmatpush1.msra.mxu0 0.0
        %723 = vmatprep.subr.mxu0 0.0
        %724 = vmatpush1.msra.mxu0 0.0
        %725 = vmatprep.subr.mxu0 0.0
        %726 = vmatpush1.msra.mxu0 0.0
        %727 = vmatprep.subr.mxu0 0.0
        %728 = vmatpush1.msra.mxu0 0.0
        %729 = vmatprep.subr.mxu0 0.0
        %730 = vmatpush1.msra.mxu0 0.0
        %731 = vmatprep.subr.mxu0 0.0
        %732 = vmatpush1.msra.mxu0 0.0
        %733 = vmatprep.subr.mxu0 0.0
        %734 = vmatpush1.msra.mxu0 0.0
        %735 = vmatprep.subr.mxu0 0.0
        %736 = vmatpush1.msra.mxu0 0.0
        %737 = vmatprep.subr.mxu0 0.0
        %738 = vmatpush1.msra.mxu0 0.0
        %739 = vmatprep.subr.mxu0 0.0
        %740 = vmatpush1.msra.mxu0 0.0
        %741 = vmatprep.subr.mxu0 0.0
        %742 = vmatpush1.msra.mxu0 0.0
        %743 = vmatprep.subr.mxu0 0.0
        %744 = vmatpush1.msra.mxu0 0.0
        %745 = vmatprep.subr.mxu0 0.0
        %746 = vmatpush1.msra.mxu0 0.0
        %747 = vmatprep.mubr.f32.mxu0 0.0
        %748 = vmatmul.mubr.f32.gmra.mrb[0].mxu0 %v674
        %v749 = vpop.f32.mrb[0].mxu0
        %v750 = vadd.f32 0.0, %v749
        %v751 = vpop.f32.mrb[0].mxu0
        %752 = vmatprep.mubr.f32.mxu0 0.0
        %753 = vmatmul.mubr.f32.gmra.mrb[0].mxu0 %v677
        %v754 = vpop.f32.mrb[0].mxu0
        %v755 = vadd.f32 0.0, %v754
        %v756 = vpop.f32.mrb[0].mxu0
        %757 = vdwg.mxu0
        %v758 = vld [vmem:[%s1 + $0x10] sm:$0xff]
        %v759 = vld [vmem:[%s1 + $0x18] sm:$0xf]
        %v761 = vsel %vm672, %v758, 0
        %v764 = vsel %vm672, %v759, 0
        %766 = vmatprep.subr.mxu0 0.0
        %767 = vmatpush1.msra.mxu0 %v647
        %768 = vmatprep.subr.mxu0 0.0
        %769 = vmatpush1.msra.mxu0 %v652
        %770 = vmatprep.subr.mxu0 0.0
        %771 = vmatpush1.msra.mxu0 %v657
        %772 = vmatprep.subr.mxu0 0.0
        %773 = vmatpush1.msra.mxu0 %v662
        %774 = vmatprep.subr.mxu0 0.0
        %775 = vmatpush1.msra.mxu0 %v681
        %776 = vmatprep.subr.mxu0 0.0
        %777 = vmatpush1.msra.mxu0 0.0
        %778 = vmatprep.subr.mxu0 0.0
        %779 = vmatpush1.msra.mxu0 0.0
        %780 = vmatprep.subr.mxu0 0.0
        %781 = vmatpush1.msra.mxu0 0.0
        %782 = vmatprep.subr.mxu0 0.0
        %783 = vmatpush1.msra.mxu0 0.0
        %784 = vmatprep.subr.mxu0 0.0
        %785 = vmatpush1.msra.mxu0 0.0
        %786 = vmatprep.subr.mxu0 0.0
        %787 = vmatpush1.msra.mxu0 0.0
        %788 = vmatprep.subr.mxu0 0.0
        %789 = vmatpush1.msra.mxu0 0.0
        %790 = vmatprep.subr.mxu0 0.0
        %791 = vmatpush1.msra.mxu0 0.0
        %792 = vmatprep.subr.mxu0 0.0
        %793 = vmatpush1.msra.mxu0 0.0
        %794 = vmatprep.subr.mxu0 0.0
        %795 = vmatpush1.msra.mxu0 0.0
        %796 = vmatprep.subr.mxu0 0.0
        %797 = vmatpush1.msra.mxu0 0.0
        %798 = vmatprep.subr.mxu0 0.0
        %799 = vmatpush1.msra.mxu0 0.0
        %800 = vmatprep.subr.mxu0 0.0
        %801 = vmatpush1.msra.mxu0 0.0
        %802 = vmatprep.subr.mxu0 0.0
        %803 = vmatpush1.msra.mxu0 0.0
        %804 = vmatprep.subr.mxu0 0.0
        %805 = vmatpush1.msra.mxu0 0.0
        %806 = vmatprep.subr.mxu0 0.0
        %807 = vmatpush1.msra.mxu0 0.0
        %808 = vmatprep.subr.mxu0 0.0
        %809 = vmatpush1.msra.mxu0 0.0
        %810 = vmatprep.subr.mxu0 0.0
        %811 = vmatpush1.msra.mxu0 0.0
        %812 = vmatprep.subr.mxu0 0.0
        %813 = vmatpush1.msra.mxu0 0.0
        %814 = vmatprep.subr.mxu0 0.0
        %815 = vmatpush1.msra.mxu0 0.0
        %816 = vmatprep.subr.mxu0 0.0
        %817 = vmatpush1.msra.mxu0 0.0
        %818 = vmatprep.subr.mxu0 0.0
        %819 = vmatpush1.msra.mxu0 0.0
        %820 = vmatprep.subr.mxu0 0.0
        %821 = vmatpush1.msra.mxu0 0.0
        %822 = vmatprep.subr.mxu0 0.0
        %823 = vmatpush1.msra.mxu0 0.0
        %824 = vmatprep.subr.mxu0 0.0
        %825 = vmatpush1.msra.mxu0 0.0
        %826 = vmatprep.subr.mxu0 0.0
        %827 = vmatpush1.msra.mxu0 0.0
        %828 = vmatprep.subr.mxu0 0.0
        %829 = vmatpush1.msra.mxu0 0.0
        %830 = vmatprep.mubr.f32.mxu0 0.0
        %831 = vmatmul.mubr.f32.gmra.mrb[0].mxu0 %v761
        %v832 = vpop.f32.mrb[0].mxu0
        %v833 = vadd.f32 0.0, %v832
        %v834 = vpop.f32.mrb[0].mxu0
        %835 = vmatprep.mubr.f32.mxu0 0.0
        %836 = vmatmul.mubr.f32.gmra.mrb[0].mxu0 %v764
        %v837 = vpop.f32.mrb[0].mxu0
        %v838 = vadd.f32 0.0, %v837
        %v839 = vpop.f32.mrb[0].mxu0
        %840 = vdwg.mxu0
        %v841 = vld [vmem:[%s1 + $0x20] sm:$0xff]
        %v842 = vld [vmem:[%s1 + $0x28] sm:$0xf]
        %v844 = vsel %vm672, %v841, 0
        %v847 = vsel %vm672, %v842, 0
        %v850 = vsel %vm679, %v470, 0
        %852 = vmatprep.subr.mxu0 0.0
        %853 = vmatpush1.msra.mxu0 %v466
        %854 = vmatprep.subr.mxu0 0.0
        %855 = vmatpush1.msra.mxu0 %v467
        %856 = vmatprep.subr.mxu0 0.0
        %857 = vmatpush1.msra.mxu0 %v468
        %858 = vmatprep.subr.mxu0 0.0
        %859 = vmatpush1.msra.mxu0 %v469
        %860 = vmatprep.subr.mxu0 0.0
        %861 = vmatpush1.msra.mxu0 %v850
        %862 = vmatprep.subr.mxu0 0.0
        %863 = vmatpush1.msra.mxu0 0.0
        %864 = vmatprep.subr.mxu0 0.0
        %865 = vmatpush1.msra.mxu0 0.0
        %866 = vmatprep.subr.mxu0 0.0
        %867 = vmatpush1.msra.mxu0 0.0
        %868 = vmatprep.subr.mxu0 0.0
        %869 = vmatpush1.msra.mxu0 0.0
        %870 = vmatprep.subr.mxu0 0.0
        %871 = vmatpush1.msra.mxu0 0.0
        %872 = vmatprep.subr.mxu0 0.0
        %873 = vmatpush1.msra.mxu0 0.0
        %874 = vmatprep.subr.mxu0 0.0
        %875 = vmatpush1.msra.mxu0 0.0
        %876 = vmatprep.subr.mxu0 0.0
        %877 = vmatpush1.msra.mxu0 0.0
        %878 = vmatprep.subr.mxu0 0.0
        %879 = vmatpush1.msra.mxu0 0.0
        %880 = vmatprep.subr.mxu0 0.0
        %881 = vmatpush1.msra.mxu0 0.0
        %882 = vmatprep.subr.mxu0 0.0
        %883 = vmatpush1.msra.mxu0 0.0
        %884 = vmatprep.subr.mxu0 0.0
        %885 = vmatpush1.msra.mxu0 0.0
        %886 = vmatprep.subr.mxu0 0.0
        %887 = vmatpush1.msra.mxu0 0.0
        %888 = vmatprep.subr.mxu0 0.0
        %889 = vmatpush1.msra.mxu0 0.0
        %890 = vmatprep.subr.mxu0 0.0
        %891 = vmatpush1.msra.mxu0 0.0
        %892 = vmatprep.subr.mxu0 0.0
        %893 = vmatpush1.msra.mxu0 0.0
        %894 = vmatprep.subr.mxu0 0.0
        %895 = vmatpush1.msra.mxu0 0.0
        %896 = vmatprep.subr.mxu0 0.0
        %897 = vmatpush1.msra.mxu0 0.0
        %898 = vmatprep.subr.mxu0 0.0
        %899 = vmatpush1.msra.mxu0 0.0
        %900 = vmatprep.subr.mxu0 0.0
        %901 = vmatpush1.msra.mxu0 0.0
        %902 = vmatprep.subr.mxu0 0.0
        %903 = vmatpush1.msra.mxu0 0.0
        %904 = vmatprep.subr.mxu0 0.0
        %905 = vmatpush1.msra.mxu0 0.0
        %906 = vmatprep.subr.mxu0 0.0
        %907 = vmatpush1.msra.mxu0 0.0
        %908 = vmatprep.subr.mxu0 0.0
        %909 = vmatpush1.msra.mxu0 0.0
        %910 = vmatprep.subr.mxu0 0.0
        %911 = vmatpush1.msra.mxu0 0.0
        %912 = vmatprep.subr.mxu0 0.0
        %913 = vmatpush1.msra.mxu0 0.0
        %914 = vmatprep.subr.mxu0 0.0
        %915 = vmatpush1.msra.mxu0 0.0
        %916 = vmatprep.mubr.f32.mxu0 0.0
        %917 = vmatmul.mubr.f32.gmra.mrb[0].mxu0 %v844
        %v918 = vpop.f32.mrb[0].mxu0
        %v919 = vadd.f32 0.0, %v918
        %v920 = vpop.f32.mrb[0].mxu0
        %921 = vmatprep.mubr.f32.mxu0 0.0
        %922 = vmatmul.mubr.f32.gmra.mrb[0].mxu0 %v847
        %v923 = vpop.f32.mrb[0].mxu0
        %v924 = vadd.f32 0.0, %v923
        %v925 = vpop.f32.mrb[0].mxu0
        %926 = vdwg.mxu0
        %927 = vmatprep.subr.mxu0 0.0
        %928 = vmatpush1.msra.mxu0 %v487
        %929 = vmatprep.subr.mxu0 0.0
        %930 = vmatpush1.msra.mxu0 %v488
        %931 = vmatprep.subr.mxu0 0.0
        %932 = vmatpush1.msra.mxu0 %v489
        %933 = vmatprep.subr.mxu0 0.0
        %934 = vmatpush1.msra.mxu0 %v490
        %935 = vmatprep.subr.mxu0 0.0
        %936 = vmatpush1.msra.mxu0 %v491
        %937 = vmatprep.subr.mxu0 0.0
        %938 = vmatpush1.msra.mxu0 %v492
        %939 = vmatprep.subr.mxu0 0.0
        %940 = vmatpush1.msra.mxu0 %v493
        %941 = vmatprep.subr.mxu0 0.0
        %942 = vmatpush1.msra.mxu0 %v494
        %943 = vmatprep.subr.mxu0 0.0
        %944 = vmatpush1.msra.mxu0 %v495
        %945 = vmatprep.subr.mxu0 0.0
        %946 = vmatpush1.msra.mxu0 %v496
        %947 = vmatprep.subr.mxu0 0.0
        %948 = vmatpush1.msra.mxu0 %v497
        %949 = vmatprep.subr.mxu0 0.0
        %950 = vmatpush1.msra.mxu0 %v498
        %951 = vmatprep.subr.mxu0 0.0
        %952 = vmatpush1.msra.mxu0 %v499
        %953 = vmatprep.subr.mxu0 0.0
        %954 = vmatpush1.msra.mxu0 %v500
        %955 = vmatprep.subr.mxu0 0.0
        %956 = vmatpush1.msra.mxu0 %v501
        %957 = vmatprep.subr.mxu0 0.0
        %958 = vmatpush1.msra.mxu0 %v502
        %959 = vmatprep.subr.mxu0 0.0
        %960 = vmatpush1.msra.mxu0 0.0
        %961 = vmatprep.subr.mxu0 0.0
        %962 = vmatpush1.msra.mxu0 0.0
        %963 = vmatprep.subr.mxu0 0.0
        %964 = vmatpush1.msra.mxu0 0.0
        %965 = vmatprep.subr.mxu0 0.0
        %966 = vmatpush1.msra.mxu0 0.0
        %967 = vmatprep.subr.mxu0 0.0
        %968 = vmatpush1.msra.mxu0 0.0
        %969 = vmatprep.subr.mxu0 0.0
        %970 = vmatpush1.msra.mxu0 0.0
        %971 = vmatprep.subr.mxu0 0.0
        %972 = vmatpush1.msra.mxu0 0.0
        %973 = vmatprep.subr.mxu0 0.0
        %974 = vmatpush1.msra.mxu0 0.0
        %975 = vmatprep.subr.mxu0 0.0
        %976 = vmatpush1.msra.mxu0 0.0
        %977 = vmatprep.subr.mxu0 0.0
        %978 = vmatpush1.msra.mxu0 0.0
        %979 = vmatprep.subr.mxu0 0.0
        %980 = vmatpush1.msra.mxu0 0.0
        %981 = vmatprep.subr.mxu0 0.0
        %982 = vmatpush1.msra.mxu0 0.0
        %983 = vmatprep.subr.mxu0 0.0
        %984 = vmatpush1.msra.mxu0 0.0
        %985 = vmatprep.subr.mxu0 0.0
        %986 = vmatpush1.msra.mxu0 0.0
        %987 = vmatprep.subr.mxu0 0.0
        %988 = vmatpush1.msra.mxu0 0.0
        %989 = vmatprep.subr.mxu0 0.0
        %990 = vmatpush1.msra.mxu0 0.0
        %991 = vmatprep.mubr.f32.mxu0 0.0
        %992 = vmatmul.mubr.f32.gmra.mrb[0].mxu0 %v919
        %v993 = vpop.f32.mrb[0].mxu0
        %v994 = vadd.f32 0.0, %v993
        %v995 = vpop.f32.mrb[0].mxu0
        %996 = vmatprep.mubr.f32.mxu0 0.0
        %997 = vmatmul.mubr.f32.gmra.mrb[0].mxu0 %v924
        %v998 = vpop.f32.mrb[0].mxu0
        %v999 = vadd.f32 0.0, %v998
        %v1000 = vpop.f32.mrb[0].mxu0
        %1001 = vdwg.mxu0
        %vm1002 = vcmask 64512
        %v1003 = vsel %vm1002, %v994, 0.0
        %1004 = vadd.xlane.f32.xlu0 %v1003
        %v1005 = vpop.xlane.xlu0 %1004
        %vm1006 = vcmask 60416
        %v1007 = vsel %vm1006, %v999, 0.0
        %1008 = vadd.xlane.f32.xlu0 %v1007
        %v1009 = vpop.xlane.xlu0 %1008
        %v1010 = vrcp.pop 8.0
        %v1011 = vmul.f32 %v1005, %v1010
        %v1012 = vmul.f32 %v1009, %v1010
        %v1013 = vld [vmem:[%s2] sm:$0xff]
        %v1014 = vld [vmem:[%s2 + $0x8] sm:$0xf]
        %vm1015 = vcmask 97280
        %v1017 = vsel %vm1015, %v1013, 0
        %v1020 = vsel %vm1015, %v1014, 0
        %vm1022 = vcmask 1043456
        %v1024 = vsel %vm1022, %v1012, 0
        %1026 = vmatprep.subr.mxu0 0.0
        %1027 = vmatpush1.msra.mxu0 %v1011
        %1028 = vmatprep.subr.mxu0 0.0
        %1029 = vmatpush1.msra.mxu0 %v1024
        %1030 = vmatprep.subr.mxu0 0.0
        %1031 = vmatpush1.msra.mxu0 0.0
        %1032 = vmatprep.subr.mxu0 0.0
        %1033 = vmatpush1.msra.mxu0 0.0
        %1034 = vmatprep.subr.mxu0 0.0
        %1035 = vmatpush1.msra.mxu0 0.0
        %1036 = vmatprep.subr.mxu0 0.0
        %1037 = vmatpush1.msra.mxu0 0.0
        %1038 = vmatprep.subr.mxu0 0.0
        %1039 = vmatpush1.msra.mxu0 0.0
        %1040 = vmatprep.subr.mxu0 0.0
        %1041 = vmatpush1.msra.mxu0 0.0
        %1042 = vmatprep.subr.mxu0 0.0
        %1043 = vmatpush1.msra.mxu0 0.0
        %1044 = vmatprep.subr.mxu0 0.0
        %1045 = vmatpush1.msra.mxu0 0.0
        %1046 = vmatprep.subr.mxu0 0.0
        %1047 = vmatpush1.msra.mxu0 0.0
        %1048 = vmatprep.subr.mxu0 0.0
        %1049 = vmatpush1.msra.mxu0 0.0
        %1050 = vmatprep.subr.mxu0 0.0
        %1051 = vmatpush1.msra.mxu0 0.0
        %1052 = vmatprep.subr.mxu0 0.0
        %1053 = vmatpush1.msra.mxu0 0.0
        %1054 = vmatprep.subr.mxu0 0.0
        %1055 = vmatpush1.msra.mxu0 0.0
        %1056 = vmatprep.subr.mxu0 0.0
        %1057 = vmatpush1.msra.mxu0 0.0
        %1058 = vmatprep.subr.mxu0 0.0
        %1059 = vmatpush1.msra.mxu0 0.0
        %1060 = vmatprep.subr.mxu0 0.0
        %1061 = vmatpush1.msra.mxu0 0.0
        %1062 = vmatprep.subr.mxu0 0.0
        %1063 = vmatpush1.msra.mxu0 0.0
        %1064 = vmatprep.subr.mxu0 0.0
        %1065 = vmatpush1.msra.mxu0 0.0
        %1066 = vmatprep.subr.mxu0 0.0
        %1067 = vmatpush1.msra.mxu0 0.0
        %1068 = vmatprep.subr.mxu0 0.0
        %1069 = vmatpush1.msra.mxu0 0.0
        %1070 = vmatprep.subr.mxu0 0.0
        %1071 = vmatpush1.msra.mxu0 0.0
        %1072 = vmatprep.subr.mxu0 0.0
        %1073 = vmatpush1.msra.mxu0 0.0
        %1074 = vmatprep.subr.mxu0 0.0
        %1075 = vmatpush1.msra.mxu0 0.0
        %1076 = vmatprep.subr.mxu0 0.0
        %1077 = vmatpush1.msra.mxu0 0.0
        %1078 = vmatprep.subr.mxu0 0.0
        %1079 = vmatpush1.msra.mxu0 0.0
        %1080 = vmatprep.subr.mxu0 0.0
        %1081 = vmatpush1.msra.mxu0 0.0
        %1082 = vmatprep.subr.mxu0 0.0
        %1083 = vmatpush1.msra.mxu0 0.0
        %1084 = vmatprep.subr.mxu0 0.0
        %1085 = vmatpush1.msra.mxu0 0.0
        %1086 = vmatprep.subr.mxu0 0.0
        %1087 = vmatpush1.msra.mxu0 0.0
        %1088 = vmatprep.subr.mxu0 0.0
        %1089 = vmatpush1.msra.mxu0 0.0
        %1090 = vmatprep.mubr.f32.mxu0 0.0
        %1091 = vmatmul.mubr.f32.gmra.mrb[0].mxu0 %v1017
        %v1092 = vpop.f32.mrb[0].mxu0
        %v1093 = vadd.f32 0.0, %v1092
        %v1094 = vpop.f32.mrb[0].mxu0
        %1095 = vmatprep.mubr.f32.mxu0 0.0
        %1096 = vmatmul.mubr.f32.gmra.mrb[0].mxu0 %v1020
        %v1097 = vpop.f32.mrb[0].mxu0
        %v1098 = vadd.f32 0.0, %v1097
        %v1099 = vpop.f32.mrb[0].mxu0
        %1100 = vdwg.mxu0
        %1102 = vset.pattern.permute.xlu0 0
        %1103 = vperm.xlu0 %1102, %v1093
        %v1104 = vpop.permute.xlu0 %1103
        %1107 = vset.pattern.permute.xlu0 0
        %1108 = vperm.xlu0 %1107, %v1098
        %v1109 = vpop.permute.xlu0 %1108
        %v1111 = vadd.f32 %v994, %v1104
        %v1112 = vadd.f32 %v999, %v1109
        %v1113 = vld [vmem:[%s4] sm:$0xff]
        %v1114 = vld [vmem:[%s4 + $0x8] sm:$0xf]
        %1116 = vset.pattern.permute.xlu0 0
        %1117 = vperm.xlu0 %1116, %v1113
        %v1118 = vpop.permute.xlu0 %1117
        %1121 = vset.pattern.permute.xlu0 0
        %1122 = vperm.xlu0 %1121, %v1114
        %v1123 = vpop.permute.xlu0 %1122
        %v1125 = vadd.f32 %v1111, %v1118
        %v1126 = vadd.f32 %v1112, %v1123
        %v1127 = vld [vmem:[%s4 + $0x10] sm:$0xff]
        %v1128 = vld [vmem:[%s4 + $0x18] sm:$0xf]
        %v1130 = vsel %vm1002, %v1125, 0
        %v1133 = vsel %vm1002, %v1126, 0
        %1135 = vmatprep.subr.mxu0 0.0
        %1136 = vmatpush1.msra.mxu0 %v513
        %1137 = vmatprep.subr.mxu0 0.0
        %1138 = vmatpush1.msra.mxu0 0.0
        %1139 = vmatprep.subr.mxu0 0.0
        %1140 = vmatpush1.msra.mxu0 0.0
        %1141 = vmatprep.subr.mxu0 0.0
        %1142 = vmatpush1.msra.mxu0 0.0
        %1143 = vmatprep.subr.mxu0 0.0
        %1144 = vmatpush1.msra.mxu0 0.0
        %1145 = vmatprep.subr.mxu0 0.0
        %1146 = vmatpush1.msra.mxu0 0.0
        %1147 = vmatprep.subr.mxu0 0.0
        %1148 = vmatpush1.msra.mxu0 0.0
        %1149 = vmatprep.subr.mxu0 0.0
        %1150 = vmatpush1.msra.mxu0 0.0
        %1151 = vmatprep.subr.mxu0 0.0
        %1152 = vmatpush1.msra.mxu0 0.0
        %1153 = vmatprep.subr.mxu0 0.0
        %1154 = vmatpush1.msra.mxu0 0.0
        %1155 = vmatprep.subr.mxu0 0.0
        %1156 = vmatpush1.msra.mxu0 0.0
        %1157 = vmatprep.subr.mxu0 0.0
        %1158 = vmatpush1.msra.mxu0 0.0
        %1159 = vmatprep.subr.mxu0 0.0
        %1160 = vmatpush1.msra.mxu0 0.0
        %1161 = vmatprep.subr.mxu0 0.0
        %1162 = vmatpush1.msra.mxu0 0.0
        %1163 = vmatprep.subr.mxu0 0.0
        %1164 = vmatpush1.msra.mxu0 0.0
        %1165 = vmatprep.subr.mxu0 0.0
        %1166 = vmatpush1.msra.mxu0 0.0
        %1167 = vmatprep.subr.mxu0 0.0
        %1168 = vmatpush1.msra.mxu0 0.0
        %1169 = vmatprep.subr.mxu0 0.0
        %1170 = vmatpush1.msra.mxu0 0.0
        %1171 = vmatprep.subr.mxu0 0.0
        %1172 = vmatpush1.msra.mxu0 0.0
        %1173 = vmatprep.subr.mxu0 0.0
        %1174 = vmatpush1.msra.mxu0 0.0
        %1175 = vmatprep.subr.mxu0 0.0
        %1176 = vmatpush1.msra.mxu0 0.0
        %1177 = vmatprep.subr.mxu0 0.0
        %1178 = vmatpush1.msra.mxu0 0.0
        %1179 = vmatprep.subr.mxu0 0.0
        %1180 = vmatpush1.msra.mxu0 0.0
        %1181 = vmatprep.subr.mxu0 0.0
        %1182 = vmatpush1.msra.mxu0 0.0
        %1183 = vmatprep.subr.mxu0 0.0
        %1184 = vmatpush1.msra.mxu0 0.0
        %1185 = vmatprep.subr.mxu0 0.0
        %1186 = vmatpush1.msra.mxu0 0.0
        %1187 = vmatprep.subr.mxu0 0.0
        %1188 = vmatpush1.msra.mxu0 0.0
        %1189 = vmatprep.subr.mxu0 0.0
        %1190 = vmatpush1.msra.mxu0 0.0
        %1191 = vmatprep.subr.mxu0 0.0
        %1192 = vmatpush1.msra.mxu0 0.0
        %1193 = vmatprep.subr.mxu0 0.0
        %1194 = vmatpush1.msra.mxu0 0.0
        %1195 = vmatprep.subr.mxu0 0.0
        %1196 = vmatpush1.msra.mxu0 0.0
        %1197 = vmatprep.subr.mxu0 0.0
        %1198 = vmatpush1.msra.mxu0 0.0
        %1199 = vmatprep.mubr.f32.mxu0 0.0
        %1200 = vmatmul.mubr.f32.gmra.mrb[0].mxu0 %v1130
        %v1201 = vpop.f32.mrb[0].mxu0
        %v1202 = vadd.f32 0.0, %v1201
        %v1203 = vpop.f32.mrb[0].mxu0
        %1204 = vmatprep.mubr.f32.mxu0 0.0
        %1205 = vmatmul.mubr.f32.gmra.mrb[0].mxu0 %v1133
        %v1206 = vpop.f32.mrb[0].mxu0
        %v1207 = vadd.f32 0.0, %v1206
        %v1208 = vpop.f32.mrb[0].mxu0
        %1209 = vdwg.mxu0
        %1210 = vmatprep.subr.mxu0 0.0
        %1211 = vmatpush1.msra.mxu0 %v515
        %1212 = vmatprep.subr.mxu0 0.0
        %1213 = vmatpush1.msra.mxu0 0.0
        %1214 = vmatprep.subr.mxu0 0.0
        %1215 = vmatpush1.msra.mxu0 0.0
        %1216 = vmatprep.subr.mxu0 0.0
        %1217 = vmatpush1.msra.mxu0 0.0
        %1218 = vmatprep.subr.mxu0 0.0
        %1219 = vmatpush1.msra.mxu0 0.0
        %1220 = vmatprep.subr.mxu0 0.0
        %1221 = vmatpush1.msra.mxu0 0.0
        %1222 = vmatprep.subr.mxu0 0.0
        %1223 = vmatpush1.msra.mxu0 0.0
        %1224 = vmatprep.subr.mxu0 0.0
        %1225 = vmatpush1.msra.mxu0 0.0
        %1226 = vmatprep.subr.mxu0 0.0
        %1227 = vmatpush1.msra.mxu0 0.0
        %1228 = vmatprep.subr.mxu0 0.0
        %1229 = vmatpush1.msra.mxu0 0.0
        %1230 = vmatprep.subr.mxu0 0.0
        %1231 = vmatpush1.msra.mxu0 0.0
        %1232 = vmatprep.subr.mxu0 0.0
        %1233 = vmatpush1.msra.mxu0 0.0
        %1234 = vmatprep.subr.mxu0 0.0
        %1235 = vmatpush1.msra.mxu0 0.0
        %1236 = vmatprep.subr.mxu0 0.0
        %1237 = vmatpush1.msra.mxu0 0.0
        %1238 = vmatprep.subr.mxu0 0.0
        %1239 = vmatpush1.msra.mxu0 0.0
        %1240 = vmatprep.subr.mxu0 0.0
        %1241 = vmatpush1.msra.mxu0 0.0
        %1242 = vmatprep.subr.mxu0 0.0
        %1243 = vmatpush1.msra.mxu0 0.0
        %1244 = vmatprep.subr.mxu0 0.0
        %1245 = vmatpush1.msra.mxu0 0.0
        %1246 = vmatprep.subr.mxu0 0.0
        %1247 = vmatpush1.msra.mxu0 0.0
        %1248 = vmatprep.subr.mxu0 0.0
        %1249 = vmatpush1.msra.mxu0 0.0
        %1250 = vmatprep.subr.mxu0 0.0
        %1251 = vmatpush1.msra.mxu0 0.0
        %1252 = vmatprep.subr.mxu0 0.0
        %1253 = vmatpush1.msra.mxu0 0.0
        %1254 = vmatprep.subr.mxu0 0.0
        %1255 = vmatpush1.msra.mxu0 0.0
        %1256 = vmatprep.subr.mxu0 0.0
        %1257 = vmatpush1.msra.mxu0 0.0
        %1258 = vmatprep.subr.mxu0 0.0
        %1259 = vmatpush1.msra.mxu0 0.0
        %1260 = vmatprep.subr.mxu0 0.0
        %1261 = vmatpush1.msra.mxu0 0.0
        %1262 = vmatprep.subr.mxu0 0.0
        %1263 = vmatpush1.msra.mxu0 0.0
        %1264 = vmatprep.subr.mxu0 0.0
        %1265 = vmatpush1.msra.mxu0 0.0
        %1266 = vmatprep.subr.mxu0 0.0
        %1267 = vmatpush1.msra.mxu0 0.0
        %1268 = vmatprep.subr.mxu0 0.0
        %1269 = vmatpush1.msra.mxu0 0.0
        %1270 = vmatprep.subr.mxu0 0.0
        %1271 = vmatpush1.msra.mxu0 0.0
        %1272 = vmatprep.subr.mxu0 0.0
        %1273 = vmatpush1.msra.mxu0 0.0
        %1274 = vmatprep.mubr.f32.mxu0 0.0
        %1275 = vmatmul.mubr.f32.gmra.mrb[0].mxu0 %v1130
        %v1276 = vpop.f32.mrb[0].mxu0
        %v1277 = vadd.f32 0.0, %v1276
        %v1278 = vpop.f32.mrb[0].mxu0
        %1279 = vmatprep.mubr.f32.mxu0 0.0
        %1280 = vmatmul.mubr.f32.gmra.mrb[0].mxu0 %v1133
        %v1281 = vpop.f32.mrb[0].mxu0
        %v1282 = vadd.f32 0.0, %v1281
        %v1283 = vpop.f32.mrb[0].mxu0
        %1284 = vdwg.mxu0
        %s1285 = scalar_lea.vmem %s2, 16
        %v1286 = vld [vmem:[%s1285] sm:$0xff]
        %v1287 = vld [vmem:[%s1285 + $0x8] sm:$0xf]
        %s1288 = scalar_lea.vmem %s2, 32
        %v1289 = vld [vmem:[%s1288] sm:$0xff]
        %v1290 = vld [vmem:[%s1288 + $0x8] sm:$0xf]
        %v1292 = vsel %vm1015, %v1289, 0
        %v1295 = vsel %vm1015, %v1290, 0
        %v1297 = vsel %vm1022, %v1126, 0
        %1299 = vmatprep.subr.mxu0 0.0
        %1300 = vmatpush1.msra.mxu0 %v1125
        %1301 = vmatprep.subr.mxu0 0.0
        %1302 = vmatpush1.msra.mxu0 %v1297
        %1303 = vmatprep.subr.mxu0 0.0
        %1304 = vmatpush1.msra.mxu0 0.0
        %1305 = vmatprep.subr.mxu0 0.0
        %1306 = vmatpush1.msra.mxu0 0.0
        %1307 = vmatprep.subr.mxu0 0.0
        %1308 = vmatpush1.msra.mxu0 0.0
        %1309 = vmatprep.subr.mxu0 0.0
        %1310 = vmatpush1.msra.mxu0 0.0
        %1311 = vmatprep.subr.mxu0 0.0
        %1312 = vmatpush1.msra.mxu0 0.0
        %1313 = vmatprep.subr.mxu0 0.0
        %1314 = vmatpush1.msra.mxu0 0.0
        %1315 = vmatprep.subr.mxu0 0.0
        %1316 = vmatpush1.msra.mxu0 0.0
        %1317 = vmatprep.subr.mxu0 0.0
        %1318 = vmatpush1.msra.mxu0 0.0
        %1319 = vmatprep.subr.mxu0 0.0
        %1320 = vmatpush1.msra.mxu0 0.0
        %1321 = vmatprep.subr.mxu0 0.0
        %1322 = vmatpush1.msra.mxu0 0.0
        %1323 = vmatprep.subr.mxu0 0.0
        %1324 = vmatpush1.msra.mxu0 0.0
        %1325 = vmatprep.subr.mxu0 0.0
        %1326 = vmatpush1.msra.mxu0 0.0
        %1327 = vmatprep.subr.mxu0 0.0
        %1328 = vmatpush1.msra.mxu0 0.0
        %1329 = vmatprep.subr.mxu0 0.0
        %1330 = vmatpush1.msra.mxu0 0.0
        %1331 = vmatprep.subr.mxu0 0.0
        %1332 = vmatpush1.msra.mxu0 0.0
        %1333 = vmatprep.subr.mxu0 0.0
        %1334 = vmatpush1.msra.mxu0 0.0
        %1335 = vmatprep.subr.mxu0 0.0
        %1336 = vmatpush1.msra.mxu0 0.0
        %1337 = vmatprep.subr.mxu0 0.0
        %1338 = vmatpush1.msra.mxu0 0.0
        %1339 = vmatprep.subr.mxu0 0.0
        %1340 = vmatpush1.msra.mxu0 0.0
        %1341 = vmatprep.subr.mxu0 0.0
        %1342 = vmatpush1.msra.mxu0 0.0
        %1343 = vmatprep.subr.mxu0 0.0
        %1344 = vmatpush1.msra.mxu0 0.0
        %1345 = vmatprep.subr.mxu0 0.0
        %1346 = vmatpush1.msra.mxu0 0.0
        %1347 = vmatprep.subr.mxu0 0.0
        %1348 = vmatpush1.msra.mxu0 0.0
        %1349 = vmatprep.subr.mxu0 0.0
        %1350 = vmatpush1.msra.mxu0 0.0
        %1351 = vmatprep.subr.mxu0 0.0
        %1352 = vmatpush1.msra.mxu0 0.0
        %1353 = vmatprep.subr.mxu0 0.0
        %1354 = vmatpush1.msra.mxu0 0.0
        %1355 = vmatprep.subr.mxu0 0.0
        %1356 = vmatpush1.msra.mxu0 0.0
        %1357 = vmatprep.subr.mxu0 0.0
        %1358 = vmatpush1.msra.mxu0 0.0
        %1359 = vmatprep.subr.mxu0 0.0
        %1360 = vmatpush1.msra.mxu0 0.0
        %1361 = vmatprep.subr.mxu0 0.0
        %1362 = vmatpush1.msra.mxu0 0.0
        %1363 = vmatprep.mubr.f32.mxu0 0.0
        %1364 = vmatmul.mubr.f32.gmra.mrb[0].mxu0 %v1292
        %v1365 = vpop.f32.mrb[0].mxu0
        %v1366 = vadd.f32 0.0, %v1365
        %v1367 = vpop.f32.mrb[0].mxu0
        %1368 = vmatprep.mubr.f32.mxu0 0.0
        %1369 = vmatmul.mubr.f32.gmra.mrb[0].mxu0 %v1295
        %v1370 = vpop.f32.mrb[0].mxu0
        %v1371 = vadd.f32 0.0, %v1370
        %v1372 = vpop.f32.mrb[0].mxu0
        %1373 = vdwg.mxu0
        %v1375 = vsel %vm1015, %v1286, 0
        %v1378 = vsel %vm1015, %v1287, 0
        %v1381 = vsel %vm1022, %v1207, 0
        %1383 = vmatprep.subr.mxu0 0.0
        %1384 = vmatpush1.msra.mxu0 %v1202
        %1385 = vmatprep.subr.mxu0 0.0
        %1386 = vmatpush1.msra.mxu0 %v1381
        %1387 = vmatprep.subr.mxu0 0.0
        %1388 = vmatpush1.msra.mxu0 0.0
        %1389 = vmatprep.subr.mxu0 0.0
        %1390 = vmatpush1.msra.mxu0 0.0
        %1391 = vmatprep.subr.mxu0 0.0
        %1392 = vmatpush1.msra.mxu0 0.0
        %1393 = vmatprep.subr.mxu0 0.0
        %1394 = vmatpush1.msra.mxu0 0.0
        %1395 = vmatprep.subr.mxu0 0.0
        %1396 = vmatpush1.msra.mxu0 0.0
        %1397 = vmatprep.subr.mxu0 0.0
        %1398 = vmatpush1.msra.mxu0 0.0
        %1399 = vmatprep.subr.mxu0 0.0
        %1400 = vmatpush1.msra.mxu0 0.0
        %1401 = vmatprep.subr.mxu0 0.0
        %1402 = vmatpush1.msra.mxu0 0.0
        %1403 = vmatprep.subr.mxu0 0.0
        %1404 = vmatpush1.msra.mxu0 0.0
        %1405 = vmatprep.subr.mxu0 0.0
        %1406 = vmatpush1.msra.mxu0 0.0
        %1407 = vmatprep.subr.mxu0 0.0
        %1408 = vmatpush1.msra.mxu0 0.0
        %1409 = vmatprep.subr.mxu0 0.0
        %1410 = vmatpush1.msra.mxu0 0.0
        %1411 = vmatprep.subr.mxu0 0.0
        %1412 = vmatpush1.msra.mxu0 0.0
        %1413 = vmatprep.subr.mxu0 0.0
        %1414 = vmatpush1.msra.mxu0 0.0
        %1415 = vmatprep.subr.mxu0 0.0
        %1416 = vmatpush1.msra.mxu0 0.0
        %1417 = vmatprep.subr.mxu0 0.0
        %1418 = vmatpush1.msra.mxu0 0.0
        %1419 = vmatprep.subr.mxu0 0.0
        %1420 = vmatpush1.msra.mxu0 0.0
        %1421 = vmatprep.subr.mxu0 0.0
        %1422 = vmatpush1.msra.mxu0 0.0
        %1423 = vmatprep.subr.mxu0 0.0
        %1424 = vmatpush1.msra.mxu0 0.0
        %1425 = vmatprep.subr.mxu0 0.0
        %1426 = vmatpush1.msra.mxu0 0.0
        %1427 = vmatprep.subr.mxu0 0.0
        %1428 = vmatpush1.msra.mxu0 0.0
        %1429 = vmatprep.subr.mxu0 0.0
        %1430 = vmatpush1.msra.mxu0 0.0
        %1431 = vmatprep.subr.mxu0 0.0
        %1432 = vmatpush1.msra.mxu0 0.0
        %1433 = vmatprep.subr.mxu0 0.0
        %1434 = vmatpush1.msra.mxu0 0.0
        %1435 = vmatprep.subr.mxu0 0.0
        %1436 = vmatpush1.msra.mxu0 0.0
        %1437 = vmatprep.subr.mxu0 0.0
        %1438 = vmatpush1.msra.mxu0 0.0
        %1439 = vmatprep.subr.mxu0 0.0
        %1440 = vmatpush1.msra.mxu0 0.0
        %1441 = vmatprep.subr.mxu0 0.0
        %1442 = vmatpush1.msra.mxu0 0.0
        %1443 = vmatprep.subr.mxu0 0.0
        %1444 = vmatpush1.msra.mxu0 0.0
        %1445 = vmatprep.subr.mxu0 0.0
        %1446 = vmatpush1.msra.mxu0 0.0
        %1447 = vmatprep.mubr.f32.mxu0 0.0
        %1448 = vmatmul.mubr.f32.gmra.mrb[0].mxu0 %v1375
        %v1449 = vpop.f32.mrb[0].mxu0
        %v1450 = vadd.f32 %v1366, %v1449
        %v1451 = vpop.f32.mrb[0].mxu0
        %1452 = vmatprep.mubr.f32.mxu0 0.0
        %1453 = vmatmul.mubr.f32.gmra.mrb[0].mxu0 %v1378
        %v1454 = vpop.f32.mrb[0].mxu0
        %v1455 = vadd.f32 %v1371, %v1454
        %v1456 = vpop.f32.mrb[0].mxu0
        %1457 = vdwg.mxu0
        %s1458 = scalar_lea.vmem %s2, 48
        %v1459 = vld [vmem:[%s1458] sm:$0xff]
        %v1460 = vld [vmem:[%s1458 + $0x8] sm:$0xf]
        %v1462 = vsel %vm1015, %v1459, 0
        %v1465 = vsel %vm1015, %v1460, 0
        %v1468 = vsel %vm1022, %v1282, 0
        %1470 = vmatprep.subr.mxu0 0.0
        %1471 = vmatpush1.msra.mxu0 %v1277
        %1472 = vmatprep.subr.mxu0 0.0
        %1473 = vmatpush1.msra.mxu0 %v1468
        %1474 = vmatprep.subr.mxu0 0.0
        %1475 = vmatpush1.msra.mxu0 0.0
        %1476 = vmatprep.subr.mxu0 0.0
        %1477 = vmatpush1.msra.mxu0 0.0
        %1478 = vmatprep.subr.mxu0 0.0
        %1479 = vmatpush1.msra.mxu0 0.0
        %1480 = vmatprep.subr.mxu0 0.0
        %1481 = vmatpush1.msra.mxu0 0.0
        %1482 = vmatprep.subr.mxu0 0.0
        %1483 = vmatpush1.msra.mxu0 0.0
        %1484 = vmatprep.subr.mxu0 0.0
        %1485 = vmatpush1.msra.mxu0 0.0
        %1486 = vmatprep.subr.mxu0 0.0
        %1487 = vmatpush1.msra.mxu0 0.0
        %1488 = vmatprep.subr.mxu0 0.0
        %1489 = vmatpush1.msra.mxu0 0.0
        %1490 = vmatprep.subr.mxu0 0.0
        %1491 = vmatpush1.msra.mxu0 0.0
        %1492 = vmatprep.subr.mxu0 0.0
        %1493 = vmatpush1.msra.mxu0 0.0
        %1494 = vmatprep.subr.mxu0 0.0
        %1495 = vmatpush1.msra.mxu0 0.0
        %1496 = vmatprep.subr.mxu0 0.0
        %1497 = vmatpush1.msra.mxu0 0.0
        %1498 = vmatprep.subr.mxu0 0.0
        %1499 = vmatpush1.msra.mxu0 0.0
        %1500 = vmatprep.subr.mxu0 0.0
        %1501 = vmatpush1.msra.mxu0 0.0
        %1502 = vmatprep.subr.mxu0 0.0
        %1503 = vmatpush1.msra.mxu0 0.0
        %1504 = vmatprep.subr.mxu0 0.0
        %1505 = vmatpush1.msra.mxu0 0.0
        %1506 = vmatprep.subr.mxu0 0.0
        %1507 = vmatpush1.msra.mxu0 0.0
        %1508 = vmatprep.subr.mxu0 0.0
        %1509 = vmatpush1.msra.mxu0 0.0
        %1510 = vmatprep.subr.mxu0 0.0
        %1511 = vmatpush1.msra.mxu0 0.0
        %1512 = vmatprep.subr.mxu0 0.0
        %1513 = vmatpush1.msra.mxu0 0.0
        %1514 = vmatprep.subr.mxu0 0.0
        %1515 = vmatpush1.msra.mxu0 0.0
        %1516 = vmatprep.subr.mxu0 0.0
        %1517 = vmatpush1.msra.mxu0 0.0
        %1518 = vmatprep.subr.mxu0 0.0
        %1519 = vmatpush1.msra.mxu0 0.0
        %1520 = vmatprep.subr.mxu0 0.0
        %1521 = vmatpush1.msra.mxu0 0.0
        %1522 = vmatprep.subr.mxu0 0.0
        %1523 = vmatpush1.msra.mxu0 0.0
        %1524 = vmatprep.subr.mxu0 0.0
        %1525 = vmatpush1.msra.mxu0 0.0
        %1526 = vmatprep.subr.mxu0 0.0
        %1527 = vmatpush1.msra.mxu0 0.0
        %1528 = vmatprep.subr.mxu0 0.0
        %1529 = vmatpush1.msra.mxu0 0.0
        %1530 = vmatprep.subr.mxu0 0.0
        %1531 = vmatpush1.msra.mxu0 0.0
        %1532 = vmatprep.subr.mxu0 0.0
        %1533 = vmatpush1.msra.mxu0 0.0
        %1534 = vmatprep.mubr.f32.mxu0 0.0
        %1535 = vmatmul.mubr.f32.gmra.mrb[0].mxu0 %v1462
        %v1536 = vpop.f32.mrb[0].mxu0
        %v1537 = vadd.f32 0.0, %v1536
        %v1538 = vpop.f32.mrb[0].mxu0
        %1539 = vmatprep.mubr.f32.mxu0 0.0
        %1540 = vmatmul.mubr.f32.gmra.mrb[0].mxu0 %v1465
        %v1541 = vpop.f32.mrb[0].mxu0
        %v1542 = vadd.f32 0.0, %v1541
        %v1543 = vpop.f32.mrb[0].mxu0
        %1544 = vdwg.mxu0
        %v1545 = vadd.f32 %v1450, %v1537
        %v1546 = vadd.f32 %v1455, %v1542
        %1548 = vset.pattern.permute.xlu0 0
        %1549 = vperm.xlu0 %1548, %v1127
        %v1550 = vpop.permute.xlu0 %1549
        %1553 = vset.pattern.permute.xlu0 0
        %1554 = vperm.xlu0 %1553, %v1128
        %v1555 = vpop.permute.xlu0 %1554
        %v1557 = vadd.f32 %v1545, %v1550
        %v1558 = vadd.f32 %v1546, %v1555
        %v1559 = vmax.f32 %v1557, 0.0
        %v1560 = vmax.f32 %v1558, 0.0
        %v1562 = vsel %vm1002, %v1559, 0
        %v1565 = vsel %vm1002, %v1560, 0
        %1567 = vmatprep.subr.mxu0 0.0
        %1568 = vmatpush1.msra.mxu0 %v513
        %1569 = vmatprep.subr.mxu0 0.0
        %1570 = vmatpush1.msra.mxu0 0.0
        %1571 = vmatprep.subr.mxu0 0.0
        %1572 = vmatpush1.msra.mxu0 0.0
        %1573 = vmatprep.subr.mxu0 0.0
        %1574 = vmatpush1.msra.mxu0 0.0
        %1575 = vmatprep.subr.mxu0 0.0
        %1576 = vmatpush1.msra.mxu0 0.0
        %1577 = vmatprep.subr.mxu0 0.0
        %1578 = vmatpush1.msra.mxu0 0.0
        %1579 = vmatprep.subr.mxu0 0.0
        %1580 = vmatpush1.msra.mxu0 0.0
        %1581 = vmatprep.subr.mxu0 0.0
        %1582 = vmatpush1.msra.mxu0 0.0
        %1583 = vmatprep.subr.mxu0 0.0
        %1584 = vmatpush1.msra.mxu0 0.0
        %1585 = vmatprep.subr.mxu0 0.0
        %1586 = vmatpush1.msra.mxu0 0.0
        %1587 = vmatprep.subr.mxu0 0.0
        %1588 = vmatpush1.msra.mxu0 0.0
        %1589 = vmatprep.subr.mxu0 0.0
        %1590 = vmatpush1.msra.mxu0 0.0
        %1591 = vmatprep.subr.mxu0 0.0
        %1592 = vmatpush1.msra.mxu0 0.0
        %1593 = vmatprep.subr.mxu0 0.0
        %1594 = vmatpush1.msra.mxu0 0.0
        %1595 = vmatprep.subr.mxu0 0.0
        %1596 = vmatpush1.msra.mxu0 0.0
        %1597 = vmatprep.subr.mxu0 0.0
        %1598 = vmatpush1.msra.mxu0 0.0
        %1599 = vmatprep.subr.mxu0 0.0
        %1600 = vmatpush1.msra.mxu0 0.0
        %1601 = vmatprep.subr.mxu0 0.0
        %1602 = vmatpush1.msra.mxu0 0.0
        %1603 = vmatprep.subr.mxu0 0.0
        %1604 = vmatpush1.msra.mxu0 0.0
        %1605 = vmatprep.subr.mxu0 0.0
        %1606 = vmatpush1.msra.mxu0 0.0
        %1607 = vmatprep.subr.mxu0 0.0
        %1608 = vmatpush1.msra.mxu0 0.0
        %1609 = vmatprep.subr.mxu0 0.0
        %1610 = vmatpush1.msra.mxu0 0.0
        %1611 = vmatprep.subr.mxu0 0.0
        %1612 = vmatpush1.msra.mxu0 0.0
        %1613 = vmatprep.subr.mxu0 0.0
        %1614 = vmatpush1.msra.mxu0 0.0
        %1615 = vmatprep.subr.mxu0 0.0
        %1616 = vmatpush1.msra.mxu0 0.0
        %1617 = vmatprep.subr.mxu0 0.0
        %1618 = vmatpush1.msra.mxu0 0.0
        %1619 = vmatprep.subr.mxu0 0.0
        %1620 = vmatpush1.msra.mxu0 0.0
        %1621 = vmatprep.subr.mxu0 0.0
        %1622 = vmatpush1.msra.mxu0 0.0
        %1623 = vmatprep.subr.mxu0 0.0
        %1624 = vmatpush1.msra.mxu0 0.0
        %1625 = vmatprep.subr.mxu0 0.0
        %1626 = vmatpush1.msra.mxu0 0.0
        %1627 = vmatprep.subr.mxu0 0.0
        %1628 = vmatpush1.msra.mxu0 0.0
        %1629 = vmatprep.subr.mxu0 0.0
        %1630 = vmatpush1.msra.mxu0 0.0
        %1631 = vmatprep.mubr.f32.mxu0 0.0
        %1632 = vmatmul.mubr.f32.gmra.mrb[0].mxu0 %v1562
        %v1633 = vpop.f32.mrb[0].mxu0
        %v1634 = vadd.f32 0.0, %v1633
        %v1635 = vpop.f32.mrb[0].mxu0
        %1636 = vmatprep.mubr.f32.mxu0 0.0
        %1637 = vmatmul.mubr.f32.gmra.mrb[0].mxu0 %v1565
        %v1638 = vpop.f32.mrb[0].mxu0
        %v1639 = vadd.f32 0.0, %v1638
        %v1640 = vpop.f32.mrb[0].mxu0
        %1641 = vdwg.mxu0
        %1642 = vmatprep.subr.mxu0 0.0
        %1643 = vmatpush1.msra.mxu0 %v515
        %1644 = vmatprep.subr.mxu0 0.0
        %1645 = vmatpush1.msra.mxu0 0.0
        %1646 = vmatprep.subr.mxu0 0.0
        %1647 = vmatpush1.msra.mxu0 0.0
        %1648 = vmatprep.subr.mxu0 0.0
        %1649 = vmatpush1.msra.mxu0 0.0
        %1650 = vmatprep.subr.mxu0 0.0
        %1651 = vmatpush1.msra.mxu0 0.0
        %1652 = vmatprep.subr.mxu0 0.0
        %1653 = vmatpush1.msra.mxu0 0.0
        %1654 = vmatprep.subr.mxu0 0.0
        %1655 = vmatpush1.msra.mxu0 0.0
        %1656 = vmatprep.subr.mxu0 0.0
        %1657 = vmatpush1.msra.mxu0 0.0
        %1658 = vmatprep.subr.mxu0 0.0
        %1659 = vmatpush1.msra.mxu0 0.0
        %1660 = vmatprep.subr.mxu0 0.0
        %1661 = vmatpush1.msra.mxu0 0.0
        %1662 = vmatprep.subr.mxu0 0.0
        %1663 = vmatpush1.msra.mxu0 0.0
        %1664 = vmatprep.subr.mxu0 0.0
        %1665 = vmatpush1.msra.mxu0 0.0
        %1666 = vmatprep.subr.mxu0 0.0
        %1667 = vmatpush1.msra.mxu0 0.0
        %1668 = vmatprep.subr.mxu0 0.0
        %1669 = vmatpush1.msra.mxu0 0.0
        %1670 = vmatprep.subr.mxu0 0.0
        %1671 = vmatpush1.msra.mxu0 0.0
        %1672 = vmatprep.subr.mxu0 0.0
        %1673 = vmatpush1.msra.mxu0 0.0
        %1674 = vmatprep.subr.mxu0 0.0
        %1675 = vmatpush1.msra.mxu0 0.0
        %1676 = vmatprep.subr.mxu0 0.0
        %1677 = vmatpush1.msra.mxu0 0.0
        %1678 = vmatprep.subr.mxu0 0.0
        %1679 = vmatpush1.msra.mxu0 0.0
        %1680 = vmatprep.subr.mxu0 0.0
        %1681 = vmatpush1.msra.mxu0 0.0
        %1682 = vmatprep.subr.mxu0 0.0
        %1683 = vmatpush1.msra.mxu0 0.0
        %1684 = vmatprep.subr.mxu0 0.0
        %1685 = vmatpush1.msra.mxu0 0.0
        %1686 = vmatprep.subr.mxu0 0.0
        %1687 = vmatpush1.msra.mxu0 0.0
        %1688 = vmatprep.subr.mxu0 0.0
        %1689 = vmatpush1.msra.mxu0 0.0
        %1690 = vmatprep.subr.mxu0 0.0
        %1691 = vmatpush1.msra.mxu0 0.0
        %1692 = vmatprep.subr.mxu0 0.0
        %1693 = vmatpush1.msra.mxu0 0.0
        %1694 = vmatprep.subr.mxu0 0.0
        %1695 = vmatpush1.msra.mxu0 0.0
        %1696 = vmatprep.subr.mxu0 0.0
        %1697 = vmatpush1.msra.mxu0 0.0
        %1698 = vmatprep.subr.mxu0 0.0
        %1699 = vmatpush1.msra.mxu0 0.0
        %1700 = vmatprep.subr.mxu0 0.0
        %1701 = vmatpush1.msra.mxu0 0.0
        %1702 = vmatprep.subr.mxu0 0.0
        %1703 = vmatpush1.msra.mxu0 0.0
        %1704 = vmatprep.subr.mxu0 0.0
        %1705 = vmatpush1.msra.mxu0 0.0
        %1706 = vmatprep.mubr.f32.mxu0 0.0
        %1707 = vmatmul.mubr.f32.gmra.mrb[0].mxu0 %v1562
        %v1708 = vpop.f32.mrb[0].mxu0
        %v1709 = vadd.f32 0.0, %v1708
        %v1710 = vpop.f32.mrb[0].mxu0
        %1711 = vmatprep.mubr.f32.mxu0 0.0
        %1712 = vmatmul.mubr.f32.gmra.mrb[0].mxu0 %v1565
        %v1713 = vpop.f32.mrb[0].mxu0
        %v1714 = vadd.f32 0.0, %v1713
        %v1715 = vpop.f32.mrb[0].mxu0
        %1716 = vdwg.mxu0
        %s1717 = scalar_lea.vmem %s2, 64
        %v1718 = vld [vmem:[%s1717] sm:$0xff]
        %v1719 = vld [vmem:[%s1717 + $0x8] sm:$0xf]
        %s1720 = scalar_lea.vmem %s2, 80
        %v1721 = vld [vmem:[%s1720] sm:$0xff]
        %v1722 = vld [vmem:[%s1720 + $0x8] sm:$0xf]
        %v1724 = vsel %vm1015, %v1721, 0
        %v1727 = vsel %vm1015, %v1722, 0
        %v1729 = vsel %vm1022, %v1560, 0
        %1731 = vmatprep.subr.mxu0 0.0
        %1732 = vmatpush1.msra.mxu0 %v1559
        %1733 = vmatprep.subr.mxu0 0.0
        %1734 = vmatpush1.msra.mxu0 %v1729
        %1735 = vmatprep.subr.mxu0 0.0
        %1736 = vmatpush1.msra.mxu0 0.0
        %1737 = vmatprep.subr.mxu0 0.0
        %1738 = vmatpush1.msra.mxu0 0.0
        %1739 = vmatprep.subr.mxu0 0.0
        %1740 = vmatpush1.msra.mxu0 0.0
        %1741 = vmatprep.subr.mxu0 0.0
        %1742 = vmatpush1.msra.mxu0 0.0
        %1743 = vmatprep.subr.mxu0 0.0
        %1744 = vmatpush1.msra.mxu0 0.0
        %1745 = vmatprep.subr.mxu0 0.0
        %1746 = vmatpush1.msra.mxu0 0.0
        %1747 = vmatprep.subr.mxu0 0.0
        %1748 = vmatpush1.msra.mxu0 0.0
        %1749 = vmatprep.subr.mxu0 0.0
        %1750 = vmatpush1.msra.mxu0 0.0
        %1751 = vmatprep.subr.mxu0 0.0
        %1752 = vmatpush1.msra.mxu0 0.0
        %1753 = vmatprep.subr.mxu0 0.0
        %1754 = vmatpush1.msra.mxu0 0.0
        %1755 = vmatprep.subr.mxu0 0.0
        %1756 = vmatpush1.msra.mxu0 0.0
        %1757 = vmatprep.subr.mxu0 0.0
        %1758 = vmatpush1.msra.mxu0 0.0
        %1759 = vmatprep.subr.mxu0 0.0
        %1760 = vmatpush1.msra.mxu0 0.0
        %1761 = vmatprep.subr.mxu0 0.0
        %1762 = vmatpush1.msra.mxu0 0.0
        %1763 = vmatprep.subr.mxu0 0.0
        %1764 = vmatpush1.msra.mxu0 0.0
        %1765 = vmatprep.subr.mxu0 0.0
        %1766 = vmatpush1.msra.mxu0 0.0
        %1767 = vmatprep.subr.mxu0 0.0
        %1768 = vmatpush1.msra.mxu0 0.0
        %1769 = vmatprep.subr.mxu0 0.0
        %1770 = vmatpush1.msra.mxu0 0.0
        %1771 = vmatprep.subr.mxu0 0.0
        %1772 = vmatpush1.msra.mxu0 0.0
        %1773 = vmatprep.subr.mxu0 0.0
        %1774 = vmatpush1.msra.mxu0 0.0
        %1775 = vmatprep.subr.mxu0 0.0
        %1776 = vmatpush1.msra.mxu0 0.0
        %1777 = vmatprep.subr.mxu0 0.0
        %1778 = vmatpush1.msra.mxu0 0.0
        %1779 = vmatprep.subr.mxu0 0.0
        %1780 = vmatpush1.msra.mxu0 0.0
        %1781 = vmatprep.subr.mxu0 0.0
        %1782 = vmatpush1.msra.mxu0 0.0
        %1783 = vmatprep.subr.mxu0 0.0
        %1784 = vmatpush1.msra.mxu0 0.0
        %1785 = vmatprep.subr.mxu0 0.0
        %1786 = vmatpush1.msra.mxu0 0.0
        %1787 = vmatprep.subr.mxu0 0.0
        %1788 = vmatpush1.msra.mxu0 0.0
        %1789 = vmatprep.subr.mxu0 0.0
        %1790 = vmatpush1.msra.mxu0 0.0
        %1791 = vmatprep.subr.mxu0 0.0
        %1792 = vmatpush1.msra.mxu0 0.0
        %1793 = vmatprep.subr.mxu0 0.0
        %1794 = vmatpush1.msra.mxu0 0.0
        %1795 = vmatprep.mubr.f32.mxu0 0.0
        %1796 = vmatmul.mubr.f32.gmra.mrb[0].mxu0 %v1724
        %v1797 = vpop.f32.mrb[0].mxu0
        %v1798 = vadd.f32 0.0, %v1797
        %v1799 = vpop.f32.mrb[0].mxu0
        %1800 = vmatprep.mubr.f32.mxu0 0.0
        %1801 = vmatmul.mubr.f32.gmra.mrb[0].mxu0 %v1727
        %v1802 = vpop.f32.mrb[0].mxu0
        %v1803 = vadd.f32 0.0, %v1802
        %v1804 = vpop.f32.mrb[0].mxu0
        %1805 = vdwg.mxu0
        %v1807 = vsel %vm1015, %v1718, 0
        %v1810 = vsel %vm1015, %v1719, 0
        %v1813 = vsel %vm1022, %v1639, 0
        %1815 = vmatprep.subr.mxu0 0.0
        %1816 = vmatpush1.msra.mxu0 %v1634
        %1817 = vmatprep.subr.mxu0 0.0
        %1818 = vmatpush1.msra.mxu0 %v1813
        %1819 = vmatprep.subr.mxu0 0.0
        %1820 = vmatpush1.msra.mxu0 0.0
        %1821 = vmatprep.subr.mxu0 0.0
        %1822 = vmatpush1.msra.mxu0 0.0
        %1823 = vmatprep.subr.mxu0 0.0
        %1824 = vmatpush1.msra.mxu0 0.0
        %1825 = vmatprep.subr.mxu0 0.0
        %1826 = vmatpush1.msra.mxu0 0.0
        %1827 = vmatprep.subr.mxu0 0.0
        %1828 = vmatpush1.msra.mxu0 0.0
        %1829 = vmatprep.subr.mxu0 0.0
        %1830 = vmatpush1.msra.mxu0 0.0
        %1831 = vmatprep.subr.mxu0 0.0
        %1832 = vmatpush1.msra.mxu0 0.0
        %1833 = vmatprep.subr.mxu0 0.0
        %1834 = vmatpush1.msra.mxu0 0.0
        %1835 = vmatprep.subr.mxu0 0.0
        %1836 = vmatpush1.msra.mxu0 0.0
        %1837 = vmatprep.subr.mxu0 0.0
        %1838 = vmatpush1.msra.mxu0 0.0
        %1839 = vmatprep.subr.mxu0 0.0
        %1840 = vmatpush1.msra.mxu0 0.0
        %1841 = vmatprep.subr.mxu0 0.0
        %1842 = vmatpush1.msra.mxu0 0.0
        %1843 = vmatprep.subr.mxu0 0.0
        %1844 = vmatpush1.msra.mxu0 0.0
        %1845 = vmatprep.subr.mxu0 0.0
        %1846 = vmatpush1.msra.mxu0 0.0
        %1847 = vmatprep.subr.mxu0 0.0
        %1848 = vmatpush1.msra.mxu0 0.0
        %1849 = vmatprep.subr.mxu0 0.0
        %1850 = vmatpush1.msra.mxu0 0.0
        %1851 = vmatprep.subr.mxu0 0.0
        %1852 = vmatpush1.msra.mxu0 0.0
        %1853 = vmatprep.subr.mxu0 0.0
        %1854 = vmatpush1.msra.mxu0 0.0
        %1855 = vmatprep.subr.mxu0 0.0
        %1856 = vmatpush1.msra.mxu0 0.0
        %1857 = vmatprep.subr.mxu0 0.0
        %1858 = vmatpush1.msra.mxu0 0.0
        %1859 = vmatprep.subr.mxu0 0.0
        %1860 = vmatpush1.msra.mxu0 0.0
        %1861 = vmatprep.subr.mxu0 0.0
        %1862 = vmatpush1.msra.mxu0 0.0
        %1863 = vmatprep.subr.mxu0 0.0
        %1864 = vmatpush1.msra.mxu0 0.0
        %1865 = vmatprep.subr.mxu0 0.0
        %1866 = vmatpush1.msra.mxu0 0.0
        %1867 = vmatprep.subr.mxu0 0.0
        %1868 = vmatpush1.msra.mxu0 0.0
        %1869 = vmatprep.subr.mxu0 0.0
        %1870 = vmatpush1.msra.mxu0 0.0
        %1871 = vmatprep.subr.mxu0 0.0
        %1872 = vmatpush1.msra.mxu0 0.0
        %1873 = vmatprep.subr.mxu0 0.0
        %1874 = vmatpush1.msra.mxu0 0.0
        %1875 = vmatprep.subr.mxu0 0.0
        %1876 = vmatpush1.msra.mxu0 0.0
        %1877 = vmatprep.subr.mxu0 0.0
        %1878 = vmatpush1.msra.mxu0 0.0
        %1879 = vmatprep.mubr.f32.mxu0 0.0
        %1880 = vmatmul.mubr.f32.gmra.mrb[0].mxu0 %v1807
        %v1881 = vpop.f32.mrb[0].mxu0
        %v1882 = vadd.f32 %v1798, %v1881
        %v1883 = vpop.f32.mrb[0].mxu0
        %1884 = vmatprep.mubr.f32.mxu0 0.0
        %1885 = vmatmul.mubr.f32.gmra.mrb[0].mxu0 %v1810
        %v1886 = vpop.f32.mrb[0].mxu0
        %v1887 = vadd.f32 %v1803, %v1886
        %v1888 = vpop.f32.mrb[0].mxu0
        %1889 = vdwg.mxu0
        %s1890 = scalar_lea.vmem %s2, 96
        %v1891 = vld [vmem:[%s1890] sm:$0xff]
        %v1892 = vld [vmem:[%s1890 + $0x8] sm:$0xf]
        %v1894 = vsel %vm1015, %v1891, 0
        %v1897 = vsel %vm1015, %v1892, 0
        %v1900 = vsel %vm1022, %v1714, 0
        %1902 = vmatprep.subr.mxu0 0.0
        %1903 = vmatpush1.msra.mxu0 %v1709
        %1904 = vmatprep.subr.mxu0 0.0
        %1905 = vmatpush1.msra.mxu0 %v1900
        %1906 = vmatprep.subr.mxu0 0.0
        %1907 = vmatpush1.msra.mxu0 0.0
        %1908 = vmatprep.subr.mxu0 0.0
        %1909 = vmatpush1.msra.mxu0 0.0
        %1910 = vmatprep.subr.mxu0 0.0
        %1911 = vmatpush1.msra.mxu0 0.0
        %1912 = vmatprep.subr.mxu0 0.0
        %1913 = vmatpush1.msra.mxu0 0.0
        %1914 = vmatprep.subr.mxu0 0.0
        %1915 = vmatpush1.msra.mxu0 0.0
        %1916 = vmatprep.subr.mxu0 0.0
        %1917 = vmatpush1.msra.mxu0 0.0
        %1918 = vmatprep.subr.mxu0 0.0
        %1919 = vmatpush1.msra.mxu0 0.0
        %1920 = vmatprep.subr.mxu0 0.0
        %1921 = vmatpush1.msra.mxu0 0.0
        %1922 = vmatprep.subr.mxu0 0.0
        %1923 = vmatpush1.msra.mxu0 0.0
        %1924 = vmatprep.subr.mxu0 0.0
        %1925 = vmatpush1.msra.mxu0 0.0
        %1926 = vmatprep.subr.mxu0 0.0
        %1927 = vmatpush1.msra.mxu0 0.0
        %1928 = vmatprep.subr.mxu0 0.0
        %1929 = vmatpush1.msra.mxu0 0.0
        %1930 = vmatprep.subr.mxu0 0.0
        %1931 = vmatpush1.msra.mxu0 0.0
        %1932 = vmatprep.subr.mxu0 0.0
        %1933 = vmatpush1.msra.mxu0 0.0
        %1934 = vmatprep.subr.mxu0 0.0
        %1935 = vmatpush1.msra.mxu0 0.0
        %1936 = vmatprep.subr.mxu0 0.0
        %1937 = vmatpush1.msra.mxu0 0.0
        %1938 = vmatprep.subr.mxu0 0.0
        %1939 = vmatpush1.msra.mxu0 0.0
        %1940 = vmatprep.subr.mxu0 0.0
        %1941 = vmatpush1.msra.mxu0 0.0
        %1942 = vmatprep.subr.mxu0 0.0
        %1943 = vmatpush1.msra.mxu0 0.0
        %1944 = vmatprep.subr.mxu0 0.0
        %1945 = vmatpush1.msra.mxu0 0.0
        %1946 = vmatprep.subr.mxu0 0.0
        %1947 = vmatpush1.msra.mxu0 0.0
        %1948 = vmatprep.subr.mxu0 0.0
        %1949 = vmatpush1.msra.mxu0 0.0
        %1950 = vmatprep.subr.mxu0 0.0
        %1951 = vmatpush1.msra.mxu0 0.0
        %1952 = vmatprep.subr.mxu0 0.0
        %1953 = vmatpush1.msra.mxu0 0.0
        %1954 = vmatprep.subr.mxu0 0.0
        %1955 = vmatpush1.msra.mxu0 0.0
        %1956 = vmatprep.subr.mxu0 0.0
        %1957 = vmatpush1.msra.mxu0 0.0
        %1958 = vmatprep.subr.mxu0 0.0
        %1959 = vmatpush1.msra.mxu0 0.0
        %1960 = vmatprep.subr.mxu0 0.0
        %1961 = vmatpush1.msra.mxu0 0.0
        %1962 = vmatprep.subr.mxu0 0.0
        %1963 = vmatpush1.msra.mxu0 0.0
        %1964 = vmatprep.subr.mxu0 0.0
        %1965 = vmatpush1.msra.mxu0 0.0
        %1966 = vmatprep.mubr.f32.mxu0 0.0
        %1967 = vmatmul.mubr.f32.gmra.mrb[0].mxu0 %v1894
        %v1968 = vpop.f32.mrb[0].mxu0
        %v1969 = vadd.f32 0.0, %v1968
        %v1970 = vpop.f32.mrb[0].mxu0
        %1971 = vmatprep.mubr.f32.mxu0 0.0
        %1972 = vmatmul.mubr.f32.gmra.mrb[0].mxu0 %v1897
        %v1973 = vpop.f32.mrb[0].mxu0
        %v1974 = vadd.f32 0.0, %v1973
        %v1975 = vpop.f32.mrb[0].mxu0
        %1976 = vdwg.mxu0
        %v1977 = vadd.f32 %v1882, %v1969
        %v1978 = vadd.f32 %v1887, %v1974
        %v1979 = vadd.f32 %v1977, 1.0
        %v1980 = vadd.f32 %v1978, 1.0
        %v1982 = vsel %vm1002, %v1979, 0
        %v1985 = vsel %vm1002, %v1980, 0
        %1987 = vmatprep.subr.mxu0 0.0
        %1988 = vmatpush1.msra.mxu0 %v503
        %1989 = vmatprep.subr.mxu0 0.0
        %1990 = vmatpush1.msra.mxu0 0.0
        %1991 = vmatprep.subr.mxu0 0.0
        %1992 = vmatpush1.msra.mxu0 0.0
        %1993 = vmatprep.subr.mxu0 0.0
        %1994 = vmatpush1.msra.mxu0 0.0
        %1995 = vmatprep.subr.mxu0 0.0
        %1996 = vmatpush1.msra.mxu0 0.0
        %1997 = vmatprep.subr.mxu0 0.0
        %1998 = vmatpush1.msra.mxu0 0.0
        %1999 = vmatprep.subr.mxu0 0.0
        %2000 = vmatpush1.msra.mxu0 0.0
        %2001 = vmatprep.subr.mxu0 0.0
        %2002 = vmatpush1.msra.mxu0 0.0
        %2003 = vmatprep.subr.mxu0 0.0
        %2004 = vmatpush1.msra.mxu0 0.0
        %2005 = vmatprep.subr.mxu0 0.0
        %2006 = vmatpush1.msra.mxu0 0.0
        %2007 = vmatprep.subr.mxu0 0.0
        %2008 = vmatpush1.msra.mxu0 0.0
        %2009 = vmatprep.subr.mxu0 0.0
        %2010 = vmatpush1.msra.mxu0 0.0
        %2011 = vmatprep.subr.mxu0 0.0
        %2012 = vmatpush1.msra.mxu0 0.0
        %2013 = vmatprep.subr.mxu0 0.0
        %2014 = vmatpush1.msra.mxu0 0.0
        %2015 = vmatprep.subr.mxu0 0.0
        %2016 = vmatpush1.msra.mxu0 0.0
        %2017 = vmatprep.subr.mxu0 0.0
        %2018 = vmatpush1.msra.mxu0 0.0
        %2019 = vmatprep.subr.mxu0 0.0
        %2020 = vmatpush1.msra.mxu0 0.0
        %2021 = vmatprep.subr.mxu0 0.0
        %2022 = vmatpush1.msra.mxu0 0.0
        %2023 = vmatprep.subr.mxu0 0.0
        %2024 = vmatpush1.msra.mxu0 0.0
        %2025 = vmatprep.subr.mxu0 0.0
        %2026 = vmatpush1.msra.mxu0 0.0
        %2027 = vmatprep.subr.mxu0 0.0
        %2028 = vmatpush1.msra.mxu0 0.0
        %2029 = vmatprep.subr.mxu0 0.0
        %2030 = vmatpush1.msra.mxu0 0.0
        %2031 = vmatprep.subr.mxu0 0.0
        %2032 = vmatpush1.msra.mxu0 0.0
        %2033 = vmatprep.subr.mxu0 0.0
        %2034 = vmatpush1.msra.mxu0 0.0
        %2035 = vmatprep.subr.mxu0 0.0
        %2036 = vmatpush1.msra.mxu0 0.0
        %2037 = vmatprep.subr.mxu0 0.0
        %2038 = vmatpush1.msra.mxu0 0.0
        %2039 = vmatprep.subr.mxu0 0.0
        %2040 = vmatpush1.msra.mxu0 0.0
        %2041 = vmatprep.subr.mxu0 0.0
        %2042 = vmatpush1.msra.mxu0 0.0
        %2043 = vmatprep.subr.mxu0 0.0
        %2044 = vmatpush1.msra.mxu0 0.0
        %2045 = vmatprep.subr.mxu0 0.0
        %2046 = vmatpush1.msra.mxu0 0.0
        %2047 = vmatprep.subr.mxu0 0.0
        %2048 = vmatpush1.msra.mxu0 0.0
        %2049 = vmatprep.subr.mxu0 0.0
        %2050 = vmatpush1.msra.mxu0 0.0
        %2051 = vmatprep.mubr.f32.mxu0 0.0
        %2052 = vmatmul.mubr.f32.gmra.mrb[0].mxu0 %v1982
        %v2053 = vpop.f32.mrb[0].mxu0
        %v2054 = vadd.f32 0.0, %v2053
        %v2055 = vpop.f32.mrb[0].mxu0
        %2056 = vmatprep.mubr.f32.mxu0 0.0
        %2057 = vmatmul.mubr.f32.gmra.mrb[0].mxu0 %v1985
        %v2058 = vpop.f32.mrb[0].mxu0
        %v2059 = vadd.f32 0.0, %v2058
        %v2060 = vpop.f32.mrb[0].mxu0
        %2061 = vdwg.mxu0
        %v2062 = vld [vmem:[%s3] sm:$0xff]
        %v2063 = vld [vmem:[%s3 + $0x8] sm:$0xff]
        %v2064 = vld [vmem:[%s3 + $0x10] sm:$0xff]
        %v2065 = vld [vmem:[%s3 + $0x18] sm:$0xff]
        %v2066 = vld [vmem:[%s3 + $0x20] sm:$0xff]
        %v2067 = vld [vmem:[%s3 + $0x28] sm:$0xff]
        %v2068 = vld [vmem:[%s3 + $0x30] sm:$0xff]
        %v2069 = vld [vmem:[%s3 + $0x38] sm:$0xff]
        %v2070 = vld [vmem:[%s3 + $0x40] sm:$0xff]
        %v2071 = vld [vmem:[%s3 + $0x48] sm:$0xff]
        %v2072 = vld [vmem:[%s3 + $0x50] sm:$0xff]
        %v2073 = vld [vmem:[%s3 + $0x58] sm:$0xff]
        %v2074 = vmul.f32 %v919, %v2054
        %v2075 = vmul.f32 %v924, %v2059
        %v2076 = vld [vmem:[%s4 + $0x20] sm:$0xff]
        %v2077 = vld [vmem:[%s4 + $0x28] sm:$0xff]
        %v2078 = vld [vmem:[%s4 + $0x30] sm:$0xff]
        %v2079 = vld [vmem:[%s4 + $0x38] sm:$0xff]
        %v2080 = vld [vmem:[%s4 + $0x40] sm:$0xff]
        %v2081 = vld [vmem:[%s4 + $0x48] sm:$0xff]
        %v2082 = vld [vmem:[%s4 + $0x50] sm:$0xff]
        %v2083 = vld [vmem:[%s4 + $0x58] sm:$0xff]
        %v2084 = vld [vmem:[%s4 + $0x60] sm:$0xff]
        %v2085 = vld [vmem:[%s4 + $0x68] sm:$0xff]
        %v2086 = vld [vmem:[%s4 + $0x70] sm:$0xff]
        %v2087 = vld [vmem:[%s4 + $0x78] sm:$0xff]
        %2089 = vset.pattern.permute.xlu0 0
        %2090 = vperm.xlu0 %2089, %v2076
        %v2091 = vpop.permute.xlu0 %2090
        %2094 = vset.pattern.permute.xlu0 0
        %2095 = vperm.xlu0 %2094, %v2077
        %v2096 = vpop.permute.xlu0 %2095
        %2099 = vset.pattern.permute.xlu0 0
        %2100 = vperm.xlu0 %2099, %v2078
        %v2101 = vpop.permute.xlu0 %2100
        %2104 = vset.pattern.permute.xlu0 0
        %2105 = vperm.xlu0 %2104, %v2079
        %v2106 = vpop.permute.xlu0 %2105
        %2109 = vset.pattern.permute.xlu0 0
        %2110 = vperm.xlu0 %2109, %v2080
        %v2111 = vpop.permute.xlu0 %2110
        %2114 = vset.pattern.permute.xlu0 0
        %2115 = vperm.xlu0 %2114, %v2081
        %v2116 = vpop.permute.xlu0 %2115
        %2119 = vset.pattern.permute.xlu0 0
        %2120 = vperm.xlu0 %2119, %v2082
        %v2121 = vpop.permute.xlu0 %2120
        %2124 = vset.pattern.permute.xlu0 0
        %2125 = vperm.xlu0 %2124, %v2083
        %v2126 = vpop.permute.xlu0 %2125
        %2129 = vset.pattern.permute.xlu0 0
        %2130 = vperm.xlu0 %2129, %v2084
        %v2131 = vpop.permute.xlu0 %2130
        %2134 = vset.pattern.permute.xlu0 0
        %2135 = vperm.xlu0 %2134, %v2085
        %v2136 = vpop.permute.xlu0 %2135
        %2139 = vset.pattern.permute.xlu0 0
        %2140 = vperm.xlu0 %2139, %v2086
        %v2141 = vpop.permute.xlu0 %2140
        %2144 = vset.pattern.permute.xlu0 0
        %2145 = vperm.xlu0 %2144, %v2087
        %v2146 = vpop.permute.xlu0 %2145
        %v2149 = vsel %vm1015, %v2062, 0
        %v2152 = vsel %vm1015, %v2063, 0
        %v2155 = vsel %vm1015, %v2064, 0
        %v2158 = vsel %vm1015, %v2065, 0
        %v2161 = vsel %vm1015, %v2066, 0
        %v2164 = vsel %vm1015, %v2067, 0
        %v2167 = vsel %vm1015, %v2068, 0
        %v2170 = vsel %vm1015, %v2069, 0
        %v2173 = vsel %vm1015, %v2070, 0
        %v2176 = vsel %vm1015, %v2071, 0
        %v2179 = vsel %vm1015, %v2072, 0
        %v2182 = vsel %vm1015, %v2073, 0
        %v2185 = vsel %vm1022, %v2075, 0
        %2187 = vmatprep.subr.mxu0 0.0
        %2188 = vmatpush1.msra.mxu0 %v2074
        %2189 = vmatprep.subr.mxu0 0.0
        %2190 = vmatpush1.msra.mxu0 %v2185
        %2191 = vmatprep.subr.mxu0 0.0
        %2192 = vmatpush1.msra.mxu0 0.0
        %2193 = vmatprep.subr.mxu0 0.0
        %2194 = vmatpush1.msra.mxu0 0.0
        %2195 = vmatprep.subr.mxu0 0.0
        %2196 = vmatpush1.msra.mxu0 0.0
        %2197 = vmatprep.subr.mxu0 0.0
        %2198 = vmatpush1.msra.mxu0 0.0
        %2199 = vmatprep.subr.mxu0 0.0
        %2200 = vmatpush1.msra.mxu0 0.0
        %2201 = vmatprep.subr.mxu0 0.0
        %2202 = vmatpush1.msra.mxu0 0.0
        %2203 = vmatprep.subr.mxu0 0.0
        %2204 = vmatpush1.msra.mxu0 0.0
        %2205 = vmatprep.subr.mxu0 0.0
        %2206 = vmatpush1.msra.mxu0 0.0
        %2207 = vmatprep.subr.mxu0 0.0
        %2208 = vmatpush1.msra.mxu0 0.0
        %2209 = vmatprep.subr.mxu0 0.0
        %2210 = vmatpush1.msra.mxu0 0.0
        %2211 = vmatprep.subr.mxu0 0.0
        %2212 = vmatpush1.msra.mxu0 0.0
        %2213 = vmatprep.subr.mxu0 0.0
        %2214 = vmatpush1.msra.mxu0 0.0
        %2215 = vmatprep.subr.mxu0 0.0
        %2216 = vmatpush1.msra.mxu0 0.0
        %2217 = vmatprep.subr.mxu0 0.0
        %2218 = vmatpush1.msra.mxu0 0.0
        %2219 = vmatprep.subr.mxu0 0.0
        %2220 = vmatpush1.msra.mxu0 0.0
        %2221 = vmatprep.subr.mxu0 0.0
        %2222 = vmatpush1.msra.mxu0 0.0
        %2223 = vmatprep.subr.mxu0 0.0
        %2224 = vmatpush1.msra.mxu0 0.0
        %2225 = vmatprep.subr.mxu0 0.0
        %2226 = vmatpush1.msra.mxu0 0.0
        %2227 = vmatprep.subr.mxu0 0.0
        %2228 = vmatpush1.msra.mxu0 0.0
        %2229 = vmatprep.subr.mxu0 0.0
        %2230 = vmatpush1.msra.mxu0 0.0
        %2231 = vmatprep.subr.mxu0 0.0
        %2232 = vmatpush1.msra.mxu0 0.0
        %2233 = vmatprep.subr.mxu0 0.0
        %2234 = vmatpush1.msra.mxu0 0.0
        %2235 = vmatprep.subr.mxu0 0.0
        %2236 = vmatpush1.msra.mxu0 0.0
        %2237 = vmatprep.subr.mxu0 0.0
        %2238 = vmatpush1.msra.mxu0 0.0
        %2239 = vmatprep.subr.mxu0 0.0
        %2240 = vmatpush1.msra.mxu0 0.0
        %2241 = vmatprep.subr.mxu0 0.0
        %2242 = vmatpush1.msra.mxu0 0.0
        %2243 = vmatprep.subr.mxu0 0.0
        %2244 = vmatpush1.msra.mxu0 0.0
        %2245 = vmatprep.subr.mxu0 0.0
        %2246 = vmatpush1.msra.mxu0 0.0
        %2247 = vmatprep.subr.mxu0 0.0
        %2248 = vmatpush1.msra.mxu0 0.0
        %2249 = vmatprep.subr.mxu0 0.0
        %2250 = vmatpush1.msra.mxu0 0.0
        %2251 = vmatprep.mubr.f32.mxu0 0.0
        %2252 = vmatmul.mubr.f32.gmra.mrb[0].mxu0 %v2149
        %v2253 = vpop.f32.mrb[0].mxu0
        %v2254 = vadd.f32 %v2091, %v2253
        %v2255 = vpop.f32.mrb[0].mxu0
        %2256 = vmatprep.mubr.f32.mxu0 0.0
        %2257 = vmatmul.mubr.f32.gmra.mrb[0].mxu0 %v2152
        %v2258 = vpop.f32.mrb[0].mxu0
        %v2259 = vadd.f32 %v2096, %v2258
        %v2260 = vpop.f32.mrb[0].mxu0
        %2261 = vmatprep.mubr.f32.mxu0 0.0
        %2262 = vmatmul.mubr.f32.gmra.mrb[0].mxu0 %v2155
        %v2263 = vpop.f32.mrb[0].mxu0
        %v2264 = vadd.f32 %v2101, %v2263
        %v2265 = vpop.f32.mrb[0].mxu0
        %2266 = vmatprep.mubr.f32.mxu0 0.0
        %2267 = vmatmul.mubr.f32.gmra.mrb[0].mxu0 %v2158
        %v2268 = vpop.f32.mrb[0].mxu0
        %v2269 = vadd.f32 %v2106, %v2268
        %v2270 = vpop.f32.mrb[0].mxu0
        %2271 = vmatprep.mubr.f32.mxu0 0.0
        %2272 = vmatmul.mubr.f32.gmra.mrb[0].mxu0 %v2161
        %v2273 = vpop.f32.mrb[0].mxu0
        %v2274 = vadd.f32 %v2111, %v2273
        %v2275 = vpop.f32.mrb[0].mxu0
        %2276 = vmatprep.mubr.f32.mxu0 0.0
        %2277 = vmatmul.mubr.f32.gmra.mrb[0].mxu0 %v2164
        %v2278 = vpop.f32.mrb[0].mxu0
        %v2279 = vadd.f32 %v2116, %v2278
        %v2280 = vpop.f32.mrb[0].mxu0
        %2281 = vmatprep.mubr.f32.mxu0 0.0
        %2282 = vmatmul.mubr.f32.gmra.mrb[0].mxu0 %v2167
        %v2283 = vpop.f32.mrb[0].mxu0
        %v2284 = vadd.f32 %v2121, %v2283
        %v2285 = vpop.f32.mrb[0].mxu0
        %2286 = vmatprep.mubr.f32.mxu0 0.0
        %2287 = vmatmul.mubr.f32.gmra.mrb[0].mxu0 %v2170
        %v2288 = vpop.f32.mrb[0].mxu0
        %v2289 = vadd.f32 %v2126, %v2288
        %v2290 = vpop.f32.mrb[0].mxu0
        %2291 = vmatprep.mubr.f32.mxu0 0.0
        %2292 = vmatmul.mubr.f32.gmra.mrb[0].mxu0 %v2173
        %v2293 = vpop.f32.mrb[0].mxu0
        %v2294 = vadd.f32 %v2131, %v2293
        %v2295 = vpop.f32.mrb[0].mxu0
        %2296 = vmatprep.mubr.f32.mxu0 0.0
        %2297 = vmatmul.mubr.f32.gmra.mrb[0].mxu0 %v2176
        %v2298 = vpop.f32.mrb[0].mxu0
        %v2299 = vadd.f32 %v2136, %v2298
        %v2300 = vpop.f32.mrb[0].mxu0
        %2301 = vmatprep.mubr.f32.mxu0 0.0
        %2302 = vmatmul.mubr.f32.gmra.mrb[0].mxu0 %v2179
        %v2303 = vpop.f32.mrb[0].mxu0
        %v2304 = vadd.f32 %v2141, %v2303
        %v2305 = vpop.f32.mrb[0].mxu0
        %2306 = vmatprep.mubr.f32.mxu0 0.0
        %2307 = vmatmul.mubr.f32.gmra.mrb[0].mxu0 %v2182
        %v2308 = vpop.f32.mrb[0].mxu0
        %v2309 = vadd.f32 %v2146, %v2308
        %v2310 = vpop.f32.mrb[0].mxu0
        %2311 = vdwg.mxu0
        %vm2312 = vcmask 130048
        %v2314 = vsel %vm2312, %v750, 0
        %v2317 = vsel %vm2312, %v755, 0
        %2319 = vmatprep.subr.mxu0 %v505
        %2320 = vmatpush1.msra.mxu0 %v504
        %2321 = vmatprep.subr.mxu0 %v507
        %2322 = vmatpush1.msra.mxu0 %v506
        %2323 = vmatprep.subr.mxu0 0.0
        %2324 = vmatpush1.msra.mxu0 0.0
        %2325 = vmatprep.subr.mxu0 0.0
        %2326 = vmatpush1.msra.mxu0 0.0
        %2327 = vmatprep.subr.mxu0 0.0
        %2328 = vmatpush1.msra.mxu0 0.0
        %2329 = vmatprep.subr.mxu0 0.0
        %2330 = vmatpush1.msra.mxu0 0.0
        %2331 = vmatprep.subr.mxu0 0.0
        %2332 = vmatpush1.msra.mxu0 0.0
        %2333 = vmatprep.subr.mxu0 0.0
        %2334 = vmatpush1.msra.mxu0 0.0
        %2335 = vmatprep.subr.mxu0 0.0
        %2336 = vmatpush1.msra.mxu0 0.0
        %2337 = vmatprep.subr.mxu0 0.0
        %2338 = vmatpush1.msra.mxu0 0.0
        %2339 = vmatprep.subr.mxu0 0.0
        %2340 = vmatpush1.msra.mxu0 0.0
        %2341 = vmatprep.subr.mxu0 0.0
        %2342 = vmatpush1.msra.mxu0 0.0
        %2343 = vmatprep.subr.mxu0 0.0
        %2344 = vmatpush1.msra.mxu0 0.0
        %2345 = vmatprep.subr.mxu0 0.0
        %2346 = vmatpush1.msra.mxu0 0.0
        %2347 = vmatprep.subr.mxu0 0.0
        %2348 = vmatpush1.msra.mxu0 0.0
        %2349 = vmatprep.subr.mxu0 0.0
        %2350 = vmatpush1.msra.mxu0 0.0
        %2351 = vmatprep.subr.mxu0 0.0
        %2352 = vmatpush1.msra.mxu0 0.0
        %2353 = vmatprep.subr.mxu0 0.0
        %2354 = vmatpush1.msra.mxu0 0.0
        %2355 = vmatprep.subr.mxu0 0.0
        %2356 = vmatpush1.msra.mxu0 0.0
        %2357 = vmatprep.subr.mxu0 0.0
        %2358 = vmatpush1.msra.mxu0 0.0
        %2359 = vmatprep.subr.mxu0 0.0
        %2360 = vmatpush1.msra.mxu0 0.0
        %2361 = vmatprep.subr.mxu0 0.0
        %2362 = vmatpush1.msra.mxu0 0.0
        %2363 = vmatprep.subr.mxu0 0.0
        %2364 = vmatpush1.msra.mxu0 0.0
        %2365 = vmatprep.subr.mxu0 0.0
        %2366 = vmatpush1.msra.mxu0 0.0
        %2367 = vmatprep.subr.mxu0 0.0
        %2368 = vmatpush1.msra.mxu0 0.0
        %2369 = vmatprep.subr.mxu0 0.0
        %2370 = vmatpush1.msra.mxu0 0.0
        %2371 = vmatprep.subr.mxu0 0.0
        %2372 = vmatpush1.msra.mxu0 0.0
        %2373 = vmatprep.subr.mxu0 0.0
        %2374 = vmatpush1.msra.mxu0 0.0
        %2375 = vmatprep.subr.mxu0 0.0
        %2376 = vmatpush1.msra.mxu0 0.0
        %2377 = vmatprep.subr.mxu0 0.0
        %2378 = vmatpush1.msra.mxu0 0.0
        %2379 = vmatprep.subr.mxu0 0.0
        %2380 = vmatpush1.msra.mxu0 0.0
        %2381 = vmatprep.subr.mxu0 0.0
        %2382 = vmatpush1.msra.mxu0 0.0
        %2383 = vmatprep.mubr.f32.mxu0 0.0
        %2384 = vmatmul.mubr.f32.gmra.mrb[0].mxu0 %v2314
        %v2385 = vpop.f32.mrb[0].mxu0
        %v2386 = vadd.f32 0.0, %v2385
        %v2387 = vpop.f32.mrb[0].mxu0
        %v2388 = vadd.f32 0.0, %v2387
        %2389 = vmatprep.mubr.f32.mxu0 0.0
        %2390 = vmatmul.mubr.f32.gmra.mrb[0].mxu0 %v2317
        %v2391 = vpop.f32.mrb[0].mxu0
        %v2392 = vadd.f32 0.0, %v2391
        %v2393 = vpop.f32.mrb[0].mxu0
        %v2394 = vadd.f32 0.0, %v2393
        %2395 = vdwg.mxu0
        %v2397 = vsel %vm2312, %v833, 0
        %v2400 = vsel %vm2312, %v838, 0
        %2402 = vmatprep.subr.mxu0 %v510
        %2403 = vmatpush1.msra.mxu0 %v509
        %2404 = vmatprep.subr.mxu0 %v512
        %2405 = vmatpush1.msra.mxu0 %v511
        %2406 = vmatprep.subr.mxu0 0.0
        %2407 = vmatpush1.msra.mxu0 0.0
        %2408 = vmatprep.subr.mxu0 0.0
        %2409 = vmatpush1.msra.mxu0 0.0
        %2410 = vmatprep.subr.mxu0 0.0
        %2411 = vmatpush1.msra.mxu0 0.0
        %2412 = vmatprep.subr.mxu0 0.0
        %2413 = vmatpush1.msra.mxu0 0.0
        %2414 = vmatprep.subr.mxu0 0.0
        %2415 = vmatpush1.msra.mxu0 0.0
        %2416 = vmatprep.subr.mxu0 0.0
        %2417 = vmatpush1.msra.mxu0 0.0
        %2418 = vmatprep.subr.mxu0 0.0
        %2419 = vmatpush1.msra.mxu0 0.0
        %2420 = vmatprep.subr.mxu0 0.0
        %2421 = vmatpush1.msra.mxu0 0.0
        %2422 = vmatprep.subr.mxu0 0.0
        %2423 = vmatpush1.msra.mxu0 0.0
        %2424 = vmatprep.subr.mxu0 0.0
        %2425 = vmatpush1.msra.mxu0 0.0
        %2426 = vmatprep.subr.mxu0 0.0
        %2427 = vmatpush1.msra.mxu0 0.0
        %2428 = vmatprep.subr.mxu0 0.0
        %2429 = vmatpush1.msra.mxu0 0.0
        %2430 = vmatprep.subr.mxu0 0.0
        %2431 = vmatpush1.msra.mxu0 0.0
        %2432 = vmatprep.subr.mxu0 0.0
        %2433 = vmatpush1.msra.mxu0 0.0
        %2434 = vmatprep.subr.mxu0 0.0
        %2435 = vmatpush1.msra.mxu0 0.0
        %2436 = vmatprep.subr.mxu0 0.0
        %2437 = vmatpush1.msra.mxu0 0.0
        %2438 = vmatprep.subr.mxu0 0.0
        %2439 = vmatpush1.msra.mxu0 0.0
        %2440 = vmatprep.subr.mxu0 0.0
        %2441 = vmatpush1.msra.mxu0 0.0
        %2442 = vmatprep.subr.mxu0 0.0
        %2443 = vmatpush1.msra.mxu0 0.0
        %2444 = vmatprep.subr.mxu0 0.0
        %2445 = vmatpush1.msra.mxu0 0.0
        %2446 = vmatprep.subr.mxu0 0.0
        %2447 = vmatpush1.msra.mxu0 0.0
        %2448 = vmatprep.subr.mxu0 0.0
        %2449 = vmatpush1.msra.mxu0 0.0
        %2450 = vmatprep.subr.mxu0 0.0
        %2451 = vmatpush1.msra.mxu0 0.0
        %2452 = vmatprep.subr.mxu0 0.0
        %2453 = vmatpush1.msra.mxu0 0.0
        %2454 = vmatprep.subr.mxu0 0.0
        %2455 = vmatpush1.msra.mxu0 0.0
        %2456 = vmatprep.subr.mxu0 0.0
        %2457 = vmatpush1.msra.mxu0 0.0
        %2458 = vmatprep.subr.mxu0 0.0
        %2459 = vmatpush1.msra.mxu0 0.0
        %2460 = vmatprep.subr.mxu0 0.0
        %2461 = vmatpush1.msra.mxu0 0.0
        %2462 = vmatprep.subr.mxu0 0.0
        %2463 = vmatpush1.msra.mxu0 0.0
        %2464 = vmatprep.subr.mxu0 0.0
        %2465 = vmatpush1.msra.mxu0 0.0
        %2466 = vmatprep.mubr.f32.mxu0 0.0
        %2467 = vmatmul.mubr.f32.gmra.mrb[0].mxu0 %v2397
        %v2468 = vpop.f32.mrb[0].mxu0
        %v2469 = vadd.f32 0.0, %v2468
        %v2470 = vpop.f32.mrb[0].mxu0
        %v2471 = vadd.f32 0.0, %v2470
        %2472 = vmatprep.mubr.f32.mxu0 0.0
        %2473 = vmatmul.mubr.f32.gmra.mrb[0].mxu0 %v2400
        %v2474 = vpop.f32.mrb[0].mxu0
        %v2475 = vadd.f32 0.0, %v2474
        %v2476 = vpop.f32.mrb[0].mxu0
        %v2477 = vadd.f32 0.0, %v2476
        %2478 = vdwg.mxu0
        %v2479 = vsub.f32 %v2386, %v2469
        %v2480 = vsub.f32 %v2388, %v2471
        %v2481 = vsub.f32 %v2392, %v2475
        %v2482 = vsub.f32 %v2394, %v2477
        %v2483 = vtanh.pop %v2479
        %v2484 = vtanh.pop %v2480
        %v2485 = vtanh.pop %v2481
        %v2486 = vtanh.pop %v2482
        %v2487 = vld [vmem:[%s3 + $0x60] sm:$0xff]
        %v2488 = vld [vmem:[%s3 + $0x68] sm:$0xff]
        %v2489 = vld [vmem:[%s3 + $0x70] sm:$0xff]
        %v2490 = vld [vmem:[%s3 + $0x78] sm:$0xff]
        %v2491 = vld [vmem:[%s5] sm:$0xff]
        %v2492 = vld [vmem:[%s5 + $0x8] sm:$0xff]
        %v2493 = vld [vmem:[%s5 + $0x10] sm:$0xff]
        %v2494 = vld [vmem:[%s5 + $0x18] sm:$0xff]
        %v2495 = vld [vmem:[%s5 + $0x20] sm:$0xff]
        %v2496 = vld [vmem:[%s5 + $0x28] sm:$0xff]
        %v2497 = vld [vmem:[%s5 + $0x30] sm:$0xff]
        %v2498 = vld [vmem:[%s5 + $0x38] sm:$0xff]
        %v2500 = vsel %vm1015, %v2487, 0
        %v2503 = vsel %vm1015, %v2488, 0
        %v2506 = vsel %vm1015, %v2489, 0
        %v2509 = vsel %vm1015, %v2490, 0
        %v2512 = vsel %vm1022, %v2485, 0
        %v2515 = vsel %vm1022, %v2486, 0
        %2517 = vmatprep.subr.mxu0 %v2484
        %2518 = vmatpush1.msra.mxu0 %v2483
        %2519 = vmatprep.subr.mxu0 %v2515
        %2520 = vmatpush1.msra.mxu0 %v2512
        %2521 = vmatprep.subr.mxu0 0.0
        %2522 = vmatpush1.msra.mxu0 0.0
        %2523 = vmatprep.subr.mxu0 0.0
        %2524 = vmatpush1.msra.mxu0 0.0
        %2525 = vmatprep.subr.mxu0 0.0
        %2526 = vmatpush1.msra.mxu0 0.0
        %2527 = vmatprep.subr.mxu0 0.0
        %2528 = vmatpush1.msra.mxu0 0.0
        %2529 = vmatprep.subr.mxu0 0.0
        %2530 = vmatpush1.msra.mxu0 0.0
        %2531 = vmatprep.subr.mxu0 0.0
        %2532 = vmatpush1.msra.mxu0 0.0
        %2533 = vmatprep.subr.mxu0 0.0
        %2534 = vmatpush1.msra.mxu0 0.0
        %2535 = vmatprep.subr.mxu0 0.0
        %2536 = vmatpush1.msra.mxu0 0.0
        %2537 = vmatprep.subr.mxu0 0.0
        %2538 = vmatpush1.msra.mxu0 0.0
        %2539 = vmatprep.subr.mxu0 0.0
        %2540 = vmatpush1.msra.mxu0 0.0
        %2541 = vmatprep.subr.mxu0 0.0
        %2542 = vmatpush1.msra.mxu0 0.0
        %2543 = vmatprep.subr.mxu0 0.0
        %2544 = vmatpush1.msra.mxu0 0.0
        %2545 = vmatprep.subr.mxu0 0.0
        %2546 = vmatpush1.msra.mxu0 0.0
        %2547 = vmatprep.subr.mxu0 0.0
        %2548 = vmatpush1.msra.mxu0 0.0
        %2549 = vmatprep.subr.mxu0 0.0
        %2550 = vmatpush1.msra.mxu0 0.0
        %2551 = vmatprep.subr.mxu0 0.0
        %2552 = vmatpush1.msra.mxu0 0.0
        %2553 = vmatprep.subr.mxu0 0.0
        %2554 = vmatpush1.msra.mxu0 0.0
        %2555 = vmatprep.subr.mxu0 0.0
        %2556 = vmatpush1.msra.mxu0 0.0
        %2557 = vmatprep.subr.mxu0 0.0
        %2558 = vmatpush1.msra.mxu0 0.0
        %2559 = vmatprep.subr.mxu0 0.0
        %2560 = vmatpush1.msra.mxu0 0.0
        %2561 = vmatprep.subr.mxu0 0.0
        %2562 = vmatpush1.msra.mxu0 0.0
        %2563 = vmatprep.subr.mxu0 0.0
        %2564 = vmatpush1.msra.mxu0 0.0
        %2565 = vmatprep.subr.mxu0 0.0
        %2566 = vmatpush1.msra.mxu0 0.0
        %2567 = vmatprep.subr.mxu0 0.0
        %2568 = vmatpush1.msra.mxu0 0.0
        %2569 = vmatprep.subr.mxu0 0.0
        %2570 = vmatpush1.msra.mxu0 0.0
        %2571 = vmatprep.subr.mxu0 0.0
        %2572 = vmatpush1.msra.mxu0 0.0
        %2573 = vmatprep.subr.mxu0 0.0
        %2574 = vmatpush1.msra.mxu0 0.0
        %2575 = vmatprep.subr.mxu0 0.0
        %2576 = vmatpush1.msra.mxu0 0.0
        %2577 = vmatprep.subr.mxu0 0.0
        %2578 = vmatpush1.msra.mxu0 0.0
        %2579 = vmatprep.subr.mxu0 0.0
        %2580 = vmatpush1.msra.mxu0 0.0
        %2581 = vmatprep.mubr.f32.mxu0 0.0
        %2582 = vmatmul.mubr.f32.gmra.mrb[0].mxu0 %v2500
        %v2583 = vpop.f32.mrb[0].mxu0
        %v2584 = vadd.f32 %v2491, %v2583
        %v2585 = vpop.f32.mrb[0].mxu0
        %v2586 = vadd.f32 %v2492, %v2585
        %2587 = vmatprep.mubr.f32.mxu0 0.0
        %2588 = vmatmul.mubr.f32.gmra.mrb[0].mxu0 %v2503
        %v2589 = vpop.f32.mrb[0].mxu0
        %v2590 = vadd.f32 %v2493, %v2589
        %v2591 = vpop.f32.mrb[0].mxu0
        %v2592 = vadd.f32 %v2494, %v2591
        %2593 = vmatprep.mubr.f32.mxu0 0.0
        %2594 = vmatmul.mubr.f32.gmra.mrb[0].mxu0 %v2506
        %v2595 = vpop.f32.mrb[0].mxu0
        %v2596 = vadd.f32 %v2495, %v2595
        %v2597 = vpop.f32.mrb[0].mxu0
        %v2598 = vadd.f32 %v2496, %v2597
        %2599 = vmatprep.mubr.f32.mxu0 0.0
        %2600 = vmatmul.mubr.f32.gmra.mrb[0].mxu0 %v2509
        %v2601 = vpop.f32.mrb[0].mxu0
        %v2602 = vadd.f32 %v2497, %v2601
        %v2603 = vpop.f32.mrb[0].mxu0
        %v2604 = vadd.f32 %v2498, %v2603
        %2605 = vdwg.mxu0
        %v2606 = vld [vmem:[%s13] sm:$0x1]
        %v2608 = vlaneseq
        %v2609 = vshrl.u32 %v2608, 7
        %v2610 = vsub.s32 0, %v2609
        %v2611 = vrot.slane %v2606, %v2610
        %v2613 = vmul.f32 %v2254, %v2611
        %v2614 = vmul.f32 %v2259, %v2611
        %v2615 = vmul.f32 %v2264, %v2611
        %v2616 = vmul.f32 %v2269, %v2611
        %2617 = vmatprep.subr.mxu0 %v517
        %2618 = vmatpush1.msra.mxu0 %v516
        %2619 = vmatprep.subr.mxu0 %v519
        %2620 = vmatpush1.msra.mxu0 %v518
        %2621 = vmatprep.subr.mxu0 %v521
        %2622 = vmatpush1.msra.mxu0 %v520
        %2623 = vmatprep.subr.mxu0 %v523
        %2624 = vmatpush1.msra.mxu0 %v522
        %2625 = vmatprep.subr.mxu0 %v525
        %2626 = vmatpush1.msra.mxu0 %v524
        %2627 = vmatprep.subr.mxu0 %v527
        %2628 = vmatpush1.msra.mxu0 %v526
        %2629 = vmatprep.subr.mxu0 %v529
        %2630 = vmatpush1.msra.mxu0 %v528
        %2631 = vmatprep.subr.mxu0 %v531
        %2632 = vmatpush1.msra.mxu0 %v530
        %2633 = vmatprep.subr.mxu0 %v533
        %2634 = vmatpush1.msra.mxu0 %v532
        %2635 = vmatprep.subr.mxu0 %v535
        %2636 = vmatpush1.msra.mxu0 %v534
        %2637 = vmatprep.subr.mxu0 %v537
        %2638 = vmatpush1.msra.mxu0 %v536
        %2639 = vmatprep.subr.mxu0 %v539
        %2640 = vmatpush1.msra.mxu0 %v538
        %2641 = vmatprep.subr.mxu0 %v541
        %2642 = vmatpush1.msra.mxu0 %v540
        %2643 = vmatprep.subr.mxu0 %v543
        %2644 = vmatpush1.msra.mxu0 %v542
        %2645 = vmatprep.subr.mxu0 %v545
        %2646 = vmatpush1.msra.mxu0 %v544
        %2647 = vmatprep.subr.mxu0 %v547
        %2648 = vmatpush1.msra.mxu0 %v546
        %2649 = vmatprep.subr.mxu0 0.0
        %2650 = vmatpush1.msra.mxu0 0.0
        %2651 = vmatprep.subr.mxu0 0.0
        %2652 = vmatpush1.msra.mxu0 0.0
        %2653 = vmatprep.subr.mxu0 0.0
        %2654 = vmatpush1.msra.mxu0 0.0
        %2655 = vmatprep.subr.mxu0 0.0
        %2656 = vmatpush1.msra.mxu0 0.0
        %2657 = vmatprep.subr.mxu0 0.0
        %2658 = vmatpush1.msra.mxu0 0.0
        %2659 = vmatprep.subr.mxu0 0.0
        %2660 = vmatpush1.msra.mxu0 0.0
        %2661 = vmatprep.subr.mxu0 0.0
        %2662 = vmatpush1.msra.mxu0 0.0
        %2663 = vmatprep.subr.mxu0 0.0
        %2664 = vmatpush1.msra.mxu0 0.0
        %2665 = vmatprep.subr.mxu0 0.0
        %2666 = vmatpush1.msra.mxu0 0.0
        %2667 = vmatprep.subr.mxu0 0.0
        %2668 = vmatpush1.msra.mxu0 0.0
        %2669 = vmatprep.subr.mxu0 0.0
        %2670 = vmatpush1.msra.mxu0 0.0
        %2671 = vmatprep.subr.mxu0 0.0
        %2672 = vmatpush1.msra.mxu0 0.0
        %2673 = vmatprep.subr.mxu0 0.0
        %2674 = vmatpush1.msra.mxu0 0.0
        %2675 = vmatprep.subr.mxu0 0.0
        %2676 = vmatpush1.msra.mxu0 0.0
        %2677 = vmatprep.subr.mxu0 0.0
        %2678 = vmatpush1.msra.mxu0 0.0
        %2679 = vmatprep.subr.mxu0 0.0
        %2680 = vmatpush1.msra.mxu0 0.0
        %2681 = vmatprep.mubr.f32.mxu0 0.0
        %2682 = vmatmul.mubr.f32.gmra.mrb[0].mxu0 %v2613
        %v2683 = vpop.f32.mrb[0].mxu0
        %v2684 = vadd.f32 0.0, %v2683
        %v2685 = vpop.f32.mrb[0].mxu0
        %v2686 = vadd.f32 0.0, %v2685
        %2687 = vmatprep.mubr.f32.mxu0 0.0
        %2688 = vmatmul.mubr.f32.gmra.mrb[0].mxu0 %v2614
        %v2689 = vpop.f32.mrb[0].mxu0
        %v2690 = vadd.f32 0.0, %v2689
        %v2691 = vpop.f32.mrb[0].mxu0
        %v2692 = vadd.f32 0.0, %v2691
        %2693 = vmatprep.mubr.f32.mxu0 0.0
        %2694 = vmatmul.mubr.f32.gmra.mrb[0].mxu0 %v2615
        %v2695 = vpop.f32.mrb[0].mxu0
        %v2696 = vadd.f32 0.0, %v2695
        %v2697 = vpop.f32.mrb[0].mxu0
        %v2698 = vadd.f32 0.0, %v2697
        %2699 = vmatprep.mubr.f32.mxu0 0.0
        %2700 = vmatmul.mubr.f32.gmra.mrb[0].mxu0 %v2616
        %v2701 = vpop.f32.mrb[0].mxu0
        %v2702 = vadd.f32 0.0, %v2701
        %v2703 = vpop.f32.mrb[0].mxu0
        %v2704 = vadd.f32 0.0, %v2703
        %2705 = vdwg.mxu0
        %v2706 = vmul.f32 %v2584, %v2684
        %v2707 = vmul.f32 %v2586, %v2686
        %v2708 = vmul.f32 %v2590, %v2690
        %v2709 = vmul.f32 %v2592, %v2692
        %v2710 = vmul.f32 %v2596, %v2696
        %v2711 = vmul.f32 %v2598, %v2698
        %v2712 = vmul.f32 %v2602, %v2702
        %v2713 = vmul.f32 %v2604, %v2704
        %2714 = vmatprep.subr.mxu0 0.0
        %2715 = vmatpush1.msra.mxu0 %v548
        %2716 = vmatprep.subr.mxu0 0.0
        %2717 = vmatpush1.msra.mxu0 %v549
        %2718 = vmatprep.subr.mxu0 0.0
        %2719 = vmatpush1.msra.mxu0 %v550
        %2720 = vmatprep.subr.mxu0 0.0
        %2721 = vmatpush1.msra.mxu0 %v551
        %2722 = vmatprep.subr.mxu0 0.0
        %2723 = vmatpush1.msra.mxu0 %v552
        %2724 = vmatprep.subr.mxu0 0.0
        %2725 = vmatpush1.msra.mxu0 %v553
        %2726 = vmatprep.subr.mxu0 0.0
        %2727 = vmatpush1.msra.mxu0 %v554
        %2728 = vmatprep.subr.mxu0 0.0
        %2729 = vmatpush1.msra.mxu0 %v555
        %2730 = vmatprep.subr.mxu0 0.0
        %2731 = vmatpush1.msra.mxu0 %v556
        %2732 = vmatprep.subr.mxu0 0.0
        %2733 = vmatpush1.msra.mxu0 %v557
        %2734 = vmatprep.subr.mxu0 0.0
        %2735 = vmatpush1.msra.mxu0 %v558
        %2736 = vmatprep.subr.mxu0 0.0
        %2737 = vmatpush1.msra.mxu0 %v559
        %2738 = vmatprep.subr.mxu0 0.0
        %2739 = vmatpush1.msra.mxu0 %v560
        %2740 = vmatprep.subr.mxu0 0.0
        %2741 = vmatpush1.msra.mxu0 %v561
        %2742 = vmatprep.subr.mxu0 0.0
        %2743 = vmatpush1.msra.mxu0 %v562
        %2744 = vmatprep.subr.mxu0 0.0
        %2745 = vmatpush1.msra.mxu0 %v563
        %2746 = vmatprep.subr.mxu0 0.0
        %2747 = vmatpush1.msra.mxu0 %v564
        %2748 = vmatprep.subr.mxu0 0.0
        %2749 = vmatpush1.msra.mxu0 %v565
        %2750 = vmatprep.subr.mxu0 0.0
        %2751 = vmatpush1.msra.mxu0 %v566
        %2752 = vmatprep.subr.mxu0 0.0
        %2753 = vmatpush1.msra.mxu0 %v567
        %2754 = vmatprep.subr.mxu0 0.0
        %2755 = vmatpush1.msra.mxu0 %v568
        %2756 = vmatprep.subr.mxu0 0.0
        %2757 = vmatpush1.msra.mxu0 %v569
        %2758 = vmatprep.subr.mxu0 0.0
        %2759 = vmatpush1.msra.mxu0 %v570
        %2760 = vmatprep.subr.mxu0 0.0
        %2761 = vmatpush1.msra.mxu0 %v571
        %2762 = vmatprep.subr.mxu0 0.0
        %2763 = vmatpush1.msra.mxu0 %v572
        %2764 = vmatprep.subr.mxu0 0.0
        %2765 = vmatpush1.msra.mxu0 %v573
        %2766 = vmatprep.subr.mxu0 0.0
        %2767 = vmatpush1.msra.mxu0 %v574
        %2768 = vmatprep.subr.mxu0 0.0
        %2769 = vmatpush1.msra.mxu0 %v575
        %2770 = vmatprep.subr.mxu0 0.0
        %2771 = vmatpush1.msra.mxu0 %v576
        %2772 = vmatprep.subr.mxu0 0.0
        %2773 = vmatpush1.msra.mxu0 %v577
        %2774 = vmatprep.subr.mxu0 0.0
        %2775 = vmatpush1.msra.mxu0 %v578
        %2776 = vmatprep.subr.mxu0 0.0
        %2777 = vmatpush1.msra.mxu0 %v579
        %2778 = vmatprep.mubr.f32.mxu0 %v2707
        %2779 = vmatmul.mubr.f32.gmra.mrb[0].mxu0 %v2706
        %v2780 = vpop.f32.mrb[0].mxu0
        %v2781 = vadd.f32 0.0, %v2780
        %v2782 = vpop.f32.mrb[0].mxu0
        %2783 = vmatprep.mubr.f32.mxu0 %v2709
        %2784 = vmatmul.mubr.f32.gmra.mrb[0].mxu0 %v2708
        %v2785 = vpop.f32.mrb[0].mxu0
        %v2786 = vadd.f32 0.0, %v2785
        %v2787 = vpop.f32.mrb[0].mxu0
        %2788 = vmatprep.mubr.f32.mxu0 %v2711
        %2789 = vmatmul.mubr.f32.gmra.mrb[0].mxu0 %v2710
        %v2790 = vpop.f32.mrb[0].mxu0
        %v2791 = vadd.f32 0.0, %v2790
        %v2792 = vpop.f32.mrb[0].mxu0
        %2793 = vmatprep.mubr.f32.mxu0 %v2713
        %2794 = vmatmul.mubr.f32.gmra.mrb[0].mxu0 %v2712
        %v2795 = vpop.f32.mrb[0].mxu0
        %v2796 = vadd.f32 0.0, %v2795
        %v2797 = vpop.f32.mrb[0].mxu0
        %2798 = vdwg.mxu0
        %v2799 = vmul.f32 %v2781, %v2611
        %v2800 = vmul.f32 %v2786, %v2611
        %v2801 = vmul.f32 %v2791, %v2611
        %v2802 = vmul.f32 %v2796, %v2611
        %s2803 = scalar_lea.vmem %s13, 1
        %v2804 = vld [vmem:[%s2803] sm:$0x1]
        %v2806 = vlaneseq
        %v2807 = vshrl.u32 %v2806, 7
        %v2808 = vsub.s32 0, %v2807
        %v2809 = vrot.slane %v2804, %v2808
        %v2811 = vmul.f32 %v2254, %v2809
        %v2812 = vmul.f32 %v2259, %v2809
        %v2813 = vmul.f32 %v2264, %v2809
        %v2814 = vmul.f32 %v2269, %v2809
        %2815 = vmatprep.subr.mxu0 %v517
        %2816 = vmatpush1.msra.mxu0 %v516
        %2817 = vmatprep.subr.mxu0 %v519
        %2818 = vmatpush1.msra.mxu0 %v518
        %2819 = vmatprep.subr.mxu0 %v521
        %2820 = vmatpush1.msra.mxu0 %v520
        %2821 = vmatprep.subr.mxu0 %v523
        %2822 = vmatpush1.msra.mxu0 %v522
        %2823 = vmatprep.subr.mxu0 %v525
        %2824 = vmatpush1.msra.mxu0 %v524
        %2825 = vmatprep.subr.mxu0 %v527
        %2826 = vmatpush1.msra.mxu0 %v526
        %2827 = vmatprep.subr.mxu0 %v529
        %2828 = vmatpush1.msra.mxu0 %v528
        %2829 = vmatprep.subr.mxu0 %v531
        %2830 = vmatpush1.msra.mxu0 %v530
        %2831 = vmatprep.subr.mxu0 %v533
        %2832 = vmatpush1.msra.mxu0 %v532
        %2833 = vmatprep.subr.mxu0 %v535
        %2834 = vmatpush1.msra.mxu0 %v534
        %2835 = vmatprep.subr.mxu0 %v537
        %2836 = vmatpush1.msra.mxu0 %v536
        %2837 = vmatprep.subr.mxu0 %v539
        %2838 = vmatpush1.msra.mxu0 %v538
        %2839 = vmatprep.subr.mxu0 %v541
        %2840 = vmatpush1.msra.mxu0 %v540
        %2841 = vmatprep.subr.mxu0 %v543
        %2842 = vmatpush1.msra.mxu0 %v542
        %2843 = vmatprep.subr.mxu0 %v545
        %2844 = vmatpush1.msra.mxu0 %v544
        %2845 = vmatprep.subr.mxu0 %v547
        %2846 = vmatpush1.msra.mxu0 %v546
        %2847 = vmatprep.subr.mxu0 0.0
        %2848 = vmatpush1.msra.mxu0 0.0
        %2849 = vmatprep.subr.mxu0 0.0
        %2850 = vmatpush1.msra.mxu0 0.0
        %2851 = vmatprep.subr.mxu0 0.0
        %2852 = vmatpush1.msra.mxu0 0.0
        %2853 = vmatprep.subr.mxu0 0.0
        %2854 = vmatpush1.msra.mxu0 0.0
        %2855 = vmatprep.subr.mxu0 0.0
        %2856 = vmatpush1.msra.mxu0 0.0
        %2857 = vmatprep.subr.mxu0 0.0
        %2858 = vmatpush1.msra.mxu0 0.0
        %2859 = vmatprep.subr.mxu0 0.0
        %2860 = vmatpush1.msra.mxu0 0.0
        %2861 = vmatprep.subr.mxu0 0.0
        %2862 = vmatpush1.msra.mxu0 0.0
        %2863 = vmatprep.subr.mxu0 0.0
        %2864 = vmatpush1.msra.mxu0 0.0
        %2865 = vmatprep.subr.mxu0 0.0
        %2866 = vmatpush1.msra.mxu0 0.0
        %2867 = vmatprep.subr.mxu0 0.0
        %2868 = vmatpush1.msra.mxu0 0.0
        %2869 = vmatprep.subr.mxu0 0.0
        %2870 = vmatpush1.msra.mxu0 0.0
        %2871 = vmatprep.subr.mxu0 0.0
        %2872 = vmatpush1.msra.mxu0 0.0
        %2873 = vmatprep.subr.mxu0 0.0
        %2874 = vmatpush1.msra.mxu0 0.0
        %2875 = vmatprep.subr.mxu0 0.0
        %2876 = vmatpush1.msra.mxu0 0.0
        %2877 = vmatprep.subr.mxu0 0.0
        %2878 = vmatpush1.msra.mxu0 0.0
        %2879 = vmatprep.mubr.f32.mxu0 0.0
        %2880 = vmatmul.mubr.f32.gmra.mrb[0].mxu0 %v2811
        %v2881 = vpop.f32.mrb[0].mxu0
        %v2882 = vadd.f32 0.0, %v2881
        %v2883 = vpop.f32.mrb[0].mxu0
        %v2884 = vadd.f32 0.0, %v2883
        %2885 = vmatprep.mubr.f32.mxu0 0.0
        %2886 = vmatmul.mubr.f32.gmra.mrb[0].mxu0 %v2812
        %v2887 = vpop.f32.mrb[0].mxu0
        %v2888 = vadd.f32 0.0, %v2887
        %v2889 = vpop.f32.mrb[0].mxu0
        %v2890 = vadd.f32 0.0, %v2889
        %2891 = vmatprep.mubr.f32.mxu0 0.0
        %2892 = vmatmul.mubr.f32.gmra.mrb[0].mxu0 %v2813
        %v2893 = vpop.f32.mrb[0].mxu0
        %v2894 = vadd.f32 0.0, %v2893
        %v2895 = vpop.f32.mrb[0].mxu0
        %v2896 = vadd.f32 0.0, %v2895
        %2897 = vmatprep.mubr.f32.mxu0 0.0
        %2898 = vmatmul.mubr.f32.gmra.mrb[0].mxu0 %v2814
        %v2899 = vpop.f32.mrb[0].mxu0
        %v2900 = vadd.f32 0.0, %v2899
        %v2901 = vpop.f32.mrb[0].mxu0
        %v2902 = vadd.f32 0.0, %v2901
        %2903 = vdwg.mxu0
        %v2904 = vmul.f32 %v2584, %v2882
        %v2905 = vmul.f32 %v2586, %v2884
        %v2906 = vmul.f32 %v2590, %v2888
        %v2907 = vmul.f32 %v2592, %v2890
        %v2908 = vmul.f32 %v2596, %v2894
        %v2909 = vmul.f32 %v2598, %v2896
        %v2910 = vmul.f32 %v2602, %v2900
        %v2911 = vmul.f32 %v2604, %v2902
        %2912 = vmatprep.subr.mxu0 0.0
        %2913 = vmatpush1.msra.mxu0 %v548
        %2914 = vmatprep.subr.mxu0 0.0
        %2915 = vmatpush1.msra.mxu0 %v549
        %2916 = vmatprep.subr.mxu0 0.0
        %2917 = vmatpush1.msra.mxu0 %v550
        %2918 = vmatprep.subr.mxu0 0.0
        %2919 = vmatpush1.msra.mxu0 %v551
        %2920 = vmatprep.subr.mxu0 0.0
        %2921 = vmatpush1.msra.mxu0 %v552
        %2922 = vmatprep.subr.mxu0 0.0
        %2923 = vmatpush1.msra.mxu0 %v553
        %2924 = vmatprep.subr.mxu0 0.0
        %2925 = vmatpush1.msra.mxu0 %v554
        %2926 = vmatprep.subr.mxu0 0.0
        %2927 = vmatpush1.msra.mxu0 %v555
        %2928 = vmatprep.subr.mxu0 0.0
        %2929 = vmatpush1.msra.mxu0 %v556
        %2930 = vmatprep.subr.mxu0 0.0
        %2931 = vmatpush1.msra.mxu0 %v557
        %2932 = vmatprep.subr.mxu0 0.0
        %2933 = vmatpush1.msra.mxu0 %v558
        %2934 = vmatprep.subr.mxu0 0.0
        %2935 = vmatpush1.msra.mxu0 %v559
        %2936 = vmatprep.subr.mxu0 0.0
        %2937 = vmatpush1.msra.mxu0 %v560
        %2938 = vmatprep.subr.mxu0 0.0
        %2939 = vmatpush1.msra.mxu0 %v561
        %2940 = vmatprep.subr.mxu0 0.0
        %2941 = vmatpush1.msra.mxu0 %v562
        %2942 = vmatprep.subr.mxu0 0.0
        %2943 = vmatpush1.msra.mxu0 %v563
        %2944 = vmatprep.subr.mxu0 0.0
        %2945 = vmatpush1.msra.mxu0 %v564
        %2946 = vmatprep.subr.mxu0 0.0
        %2947 = vmatpush1.msra.mxu0 %v565
        %2948 = vmatprep.subr.mxu0 0.0
        %2949 = vmatpush1.msra.mxu0 %v566
        %2950 = vmatprep.subr.mxu0 0.0
        %2951 = vmatpush1.msra.mxu0 %v567
        %2952 = vmatprep.subr.mxu0 0.0
        %2953 = vmatpush1.msra.mxu0 %v568
        %2954 = vmatprep.subr.mxu0 0.0
        %2955 = vmatpush1.msra.mxu0 %v569
        %2956 = vmatprep.subr.mxu0 0.0
        %2957 = vmatpush1.msra.mxu0 %v570
        %2958 = vmatprep.subr.mxu0 0.0
        %2959 = vmatpush1.msra.mxu0 %v571
        %2960 = vmatprep.subr.mxu0 0.0
        %2961 = vmatpush1.msra.mxu0 %v572
        %2962 = vmatprep.subr.mxu0 0.0
        %2963 = vmatpush1.msra.mxu0 %v573
        %2964 = vmatprep.subr.mxu0 0.0
        %2965 = vmatpush1.msra.mxu0 %v574
        %2966 = vmatprep.subr.mxu0 0.0
        %2967 = vmatpush1.msra.mxu0 %v575
        %2968 = vmatprep.subr.mxu0 0.0
        %2969 = vmatpush1.msra.mxu0 %v576
        %2970 = vmatprep.subr.mxu0 0.0
        %2971 = vmatpush1.msra.mxu0 %v577
        %2972 = vmatprep.subr.mxu0 0.0
        %2973 = vmatpush1.msra.mxu0 %v578
        %2974 = vmatprep.subr.mxu0 0.0
        %2975 = vmatpush1.msra.mxu0 %v579
        %2976 = vmatprep.mubr.f32.mxu0 %v2905
        %2977 = vmatmul.mubr.f32.gmra.mrb[0].mxu0 %v2904
        %v2978 = vpop.f32.mrb[0].mxu0
        %v2979 = vadd.f32 0.0, %v2978
        %v2980 = vpop.f32.mrb[0].mxu0
        %2981 = vmatprep.mubr.f32.mxu0 %v2907
        %2982 = vmatmul.mubr.f32.gmra.mrb[0].mxu0 %v2906
        %v2983 = vpop.f32.mrb[0].mxu0
        %v2984 = vadd.f32 0.0, %v2983
        %v2985 = vpop.f32.mrb[0].mxu0
        %2986 = vmatprep.mubr.f32.mxu0 %v2909
        %2987 = vmatmul.mubr.f32.gmra.mrb[0].mxu0 %v2908
        %v2988 = vpop.f32.mrb[0].mxu0
        %v2989 = vadd.f32 0.0, %v2988
        %v2990 = vpop.f32.mrb[0].mxu0
        %2991 = vmatprep.mubr.f32.mxu0 %v2911
        %2992 = vmatmul.mubr.f32.gmra.mrb[0].mxu0 %v2910
        %v2993 = vpop.f32.mrb[0].mxu0
        %v2994 = vadd.f32 0.0, %v2993
        %v2995 = vpop.f32.mrb[0].mxu0
        %2996 = vdwg.mxu0
        %v2997 = vmul.f32 %v2979, %v2809
        %v2998 = vmul.f32 %v2984, %v2809
        %v2999 = vmul.f32 %v2989, %v2809
        %v3000 = vmul.f32 %v2994, %v2809
        %v3001 = vadd.f32 %v2799, %v2997
        %v3002 = vadd.f32 %v2800, %v2998
        %v3003 = vadd.f32 %v2801, %v2999
        %v3004 = vadd.f32 %v2802, %v3000
        %s3005 = scalar_lea.vmem %s13, 2
        %v3006 = vld [vmem:[%s3005] sm:$0x1]
        %v3008 = vlaneseq
        %v3009 = vshrl.u32 %v3008, 7
        %v3010 = vsub.s32 0, %v3009
        %v3011 = vrot.slane %v3006, %v3010
        %v3013 = vmul.f32 %v2254, %v3011
        %v3014 = vmul.f32 %v2259, %v3011
        %v3015 = vmul.f32 %v2264, %v3011
        %v3016 = vmul.f32 %v2269, %v3011
        %3017 = vmatprep.subr.mxu0 %v517
        %3018 = vmatpush1.msra.mxu0 %v516
        %3019 = vmatprep.subr.mxu0 %v519
        %3020 = vmatpush1.msra.mxu0 %v518
        %3021 = vmatprep.subr.mxu0 %v521
        %3022 = vmatpush1.msra.mxu0 %v520
        %3023 = vmatprep.subr.mxu0 %v523
        %3024 = vmatpush1.msra.mxu0 %v522
        %3025 = vmatprep.subr.mxu0 %v525
        %3026 = vmatpush1.msra.mxu0 %v524
        %3027 = vmatprep.subr.mxu0 %v527
        %3028 = vmatpush1.msra.mxu0 %v526
        %3029 = vmatprep.subr.mxu0 %v529
        %3030 = vmatpush1.msra.mxu0 %v528
        %3031 = vmatprep.subr.mxu0 %v531
        %3032 = vmatpush1.msra.mxu0 %v530
        %3033 = vmatprep.subr.mxu0 %v533
        %3034 = vmatpush1.msra.mxu0 %v532
        %3035 = vmatprep.subr.mxu0 %v535
        %3036 = vmatpush1.msra.mxu0 %v534
        %3037 = vmatprep.subr.mxu0 %v537
        %3038 = vmatpush1.msra.mxu0 %v536
        %3039 = vmatprep.subr.mxu0 %v539
        %3040 = vmatpush1.msra.mxu0 %v538
        %3041 = vmatprep.subr.mxu0 %v541
        %3042 = vmatpush1.msra.mxu0 %v540
        %3043 = vmatprep.subr.mxu0 %v543
        %3044 = vmatpush1.msra.mxu0 %v542
        %3045 = vmatprep.subr.mxu0 %v545
        %3046 = vmatpush1.msra.mxu0 %v544
        %3047 = vmatprep.subr.mxu0 %v547
        %3048 = vmatpush1.msra.mxu0 %v546
        %3049 = vmatprep.subr.mxu0 0.0
        %3050 = vmatpush1.msra.mxu0 0.0
        %3051 = vmatprep.subr.mxu0 0.0
        %3052 = vmatpush1.msra.mxu0 0.0
        %3053 = vmatprep.subr.mxu0 0.0
        %3054 = vmatpush1.msra.mxu0 0.0
        %3055 = vmatprep.subr.mxu0 0.0
        %3056 = vmatpush1.msra.mxu0 0.0
        %3057 = vmatprep.subr.mxu0 0.0
        %3058 = vmatpush1.msra.mxu0 0.0
        %3059 = vmatprep.subr.mxu0 0.0
        %3060 = vmatpush1.msra.mxu0 0.0
        %3061 = vmatprep.subr.mxu0 0.0
        %3062 = vmatpush1.msra.mxu0 0.0
        %3063 = vmatprep.subr.mxu0 0.0
        %3064 = vmatpush1.msra.mxu0 0.0
        %3065 = vmatprep.subr.mxu0 0.0
        %3066 = vmatpush1.msra.mxu0 0.0
        %3067 = vmatprep.subr.mxu0 0.0
        %3068 = vmatpush1.msra.mxu0 0.0
        %3069 = vmatprep.subr.mxu0 0.0
        %3070 = vmatpush1.msra.mxu0 0.0
        %3071 = vmatprep.subr.mxu0 0.0
        %3072 = vmatpush1.msra.mxu0 0.0
        %3073 = vmatprep.subr.mxu0 0.0
        %3074 = vmatpush1.msra.mxu0 0.0
        %3075 = vmatprep.subr.mxu0 0.0
        %3076 = vmatpush1.msra.mxu0 0.0
        %3077 = vmatprep.subr.mxu0 0.0
        %3078 = vmatpush1.msra.mxu0 0.0
        %3079 = vmatprep.subr.mxu0 0.0
        %3080 = vmatpush1.msra.mxu0 0.0
        %3081 = vmatprep.mubr.f32.mxu0 0.0
        %3082 = vmatmul.mubr.f32.gmra.mrb[0].mxu0 %v3013
        %v3083 = vpop.f32.mrb[0].mxu0
        %v3084 = vadd.f32 0.0, %v3083
        %v3085 = vpop.f32.mrb[0].mxu0
        %v3086 = vadd.f32 0.0, %v3085
        %3087 = vmatprep.mubr.f32.mxu0 0.0
        %3088 = vmatmul.mubr.f32.gmra.mrb[0].mxu0 %v3014
        %v3089 = vpop.f32.mrb[0].mxu0
        %v3090 = vadd.f32 0.0, %v3089
        %v3091 = vpop.f32.mrb[0].mxu0
        %v3092 = vadd.f32 0.0, %v3091
        %3093 = vmatprep.mubr.f32.mxu0 0.0
        %3094 = vmatmul.mubr.f32.gmra.mrb[0].mxu0 %v3015
        %v3095 = vpop.f32.mrb[0].mxu0
        %v3096 = vadd.f32 0.0, %v3095
        %v3097 = vpop.f32.mrb[0].mxu0
        %v3098 = vadd.f32 0.0, %v3097
        %3099 = vmatprep.mubr.f32.mxu0 0.0
        %3100 = vmatmul.mubr.f32.gmra.mrb[0].mxu0 %v3016
        %v3101 = vpop.f32.mrb[0].mxu0
        %v3102 = vadd.f32 0.0, %v3101
        %v3103 = vpop.f32.mrb[0].mxu0
        %v3104 = vadd.f32 0.0, %v3103
        %3105 = vdwg.mxu0
        %v3106 = vmul.f32 %v2584, %v3084
        %v3107 = vmul.f32 %v2586, %v3086
        %v3108 = vmul.f32 %v2590, %v3090
        %v3109 = vmul.f32 %v2592, %v3092
        %v3110 = vmul.f32 %v2596, %v3096
        %v3111 = vmul.f32 %v2598, %v3098
        %v3112 = vmul.f32 %v2602, %v3102
        %v3113 = vmul.f32 %v2604, %v3104
        %3114 = vmatprep.subr.mxu0 0.0
        %3115 = vmatpush1.msra.mxu0 %v548
        %3116 = vmatprep.subr.mxu0 0.0
        %3117 = vmatpush1.msra.mxu0 %v549
        %3118 = vmatprep.subr.mxu0 0.0
        %3119 = vmatpush1.msra.mxu0 %v550
        %3120 = vmatprep.subr.mxu0 0.0
        %3121 = vmatpush1.msra.mxu0 %v551
        %3122 = vmatprep.subr.mxu0 0.0
        %3123 = vmatpush1.msra.mxu0 %v552
        %3124 = vmatprep.subr.mxu0 0.0
        %3125 = vmatpush1.msra.mxu0 %v553
        %3126 = vmatprep.subr.mxu0 0.0
        %3127 = vmatpush1.msra.mxu0 %v554
        %3128 = vmatprep.subr.mxu0 0.0
        %3129 = vmatpush1.msra.mxu0 %v555
        %3130 = vmatprep.subr.mxu0 0.0
        %3131 = vmatpush1.msra.mxu0 %v556
        %3132 = vmatprep.subr.mxu0 0.0
        %3133 = vmatpush1.msra.mxu0 %v557
        %3134 = vmatprep.subr.mxu0 0.0
        %3135 = vmatpush1.msra.mxu0 %v558
        %3136 = vmatprep.subr.mxu0 0.0
        %3137 = vmatpush1.msra.mxu0 %v559
        %3138 = vmatprep.subr.mxu0 0.0
        %3139 = vmatpush1.msra.mxu0 %v560
        %3140 = vmatprep.subr.mxu0 0.0
        %3141 = vmatpush1.msra.mxu0 %v561
        %3142 = vmatprep.subr.mxu0 0.0
        %3143 = vmatpush1.msra.mxu0 %v562
        %3144 = vmatprep.subr.mxu0 0.0
        %3145 = vmatpush1.msra.mxu0 %v563
        %3146 = vmatprep.subr.mxu0 0.0
        %3147 = vmatpush1.msra.mxu0 %v564
        %3148 = vmatprep.subr.mxu0 0.0
        %3149 = vmatpush1.msra.mxu0 %v565
        %3150 = vmatprep.subr.mxu0 0.0
        %3151 = vmatpush1.msra.mxu0 %v566
        %3152 = vmatprep.subr.mxu0 0.0
        %3153 = vmatpush1.msra.mxu0 %v567
        %3154 = vmatprep.subr.mxu0 0.0
        %3155 = vmatpush1.msra.mxu0 %v568
        %3156 = vmatprep.subr.mxu0 0.0
        %3157 = vmatpush1.msra.mxu0 %v569
        %3158 = vmatprep.subr.mxu0 0.0
        %3159 = vmatpush1.msra.mxu0 %v570
        %3160 = vmatprep.subr.mxu0 0.0
        %3161 = vmatpush1.msra.mxu0 %v571
        %3162 = vmatprep.subr.mxu0 0.0
        %3163 = vmatpush1.msra.mxu0 %v572
        %3164 = vmatprep.subr.mxu0 0.0
        %3165 = vmatpush1.msra.mxu0 %v573
        %3166 = vmatprep.subr.mxu0 0.0
        %3167 = vmatpush1.msra.mxu0 %v574
        %3168 = vmatprep.subr.mxu0 0.0
        %3169 = vmatpush1.msra.mxu0 %v575
        %3170 = vmatprep.subr.mxu0 0.0
        %3171 = vmatpush1.msra.mxu0 %v576
        %3172 = vmatprep.subr.mxu0 0.0
        %3173 = vmatpush1.msra.mxu0 %v577
        %3174 = vmatprep.subr.mxu0 0.0
        %3175 = vmatpush1.msra.mxu0 %v578
        %3176 = vmatprep.subr.mxu0 0.0
        %3177 = vmatpush1.msra.mxu0 %v579
        %3178 = vmatprep.mubr.f32.mxu0 %v3107
        %3179 = vmatmul.mubr.f32.gmra.mrb[0].mxu0 %v3106
        %v3180 = vpop.f32.mrb[0].mxu0
        %v3181 = vadd.f32 0.0, %v3180
        %v3182 = vpop.f32.mrb[0].mxu0
        %3183 = vmatprep.mubr.f32.mxu0 %v3109
        %3184 = vmatmul.mubr.f32.gmra.mrb[0].mxu0 %v3108
        %v3185 = vpop.f32.mrb[0].mxu0
        %v3186 = vadd.f32 0.0, %v3185
        %v3187 = vpop.f32.mrb[0].mxu0
        %3188 = vmatprep.mubr.f32.mxu0 %v3111
        %3189 = vmatmul.mubr.f32.gmra.mrb[0].mxu0 %v3110
        %v3190 = vpop.f32.mrb[0].mxu0
        %v3191 = vadd.f32 0.0, %v3190
        %v3192 = vpop.f32.mrb[0].mxu0
        %3193 = vmatprep.mubr.f32.mxu0 %v3113
        %3194 = vmatmul.mubr.f32.gmra.mrb[0].mxu0 %v3112
        %v3195 = vpop.f32.mrb[0].mxu0
        %v3196 = vadd.f32 0.0, %v3195
        %v3197 = vpop.f32.mrb[0].mxu0
        %3198 = vdwg.mxu0
        %v3199 = vmul.f32 %v3181, %v3011
        %v3200 = vmul.f32 %v3186, %v3011
        %v3201 = vmul.f32 %v3191, %v3011
        %v3202 = vmul.f32 %v3196, %v3011
        %v3203 = vadd.f32 %v3001, %v3199
        %v3204 = vadd.f32 %v3002, %v3200
        %v3205 = vadd.f32 %v3003, %v3201
        %v3206 = vadd.f32 %v3004, %v3202
        %s3207 = scalar_lea.vmem %s13, 3
        %v3208 = vld [vmem:[%s3207] sm:$0x1]
        %v3210 = vlaneseq
        %v3211 = vshrl.u32 %v3210, 7
        %v3212 = vsub.s32 0, %v3211
        %v3213 = vrot.slane %v3208, %v3212
        %v3215 = vmul.f32 %v2254, %v3213
        %v3216 = vmul.f32 %v2259, %v3213
        %v3217 = vmul.f32 %v2264, %v3213
        %v3218 = vmul.f32 %v2269, %v3213
        %3219 = vmatprep.subr.mxu0 %v517
        %3220 = vmatpush1.msra.mxu0 %v516
        %3221 = vmatprep.subr.mxu0 %v519
        %3222 = vmatpush1.msra.mxu0 %v518
        %3223 = vmatprep.subr.mxu0 %v521
        %3224 = vmatpush1.msra.mxu0 %v520
        %3225 = vmatprep.subr.mxu0 %v523
        %3226 = vmatpush1.msra.mxu0 %v522
        %3227 = vmatprep.subr.mxu0 %v525
        %3228 = vmatpush1.msra.mxu0 %v524
        %3229 = vmatprep.subr.mxu0 %v527
        %3230 = vmatpush1.msra.mxu0 %v526
        %3231 = vmatprep.subr.mxu0 %v529
        %3232 = vmatpush1.msra.mxu0 %v528
        %3233 = vmatprep.subr.mxu0 %v531
        %3234 = vmatpush1.msra.mxu0 %v530
        %3235 = vmatprep.subr.mxu0 %v533
        %3236 = vmatpush1.msra.mxu0 %v532
        %3237 = vmatprep.subr.mxu0 %v535
        %3238 = vmatpush1.msra.mxu0 %v534
        %3239 = vmatprep.subr.mxu0 %v537
        %3240 = vmatpush1.msra.mxu0 %v536
        %3241 = vmatprep.subr.mxu0 %v539
        %3242 = vmatpush1.msra.mxu0 %v538
        %3243 = vmatprep.subr.mxu0 %v541
        %3244 = vmatpush1.msra.mxu0 %v540
        %3245 = vmatprep.subr.mxu0 %v543
        %3246 = vmatpush1.msra.mxu0 %v542
        %3247 = vmatprep.subr.mxu0 %v545
        %3248 = vmatpush1.msra.mxu0 %v544
        %3249 = vmatprep.subr.mxu0 %v547
        %3250 = vmatpush1.msra.mxu0 %v546
        %3251 = vmatprep.subr.mxu0 0.0
        %3252 = vmatpush1.msra.mxu0 0.0
        %3253 = vmatprep.subr.mxu0 0.0
        %3254 = vmatpush1.msra.mxu0 0.0
        %3255 = vmatprep.subr.mxu0 0.0
        %3256 = vmatpush1.msra.mxu0 0.0
        %3257 = vmatprep.subr.mxu0 0.0
        %3258 = vmatpush1.msra.mxu0 0.0
        %3259 = vmatprep.subr.mxu0 0.0
        %3260 = vmatpush1.msra.mxu0 0.0
        %3261 = vmatprep.subr.mxu0 0.0
        %3262 = vmatpush1.msra.mxu0 0.0
        %3263 = vmatprep.subr.mxu0 0.0
        %3264 = vmatpush1.msra.mxu0 0.0
        %3265 = vmatprep.subr.mxu0 0.0
        %3266 = vmatpush1.msra.mxu0 0.0
        %3267 = vmatprep.subr.mxu0 0.0
        %3268 = vmatpush1.msra.mxu0 0.0
        %3269 = vmatprep.subr.mxu0 0.0
        %3270 = vmatpush1.msra.mxu0 0.0
        %3271 = vmatprep.subr.mxu0 0.0
        %3272 = vmatpush1.msra.mxu0 0.0
        %3273 = vmatprep.subr.mxu0 0.0
        %3274 = vmatpush1.msra.mxu0 0.0
        %3275 = vmatprep.subr.mxu0 0.0
        %3276 = vmatpush1.msra.mxu0 0.0
        %3277 = vmatprep.subr.mxu0 0.0
        %3278 = vmatpush1.msra.mxu0 0.0
        %3279 = vmatprep.subr.mxu0 0.0
        %3280 = vmatpush1.msra.mxu0 0.0
        %3281 = vmatprep.subr.mxu0 0.0
        %3282 = vmatpush1.msra.mxu0 0.0
        %3283 = vmatprep.mubr.f32.mxu0 0.0
        %3284 = vmatmul.mubr.f32.gmra.mrb[0].mxu0 %v3215
        %v3285 = vpop.f32.mrb[0].mxu0
        %v3286 = vadd.f32 0.0, %v3285
        %v3287 = vpop.f32.mrb[0].mxu0
        %v3288 = vadd.f32 0.0, %v3287
        %3289 = vmatprep.mubr.f32.mxu0 0.0
        %3290 = vmatmul.mubr.f32.gmra.mrb[0].mxu0 %v3216
        %v3291 = vpop.f32.mrb[0].mxu0
        %v3292 = vadd.f32 0.0, %v3291
        %v3293 = vpop.f32.mrb[0].mxu0
        %v3294 = vadd.f32 0.0, %v3293
        %3295 = vmatprep.mubr.f32.mxu0 0.0
        %3296 = vmatmul.mubr.f32.gmra.mrb[0].mxu0 %v3217
        %v3297 = vpop.f32.mrb[0].mxu0
        %v3298 = vadd.f32 0.0, %v3297
        %v3299 = vpop.f32.mrb[0].mxu0
        %v3300 = vadd.f32 0.0, %v3299
        %3301 = vmatprep.mubr.f32.mxu0 0.0
        %3302 = vmatmul.mubr.f32.gmra.mrb[0].mxu0 %v3218
        %v3303 = vpop.f32.mrb[0].mxu0
        %v3304 = vadd.f32 0.0, %v3303
        %v3305 = vpop.f32.mrb[0].mxu0
        %v3306 = vadd.f32 0.0, %v3305
        %3307 = vdwg.mxu0
        %v3308 = vmul.f32 %v2584, %v3286
        %v3309 = vmul.f32 %v2586, %v3288
        %v3310 = vmul.f32 %v2590, %v3292
        %v3311 = vmul.f32 %v2592, %v3294
        %v3312 = vmul.f32 %v2596, %v3298
        %v3313 = vmul.f32 %v2598, %v3300
        %v3314 = vmul.f32 %v2602, %v3304
        %v3315 = vmul.f32 %v2604, %v3306
        %3316 = vmatprep.subr.mxu0 0.0
        %3317 = vmatpush1.msra.mxu0 %v548
        %3318 = vmatprep.subr.mxu0 0.0
        %3319 = vmatpush1.msra.mxu0 %v549
        %3320 = vmatprep.subr.mxu0 0.0
        %3321 = vmatpush1.msra.mxu0 %v550
        %3322 = vmatprep.subr.mxu0 0.0
        %3323 = vmatpush1.msra.mxu0 %v551
        %3324 = vmatprep.subr.mxu0 0.0
        %3325 = vmatpush1.msra.mxu0 %v552
        %3326 = vmatprep.subr.mxu0 0.0
        %3327 = vmatpush1.msra.mxu0 %v553
        %3328 = vmatprep.subr.mxu0 0.0
        %3329 = vmatpush1.msra.mxu0 %v554
        %3330 = vmatprep.subr.mxu0 0.0
        %3331 = vmatpush1.msra.mxu0 %v555
        %3332 = vmatprep.subr.mxu0 0.0
        %3333 = vmatpush1.msra.mxu0 %v556
        %3334 = vmatprep.subr.mxu0 0.0
        %3335 = vmatpush1.msra.mxu0 %v557
        %3336 = vmatprep.subr.mxu0 0.0
        %3337 = vmatpush1.msra.mxu0 %v558
        %3338 = vmatprep.subr.mxu0 0.0
        %3339 = vmatpush1.msra.mxu0 %v559
        %3340 = vmatprep.subr.mxu0 0.0
        %3341 = vmatpush1.msra.mxu0 %v560
        %3342 = vmatprep.subr.mxu0 0.0
        %3343 = vmatpush1.msra.mxu0 %v561
        %3344 = vmatprep.subr.mxu0 0.0
        %3345 = vmatpush1.msra.mxu0 %v562
        %3346 = vmatprep.subr.mxu0 0.0
        %3347 = vmatpush1.msra.mxu0 %v563
        %3348 = vmatprep.subr.mxu0 0.0
        %3349 = vmatpush1.msra.mxu0 %v564
        %3350 = vmatprep.subr.mxu0 0.0
        %3351 = vmatpush1.msra.mxu0 %v565
        %3352 = vmatprep.subr.mxu0 0.0
        %3353 = vmatpush1.msra.mxu0 %v566
        %3354 = vmatprep.subr.mxu0 0.0
        %3355 = vmatpush1.msra.mxu0 %v567
        %3356 = vmatprep.subr.mxu0 0.0
        %3357 = vmatpush1.msra.mxu0 %v568
        %3358 = vmatprep.subr.mxu0 0.0
        %3359 = vmatpush1.msra.mxu0 %v569
        %3360 = vmatprep.subr.mxu0 0.0
        %3361 = vmatpush1.msra.mxu0 %v570
        %3362 = vmatprep.subr.mxu0 0.0
        %3363 = vmatpush1.msra.mxu0 %v571
        %3364 = vmatprep.subr.mxu0 0.0
        %3365 = vmatpush1.msra.mxu0 %v572
        %3366 = vmatprep.subr.mxu0 0.0
        %3367 = vmatpush1.msra.mxu0 %v573
        %3368 = vmatprep.subr.mxu0 0.0
        %3369 = vmatpush1.msra.mxu0 %v574
        %3370 = vmatprep.subr.mxu0 0.0
        %3371 = vmatpush1.msra.mxu0 %v575
        %3372 = vmatprep.subr.mxu0 0.0
        %3373 = vmatpush1.msra.mxu0 %v576
        %3374 = vmatprep.subr.mxu0 0.0
        %3375 = vmatpush1.msra.mxu0 %v577
        %3376 = vmatprep.subr.mxu0 0.0
        %3377 = vmatpush1.msra.mxu0 %v578
        %3378 = vmatprep.subr.mxu0 0.0
        %3379 = vmatpush1.msra.mxu0 %v579
        %3380 = vmatprep.mubr.f32.mxu0 %v3309
        %3381 = vmatmul.mubr.f32.gmra.mrb[0].mxu0 %v3308
        %v3382 = vpop.f32.mrb[0].mxu0
        %v3383 = vadd.f32 0.0, %v3382
        %v3384 = vpop.f32.mrb[0].mxu0
        %3385 = vmatprep.mubr.f32.mxu0 %v3311
        %3386 = vmatmul.mubr.f32.gmra.mrb[0].mxu0 %v3310
        %v3387 = vpop.f32.mrb[0].mxu0
        %v3388 = vadd.f32 0.0, %v3387
        %v3389 = vpop.f32.mrb[0].mxu0
        %3390 = vmatprep.mubr.f32.mxu0 %v3313
        %3391 = vmatmul.mubr.f32.gmra.mrb[0].mxu0 %v3312
        %v3392 = vpop.f32.mrb[0].mxu0
        %v3393 = vadd.f32 0.0, %v3392
        %v3394 = vpop.f32.mrb[0].mxu0
        %3395 = vmatprep.mubr.f32.mxu0 %v3315
        %3396 = vmatmul.mubr.f32.gmra.mrb[0].mxu0 %v3314
        %v3397 = vpop.f32.mrb[0].mxu0
        %v3398 = vadd.f32 0.0, %v3397
        %v3399 = vpop.f32.mrb[0].mxu0
        %3400 = vdwg.mxu0
        %v3401 = vmul.f32 %v3383, %v3213
        %v3402 = vmul.f32 %v3388, %v3213
        %v3403 = vmul.f32 %v3393, %v3213
        %v3404 = vmul.f32 %v3398, %v3213
        %v3405 = vadd.f32 %v3203, %v3401
        %v3406 = vadd.f32 %v3204, %v3402
        %v3407 = vadd.f32 %v3205, %v3403
        %v3408 = vadd.f32 %v3206, %v3404
        %s3409 = scalar_lea.vmem %s13, 4
        %v3410 = vld [vmem:[%s3409] sm:$0x1]
        %v3412 = vlaneseq
        %v3413 = vshrl.u32 %v3412, 7
        %v3414 = vsub.s32 0, %v3413
        %v3415 = vrot.slane %v3410, %v3414
        %v3417 = vmul.f32 %v2254, %v3415
        %v3418 = vmul.f32 %v2259, %v3415
        %v3419 = vmul.f32 %v2264, %v3415
        %v3420 = vmul.f32 %v2269, %v3415
        %3421 = vmatprep.subr.mxu0 %v517
        %3422 = vmatpush1.msra.mxu0 %v516
        %3423 = vmatprep.subr.mxu0 %v519
        %3424 = vmatpush1.msra.mxu0 %v518
        %3425 = vmatprep.subr.mxu0 %v521
        %3426 = vmatpush1.msra.mxu0 %v520
        %3427 = vmatprep.subr.mxu0 %v523
        %3428 = vmatpush1.msra.mxu0 %v522
        %3429 = vmatprep.subr.mxu0 %v525
        %3430 = vmatpush1.msra.mxu0 %v524
        %3431 = vmatprep.subr.mxu0 %v527
        %3432 = vmatpush1.msra.mxu0 %v526
        %3433 = vmatprep.subr.mxu0 %v529
        %3434 = vmatpush1.msra.mxu0 %v528
        %3435 = vmatprep.subr.mxu0 %v531
        %3436 = vmatpush1.msra.mxu0 %v530
        %3437 = vmatprep.subr.mxu0 %v533
        %3438 = vmatpush1.msra.mxu0 %v532
        %3439 = vmatprep.subr.mxu0 %v535
        %3440 = vmatpush1.msra.mxu0 %v534
        %3441 = vmatprep.subr.mxu0 %v537
        %3442 = vmatpush1.msra.mxu0 %v536
        %3443 = vmatprep.subr.mxu0 %v539
        %3444 = vmatpush1.msra.mxu0 %v538
        %3445 = vmatprep.subr.mxu0 %v541
        %3446 = vmatpush1.msra.mxu0 %v540
        %3447 = vmatprep.subr.mxu0 %v543
        %3448 = vmatpush1.msra.mxu0 %v542
        %3449 = vmatprep.subr.mxu0 %v545
        %3450 = vmatpush1.msra.mxu0 %v544
        %3451 = vmatprep.subr.mxu0 %v547
        %3452 = vmatpush1.msra.mxu0 %v546
        %3453 = vmatprep.subr.mxu0 0.0
        %3454 = vmatpush1.msra.mxu0 0.0
        %3455 = vmatprep.subr.mxu0 0.0
        %3456 = vmatpush1.msra.mxu0 0.0
        %3457 = vmatprep.subr.mxu0 0.0
        %3458 = vmatpush1.msra.mxu0 0.0
        %3459 = vmatprep.subr.mxu0 0.0
        %3460 = vmatpush1.msra.mxu0 0.0
        %3461 = vmatprep.subr.mxu0 0.0
        %3462 = vmatpush1.msra.mxu0 0.0
        %3463 = vmatprep.subr.mxu0 0.0
        %3464 = vmatpush1.msra.mxu0 0.0
        %3465 = vmatprep.subr.mxu0 0.0
        %3466 = vmatpush1.msra.mxu0 0.0
        %3467 = vmatprep.subr.mxu0 0.0
        %3468 = vmatpush1.msra.mxu0 0.0
        %3469 = vmatprep.subr.mxu0 0.0
        %3470 = vmatpush1.msra.mxu0 0.0
        %3471 = vmatprep.subr.mxu0 0.0
        %3472 = vmatpush1.msra.mxu0 0.0
        %3473 = vmatprep.subr.mxu0 0.0
        %3474 = vmatpush1.msra.mxu0 0.0
        %3475 = vmatprep.subr.mxu0 0.0
        %3476 = vmatpush1.msra.mxu0 0.0
        %3477 = vmatprep.subr.mxu0 0.0
        %3478 = vmatpush1.msra.mxu0 0.0
        %3479 = vmatprep.subr.mxu0 0.0
        %3480 = vmatpush1.msra.mxu0 0.0
        %3481 = vmatprep.subr.mxu0 0.0
        %3482 = vmatpush1.msra.mxu0 0.0
        %3483 = vmatprep.subr.mxu0 0.0
        %3484 = vmatpush1.msra.mxu0 0.0
        %3485 = vmatprep.mubr.f32.mxu0 0.0
        %3486 = vmatmul.mubr.f32.gmra.mrb[0].mxu0 %v3417
        %v3487 = vpop.f32.mrb[0].mxu0
        %v3488 = vadd.f32 0.0, %v3487
        %v3489 = vpop.f32.mrb[0].mxu0
        %v3490 = vadd.f32 0.0, %v3489
        %3491 = vmatprep.mubr.f32.mxu0 0.0
        %3492 = vmatmul.mubr.f32.gmra.mrb[0].mxu0 %v3418
        %v3493 = vpop.f32.mrb[0].mxu0
        %v3494 = vadd.f32 0.0, %v3493
        %v3495 = vpop.f32.mrb[0].mxu0
        %v3496 = vadd.f32 0.0, %v3495
        %3497 = vmatprep.mubr.f32.mxu0 0.0
        %3498 = vmatmul.mubr.f32.gmra.mrb[0].mxu0 %v3419
        %v3499 = vpop.f32.mrb[0].mxu0
        %v3500 = vadd.f32 0.0, %v3499
        %v3501 = vpop.f32.mrb[0].mxu0
        %v3502 = vadd.f32 0.0, %v3501
        %3503 = vmatprep.mubr.f32.mxu0 0.0
        %3504 = vmatmul.mubr.f32.gmra.mrb[0].mxu0 %v3420
        %v3505 = vpop.f32.mrb[0].mxu0
        %v3506 = vadd.f32 0.0, %v3505
        %v3507 = vpop.f32.mrb[0].mxu0
        %v3508 = vadd.f32 0.0, %v3507
        %3509 = vdwg.mxu0
        %v3510 = vmul.f32 %v2584, %v3488
        %v3511 = vmul.f32 %v2586, %v3490
        %v3512 = vmul.f32 %v2590, %v3494
        %v3513 = vmul.f32 %v2592, %v3496
        %v3514 = vmul.f32 %v2596, %v3500
        %v3515 = vmul.f32 %v2598, %v3502
        %v3516 = vmul.f32 %v2602, %v3506
        %v3517 = vmul.f32 %v2604, %v3508
        %3518 = vmatprep.subr.mxu0 0.0
        %3519 = vmatpush1.msra.mxu0 %v548
        %3520 = vmatprep.subr.mxu0 0.0
        %3521 = vmatpush1.msra.mxu0 %v549
        %3522 = vmatprep.subr.mxu0 0.0
        %3523 = vmatpush1.msra.mxu0 %v550
        %3524 = vmatprep.subr.mxu0 0.0
        %3525 = vmatpush1.msra.mxu0 %v551
        %3526 = vmatprep.subr.mxu0 0.0
        %3527 = vmatpush1.msra.mxu0 %v552
        %3528 = vmatprep.subr.mxu0 0.0
        %3529 = vmatpush1.msra.mxu0 %v553
        %3530 = vmatprep.subr.mxu0 0.0
        %3531 = vmatpush1.msra.mxu0 %v554
        %3532 = vmatprep.subr.mxu0 0.0
        %3533 = vmatpush1.msra.mxu0 %v555
        %3534 = vmatprep.subr.mxu0 0.0
        %3535 = vmatpush1.msra.mxu0 %v556
        %3536 = vmatprep.subr.mxu0 0.0
        %3537 = vmatpush1.msra.mxu0 %v557
        %3538 = vmatprep.subr.mxu0 0.0
        %3539 = vmatpush1.msra.mxu0 %v558
        %3540 = vmatprep.subr.mxu0 0.0
        %3541 = vmatpush1.msra.mxu0 %v559
        %3542 = vmatprep.subr.mxu0 0.0
        %3543 = vmatpush1.msra.mxu0 %v560
        %3544 = vmatprep.subr.mxu0 0.0
        %3545 = vmatpush1.msra.mxu0 %v561
        %3546 = vmatprep.subr.mxu0 0.0
        %3547 = vmatpush1.msra.mxu0 %v562
        %3548 = vmatprep.subr.mxu0 0.0
        %3549 = vmatpush1.msra.mxu0 %v563
        %3550 = vmatprep.subr.mxu0 0.0
        %3551 = vmatpush1.msra.mxu0 %v564
        %3552 = vmatprep.subr.mxu0 0.0
        %3553 = vmatpush1.msra.mxu0 %v565
        %3554 = vmatprep.subr.mxu0 0.0
        %3555 = vmatpush1.msra.mxu0 %v566
        %3556 = vmatprep.subr.mxu0 0.0
        %3557 = vmatpush1.msra.mxu0 %v567
        %3558 = vmatprep.subr.mxu0 0.0
        %3559 = vmatpush1.msra.mxu0 %v568
        %3560 = vmatprep.subr.mxu0 0.0
        %3561 = vmatpush1.msra.mxu0 %v569
        %3562 = vmatprep.subr.mxu0 0.0
        %3563 = vmatpush1.msra.mxu0 %v570
        %3564 = vmatprep.subr.mxu0 0.0
        %3565 = vmatpush1.msra.mxu0 %v571
        %3566 = vmatprep.subr.mxu0 0.0
        %3567 = vmatpush1.msra.mxu0 %v572
        %3568 = vmatprep.subr.mxu0 0.0
        %3569 = vmatpush1.msra.mxu0 %v573
        %3570 = vmatprep.subr.mxu0 0.0
        %3571 = vmatpush1.msra.mxu0 %v574
        %3572 = vmatprep.subr.mxu0 0.0
        %3573 = vmatpush1.msra.mxu0 %v575
        %3574 = vmatprep.subr.mxu0 0.0
        %3575 = vmatpush1.msra.mxu0 %v576
        %3576 = vmatprep.subr.mxu0 0.0
        %3577 = vmatpush1.msra.mxu0 %v577
        %3578 = vmatprep.subr.mxu0 0.0
        %3579 = vmatpush1.msra.mxu0 %v578
        %3580 = vmatprep.subr.mxu0 0.0
        %3581 = vmatpush1.msra.mxu0 %v579
        %3582 = vmatprep.mubr.f32.mxu0 %v3511
        %3583 = vmatmul.mubr.f32.gmra.mrb[0].mxu0 %v3510
        %v3584 = vpop.f32.mrb[0].mxu0
        %v3585 = vadd.f32 0.0, %v3584
        %v3586 = vpop.f32.mrb[0].mxu0
        %3587 = vmatprep.mubr.f32.mxu0 %v3513
        %3588 = vmatmul.mubr.f32.gmra.mrb[0].mxu0 %v3512
        %v3589 = vpop.f32.mrb[0].mxu0
        %v3590 = vadd.f32 0.0, %v3589
        %v3591 = vpop.f32.mrb[0].mxu0
        %3592 = vmatprep.mubr.f32.mxu0 %v3515
        %3593 = vmatmul.mubr.f32.gmra.mrb[0].mxu0 %v3514
        %v3594 = vpop.f32.mrb[0].mxu0
        %v3595 = vadd.f32 0.0, %v3594
        %v3596 = vpop.f32.mrb[0].mxu0
        %3597 = vmatprep.mubr.f32.mxu0 %v3517
        %3598 = vmatmul.mubr.f32.gmra.mrb[0].mxu0 %v3516
        %v3599 = vpop.f32.mrb[0].mxu0
        %v3600 = vadd.f32 0.0, %v3599
        %v3601 = vpop.f32.mrb[0].mxu0
        %3602 = vdwg.mxu0
        %v3603 = vmul.f32 %v3585, %v3415
        %v3604 = vmul.f32 %v3590, %v3415
        %v3605 = vmul.f32 %v3595, %v3415
        %v3606 = vmul.f32 %v3600, %v3415
        %v3607 = vadd.f32 %v3405, %v3603
        %v3608 = vadd.f32 %v3406, %v3604
        %v3609 = vadd.f32 %v3407, %v3605
        %v3610 = vadd.f32 %v3408, %v3606
        %s3611 = scalar_lea.vmem %s13, 5
        %v3612 = vld [vmem:[%s3611] sm:$0x1]
        %v3614 = vlaneseq
        %v3615 = vshrl.u32 %v3614, 7
        %v3616 = vsub.s32 0, %v3615
        %v3617 = vrot.slane %v3612, %v3616
        %v3619 = vmul.f32 %v2254, %v3617
        %v3620 = vmul.f32 %v2259, %v3617
        %v3621 = vmul.f32 %v2264, %v3617
        %v3622 = vmul.f32 %v2269, %v3617
        %3623 = vmatprep.subr.mxu0 %v517
        %3624 = vmatpush1.msra.mxu0 %v516
        %3625 = vmatprep.subr.mxu0 %v519
        %3626 = vmatpush1.msra.mxu0 %v518
        %3627 = vmatprep.subr.mxu0 %v521
        %3628 = vmatpush1.msra.mxu0 %v520
        %3629 = vmatprep.subr.mxu0 %v523
        %3630 = vmatpush1.msra.mxu0 %v522
        %3631 = vmatprep.subr.mxu0 %v525
        %3632 = vmatpush1.msra.mxu0 %v524
        %3633 = vmatprep.subr.mxu0 %v527
        %3634 = vmatpush1.msra.mxu0 %v526
        %3635 = vmatprep.subr.mxu0 %v529
        %3636 = vmatpush1.msra.mxu0 %v528
        %3637 = vmatprep.subr.mxu0 %v531
        %3638 = vmatpush1.msra.mxu0 %v530
        %3639 = vmatprep.subr.mxu0 %v533
        %3640 = vmatpush1.msra.mxu0 %v532
        %3641 = vmatprep.subr.mxu0 %v535
        %3642 = vmatpush1.msra.mxu0 %v534
        %3643 = vmatprep.subr.mxu0 %v537
        %3644 = vmatpush1.msra.mxu0 %v536
        %3645 = vmatprep.subr.mxu0 %v539
        %3646 = vmatpush1.msra.mxu0 %v538
        %3647 = vmatprep.subr.mxu0 %v541
        %3648 = vmatpush1.msra.mxu0 %v540
        %3649 = vmatprep.subr.mxu0 %v543
        %3650 = vmatpush1.msra.mxu0 %v542
        %3651 = vmatprep.subr.mxu0 %v545
        %3652 = vmatpush1.msra.mxu0 %v544
        %3653 = vmatprep.subr.mxu0 %v547
        %3654 = vmatpush1.msra.mxu0 %v546
        %3655 = vmatprep.subr.mxu0 0.0
        %3656 = vmatpush1.msra.mxu0 0.0
        %3657 = vmatprep.subr.mxu0 0.0
        %3658 = vmatpush1.msra.mxu0 0.0
        %3659 = vmatprep.subr.mxu0 0.0
        %3660 = vmatpush1.msra.mxu0 0.0
        %3661 = vmatprep.subr.mxu0 0.0
        %3662 = vmatpush1.msra.mxu0 0.0
        %3663 = vmatprep.subr.mxu0 0.0
        %3664 = vmatpush1.msra.mxu0 0.0
        %3665 = vmatprep.subr.mxu0 0.0
        %3666 = vmatpush1.msra.mxu0 0.0
        %3667 = vmatprep.subr.mxu0 0.0
        %3668 = vmatpush1.msra.mxu0 0.0
        %3669 = vmatprep.subr.mxu0 0.0
        %3670 = vmatpush1.msra.mxu0 0.0
        %3671 = vmatprep.subr.mxu0 0.0
        %3672 = vmatpush1.msra.mxu0 0.0
        %3673 = vmatprep.subr.mxu0 0.0
        %3674 = vmatpush1.msra.mxu0 0.0
        %3675 = vmatprep.subr.mxu0 0.0
        %3676 = vmatpush1.msra.mxu0 0.0
        %3677 = vmatprep.subr.mxu0 0.0
        %3678 = vmatpush1.msra.mxu0 0.0
        %3679 = vmatprep.subr.mxu0 0.0
        %3680 = vmatpush1.msra.mxu0 0.0
        %3681 = vmatprep.subr.mxu0 0.0
        %3682 = vmatpush1.msra.mxu0 0.0
        %3683 = vmatprep.subr.mxu0 0.0
        %3684 = vmatpush1.msra.mxu0 0.0
        %3685 = vmatprep.subr.mxu0 0.0
        %3686 = vmatpush1.msra.mxu0 0.0
        %3687 = vmatprep.mubr.f32.mxu0 0.0
        %3688 = vmatmul.mubr.f32.gmra.mrb[0].mxu0 %v3619
        %v3689 = vpop.f32.mrb[0].mxu0
        %v3690 = vadd.f32 0.0, %v3689
        %v3691 = vpop.f32.mrb[0].mxu0
        %v3692 = vadd.f32 0.0, %v3691
        %3693 = vmatprep.mubr.f32.mxu0 0.0
        %3694 = vmatmul.mubr.f32.gmra.mrb[0].mxu0 %v3620
        %v3695 = vpop.f32.mrb[0].mxu0
        %v3696 = vadd.f32 0.0, %v3695
        %v3697 = vpop.f32.mrb[0].mxu0
        %v3698 = vadd.f32 0.0, %v3697
        %3699 = vmatprep.mubr.f32.mxu0 0.0
        %3700 = vmatmul.mubr.f32.gmra.mrb[0].mxu0 %v3621
        %v3701 = vpop.f32.mrb[0].mxu0
        %v3702 = vadd.f32 0.0, %v3701
        %v3703 = vpop.f32.mrb[0].mxu0
        %v3704 = vadd.f32 0.0, %v3703
        %3705 = vmatprep.mubr.f32.mxu0 0.0
        %3706 = vmatmul.mubr.f32.gmra.mrb[0].mxu0 %v3622
        %v3707 = vpop.f32.mrb[0].mxu0
        %v3708 = vadd.f32 0.0, %v3707
        %v3709 = vpop.f32.mrb[0].mxu0
        %v3710 = vadd.f32 0.0, %v3709
        %3711 = vdwg.mxu0
        %v3712 = vmul.f32 %v2584, %v3690
        %v3713 = vmul.f32 %v2586, %v3692
        %v3714 = vmul.f32 %v2590, %v3696
        %v3715 = vmul.f32 %v2592, %v3698
        %v3716 = vmul.f32 %v2596, %v3702
        %v3717 = vmul.f32 %v2598, %v3704
        %v3718 = vmul.f32 %v2602, %v3708
        %v3719 = vmul.f32 %v2604, %v3710
        %3720 = vmatprep.subr.mxu0 0.0
        %3721 = vmatpush1.msra.mxu0 %v548
        %3722 = vmatprep.subr.mxu0 0.0
        %3723 = vmatpush1.msra.mxu0 %v549
        %3724 = vmatprep.subr.mxu0 0.0
        %3725 = vmatpush1.msra.mxu0 %v550
        %3726 = vmatprep.subr.mxu0 0.0
        %3727 = vmatpush1.msra.mxu0 %v551
        %3728 = vmatprep.subr.mxu0 0.0
        %3729 = vmatpush1.msra.mxu0 %v552
        %3730 = vmatprep.subr.mxu0 0.0
        %3731 = vmatpush1.msra.mxu0 %v553
        %3732 = vmatprep.subr.mxu0 0.0
        %3733 = vmatpush1.msra.mxu0 %v554
        %3734 = vmatprep.subr.mxu0 0.0
        %3735 = vmatpush1.msra.mxu0 %v555
        %3736 = vmatprep.subr.mxu0 0.0
        %3737 = vmatpush1.msra.mxu0 %v556
        %3738 = vmatprep.subr.mxu0 0.0
        %3739 = vmatpush1.msra.mxu0 %v557
        %3740 = vmatprep.subr.mxu0 0.0
        %3741 = vmatpush1.msra.mxu0 %v558
        %3742 = vmatprep.subr.mxu0 0.0
        %3743 = vmatpush1.msra.mxu0 %v559
        %3744 = vmatprep.subr.mxu0 0.0
        %3745 = vmatpush1.msra.mxu0 %v560
        %3746 = vmatprep.subr.mxu0 0.0
        %3747 = vmatpush1.msra.mxu0 %v561
        %3748 = vmatprep.subr.mxu0 0.0
        %3749 = vmatpush1.msra.mxu0 %v562
        %3750 = vmatprep.subr.mxu0 0.0
        %3751 = vmatpush1.msra.mxu0 %v563
        %3752 = vmatprep.subr.mxu0 0.0
        %3753 = vmatpush1.msra.mxu0 %v564
        %3754 = vmatprep.subr.mxu0 0.0
        %3755 = vmatpush1.msra.mxu0 %v565
        %3756 = vmatprep.subr.mxu0 0.0
        %3757 = vmatpush1.msra.mxu0 %v566
        %3758 = vmatprep.subr.mxu0 0.0
        %3759 = vmatpush1.msra.mxu0 %v567
        %3760 = vmatprep.subr.mxu0 0.0
        %3761 = vmatpush1.msra.mxu0 %v568
        %3762 = vmatprep.subr.mxu0 0.0
        %3763 = vmatpush1.msra.mxu0 %v569
        %3764 = vmatprep.subr.mxu0 0.0
        %3765 = vmatpush1.msra.mxu0 %v570
        %3766 = vmatprep.subr.mxu0 0.0
        %3767 = vmatpush1.msra.mxu0 %v571
        %3768 = vmatprep.subr.mxu0 0.0
        %3769 = vmatpush1.msra.mxu0 %v572
        %3770 = vmatprep.subr.mxu0 0.0
        %3771 = vmatpush1.msra.mxu0 %v573
        %3772 = vmatprep.subr.mxu0 0.0
        %3773 = vmatpush1.msra.mxu0 %v574
        %3774 = vmatprep.subr.mxu0 0.0
        %3775 = vmatpush1.msra.mxu0 %v575
        %3776 = vmatprep.subr.mxu0 0.0
        %3777 = vmatpush1.msra.mxu0 %v576
        %3778 = vmatprep.subr.mxu0 0.0
        %3779 = vmatpush1.msra.mxu0 %v577
        %3780 = vmatprep.subr.mxu0 0.0
        %3781 = vmatpush1.msra.mxu0 %v578
        %3782 = vmatprep.subr.mxu0 0.0
        %3783 = vmatpush1.msra.mxu0 %v579
        %3784 = vmatprep.mubr.f32.mxu0 %v3713
        %3785 = vmatmul.mubr.f32.gmra.mrb[0].mxu0 %v3712
        %v3786 = vpop.f32.mrb[0].mxu0
        %v3787 = vadd.f32 0.0, %v3786
        %v3788 = vpop.f32.mrb[0].mxu0
        %3789 = vmatprep.mubr.f32.mxu0 %v3715
        %3790 = vmatmul.mubr.f32.gmra.mrb[0].mxu0 %v3714
        %v3791 = vpop.f32.mrb[0].mxu0
        %v3792 = vadd.f32 0.0, %v3791
        %v3793 = vpop.f32.mrb[0].mxu0
        %3794 = vmatprep.mubr.f32.mxu0 %v3717
        %3795 = vmatmul.mubr.f32.gmra.mrb[0].mxu0 %v3716
        %v3796 = vpop.f32.mrb[0].mxu0
        %v3797 = vadd.f32 0.0, %v3796
        %v3798 = vpop.f32.mrb[0].mxu0
        %3799 = vmatprep.mubr.f32.mxu0 %v3719
        %3800 = vmatmul.mubr.f32.gmra.mrb[0].mxu0 %v3718
        %v3801 = vpop.f32.mrb[0].mxu0
        %v3802 = vadd.f32 0.0, %v3801
        %v3803 = vpop.f32.mrb[0].mxu0
        %3804 = vdwg.mxu0
        %v3805 = vmul.f32 %v3787, %v3617
        %v3806 = vmul.f32 %v3792, %v3617
        %v3807 = vmul.f32 %v3797, %v3617
        %v3808 = vmul.f32 %v3802, %v3617
        %v3809 = vadd.f32 %v3607, %v3805
        %v3810 = vadd.f32 %v3608, %v3806
        %v3811 = vadd.f32 %v3609, %v3807
        %v3812 = vadd.f32 %v3610, %v3808
        %s3813 = scalar_lea.vmem %s13, 6
        %v3814 = vld [vmem:[%s3813] sm:$0x1]
        %v3816 = vlaneseq
        %v3817 = vshrl.u32 %v3816, 7
        %v3818 = vsub.s32 0, %v3817
        %v3819 = vrot.slane %v3814, %v3818
        %v3821 = vmul.f32 %v2254, %v3819
        %v3822 = vmul.f32 %v2259, %v3819
        %v3823 = vmul.f32 %v2264, %v3819
        %v3824 = vmul.f32 %v2269, %v3819
        %3825 = vmatprep.subr.mxu0 %v517
        %3826 = vmatpush1.msra.mxu0 %v516
        %3827 = vmatprep.subr.mxu0 %v519
        %3828 = vmatpush1.msra.mxu0 %v518
        %3829 = vmatprep.subr.mxu0 %v521
        %3830 = vmatpush1.msra.mxu0 %v520
        %3831 = vmatprep.subr.mxu0 %v523
        %3832 = vmatpush1.msra.mxu0 %v522
        %3833 = vmatprep.subr.mxu0 %v525
        %3834 = vmatpush1.msra.mxu0 %v524
        %3835 = vmatprep.subr.mxu0 %v527
        %3836 = vmatpush1.msra.mxu0 %v526
        %3837 = vmatprep.subr.mxu0 %v529
        %3838 = vmatpush1.msra.mxu0 %v528
        %3839 = vmatprep.subr.mxu0 %v531
        %3840 = vmatpush1.msra.mxu0 %v530
        %3841 = vmatprep.subr.mxu0 %v533
        %3842 = vmatpush1.msra.mxu0 %v532
        %3843 = vmatprep.subr.mxu0 %v535
        %3844 = vmatpush1.msra.mxu0 %v534
        %3845 = vmatprep.subr.mxu0 %v537
        %3846 = vmatpush1.msra.mxu0 %v536
        %3847 = vmatprep.subr.mxu0 %v539
        %3848 = vmatpush1.msra.mxu0 %v538
        %3849 = vmatprep.subr.mxu0 %v541
        %3850 = vmatpush1.msra.mxu0 %v540
        %3851 = vmatprep.subr.mxu0 %v543
        %3852 = vmatpush1.msra.mxu0 %v542
        %3853 = vmatprep.subr.mxu0 %v545
        %3854 = vmatpush1.msra.mxu0 %v544
        %3855 = vmatprep.subr.mxu0 %v547
        %3856 = vmatpush1.msra.mxu0 %v546
        %3857 = vmatprep.subr.mxu0 0.0
        %3858 = vmatpush1.msra.mxu0 0.0
        %3859 = vmatprep.subr.mxu0 0.0
        %3860 = vmatpush1.msra.mxu0 0.0
        %3861 = vmatprep.subr.mxu0 0.0
        %3862 = vmatpush1.msra.mxu0 0.0
        %3863 = vmatprep.subr.mxu0 0.0
        %3864 = vmatpush1.msra.mxu0 0.0
        %3865 = vmatprep.subr.mxu0 0.0
        %3866 = vmatpush1.msra.mxu0 0.0
        %3867 = vmatprep.subr.mxu0 0.0
        %3868 = vmatpush1.msra.mxu0 0.0
        %3869 = vmatprep.subr.mxu0 0.0
        %3870 = vmatpush1.msra.mxu0 0.0
        %3871 = vmatprep.subr.mxu0 0.0
        %3872 = vmatpush1.msra.mxu0 0.0
        %3873 = vmatprep.subr.mxu0 0.0
        %3874 = vmatpush1.msra.mxu0 0.0
        %3875 = vmatprep.subr.mxu0 0.0
        %3876 = vmatpush1.msra.mxu0 0.0
        %3877 = vmatprep.subr.mxu0 0.0
        %3878 = vmatpush1.msra.mxu0 0.0
        %3879 = vmatprep.subr.mxu0 0.0
        %3880 = vmatpush1.msra.mxu0 0.0
        %3881 = vmatprep.subr.mxu0 0.0
        %3882 = vmatpush1.msra.mxu0 0.0
        %3883 = vmatprep.subr.mxu0 0.0
        %3884 = vmatpush1.msra.mxu0 0.0
        %3885 = vmatprep.subr.mxu0 0.0
        %3886 = vmatpush1.msra.mxu0 0.0
        %3887 = vmatprep.subr.mxu0 0.0
        %3888 = vmatpush1.msra.mxu0 0.0
        %3889 = vmatprep.mubr.f32.mxu0 0.0
        %3890 = vmatmul.mubr.f32.gmra.mrb[0].mxu0 %v3821
        %v3891 = vpop.f32.mrb[0].mxu0
        %v3892 = vadd.f32 0.0, %v3891
        %v3893 = vpop.f32.mrb[0].mxu0
        %v3894 = vadd.f32 0.0, %v3893
        %3895 = vmatprep.mubr.f32.mxu0 0.0
        %3896 = vmatmul.mubr.f32.gmra.mrb[0].mxu0 %v3822
        %v3897 = vpop.f32.mrb[0].mxu0
        %v3898 = vadd.f32 0.0, %v3897
        %v3899 = vpop.f32.mrb[0].mxu0
        %v3900 = vadd.f32 0.0, %v3899
        %3901 = vmatprep.mubr.f32.mxu0 0.0
        %3902 = vmatmul.mubr.f32.gmra.mrb[0].mxu0 %v3823
        %v3903 = vpop.f32.mrb[0].mxu0
        %v3904 = vadd.f32 0.0, %v3903
        %v3905 = vpop.f32.mrb[0].mxu0
        %v3906 = vadd.f32 0.0, %v3905
        %3907 = vmatprep.mubr.f32.mxu0 0.0
        %3908 = vmatmul.mubr.f32.gmra.mrb[0].mxu0 %v3824
        %v3909 = vpop.f32.mrb[0].mxu0
        %v3910 = vadd.f32 0.0, %v3909
        %v3911 = vpop.f32.mrb[0].mxu0
        %v3912 = vadd.f32 0.0, %v3911
        %3913 = vdwg.mxu0
        %v3914 = vmul.f32 %v2584, %v3892
        %v3915 = vmul.f32 %v2586, %v3894
        %v3916 = vmul.f32 %v2590, %v3898
        %v3917 = vmul.f32 %v2592, %v3900
        %v3918 = vmul.f32 %v2596, %v3904
        %v3919 = vmul.f32 %v2598, %v3906
        %v3920 = vmul.f32 %v2602, %v3910
        %v3921 = vmul.f32 %v2604, %v3912
        %3922 = vmatprep.subr.mxu0 0.0
        %3923 = vmatpush1.msra.mxu0 %v548
        %3924 = vmatprep.subr.mxu0 0.0
        %3925 = vmatpush1.msra.mxu0 %v549
        %3926 = vmatprep.subr.mxu0 0.0
        %3927 = vmatpush1.msra.mxu0 %v550
        %3928 = vmatprep.subr.mxu0 0.0
        %3929 = vmatpush1.msra.mxu0 %v551
        %3930 = vmatprep.subr.mxu0 0.0
        %3931 = vmatpush1.msra.mxu0 %v552
        %3932 = vmatprep.subr.mxu0 0.0
        %3933 = vmatpush1.msra.mxu0 %v553
        %3934 = vmatprep.subr.mxu0 0.0
        %3935 = vmatpush1.msra.mxu0 %v554
        %3936 = vmatprep.subr.mxu0 0.0
        %3937 = vmatpush1.msra.mxu0 %v555
        %3938 = vmatprep.subr.mxu0 0.0
        %3939 = vmatpush1.msra.mxu0 %v556
        %3940 = vmatprep.subr.mxu0 0.0
        %3941 = vmatpush1.msra.mxu0 %v557
        %3942 = vmatprep.subr.mxu0 0.0
        %3943 = vmatpush1.msra.mxu0 %v558
        %3944 = vmatprep.subr.mxu0 0.0
        %3945 = vmatpush1.msra.mxu0 %v559
        %3946 = vmatprep.subr.mxu0 0.0
        %3947 = vmatpush1.msra.mxu0 %v560
        %3948 = vmatprep.subr.mxu0 0.0
        %3949 = vmatpush1.msra.mxu0 %v561
        %3950 = vmatprep.subr.mxu0 0.0
        %3951 = vmatpush1.msra.mxu0 %v562
        %3952 = vmatprep.subr.mxu0 0.0
        %3953 = vmatpush1.msra.mxu0 %v563
        %3954 = vmatprep.subr.mxu0 0.0
        %3955 = vmatpush1.msra.mxu0 %v564
        %3956 = vmatprep.subr.mxu0 0.0
        %3957 = vmatpush1.msra.mxu0 %v565
        %3958 = vmatprep.subr.mxu0 0.0
        %3959 = vmatpush1.msra.mxu0 %v566
        %3960 = vmatprep.subr.mxu0 0.0
        %3961 = vmatpush1.msra.mxu0 %v567
        %3962 = vmatprep.subr.mxu0 0.0
        %3963 = vmatpush1.msra.mxu0 %v568
        %3964 = vmatprep.subr.mxu0 0.0
        %3965 = vmatpush1.msra.mxu0 %v569
        %3966 = vmatprep.subr.mxu0 0.0
        %3967 = vmatpush1.msra.mxu0 %v570
        %3968 = vmatprep.subr.mxu0 0.0
        %3969 = vmatpush1.msra.mxu0 %v571
        %3970 = vmatprep.subr.mxu0 0.0
        %3971 = vmatpush1.msra.mxu0 %v572
        %3972 = vmatprep.subr.mxu0 0.0
        %3973 = vmatpush1.msra.mxu0 %v573
        %3974 = vmatprep.subr.mxu0 0.0
        %3975 = vmatpush1.msra.mxu0 %v574
        %3976 = vmatprep.subr.mxu0 0.0
        %3977 = vmatpush1.msra.mxu0 %v575
        %3978 = vmatprep.subr.mxu0 0.0
        %3979 = vmatpush1.msra.mxu0 %v576
        %3980 = vmatprep.subr.mxu0 0.0
        %3981 = vmatpush1.msra.mxu0 %v577
        %3982 = vmatprep.subr.mxu0 0.0
        %3983 = vmatpush1.msra.mxu0 %v578
        %3984 = vmatprep.subr.mxu0 0.0
        %3985 = vmatpush1.msra.mxu0 %v579
        %3986 = vmatprep.mubr.f32.mxu0 %v3915
        %3987 = vmatmul.mubr.f32.gmra.mrb[0].mxu0 %v3914
        %v3988 = vpop.f32.mrb[0].mxu0
        %v3989 = vadd.f32 0.0, %v3988
        %v3990 = vpop.f32.mrb[0].mxu0
        %3991 = vmatprep.mubr.f32.mxu0 %v3917
        %3992 = vmatmul.mubr.f32.gmra.mrb[0].mxu0 %v3916
        %v3993 = vpop.f32.mrb[0].mxu0
        %v3994 = vadd.f32 0.0, %v3993
        %v3995 = vpop.f32.mrb[0].mxu0
        %3996 = vmatprep.mubr.f32.mxu0 %v3919
        %3997 = vmatmul.mubr.f32.gmra.mrb[0].mxu0 %v3918
        %v3998 = vpop.f32.mrb[0].mxu0
        %v3999 = vadd.f32 0.0, %v3998
        %v4000 = vpop.f32.mrb[0].mxu0
        %4001 = vmatprep.mubr.f32.mxu0 %v3921
        %4002 = vmatmul.mubr.f32.gmra.mrb[0].mxu0 %v3920
        %v4003 = vpop.f32.mrb[0].mxu0
        %v4004 = vadd.f32 0.0, %v4003
        %v4005 = vpop.f32.mrb[0].mxu0
        %4006 = vdwg.mxu0
        %v4007 = vmul.f32 %v3989, %v3819
        %v4008 = vmul.f32 %v3994, %v3819
        %v4009 = vmul.f32 %v3999, %v3819
        %v4010 = vmul.f32 %v4004, %v3819
        %v4011 = vadd.f32 %v3809, %v4007
        %v4012 = vadd.f32 %v3810, %v4008
        %v4013 = vadd.f32 %v3811, %v4009
        %v4014 = vadd.f32 %v3812, %v4010
        %s4015 = scalar_lea.vmem %s13, 7
        %v4016 = vld [vmem:[%s4015] sm:$0x1]
        %v4018 = vlaneseq
        %v4019 = vshrl.u32 %v4018, 7
        %v4020 = vsub.s32 0, %v4019
        %v4021 = vrot.slane %v4016, %v4020
        %v4023 = vmul.f32 %v2254, %v4021
        %v4024 = vmul.f32 %v2259, %v4021
        %v4025 = vmul.f32 %v2264, %v4021
        %v4026 = vmul.f32 %v2269, %v4021
        %4027 = vmatprep.subr.mxu0 %v517
        %4028 = vmatpush1.msra.mxu0 %v516
        %4029 = vmatprep.subr.mxu0 %v519
        %4030 = vmatpush1.msra.mxu0 %v518
        %4031 = vmatprep.subr.mxu0 %v521
        %4032 = vmatpush1.msra.mxu0 %v520
        %4033 = vmatprep.subr.mxu0 %v523
        %4034 = vmatpush1.msra.mxu0 %v522
        %4035 = vmatprep.subr.mxu0 %v525
        %4036 = vmatpush1.msra.mxu0 %v524
        %4037 = vmatprep.subr.mxu0 %v527
        %4038 = vmatpush1.msra.mxu0 %v526
        %4039 = vmatprep.subr.mxu0 %v529
        %4040 = vmatpush1.msra.mxu0 %v528
        %4041 = vmatprep.subr.mxu0 %v531
        %4042 = vmatpush1.msra.mxu0 %v530
        %4043 = vmatprep.subr.mxu0 %v533
        %4044 = vmatpush1.msra.mxu0 %v532
        %4045 = vmatprep.subr.mxu0 %v535
        %4046 = vmatpush1.msra.mxu0 %v534
        %4047 = vmatprep.subr.mxu0 %v537
        %4048 = vmatpush1.msra.mxu0 %v536
        %4049 = vmatprep.subr.mxu0 %v539
        %4050 = vmatpush1.msra.mxu0 %v538
        %4051 = vmatprep.subr.mxu0 %v541
        %4052 = vmatpush1.msra.mxu0 %v540
        %4053 = vmatprep.subr.mxu0 %v543
        %4054 = vmatpush1.msra.mxu0 %v542
        %4055 = vmatprep.subr.mxu0 %v545
        %4056 = vmatpush1.msra.mxu0 %v544
        %4057 = vmatprep.subr.mxu0 %v547
        %4058 = vmatpush1.msra.mxu0 %v546
        %4059 = vmatprep.subr.mxu0 0.0
        %4060 = vmatpush1.msra.mxu0 0.0
        %4061 = vmatprep.subr.mxu0 0.0
        %4062 = vmatpush1.msra.mxu0 0.0
        %4063 = vmatprep.subr.mxu0 0.0
        %4064 = vmatpush1.msra.mxu0 0.0
        %4065 = vmatprep.subr.mxu0 0.0
        %4066 = vmatpush1.msra.mxu0 0.0
        %4067 = vmatprep.subr.mxu0 0.0
        %4068 = vmatpush1.msra.mxu0 0.0
        %4069 = vmatprep.subr.mxu0 0.0
        %4070 = vmatpush1.msra.mxu0 0.0
        %4071 = vmatprep.subr.mxu0 0.0
        %4072 = vmatpush1.msra.mxu0 0.0
        %4073 = vmatprep.subr.mxu0 0.0
        %4074 = vmatpush1.msra.mxu0 0.0
        %4075 = vmatprep.subr.mxu0 0.0
        %4076 = vmatpush1.msra.mxu0 0.0
        %4077 = vmatprep.subr.mxu0 0.0
        %4078 = vmatpush1.msra.mxu0 0.0
        %4079 = vmatprep.subr.mxu0 0.0
        %4080 = vmatpush1.msra.mxu0 0.0
        %4081 = vmatprep.subr.mxu0 0.0
        %4082 = vmatpush1.msra.mxu0 0.0
        %4083 = vmatprep.subr.mxu0 0.0
        %4084 = vmatpush1.msra.mxu0 0.0
        %4085 = vmatprep.subr.mxu0 0.0
        %4086 = vmatpush1.msra.mxu0 0.0
        %4087 = vmatprep.subr.mxu0 0.0
        %4088 = vmatpush1.msra.mxu0 0.0
        %4089 = vmatprep.subr.mxu0 0.0
        %4090 = vmatpush1.msra.mxu0 0.0
        %4091 = vmatprep.mubr.f32.mxu0 0.0
        %4092 = vmatmul.mubr.f32.gmra.mrb[0].mxu0 %v4023
        %v4093 = vpop.f32.mrb[0].mxu0
        %v4094 = vadd.f32 0.0, %v4093
        %v4095 = vpop.f32.mrb[0].mxu0
        %v4096 = vadd.f32 0.0, %v4095
        %4097 = vmatprep.mubr.f32.mxu0 0.0
        %4098 = vmatmul.mubr.f32.gmra.mrb[0].mxu0 %v4024
        %v4099 = vpop.f32.mrb[0].mxu0
        %v4100 = vadd.f32 0.0, %v4099
        %v4101 = vpop.f32.mrb[0].mxu0
        %v4102 = vadd.f32 0.0, %v4101
        %4103 = vmatprep.mubr.f32.mxu0 0.0
        %4104 = vmatmul.mubr.f32.gmra.mrb[0].mxu0 %v4025
        %v4105 = vpop.f32.mrb[0].mxu0
        %v4106 = vadd.f32 0.0, %v4105
        %v4107 = vpop.f32.mrb[0].mxu0
        %v4108 = vadd.f32 0.0, %v4107
        %4109 = vmatprep.mubr.f32.mxu0 0.0
        %4110 = vmatmul.mubr.f32.gmra.mrb[0].mxu0 %v4026
        %v4111 = vpop.f32.mrb[0].mxu0
        %v4112 = vadd.f32 0.0, %v4111
        %v4113 = vpop.f32.mrb[0].mxu0
        %v4114 = vadd.f32 0.0, %v4113
        %4115 = vdwg.mxu0
        %v4116 = vmul.f32 %v2584, %v4094
        %v4117 = vmul.f32 %v2586, %v4096
        %v4118 = vmul.f32 %v2590, %v4100
        %v4119 = vmul.f32 %v2592, %v4102
        %v4120 = vmul.f32 %v2596, %v4106
        %v4121 = vmul.f32 %v2598, %v4108
        %v4122 = vmul.f32 %v2602, %v4112
        %v4123 = vmul.f32 %v2604, %v4114
        %4124 = vmatprep.subr.mxu0 0.0
        %4125 = vmatpush1.msra.mxu0 %v548
        %4126 = vmatprep.subr.mxu0 0.0
        %4127 = vmatpush1.msra.mxu0 %v549
        %4128 = vmatprep.subr.mxu0 0.0
        %4129 = vmatpush1.msra.mxu0 %v550
        %4130 = vmatprep.subr.mxu0 0.0
        %4131 = vmatpush1.msra.mxu0 %v551
        %4132 = vmatprep.subr.mxu0 0.0
        %4133 = vmatpush1.msra.mxu0 %v552
        %4134 = vmatprep.subr.mxu0 0.0
        %4135 = vmatpush1.msra.mxu0 %v553
        %4136 = vmatprep.subr.mxu0 0.0
        %4137 = vmatpush1.msra.mxu0 %v554
        %4138 = vmatprep.subr.mxu0 0.0
        %4139 = vmatpush1.msra.mxu0 %v555
        %4140 = vmatprep.subr.mxu0 0.0
        %4141 = vmatpush1.msra.mxu0 %v556
        %4142 = vmatprep.subr.mxu0 0.0
        %4143 = vmatpush1.msra.mxu0 %v557
        %4144 = vmatprep.subr.mxu0 0.0
        %4145 = vmatpush1.msra.mxu0 %v558
        %4146 = vmatprep.subr.mxu0 0.0
        %4147 = vmatpush1.msra.mxu0 %v559
        %4148 = vmatprep.subr.mxu0 0.0
        %4149 = vmatpush1.msra.mxu0 %v560
        %4150 = vmatprep.subr.mxu0 0.0
        %4151 = vmatpush1.msra.mxu0 %v561
        %4152 = vmatprep.subr.mxu0 0.0
        %4153 = vmatpush1.msra.mxu0 %v562
        %4154 = vmatprep.subr.mxu0 0.0
        %4155 = vmatpush1.msra.mxu0 %v563
        %4156 = vmatprep.subr.mxu0 0.0
        %4157 = vmatpush1.msra.mxu0 %v564
        %4158 = vmatprep.subr.mxu0 0.0
        %4159 = vmatpush1.msra.mxu0 %v565
        %4160 = vmatprep.subr.mxu0 0.0
        %4161 = vmatpush1.msra.mxu0 %v566
        %4162 = vmatprep.subr.mxu0 0.0
        %4163 = vmatpush1.msra.mxu0 %v567
        %4164 = vmatprep.subr.mxu0 0.0
        %4165 = vmatpush1.msra.mxu0 %v568
        %4166 = vmatprep.subr.mxu0 0.0
        %4167 = vmatpush1.msra.mxu0 %v569
        %4168 = vmatprep.subr.mxu0 0.0
        %4169 = vmatpush1.msra.mxu0 %v570
        %4170 = vmatprep.subr.mxu0 0.0
        %4171 = vmatpush1.msra.mxu0 %v571
        %4172 = vmatprep.subr.mxu0 0.0
        %4173 = vmatpush1.msra.mxu0 %v572
        %4174 = vmatprep.subr.mxu0 0.0
        %4175 = vmatpush1.msra.mxu0 %v573
        %4176 = vmatprep.subr.mxu0 0.0
        %4177 = vmatpush1.msra.mxu0 %v574
        %4178 = vmatprep.subr.mxu0 0.0
        %4179 = vmatpush1.msra.mxu0 %v575
        %4180 = vmatprep.subr.mxu0 0.0
        %4181 = vmatpush1.msra.mxu0 %v576
        %4182 = vmatprep.subr.mxu0 0.0
        %4183 = vmatpush1.msra.mxu0 %v577
        %4184 = vmatprep.subr.mxu0 0.0
        %4185 = vmatpush1.msra.mxu0 %v578
        %4186 = vmatprep.subr.mxu0 0.0
        %4187 = vmatpush1.msra.mxu0 %v579
        %4188 = vmatprep.mubr.f32.mxu0 %v4117
        %4189 = vmatmul.mubr.f32.gmra.mrb[0].mxu0 %v4116
        %v4190 = vpop.f32.mrb[0].mxu0
        %v4191 = vadd.f32 0.0, %v4190
        %v4192 = vpop.f32.mrb[0].mxu0
        %4193 = vmatprep.mubr.f32.mxu0 %v4119
        %4194 = vmatmul.mubr.f32.gmra.mrb[0].mxu0 %v4118
        %v4195 = vpop.f32.mrb[0].mxu0
        %v4196 = vadd.f32 0.0, %v4195
        %v4197 = vpop.f32.mrb[0].mxu0
        %4198 = vmatprep.mubr.f32.mxu0 %v4121
        %4199 = vmatmul.mubr.f32.gmra.mrb[0].mxu0 %v4120
        %v4200 = vpop.f32.mrb[0].mxu0
        %v4201 = vadd.f32 0.0, %v4200
        %v4202 = vpop.f32.mrb[0].mxu0
        %4203 = vmatprep.mubr.f32.mxu0 %v4123
        %4204 = vmatmul.mubr.f32.gmra.mrb[0].mxu0 %v4122
        %v4205 = vpop.f32.mrb[0].mxu0
        %v4206 = vadd.f32 0.0, %v4205
        %v4207 = vpop.f32.mrb[0].mxu0
        %4208 = vdwg.mxu0
        %v4209 = vmul.f32 %v4191, %v4021
        %v4210 = vmul.f32 %v4196, %v4021
        %v4211 = vmul.f32 %v4201, %v4021
        %v4212 = vmul.f32 %v4206, %v4021
        %v4213 = vadd.f32 %v4011, %v4209
        %v4214 = vadd.f32 %v4012, %v4210
        %v4215 = vadd.f32 %v4013, %v4211
        %v4216 = vadd.f32 %v4014, %v4212
        %v4217 = vld [vmem:[%s3 + $0x80] sm:$0xff]
        %v4218 = vld [vmem:[%s3 + $0x88] sm:$0xff]
        %v4219 = vld [vmem:[%s3 + $0x90] sm:$0xff]
        %v4220 = vld [vmem:[%s3 + $0x98] sm:$0xff]
        %s4221 = scalar_lea.vmem %s5, 64
        %v4222 = vld [vmem:[%s4221] sm:$0xff]
        %v4223 = vld [vmem:[%s4221 + $0x8] sm:$0xff]
        %v4224 = vld [vmem:[%s4221 + $0x10] sm:$0xff]
        %v4225 = vld [vmem:[%s4221 + $0x18] sm:$0xff]
        %v4226 = vld [vmem:[%s4221 + $0x20] sm:$0xff]
        %v4227 = vld [vmem:[%s4221 + $0x28] sm:$0xff]
        %v4228 = vld [vmem:[%s4221 + $0x30] sm:$0xff]
        %v4229 = vld [vmem:[%s4221 + $0x38] sm:$0xff]
        %v4231 = vsel %vm1015, %v4217, 0
        %v4234 = vsel %vm1015, %v4218, 0
        %v4237 = vsel %vm1015, %v4219, 0
        %v4240 = vsel %vm1015, %v4220, 0
        %4242 = vmatprep.subr.mxu0 %v2484
        %4243 = vmatpush1.msra.mxu0 %v2483
        %4244 = vmatprep.subr.mxu0 %v2515
        %4245 = vmatpush1.msra.mxu0 %v2512
        %4246 = vmatprep.subr.mxu0 0.0
        %4247 = vmatpush1.msra.mxu0 0.0
        %4248 = vmatprep.subr.mxu0 0.0
        %4249 = vmatpush1.msra.mxu0 0.0
        %4250 = vmatprep.subr.mxu0 0.0
        %4251 = vmatpush1.msra.mxu0 0.0
        %4252 = vmatprep.subr.mxu0 0.0
        %4253 = vmatpush1.msra.mxu0 0.0
        %4254 = vmatprep.subr.mxu0 0.0
        %4255 = vmatpush1.msra.mxu0 0.0
        %4256 = vmatprep.subr.mxu0 0.0
        %4257 = vmatpush1.msra.mxu0 0.0
        %4258 = vmatprep.subr.mxu0 0.0
        %4259 = vmatpush1.msra.mxu0 0.0
        %4260 = vmatprep.subr.mxu0 0.0
        %4261 = vmatpush1.msra.mxu0 0.0
        %4262 = vmatprep.subr.mxu0 0.0
        %4263 = vmatpush1.msra.mxu0 0.0
        %4264 = vmatprep.subr.mxu0 0.0
        %4265 = vmatpush1.msra.mxu0 0.0
        %4266 = vmatprep.subr.mxu0 0.0
        %4267 = vmatpush1.msra.mxu0 0.0
        %4268 = vmatprep.subr.mxu0 0.0
        %4269 = vmatpush1.msra.mxu0 0.0
        %4270 = vmatprep.subr.mxu0 0.0
        %4271 = vmatpush1.msra.mxu0 0.0
        %4272 = vmatprep.subr.mxu0 0.0
        %4273 = vmatpush1.msra.mxu0 0.0
        %4274 = vmatprep.subr.mxu0 0.0
        %4275 = vmatpush1.msra.mxu0 0.0
        %4276 = vmatprep.subr.mxu0 0.0
        %4277 = vmatpush1.msra.mxu0 0.0
        %4278 = vmatprep.subr.mxu0 0.0
        %4279 = vmatpush1.msra.mxu0 0.0
        %4280 = vmatprep.subr.mxu0 0.0
        %4281 = vmatpush1.msra.mxu0 0.0
        %4282 = vmatprep.subr.mxu0 0.0
        %4283 = vmatpush1.msra.mxu0 0.0
        %4284 = vmatprep.subr.mxu0 0.0
        %4285 = vmatpush1.msra.mxu0 0.0
        %4286 = vmatprep.subr.mxu0 0.0
        %4287 = vmatpush1.msra.mxu0 0.0
        %4288 = vmatprep.subr.mxu0 0.0
        %4289 = vmatpush1.msra.mxu0 0.0
        %4290 = vmatprep.subr.mxu0 0.0
        %4291 = vmatpush1.msra.mxu0 0.0
        %4292 = vmatprep.subr.mxu0 0.0
        %4293 = vmatpush1.msra.mxu0 0.0
        %4294 = vmatprep.subr.mxu0 0.0
        %4295 = vmatpush1.msra.mxu0 0.0
        %4296 = vmatprep.subr.mxu0 0.0
        %4297 = vmatpush1.msra.mxu0 0.0
        %4298 = vmatprep.subr.mxu0 0.0
        %4299 = vmatpush1.msra.mxu0 0.0
        %4300 = vmatprep.subr.mxu0 0.0
        %4301 = vmatpush1.msra.mxu0 0.0
        %4302 = vmatprep.subr.mxu0 0.0
        %4303 = vmatpush1.msra.mxu0 0.0
        %4304 = vmatprep.subr.mxu0 0.0
        %4305 = vmatpush1.msra.mxu0 0.0
        %4306 = vmatprep.mubr.f32.mxu0 0.0
        %4307 = vmatmul.mubr.f32.gmra.mrb[0].mxu0 %v4231
        %v4308 = vpop.f32.mrb[0].mxu0
        %v4309 = vadd.f32 %v4222, %v4308
        %v4310 = vpop.f32.mrb[0].mxu0
        %v4311 = vadd.f32 %v4223, %v4310
        %4312 = vmatprep.mubr.f32.mxu0 0.0
        %4313 = vmatmul.mubr.f32.gmra.mrb[0].mxu0 %v4234
        %v4314 = vpop.f32.mrb[0].mxu0
        %v4315 = vadd.f32 %v4224, %v4314
        %v4316 = vpop.f32.mrb[0].mxu0
        %v4317 = vadd.f32 %v4225, %v4316
        %4318 = vmatprep.mubr.f32.mxu0 0.0
        %4319 = vmatmul.mubr.f32.gmra.mrb[0].mxu0 %v4237
        %v4320 = vpop.f32.mrb[0].mxu0
        %v4321 = vadd.f32 %v4226, %v4320
        %v4322 = vpop.f32.mrb[0].mxu0
        %v4323 = vadd.f32 %v4227, %v4322
        %4324 = vmatprep.mubr.f32.mxu0 0.0
        %4325 = vmatmul.mubr.f32.gmra.mrb[0].mxu0 %v4240
        %v4326 = vpop.f32.mrb[0].mxu0
        %v4327 = vadd.f32 %v4228, %v4326
        %v4328 = vpop.f32.mrb[0].mxu0
        %v4329 = vadd.f32 %v4229, %v4328
        %4330 = vdwg.mxu0
        %v4331 = vmul.f32 %v2274, %v2611
        %v4332 = vmul.f32 %v2279, %v2611
        %v4333 = vmul.f32 %v2284, %v2611
        %v4334 = vmul.f32 %v2289, %v2611
        %4335 = vmatprep.subr.mxu0 %v517
        %4336 = vmatpush1.msra.mxu0 %v516
        %4337 = vmatprep.subr.mxu0 %v519
        %4338 = vmatpush1.msra.mxu0 %v518
        %4339 = vmatprep.subr.mxu0 %v521
        %4340 = vmatpush1.msra.mxu0 %v520
        %4341 = vmatprep.subr.mxu0 %v523
        %4342 = vmatpush1.msra.mxu0 %v522
        %4343 = vmatprep.subr.mxu0 %v525
        %4344 = vmatpush1.msra.mxu0 %v524
        %4345 = vmatprep.subr.mxu0 %v527
        %4346 = vmatpush1.msra.mxu0 %v526
        %4347 = vmatprep.subr.mxu0 %v529
        %4348 = vmatpush1.msra.mxu0 %v528
        %4349 = vmatprep.subr.mxu0 %v531
        %4350 = vmatpush1.msra.mxu0 %v530
        %4351 = vmatprep.subr.mxu0 %v533
        %4352 = vmatpush1.msra.mxu0 %v532
        %4353 = vmatprep.subr.mxu0 %v535
        %4354 = vmatpush1.msra.mxu0 %v534
        %4355 = vmatprep.subr.mxu0 %v537
        %4356 = vmatpush1.msra.mxu0 %v536
        %4357 = vmatprep.subr.mxu0 %v539
        %4358 = vmatpush1.msra.mxu0 %v538
        %4359 = vmatprep.subr.mxu0 %v541
        %4360 = vmatpush1.msra.mxu0 %v540
        %4361 = vmatprep.subr.mxu0 %v543
        %4362 = vmatpush1.msra.mxu0 %v542
        %4363 = vmatprep.subr.mxu0 %v545
        %4364 = vmatpush1.msra.mxu0 %v544
        %4365 = vmatprep.subr.mxu0 %v547
        %4366 = vmatpush1.msra.mxu0 %v546
        %4367 = vmatprep.subr.mxu0 0.0
        %4368 = vmatpush1.msra.mxu0 0.0
        %4369 = vmatprep.subr.mxu0 0.0
        %4370 = vmatpush1.msra.mxu0 0.0
        %4371 = vmatprep.subr.mxu0 0.0
        %4372 = vmatpush1.msra.mxu0 0.0
        %4373 = vmatprep.subr.mxu0 0.0
        %4374 = vmatpush1.msra.mxu0 0.0
        %4375 = vmatprep.subr.mxu0 0.0
        %4376 = vmatpush1.msra.mxu0 0.0
        %4377 = vmatprep.subr.mxu0 0.0
        %4378 = vmatpush1.msra.mxu0 0.0
        %4379 = vmatprep.subr.mxu0 0.0
        %4380 = vmatpush1.msra.mxu0 0.0
        %4381 = vmatprep.subr.mxu0 0.0
        %4382 = vmatpush1.msra.mxu0 0.0
        %4383 = vmatprep.subr.mxu0 0.0
        %4384 = vmatpush1.msra.mxu0 0.0
        %4385 = vmatprep.subr.mxu0 0.0
        %4386 = vmatpush1.msra.mxu0 0.0
        %4387 = vmatprep.subr.mxu0 0.0
        %4388 = vmatpush1.msra.mxu0 0.0
        %4389 = vmatprep.subr.mxu0 0.0
        %4390 = vmatpush1.msra.mxu0 0.0
        %4391 = vmatprep.subr.mxu0 0.0
        %4392 = vmatpush1.msra.mxu0 0.0
        %4393 = vmatprep.subr.mxu0 0.0
        %4394 = vmatpush1.msra.mxu0 0.0
        %4395 = vmatprep.subr.mxu0 0.0
        %4396 = vmatpush1.msra.mxu0 0.0
        %4397 = vmatprep.subr.mxu0 0.0
        %4398 = vmatpush1.msra.mxu0 0.0
        %4399 = vmatprep.mubr.f32.mxu0 0.0
        %4400 = vmatmul.mubr.f32.gmra.mrb[0].mxu0 %v4331
        %v4401 = vpop.f32.mrb[0].mxu0
        %v4402 = vadd.f32 0.0, %v4401
        %v4403 = vpop.f32.mrb[0].mxu0
        %v4404 = vadd.f32 0.0, %v4403
        %4405 = vmatprep.mubr.f32.mxu0 0.0
        %4406 = vmatmul.mubr.f32.gmra.mrb[0].mxu0 %v4332
        %v4407 = vpop.f32.mrb[0].mxu0
        %v4408 = vadd.f32 0.0, %v4407
        %v4409 = vpop.f32.mrb[0].mxu0
        %v4410 = vadd.f32 0.0, %v4409
        %4411 = vmatprep.mubr.f32.mxu0 0.0
        %4412 = vmatmul.mubr.f32.gmra.mrb[0].mxu0 %v4333
        %v4413 = vpop.f32.mrb[0].mxu0
        %v4414 = vadd.f32 0.0, %v4413
        %v4415 = vpop.f32.mrb[0].mxu0
        %v4416 = vadd.f32 0.0, %v4415
        %4417 = vmatprep.mubr.f32.mxu0 0.0
        %4418 = vmatmul.mubr.f32.gmra.mrb[0].mxu0 %v4334
        %v4419 = vpop.f32.mrb[0].mxu0
        %v4420 = vadd.f32 0.0, %v4419
        %v4421 = vpop.f32.mrb[0].mxu0
        %v4422 = vadd.f32 0.0, %v4421
        %4423 = vdwg.mxu0
        %v4424 = vmul.f32 %v4309, %v4402
        %v4425 = vmul.f32 %v4311, %v4404
        %v4426 = vmul.f32 %v4315, %v4408
        %v4427 = vmul.f32 %v4317, %v4410
        %v4428 = vmul.f32 %v4321, %v4414
        %v4429 = vmul.f32 %v4323, %v4416
        %v4430 = vmul.f32 %v4327, %v4420
        %v4431 = vmul.f32 %v4329, %v4422
        %4432 = vmatprep.subr.mxu0 0.0
        %4433 = vmatpush1.msra.mxu0 %v548
        %4434 = vmatprep.subr.mxu0 0.0
        %4435 = vmatpush1.msra.mxu0 %v549
        %4436 = vmatprep.subr.mxu0 0.0
        %4437 = vmatpush1.msra.mxu0 %v550
        %4438 = vmatprep.subr.mxu0 0.0
        %4439 = vmatpush1.msra.mxu0 %v551
        %4440 = vmatprep.subr.mxu0 0.0
        %4441 = vmatpush1.msra.mxu0 %v552
        %4442 = vmatprep.subr.mxu0 0.0
        %4443 = vmatpush1.msra.mxu0 %v553
        %4444 = vmatprep.subr.mxu0 0.0
        %4445 = vmatpush1.msra.mxu0 %v554
        %4446 = vmatprep.subr.mxu0 0.0
        %4447 = vmatpush1.msra.mxu0 %v555
        %4448 = vmatprep.subr.mxu0 0.0
        %4449 = vmatpush1.msra.mxu0 %v556
        %4450 = vmatprep.subr.mxu0 0.0
        %4451 = vmatpush1.msra.mxu0 %v557
        %4452 = vmatprep.subr.mxu0 0.0
        %4453 = vmatpush1.msra.mxu0 %v558
        %4454 = vmatprep.subr.mxu0 0.0
        %4455 = vmatpush1.msra.mxu0 %v559
        %4456 = vmatprep.subr.mxu0 0.0
        %4457 = vmatpush1.msra.mxu0 %v560
        %4458 = vmatprep.subr.mxu0 0.0
        %4459 = vmatpush1.msra.mxu0 %v561
        %4460 = vmatprep.subr.mxu0 0.0
        %4461 = vmatpush1.msra.mxu0 %v562
        %4462 = vmatprep.subr.mxu0 0.0
        %4463 = vmatpush1.msra.mxu0 %v563
        %4464 = vmatprep.subr.mxu0 0.0
        %4465 = vmatpush1.msra.mxu0 %v564
        %4466 = vmatprep.subr.mxu0 0.0
        %4467 = vmatpush1.msra.mxu0 %v565
        %4468 = vmatprep.subr.mxu0 0.0
        %4469 = vmatpush1.msra.mxu0 %v566
        %4470 = vmatprep.subr.mxu0 0.0
        %4471 = vmatpush1.msra.mxu0 %v567
        %4472 = vmatprep.subr.mxu0 0.0
        %4473 = vmatpush1.msra.mxu0 %v568
        %4474 = vmatprep.subr.mxu0 0.0
        %4475 = vmatpush1.msra.mxu0 %v569
        %4476 = vmatprep.subr.mxu0 0.0
        %4477 = vmatpush1.msra.mxu0 %v570
        %4478 = vmatprep.subr.mxu0 0.0
        %4479 = vmatpush1.msra.mxu0 %v571
        %4480 = vmatprep.subr.mxu0 0.0
        %4481 = vmatpush1.msra.mxu0 %v572
        %4482 = vmatprep.subr.mxu0 0.0
        %4483 = vmatpush1.msra.mxu0 %v573
        %4484 = vmatprep.subr.mxu0 0.0
        %4485 = vmatpush1.msra.mxu0 %v574
        %4486 = vmatprep.subr.mxu0 0.0
        %4487 = vmatpush1.msra.mxu0 %v575
        %4488 = vmatprep.subr.mxu0 0.0
        %4489 = vmatpush1.msra.mxu0 %v576
        %4490 = vmatprep.subr.mxu0 0.0
        %4491 = vmatpush1.msra.mxu0 %v577
        %4492 = vmatprep.subr.mxu0 0.0
        %4493 = vmatpush1.msra.mxu0 %v578
        %4494 = vmatprep.subr.mxu0 0.0
        %4495 = vmatpush1.msra.mxu0 %v579
        %4496 = vmatprep.mubr.f32.mxu0 %v4425
        %4497 = vmatmul.mubr.f32.gmra.mrb[0].mxu0 %v4424
        %v4498 = vpop.f32.mrb[0].mxu0
        %v4499 = vadd.f32 0.0, %v4498
        %v4500 = vpop.f32.mrb[0].mxu0
        %4501 = vmatprep.mubr.f32.mxu0 %v4427
        %4502 = vmatmul.mubr.f32.gmra.mrb[0].mxu0 %v4426
        %v4503 = vpop.f32.mrb[0].mxu0
        %v4504 = vadd.f32 0.0, %v4503
        %v4505 = vpop.f32.mrb[0].mxu0
        %4506 = vmatprep.mubr.f32.mxu0 %v4429
        %4507 = vmatmul.mubr.f32.gmra.mrb[0].mxu0 %v4428
        %v4508 = vpop.f32.mrb[0].mxu0
        %v4509 = vadd.f32 0.0, %v4508
        %v4510 = vpop.f32.mrb[0].mxu0
        %4511 = vmatprep.mubr.f32.mxu0 %v4431
        %4512 = vmatmul.mubr.f32.gmra.mrb[0].mxu0 %v4430
        %v4513 = vpop.f32.mrb[0].mxu0
        %v4514 = vadd.f32 0.0, %v4513
        %v4515 = vpop.f32.mrb[0].mxu0
        %4516 = vdwg.mxu0
        %v4517 = vmul.f32 %v4499, %v2611
        %v4518 = vmul.f32 %v4504, %v2611
        %v4519 = vmul.f32 %v4509, %v2611
        %v4520 = vmul.f32 %v4514, %v2611
        %v4521 = vadd.f32 %v4213, %v4517
        %v4522 = vadd.f32 %v4214, %v4518
        %v4523 = vadd.f32 %v4215, %v4519
        %v4524 = vadd.f32 %v4216, %v4520
        %v4525 = vmul.f32 %v2274, %v2809
        %v4526 = vmul.f32 %v2279, %v2809
        %v4527 = vmul.f32 %v2284, %v2809
        %v4528 = vmul.f32 %v2289, %v2809
        %4529 = vmatprep.subr.mxu0 %v517
        %4530 = vmatpush1.msra.mxu0 %v516
        %4531 = vmatprep.subr.mxu0 %v519
        %4532 = vmatpush1.msra.mxu0 %v518
        %4533 = vmatprep.subr.mxu0 %v521
        %4534 = vmatpush1.msra.mxu0 %v520
        %4535 = vmatprep.subr.mxu0 %v523
        %4536 = vmatpush1.msra.mxu0 %v522
        %4537 = vmatprep.subr.mxu0 %v525
        %4538 = vmatpush1.msra.mxu0 %v524
        %4539 = vmatprep.subr.mxu0 %v527
        %4540 = vmatpush1.msra.mxu0 %v526
        %4541 = vmatprep.subr.mxu0 %v529
        %4542 = vmatpush1.msra.mxu0 %v528
        %4543 = vmatprep.subr.mxu0 %v531
        %4544 = vmatpush1.msra.mxu0 %v530
        %4545 = vmatprep.subr.mxu0 %v533
        %4546 = vmatpush1.msra.mxu0 %v532
        %4547 = vmatprep.subr.mxu0 %v535
        %4548 = vmatpush1.msra.mxu0 %v534
        %4549 = vmatprep.subr.mxu0 %v537
        %4550 = vmatpush1.msra.mxu0 %v536
        %4551 = vmatprep.subr.mxu0 %v539
        %4552 = vmatpush1.msra.mxu0 %v538
        %4553 = vmatprep.subr.mxu0 %v541
        %4554 = vmatpush1.msra.mxu0 %v540
        %4555 = vmatprep.subr.mxu0 %v543
        %4556 = vmatpush1.msra.mxu0 %v542
        %4557 = vmatprep.subr.mxu0 %v545
        %4558 = vmatpush1.msra.mxu0 %v544
        %4559 = vmatprep.subr.mxu0 %v547
        %4560 = vmatpush1.msra.mxu0 %v546
        %4561 = vmatprep.subr.mxu0 0.0
        %4562 = vmatpush1.msra.mxu0 0.0
        %4563 = vmatprep.subr.mxu0 0.0
        %4564 = vmatpush1.msra.mxu0 0.0
        %4565 = vmatprep.subr.mxu0 0.0
        %4566 = vmatpush1.msra.mxu0 0.0
        %4567 = vmatprep.subr.mxu0 0.0
        %4568 = vmatpush1.msra.mxu0 0.0
        %4569 = vmatprep.subr.mxu0 0.0
        %4570 = vmatpush1.msra.mxu0 0.0
        %4571 = vmatprep.subr.mxu0 0.0
        %4572 = vmatpush1.msra.mxu0 0.0
        %4573 = vmatprep.subr.mxu0 0.0
        %4574 = vmatpush1.msra.mxu0 0.0
        %4575 = vmatprep.subr.mxu0 0.0
        %4576 = vmatpush1.msra.mxu0 0.0
        %4577 = vmatprep.subr.mxu0 0.0
        %4578 = vmatpush1.msra.mxu0 0.0
        %4579 = vmatprep.subr.mxu0 0.0
        %4580 = vmatpush1.msra.mxu0 0.0
        %4581 = vmatprep.subr.mxu0 0.0
        %4582 = vmatpush1.msra.mxu0 0.0
        %4583 = vmatprep.subr.mxu0 0.0
        %4584 = vmatpush1.msra.mxu0 0.0
        %4585 = vmatprep.subr.mxu0 0.0
        %4586 = vmatpush1.msra.mxu0 0.0
        %4587 = vmatprep.subr.mxu0 0.0
        %4588 = vmatpush1.msra.mxu0 0.0
        %4589 = vmatprep.subr.mxu0 0.0
        %4590 = vmatpush1.msra.mxu0 0.0
        %4591 = vmatprep.subr.mxu0 0.0
        %4592 = vmatpush1.msra.mxu0 0.0
        %4593 = vmatprep.mubr.f32.mxu0 0.0
        %4594 = vmatmul.mubr.f32.gmra.mrb[0].mxu0 %v4525
        %v4595 = vpop.f32.mrb[0].mxu0
        %v4596 = vadd.f32 0.0, %v4595
        %v4597 = vpop.f32.mrb[0].mxu0
        %v4598 = vadd.f32 0.0, %v4597
        %4599 = vmatprep.mubr.f32.mxu0 0.0
        %4600 = vmatmul.mubr.f32.gmra.mrb[0].mxu0 %v4526
        %v4601 = vpop.f32.mrb[0].mxu0
        %v4602 = vadd.f32 0.0, %v4601
        %v4603 = vpop.f32.mrb[0].mxu0
        %v4604 = vadd.f32 0.0, %v4603
        %4605 = vmatprep.mubr.f32.mxu0 0.0
        %4606 = vmatmul.mubr.f32.gmra.mrb[0].mxu0 %v4527
        %v4607 = vpop.f32.mrb[0].mxu0
        %v4608 = vadd.f32 0.0, %v4607
        %v4609 = vpop.f32.mrb[0].mxu0
        %v4610 = vadd.f32 0.0, %v4609
        %4611 = vmatprep.mubr.f32.mxu0 0.0
        %4612 = vmatmul.mubr.f32.gmra.mrb[0].mxu0 %v4528
        %v4613 = vpop.f32.mrb[0].mxu0
        %v4614 = vadd.f32 0.0, %v4613
        %v4615 = vpop.f32.mrb[0].mxu0
        %v4616 = vadd.f32 0.0, %v4615
        %4617 = vdwg.mxu0
        %v4618 = vmul.f32 %v4309, %v4596
        %v4619 = vmul.f32 %v4311, %v4598
        %v4620 = vmul.f32 %v4315, %v4602
        %v4621 = vmul.f32 %v4317, %v4604
        %v4622 = vmul.f32 %v4321, %v4608
        %v4623 = vmul.f32 %v4323, %v4610
        %v4624 = vmul.f32 %v4327, %v4614
        %v4625 = vmul.f32 %v4329, %v4616
        %4626 = vmatprep.subr.mxu0 0.0
        %4627 = vmatpush1.msra.mxu0 %v548
        %4628 = vmatprep.subr.mxu0 0.0
        %4629 = vmatpush1.msra.mxu0 %v549
        %4630 = vmatprep.subr.mxu0 0.0
        %4631 = vmatpush1.msra.mxu0 %v550
        %4632 = vmatprep.subr.mxu0 0.0
        %4633 = vmatpush1.msra.mxu0 %v551
        %4634 = vmatprep.subr.mxu0 0.0
        %4635 = vmatpush1.msra.mxu0 %v552
        %4636 = vmatprep.subr.mxu0 0.0
        %4637 = vmatpush1.msra.mxu0 %v553
        %4638 = vmatprep.subr.mxu0 0.0
        %4639 = vmatpush1.msra.mxu0 %v554
        %4640 = vmatprep.subr.mxu0 0.0
        %4641 = vmatpush1.msra.mxu0 %v555
        %4642 = vmatprep.subr.mxu0 0.0
        %4643 = vmatpush1.msra.mxu0 %v556
        %4644 = vmatprep.subr.mxu0 0.0
        %4645 = vmatpush1.msra.mxu0 %v557
        %4646 = vmatprep.subr.mxu0 0.0
        %4647 = vmatpush1.msra.mxu0 %v558
        %4648 = vmatprep.subr.mxu0 0.0
        %4649 = vmatpush1.msra.mxu0 %v559
        %4650 = vmatprep.subr.mxu0 0.0
        %4651 = vmatpush1.msra.mxu0 %v560
        %4652 = vmatprep.subr.mxu0 0.0
        %4653 = vmatpush1.msra.mxu0 %v561
        %4654 = vmatprep.subr.mxu0 0.0
        %4655 = vmatpush1.msra.mxu0 %v562
        %4656 = vmatprep.subr.mxu0 0.0
        %4657 = vmatpush1.msra.mxu0 %v563
        %4658 = vmatprep.subr.mxu0 0.0
        %4659 = vmatpush1.msra.mxu0 %v564
        %4660 = vmatprep.subr.mxu0 0.0
        %4661 = vmatpush1.msra.mxu0 %v565
        %4662 = vmatprep.subr.mxu0 0.0
        %4663 = vmatpush1.msra.mxu0 %v566
        %4664 = vmatprep.subr.mxu0 0.0
        %4665 = vmatpush1.msra.mxu0 %v567
        %4666 = vmatprep.subr.mxu0 0.0
        %4667 = vmatpush1.msra.mxu0 %v568
        %4668 = vmatprep.subr.mxu0 0.0
        %4669 = vmatpush1.msra.mxu0 %v569
        %4670 = vmatprep.subr.mxu0 0.0
        %4671 = vmatpush1.msra.mxu0 %v570
        %4672 = vmatprep.subr.mxu0 0.0
        %4673 = vmatpush1.msra.mxu0 %v571
        %4674 = vmatprep.subr.mxu0 0.0
        %4675 = vmatpush1.msra.mxu0 %v572
        %4676 = vmatprep.subr.mxu0 0.0
        %4677 = vmatpush1.msra.mxu0 %v573
        %4678 = vmatprep.subr.mxu0 0.0
        %4679 = vmatpush1.msra.mxu0 %v574
        %4680 = vmatprep.subr.mxu0 0.0
        %4681 = vmatpush1.msra.mxu0 %v575
        %4682 = vmatprep.subr.mxu0 0.0
        %4683 = vmatpush1.msra.mxu0 %v576
        %4684 = vmatprep.subr.mxu0 0.0
        %4685 = vmatpush1.msra.mxu0 %v577
        %4686 = vmatprep.subr.mxu0 0.0
        %4687 = vmatpush1.msra.mxu0 %v578
        %4688 = vmatprep.subr.mxu0 0.0
        %4689 = vmatpush1.msra.mxu0 %v579
        %4690 = vmatprep.mubr.f32.mxu0 %v4619
        %4691 = vmatmul.mubr.f32.gmra.mrb[0].mxu0 %v4618
        %v4692 = vpop.f32.mrb[0].mxu0
        %v4693 = vadd.f32 0.0, %v4692
        %v4694 = vpop.f32.mrb[0].mxu0
        %4695 = vmatprep.mubr.f32.mxu0 %v4621
        %4696 = vmatmul.mubr.f32.gmra.mrb[0].mxu0 %v4620
        %v4697 = vpop.f32.mrb[0].mxu0
        %v4698 = vadd.f32 0.0, %v4697
        %v4699 = vpop.f32.mrb[0].mxu0
        %4700 = vmatprep.mubr.f32.mxu0 %v4623
        %4701 = vmatmul.mubr.f32.gmra.mrb[0].mxu0 %v4622
        %v4702 = vpop.f32.mrb[0].mxu0
        %v4703 = vadd.f32 0.0, %v4702
        %v4704 = vpop.f32.mrb[0].mxu0
        %4705 = vmatprep.mubr.f32.mxu0 %v4625
        %4706 = vmatmul.mubr.f32.gmra.mrb[0].mxu0 %v4624
        %v4707 = vpop.f32.mrb[0].mxu0
        %v4708 = vadd.f32 0.0, %v4707
        %v4709 = vpop.f32.mrb[0].mxu0
        %4710 = vdwg.mxu0
        %v4711 = vmul.f32 %v4693, %v2809
        %v4712 = vmul.f32 %v4698, %v2809
        %v4713 = vmul.f32 %v4703, %v2809
        %v4714 = vmul.f32 %v4708, %v2809
        %v4715 = vadd.f32 %v4521, %v4711
        %v4716 = vadd.f32 %v4522, %v4712
        %v4717 = vadd.f32 %v4523, %v4713
        %v4718 = vadd.f32 %v4524, %v4714
        %v4719 = vmul.f32 %v2274, %v3011
        %v4720 = vmul.f32 %v2279, %v3011
        %v4721 = vmul.f32 %v2284, %v3011
        %v4722 = vmul.f32 %v2289, %v3011
        %4723 = vmatprep.subr.mxu0 %v517
        %4724 = vmatpush1.msra.mxu0 %v516
        %4725 = vmatprep.subr.mxu0 %v519
        %4726 = vmatpush1.msra.mxu0 %v518
        %4727 = vmatprep.subr.mxu0 %v521
        %4728 = vmatpush1.msra.mxu0 %v520
        %4729 = vmatprep.subr.mxu0 %v523
        %4730 = vmatpush1.msra.mxu0 %v522
        %4731 = vmatprep.subr.mxu0 %v525
        %4732 = vmatpush1.msra.mxu0 %v524
        %4733 = vmatprep.subr.mxu0 %v527
        %4734 = vmatpush1.msra.mxu0 %v526
        %4735 = vmatprep.subr.mxu0 %v529
        %4736 = vmatpush1.msra.mxu0 %v528
        %4737 = vmatprep.subr.mxu0 %v531
        %4738 = vmatpush1.msra.mxu0 %v530
        %4739 = vmatprep.subr.mxu0 %v533
        %4740 = vmatpush1.msra.mxu0 %v532
        %4741 = vmatprep.subr.mxu0 %v535
        %4742 = vmatpush1.msra.mxu0 %v534
        %4743 = vmatprep.subr.mxu0 %v537
        %4744 = vmatpush1.msra.mxu0 %v536
        %4745 = vmatprep.subr.mxu0 %v539
        %4746 = vmatpush1.msra.mxu0 %v538
        %4747 = vmatprep.subr.mxu0 %v541
        %4748 = vmatpush1.msra.mxu0 %v540
        %4749 = vmatprep.subr.mxu0 %v543
        %4750 = vmatpush1.msra.mxu0 %v542
        %4751 = vmatprep.subr.mxu0 %v545
        %4752 = vmatpush1.msra.mxu0 %v544
        %4753 = vmatprep.subr.mxu0 %v547
        %4754 = vmatpush1.msra.mxu0 %v546
        %4755 = vmatprep.subr.mxu0 0.0
        %4756 = vmatpush1.msra.mxu0 0.0
        %4757 = vmatprep.subr.mxu0 0.0
        %4758 = vmatpush1.msra.mxu0 0.0
        %4759 = vmatprep.subr.mxu0 0.0
        %4760 = vmatpush1.msra.mxu0 0.0
        %4761 = vmatprep.subr.mxu0 0.0
        %4762 = vmatpush1.msra.mxu0 0.0
        %4763 = vmatprep.subr.mxu0 0.0
        %4764 = vmatpush1.msra.mxu0 0.0
        %4765 = vmatprep.subr.mxu0 0.0
        %4766 = vmatpush1.msra.mxu0 0.0
        %4767 = vmatprep.subr.mxu0 0.0
        %4768 = vmatpush1.msra.mxu0 0.0
        %4769 = vmatprep.subr.mxu0 0.0
        %4770 = vmatpush1.msra.mxu0 0.0
        %4771 = vmatprep.subr.mxu0 0.0
        %4772 = vmatpush1.msra.mxu0 0.0
        %4773 = vmatprep.subr.mxu0 0.0
        %4774 = vmatpush1.msra.mxu0 0.0
        %4775 = vmatprep.subr.mxu0 0.0
        %4776 = vmatpush1.msra.mxu0 0.0
        %4777 = vmatprep.subr.mxu0 0.0
        %4778 = vmatpush1.msra.mxu0 0.0
        %4779 = vmatprep.subr.mxu0 0.0
        %4780 = vmatpush1.msra.mxu0 0.0
        %4781 = vmatprep.subr.mxu0 0.0
        %4782 = vmatpush1.msra.mxu0 0.0
        %4783 = vmatprep.subr.mxu0 0.0
        %4784 = vmatpush1.msra.mxu0 0.0
        %4785 = vmatprep.subr.mxu0 0.0
        %4786 = vmatpush1.msra.mxu0 0.0
        %4787 = vmatprep.mubr.f32.mxu0 0.0
        %4788 = vmatmul.mubr.f32.gmra.mrb[0].mxu0 %v4719
        %v4789 = vpop.f32.mrb[0].mxu0
        %v4790 = vadd.f32 0.0, %v4789
        %v4791 = vpop.f32.mrb[0].mxu0
        %v4792 = vadd.f32 0.0, %v4791
        %4793 = vmatprep.mubr.f32.mxu0 0.0
        %4794 = vmatmul.mubr.f32.gmra.mrb[0].mxu0 %v4720
        %v4795 = vpop.f32.mrb[0].mxu0
        %v4796 = vadd.f32 0.0, %v4795
        %v4797 = vpop.f32.mrb[0].mxu0
        %v4798 = vadd.f32 0.0, %v4797
        %4799 = vmatprep.mubr.f32.mxu0 0.0
        %4800 = vmatmul.mubr.f32.gmra.mrb[0].mxu0 %v4721
        %v4801 = vpop.f32.mrb[0].mxu0
        %v4802 = vadd.f32 0.0, %v4801
        %v4803 = vpop.f32.mrb[0].mxu0
        %v4804 = vadd.f32 0.0, %v4803
        %4805 = vmatprep.mubr.f32.mxu0 0.0
        %4806 = vmatmul.mubr.f32.gmra.mrb[0].mxu0 %v4722
        %v4807 = vpop.f32.mrb[0].mxu0
        %v4808 = vadd.f32 0.0, %v4807
        %v4809 = vpop.f32.mrb[0].mxu0
        %v4810 = vadd.f32 0.0, %v4809
        %4811 = vdwg.mxu0
        %v4812 = vmul.f32 %v4309, %v4790
        %v4813 = vmul.f32 %v4311, %v4792
        %v4814 = vmul.f32 %v4315, %v4796
        %v4815 = vmul.f32 %v4317, %v4798
        %v4816 = vmul.f32 %v4321, %v4802
        %v4817 = vmul.f32 %v4323, %v4804
        %v4818 = vmul.f32 %v4327, %v4808
        %v4819 = vmul.f32 %v4329, %v4810
        %4820 = vmatprep.subr.mxu0 0.0
        %4821 = vmatpush1.msra.mxu0 %v548
        %4822 = vmatprep.subr.mxu0 0.0
        %4823 = vmatpush1.msra.mxu0 %v549
        %4824 = vmatprep.subr.mxu0 0.0
        %4825 = vmatpush1.msra.mxu0 %v550
        %4826 = vmatprep.subr.mxu0 0.0
        %4827 = vmatpush1.msra.mxu0 %v551
        %4828 = vmatprep.subr.mxu0 0.0
        %4829 = vmatpush1.msra.mxu0 %v552
        %4830 = vmatprep.subr.mxu0 0.0
        %4831 = vmatpush1.msra.mxu0 %v553
        %4832 = vmatprep.subr.mxu0 0.0
        %4833 = vmatpush1.msra.mxu0 %v554
        %4834 = vmatprep.subr.mxu0 0.0
        %4835 = vmatpush1.msra.mxu0 %v555
        %4836 = vmatprep.subr.mxu0 0.0
        %4837 = vmatpush1.msra.mxu0 %v556
        %4838 = vmatprep.subr.mxu0 0.0
        %4839 = vmatpush1.msra.mxu0 %v557
        %4840 = vmatprep.subr.mxu0 0.0
        %4841 = vmatpush1.msra.mxu0 %v558
        %4842 = vmatprep.subr.mxu0 0.0
        %4843 = vmatpush1.msra.mxu0 %v559
        %4844 = vmatprep.subr.mxu0 0.0
        %4845 = vmatpush1.msra.mxu0 %v560
        %4846 = vmatprep.subr.mxu0 0.0
        %4847 = vmatpush1.msra.mxu0 %v561
        %4848 = vmatprep.subr.mxu0 0.0
        %4849 = vmatpush1.msra.mxu0 %v562
        %4850 = vmatprep.subr.mxu0 0.0
        %4851 = vmatpush1.msra.mxu0 %v563
        %4852 = vmatprep.subr.mxu0 0.0
        %4853 = vmatpush1.msra.mxu0 %v564
        %4854 = vmatprep.subr.mxu0 0.0
        %4855 = vmatpush1.msra.mxu0 %v565
        %4856 = vmatprep.subr.mxu0 0.0
        %4857 = vmatpush1.msra.mxu0 %v566
        %4858 = vmatprep.subr.mxu0 0.0
        %4859 = vmatpush1.msra.mxu0 %v567
        %4860 = vmatprep.subr.mxu0 0.0
        %4861 = vmatpush1.msra.mxu0 %v568
        %4862 = vmatprep.subr.mxu0 0.0
        %4863 = vmatpush1.msra.mxu0 %v569
        %4864 = vmatprep.subr.mxu0 0.0
        %4865 = vmatpush1.msra.mxu0 %v570
        %4866 = vmatprep.subr.mxu0 0.0
        %4867 = vmatpush1.msra.mxu0 %v571
        %4868 = vmatprep.subr.mxu0 0.0
        %4869 = vmatpush1.msra.mxu0 %v572
        %4870 = vmatprep.subr.mxu0 0.0
        %4871 = vmatpush1.msra.mxu0 %v573
        %4872 = vmatprep.subr.mxu0 0.0
        %4873 = vmatpush1.msra.mxu0 %v574
        %4874 = vmatprep.subr.mxu0 0.0
        %4875 = vmatpush1.msra.mxu0 %v575
        %4876 = vmatprep.subr.mxu0 0.0
        %4877 = vmatpush1.msra.mxu0 %v576
        %4878 = vmatprep.subr.mxu0 0.0
        %4879 = vmatpush1.msra.mxu0 %v577
        %4880 = vmatprep.subr.mxu0 0.0
        %4881 = vmatpush1.msra.mxu0 %v578
        %4882 = vmatprep.subr.mxu0 0.0
        %4883 = vmatpush1.msra.mxu0 %v579
        %4884 = vmatprep.mubr.f32.mxu0 %v4813
        %4885 = vmatmul.mubr.f32.gmra.mrb[0].mxu0 %v4812
        %v4886 = vpop.f32.mrb[0].mxu0
        %v4887 = vadd.f32 0.0, %v4886
        %v4888 = vpop.f32.mrb[0].mxu0
        %4889 = vmatprep.mubr.f32.mxu0 %v4815
        %4890 = vmatmul.mubr.f32.gmra.mrb[0].mxu0 %v4814
        %v4891 = vpop.f32.mrb[0].mxu0
        %v4892 = vadd.f32 0.0, %v4891
        %v4893 = vpop.f32.mrb[0].mxu0
        %4894 = vmatprep.mubr.f32.mxu0 %v4817
        %4895 = vmatmul.mubr.f32.gmra.mrb[0].mxu0 %v4816
        %v4896 = vpop.f32.mrb[0].mxu0
        %v4897 = vadd.f32 0.0, %v4896
        %v4898 = vpop.f32.mrb[0].mxu0
        %4899 = vmatprep.mubr.f32.mxu0 %v4819
        %4900 = vmatmul.mubr.f32.gmra.mrb[0].mxu0 %v4818
        %v4901 = vpop.f32.mrb[0].mxu0
        %v4902 = vadd.f32 0.0, %v4901
        %v4903 = vpop.f32.mrb[0].mxu0
        %4904 = vdwg.mxu0
        %v4905 = vmul.f32 %v4887, %v3011
        %v4906 = vmul.f32 %v4892, %v3011
        %v4907 = vmul.f32 %v4897, %v3011
        %v4908 = vmul.f32 %v4902, %v3011
        %v4909 = vadd.f32 %v4715, %v4905
        %v4910 = vadd.f32 %v4716, %v4906
        %v4911 = vadd.f32 %v4717, %v4907
        %v4912 = vadd.f32 %v4718, %v4908
        %v4913 = vmul.f32 %v2274, %v3213
        %v4914 = vmul.f32 %v2279, %v3213
        %v4915 = vmul.f32 %v2284, %v3213
        %v4916 = vmul.f32 %v2289, %v3213
        %4917 = vmatprep.subr.mxu0 %v517
        %4918 = vmatpush1.msra.mxu0 %v516
        %4919 = vmatprep.subr.mxu0 %v519
        %4920 = vmatpush1.msra.mxu0 %v518
        %4921 = vmatprep.subr.mxu0 %v521
        %4922 = vmatpush1.msra.mxu0 %v520
        %4923 = vmatprep.subr.mxu0 %v523
        %4924 = vmatpush1.msra.mxu0 %v522
        %4925 = vmatprep.subr.mxu0 %v525
        %4926 = vmatpush1.msra.mxu0 %v524
        %4927 = vmatprep.subr.mxu0 %v527
        %4928 = vmatpush1.msra.mxu0 %v526
        %4929 = vmatprep.subr.mxu0 %v529
        %4930 = vmatpush1.msra.mxu0 %v528
        %4931 = vmatprep.subr.mxu0 %v531
        %4932 = vmatpush1.msra.mxu0 %v530
        %4933 = vmatprep.subr.mxu0 %v533
        %4934 = vmatpush1.msra.mxu0 %v532
        %4935 = vmatprep.subr.mxu0 %v535
        %4936 = vmatpush1.msra.mxu0 %v534
        %4937 = vmatprep.subr.mxu0 %v537
        %4938 = vmatpush1.msra.mxu0 %v536
        %4939 = vmatprep.subr.mxu0 %v539
        %4940 = vmatpush1.msra.mxu0 %v538
        %4941 = vmatprep.subr.mxu0 %v541
        %4942 = vmatpush1.msra.mxu0 %v540
        %4943 = vmatprep.subr.mxu0 %v543
        %4944 = vmatpush1.msra.mxu0 %v542
        %4945 = vmatprep.subr.mxu0 %v545
        %4946 = vmatpush1.msra.mxu0 %v544
        %4947 = vmatprep.subr.mxu0 %v547
        %4948 = vmatpush1.msra.mxu0 %v546
        %4949 = vmatprep.subr.mxu0 0.0
        %4950 = vmatpush1.msra.mxu0 0.0
        %4951 = vmatprep.subr.mxu0 0.0
        %4952 = vmatpush1.msra.mxu0 0.0
        %4953 = vmatprep.subr.mxu0 0.0
        %4954 = vmatpush1.msra.mxu0 0.0
        %4955 = vmatprep.subr.mxu0 0.0
        %4956 = vmatpush1.msra.mxu0 0.0
        %4957 = vmatprep.subr.mxu0 0.0
        %4958 = vmatpush1.msra.mxu0 0.0
        %4959 = vmatprep.subr.mxu0 0.0
        %4960 = vmatpush1.msra.mxu0 0.0
        %4961 = vmatprep.subr.mxu0 0.0
        %4962 = vmatpush1.msra.mxu0 0.0
        %4963 = vmatprep.subr.mxu0 0.0
        %4964 = vmatpush1.msra.mxu0 0.0
        %4965 = vmatprep.subr.mxu0 0.0
        %4966 = vmatpush1.msra.mxu0 0.0
        %4967 = vmatprep.subr.mxu0 0.0
        %4968 = vmatpush1.msra.mxu0 0.0
        %4969 = vmatprep.subr.mxu0 0.0
        %4970 = vmatpush1.msra.mxu0 0.0
        %4971 = vmatprep.subr.mxu0 0.0
        %4972 = vmatpush1.msra.mxu0 0.0
        %4973 = vmatprep.subr.mxu0 0.0
        %4974 = vmatpush1.msra.mxu0 0.0
        %4975 = vmatprep.subr.mxu0 0.0
        %4976 = vmatpush1.msra.mxu0 0.0
        %4977 = vmatprep.subr.mxu0 0.0
        %4978 = vmatpush1.msra.mxu0 0.0
        %4979 = vmatprep.subr.mxu0 0.0
        %4980 = vmatpush1.msra.mxu0 0.0
        %4981 = vmatprep.mubr.f32.mxu0 0.0
        %4982 = vmatmul.mubr.f32.gmra.mrb[0].mxu0 %v4913
        %v4983 = vpop.f32.mrb[0].mxu0
        %v4984 = vadd.f32 0.0, %v4983
        %v4985 = vpop.f32.mrb[0].mxu0
        %v4986 = vadd.f32 0.0, %v4985
        %4987 = vmatprep.mubr.f32.mxu0 0.0
        %4988 = vmatmul.mubr.f32.gmra.mrb[0].mxu0 %v4914
        %v4989 = vpop.f32.mrb[0].mxu0
        %v4990 = vadd.f32 0.0, %v4989
        %v4991 = vpop.f32.mrb[0].mxu0
        %v4992 = vadd.f32 0.0, %v4991
        %4993 = vmatprep.mubr.f32.mxu0 0.0
        %4994 = vmatmul.mubr.f32.gmra.mrb[0].mxu0 %v4915
        %v4995 = vpop.f32.mrb[0].mxu0
        %v4996 = vadd.f32 0.0, %v4995
        %v4997 = vpop.f32.mrb[0].mxu0
        %v4998 = vadd.f32 0.0, %v4997
        %4999 = vmatprep.mubr.f32.mxu0 0.0
        %5000 = vmatmul.mubr.f32.gmra.mrb[0].mxu0 %v4916
        %v5001 = vpop.f32.mrb[0].mxu0
        %v5002 = vadd.f32 0.0, %v5001
        %v5003 = vpop.f32.mrb[0].mxu0
        %v5004 = vadd.f32 0.0, %v5003
        %5005 = vdwg.mxu0
        %v5006 = vmul.f32 %v4309, %v4984
        %v5007 = vmul.f32 %v4311, %v4986
        %v5008 = vmul.f32 %v4315, %v4990
        %v5009 = vmul.f32 %v4317, %v4992
        %v5010 = vmul.f32 %v4321, %v4996
        %v5011 = vmul.f32 %v4323, %v4998
        %v5012 = vmul.f32 %v4327, %v5002
        %v5013 = vmul.f32 %v4329, %v5004
        %5014 = vmatprep.subr.mxu0 0.0
        %5015 = vmatpush1.msra.mxu0 %v548
        %5016 = vmatprep.subr.mxu0 0.0
        %5017 = vmatpush1.msra.mxu0 %v549
        %5018 = vmatprep.subr.mxu0 0.0
        %5019 = vmatpush1.msra.mxu0 %v550
        %5020 = vmatprep.subr.mxu0 0.0
        %5021 = vmatpush1.msra.mxu0 %v551
        %5022 = vmatprep.subr.mxu0 0.0
        %5023 = vmatpush1.msra.mxu0 %v552
        %5024 = vmatprep.subr.mxu0 0.0
        %5025 = vmatpush1.msra.mxu0 %v553
        %5026 = vmatprep.subr.mxu0 0.0
        %5027 = vmatpush1.msra.mxu0 %v554
        %5028 = vmatprep.subr.mxu0 0.0
        %5029 = vmatpush1.msra.mxu0 %v555
        %5030 = vmatprep.subr.mxu0 0.0
        %5031 = vmatpush1.msra.mxu0 %v556
        %5032 = vmatprep.subr.mxu0 0.0
        %5033 = vmatpush1.msra.mxu0 %v557
        %5034 = vmatprep.subr.mxu0 0.0
        %5035 = vmatpush1.msra.mxu0 %v558
        %5036 = vmatprep.subr.mxu0 0.0
        %5037 = vmatpush1.msra.mxu0 %v559
        %5038 = vmatprep.subr.mxu0 0.0
        %5039 = vmatpush1.msra.mxu0 %v560
        %5040 = vmatprep.subr.mxu0 0.0
        %5041 = vmatpush1.msra.mxu0 %v561
        %5042 = vmatprep.subr.mxu0 0.0
        %5043 = vmatpush1.msra.mxu0 %v562
        %5044 = vmatprep.subr.mxu0 0.0
        %5045 = vmatpush1.msra.mxu0 %v563
        %5046 = vmatprep.subr.mxu0 0.0
        %5047 = vmatpush1.msra.mxu0 %v564
        %5048 = vmatprep.subr.mxu0 0.0
        %5049 = vmatpush1.msra.mxu0 %v565
        %5050 = vmatprep.subr.mxu0 0.0
        %5051 = vmatpush1.msra.mxu0 %v566
        %5052 = vmatprep.subr.mxu0 0.0
        %5053 = vmatpush1.msra.mxu0 %v567
        %5054 = vmatprep.subr.mxu0 0.0
        %5055 = vmatpush1.msra.mxu0 %v568
        %5056 = vmatprep.subr.mxu0 0.0
        %5057 = vmatpush1.msra.mxu0 %v569
        %5058 = vmatprep.subr.mxu0 0.0
        %5059 = vmatpush1.msra.mxu0 %v570
        %5060 = vmatprep.subr.mxu0 0.0
        %5061 = vmatpush1.msra.mxu0 %v571
        %5062 = vmatprep.subr.mxu0 0.0
        %5063 = vmatpush1.msra.mxu0 %v572
        %5064 = vmatprep.subr.mxu0 0.0
        %5065 = vmatpush1.msra.mxu0 %v573
        %5066 = vmatprep.subr.mxu0 0.0
        %5067 = vmatpush1.msra.mxu0 %v574
        %5068 = vmatprep.subr.mxu0 0.0
        %5069 = vmatpush1.msra.mxu0 %v575
        %5070 = vmatprep.subr.mxu0 0.0
        %5071 = vmatpush1.msra.mxu0 %v576
        %5072 = vmatprep.subr.mxu0 0.0
        %5073 = vmatpush1.msra.mxu0 %v577
        %5074 = vmatprep.subr.mxu0 0.0
        %5075 = vmatpush1.msra.mxu0 %v578
        %5076 = vmatprep.subr.mxu0 0.0
        %5077 = vmatpush1.msra.mxu0 %v579
        %5078 = vmatprep.mubr.f32.mxu0 %v5007
        %5079 = vmatmul.mubr.f32.gmra.mrb[0].mxu0 %v5006
        %v5080 = vpop.f32.mrb[0].mxu0
        %v5081 = vadd.f32 0.0, %v5080
        %v5082 = vpop.f32.mrb[0].mxu0
        %5083 = vmatprep.mubr.f32.mxu0 %v5009
        %5084 = vmatmul.mubr.f32.gmra.mrb[0].mxu0 %v5008
        %v5085 = vpop.f32.mrb[0].mxu0
        %v5086 = vadd.f32 0.0, %v5085
        %v5087 = vpop.f32.mrb[0].mxu0
        %5088 = vmatprep.mubr.f32.mxu0 %v5011
        %5089 = vmatmul.mubr.f32.gmra.mrb[0].mxu0 %v5010
        %v5090 = vpop.f32.mrb[0].mxu0
        %v5091 = vadd.f32 0.0, %v5090
        %v5092 = vpop.f32.mrb[0].mxu0
        %5093 = vmatprep.mubr.f32.mxu0 %v5013
        %5094 = vmatmul.mubr.f32.gmra.mrb[0].mxu0 %v5012
        %v5095 = vpop.f32.mrb[0].mxu0
        %v5096 = vadd.f32 0.0, %v5095
        %v5097 = vpop.f32.mrb[0].mxu0
        %5098 = vdwg.mxu0
        %v5099 = vmul.f32 %v5081, %v3213
        %v5100 = vmul.f32 %v5086, %v3213
        %v5101 = vmul.f32 %v5091, %v3213
        %v5102 = vmul.f32 %v5096, %v3213
        %v5103 = vadd.f32 %v4909, %v5099
        %v5104 = vadd.f32 %v4910, %v5100
        %v5105 = vadd.f32 %v4911, %v5101
        %v5106 = vadd.f32 %v4912, %v5102
        %v5107 = vmul.f32 %v2274, %v3415
        %v5108 = vmul.f32 %v2279, %v3415
        %v5109 = vmul.f32 %v2284, %v3415
        %v5110 = vmul.f32 %v2289, %v3415
        %5111 = vmatprep.subr.mxu0 %v517
        %5112 = vmatpush1.msra.mxu0 %v516
        %5113 = vmatprep.subr.mxu0 %v519
        %5114 = vmatpush1.msra.mxu0 %v518
        %5115 = vmatprep.subr.mxu0 %v521
        %5116 = vmatpush1.msra.mxu0 %v520
        %5117 = vmatprep.subr.mxu0 %v523
        %5118 = vmatpush1.msra.mxu0 %v522
        %5119 = vmatprep.subr.mxu0 %v525
        %5120 = vmatpush1.msra.mxu0 %v524
        %5121 = vmatprep.subr.mxu0 %v527
        %5122 = vmatpush1.msra.mxu0 %v526
        %5123 = vmatprep.subr.mxu0 %v529
        %5124 = vmatpush1.msra.mxu0 %v528
        %5125 = vmatprep.subr.mxu0 %v531
        %5126 = vmatpush1.msra.mxu0 %v530
        %5127 = vmatprep.subr.mxu0 %v533
        %5128 = vmatpush1.msra.mxu0 %v532
        %5129 = vmatprep.subr.mxu0 %v535
        %5130 = vmatpush1.msra.mxu0 %v534
        %5131 = vmatprep.subr.mxu0 %v537
        %5132 = vmatpush1.msra.mxu0 %v536
        %5133 = vmatprep.subr.mxu0 %v539
        %5134 = vmatpush1.msra.mxu0 %v538
        %5135 = vmatprep.subr.mxu0 %v541
        %5136 = vmatpush1.msra.mxu0 %v540
        %5137 = vmatprep.subr.mxu0 %v543
        %5138 = vmatpush1.msra.mxu0 %v542
        %5139 = vmatprep.subr.mxu0 %v545
        %5140 = vmatpush1.msra.mxu0 %v544
        %5141 = vmatprep.subr.mxu0 %v547
        %5142 = vmatpush1.msra.mxu0 %v546
        %5143 = vmatprep.subr.mxu0 0.0
        %5144 = vmatpush1.msra.mxu0 0.0
        %5145 = vmatprep.subr.mxu0 0.0
        %5146 = vmatpush1.msra.mxu0 0.0
        %5147 = vmatprep.subr.mxu0 0.0
        %5148 = vmatpush1.msra.mxu0 0.0
        %5149 = vmatprep.subr.mxu0 0.0
        %5150 = vmatpush1.msra.mxu0 0.0
        %5151 = vmatprep.subr.mxu0 0.0
        %5152 = vmatpush1.msra.mxu0 0.0
        %5153 = vmatprep.subr.mxu0 0.0
        %5154 = vmatpush1.msra.mxu0 0.0
        %5155 = vmatprep.subr.mxu0 0.0
        %5156 = vmatpush1.msra.mxu0 0.0
        %5157 = vmatprep.subr.mxu0 0.0
        %5158 = vmatpush1.msra.mxu0 0.0
        %5159 = vmatprep.subr.mxu0 0.0
        %5160 = vmatpush1.msra.mxu0 0.0
        %5161 = vmatprep.subr.mxu0 0.0
        %5162 = vmatpush1.msra.mxu0 0.0
        %5163 = vmatprep.subr.mxu0 0.0
        %5164 = vmatpush1.msra.mxu0 0.0
        %5165 = vmatprep.subr.mxu0 0.0
        %5166 = vmatpush1.msra.mxu0 0.0
        %5167 = vmatprep.subr.mxu0 0.0
        %5168 = vmatpush1.msra.mxu0 0.0
        %5169 = vmatprep.subr.mxu0 0.0
        %5170 = vmatpush1.msra.mxu0 0.0
        %5171 = vmatprep.subr.mxu0 0.0
        %5172 = vmatpush1.msra.mxu0 0.0
        %5173 = vmatprep.subr.mxu0 0.0
        %5174 = vmatpush1.msra.mxu0 0.0
        %5175 = vmatprep.mubr.f32.mxu0 0.0
        %5176 = vmatmul.mubr.f32.gmra.mrb[0].mxu0 %v5107
        %v5177 = vpop.f32.mrb[0].mxu0
        %v5178 = vadd.f32 0.0, %v5177
        %v5179 = vpop.f32.mrb[0].mxu0
        %v5180 = vadd.f32 0.0, %v5179
        %5181 = vmatprep.mubr.f32.mxu0 0.0
        %5182 = vmatmul.mubr.f32.gmra.mrb[0].mxu0 %v5108
        %v5183 = vpop.f32.mrb[0].mxu0
        %v5184 = vadd.f32 0.0, %v5183
        %v5185 = vpop.f32.mrb[0].mxu0
        %v5186 = vadd.f32 0.0, %v5185
        %5187 = vmatprep.mubr.f32.mxu0 0.0
        %5188 = vmatmul.mubr.f32.gmra.mrb[0].mxu0 %v5109
        %v5189 = vpop.f32.mrb[0].mxu0
        %v5190 = vadd.f32 0.0, %v5189
        %v5191 = vpop.f32.mrb[0].mxu0
        %v5192 = vadd.f32 0.0, %v5191
        %5193 = vmatprep.mubr.f32.mxu0 0.0
        %5194 = vmatmul.mubr.f32.gmra.mrb[0].mxu0 %v5110
        %v5195 = vpop.f32.mrb[0].mxu0
        %v5196 = vadd.f32 0.0, %v5195
        %v5197 = vpop.f32.mrb[0].mxu0
        %v5198 = vadd.f32 0.0, %v5197
        %5199 = vdwg.mxu0
        %v5200 = vmul.f32 %v4309, %v5178
        %v5201 = vmul.f32 %v4311, %v5180
        %v5202 = vmul.f32 %v4315, %v5184
        %v5203 = vmul.f32 %v4317, %v5186
        %v5204 = vmul.f32 %v4321, %v5190
        %v5205 = vmul.f32 %v4323, %v5192
        %v5206 = vmul.f32 %v4327, %v5196
        %v5207 = vmul.f32 %v4329, %v5198
        %5208 = vmatprep.subr.mxu0 0.0
        %5209 = vmatpush1.msra.mxu0 %v548
        %5210 = vmatprep.subr.mxu0 0.0
        %5211 = vmatpush1.msra.mxu0 %v549
        %5212 = vmatprep.subr.mxu0 0.0
        %5213 = vmatpush1.msra.mxu0 %v550
        %5214 = vmatprep.subr.mxu0 0.0
        %5215 = vmatpush1.msra.mxu0 %v551
        %5216 = vmatprep.subr.mxu0 0.0
        %5217 = vmatpush1.msra.mxu0 %v552
        %5218 = vmatprep.subr.mxu0 0.0
        %5219 = vmatpush1.msra.mxu0 %v553
        %5220 = vmatprep.subr.mxu0 0.0
        %5221 = vmatpush1.msra.mxu0 %v554
        %5222 = vmatprep.subr.mxu0 0.0
        %5223 = vmatpush1.msra.mxu0 %v555
        %5224 = vmatprep.subr.mxu0 0.0
        %5225 = vmatpush1.msra.mxu0 %v556
        %5226 = vmatprep.subr.mxu0 0.0
        %5227 = vmatpush1.msra.mxu0 %v557
        %5228 = vmatprep.subr.mxu0 0.0
        %5229 = vmatpush1.msra.mxu0 %v558
        %5230 = vmatprep.subr.mxu0 0.0
        %5231 = vmatpush1.msra.mxu0 %v559
        %5232 = vmatprep.subr.mxu0 0.0
        %5233 = vmatpush1.msra.mxu0 %v560
        %5234 = vmatprep.subr.mxu0 0.0
        %5235 = vmatpush1.msra.mxu0 %v561
        %5236 = vmatprep.subr.mxu0 0.0
        %5237 = vmatpush1.msra.mxu0 %v562
        %5238 = vmatprep.subr.mxu0 0.0
        %5239 = vmatpush1.msra.mxu0 %v563
        %5240 = vmatprep.subr.mxu0 0.0
        %5241 = vmatpush1.msra.mxu0 %v564
        %5242 = vmatprep.subr.mxu0 0.0
        %5243 = vmatpush1.msra.mxu0 %v565
        %5244 = vmatprep.subr.mxu0 0.0
        %5245 = vmatpush1.msra.mxu0 %v566
        %5246 = vmatprep.subr.mxu0 0.0
        %5247 = vmatpush1.msra.mxu0 %v567
        %5248 = vmatprep.subr.mxu0 0.0
        %5249 = vmatpush1.msra.mxu0 %v568
        %5250 = vmatprep.subr.mxu0 0.0
        %5251 = vmatpush1.msra.mxu0 %v569
        %5252 = vmatprep.subr.mxu0 0.0
        %5253 = vmatpush1.msra.mxu0 %v570
        %5254 = vmatprep.subr.mxu0 0.0
        %5255 = vmatpush1.msra.mxu0 %v571
        %5256 = vmatprep.subr.mxu0 0.0
        %5257 = vmatpush1.msra.mxu0 %v572
        %5258 = vmatprep.subr.mxu0 0.0
        %5259 = vmatpush1.msra.mxu0 %v573
        %5260 = vmatprep.subr.mxu0 0.0
        %5261 = vmatpush1.msra.mxu0 %v574
        %5262 = vmatprep.subr.mxu0 0.0
        %5263 = vmatpush1.msra.mxu0 %v575
        %5264 = vmatprep.subr.mxu0 0.0
        %5265 = vmatpush1.msra.mxu0 %v576
        %5266 = vmatprep.subr.mxu0 0.0
        %5267 = vmatpush1.msra.mxu0 %v577
        %5268 = vmatprep.subr.mxu0 0.0
        %5269 = vmatpush1.msra.mxu0 %v578
        %5270 = vmatprep.subr.mxu0 0.0
        %5271 = vmatpush1.msra.mxu0 %v579
        %5272 = vmatprep.mubr.f32.mxu0 %v5201
        %5273 = vmatmul.mubr.f32.gmra.mrb[0].mxu0 %v5200
        %v5274 = vpop.f32.mrb[0].mxu0
        %v5275 = vadd.f32 0.0, %v5274
        %v5276 = vpop.f32.mrb[0].mxu0
        %5277 = vmatprep.mubr.f32.mxu0 %v5203
        %5278 = vmatmul.mubr.f32.gmra.mrb[0].mxu0 %v5202
        %v5279 = vpop.f32.mrb[0].mxu0
        %v5280 = vadd.f32 0.0, %v5279
        %v5281 = vpop.f32.mrb[0].mxu0
        %5282 = vmatprep.mubr.f32.mxu0 %v5205
        %5283 = vmatmul.mubr.f32.gmra.mrb[0].mxu0 %v5204
        %v5284 = vpop.f32.mrb[0].mxu0
        %v5285 = vadd.f32 0.0, %v5284
        %v5286 = vpop.f32.mrb[0].mxu0
        %5287 = vmatprep.mubr.f32.mxu0 %v5207
        %5288 = vmatmul.mubr.f32.gmra.mrb[0].mxu0 %v5206
        %v5289 = vpop.f32.mrb[0].mxu0
        %v5290 = vadd.f32 0.0, %v5289
        %v5291 = vpop.f32.mrb[0].mxu0
        %5292 = vdwg.mxu0
        %v5293 = vmul.f32 %v5275, %v3415
        %v5294 = vmul.f32 %v5280, %v3415
        %v5295 = vmul.f32 %v5285, %v3415
        %v5296 = vmul.f32 %v5290, %v3415
        %v5297 = vadd.f32 %v5103, %v5293
        %v5298 = vadd.f32 %v5104, %v5294
        %v5299 = vadd.f32 %v5105, %v5295
        %v5300 = vadd.f32 %v5106, %v5296
        %v5301 = vmul.f32 %v2274, %v3617
        %v5302 = vmul.f32 %v2279, %v3617
        %v5303 = vmul.f32 %v2284, %v3617
        %v5304 = vmul.f32 %v2289, %v3617
        %5305 = vmatprep.subr.mxu0 %v517
        %5306 = vmatpush1.msra.mxu0 %v516
        %5307 = vmatprep.subr.mxu0 %v519
        %5308 = vmatpush1.msra.mxu0 %v518
        %5309 = vmatprep.subr.mxu0 %v521
        %5310 = vmatpush1.msra.mxu0 %v520
        %5311 = vmatprep.subr.mxu0 %v523
        %5312 = vmatpush1.msra.mxu0 %v522
        %5313 = vmatprep.subr.mxu0 %v525
        %5314 = vmatpush1.msra.mxu0 %v524
        %5315 = vmatprep.subr.mxu0 %v527
        %5316 = vmatpush1.msra.mxu0 %v526
        %5317 = vmatprep.subr.mxu0 %v529
        %5318 = vmatpush1.msra.mxu0 %v528
        %5319 = vmatprep.subr.mxu0 %v531
        %5320 = vmatpush1.msra.mxu0 %v530
        %5321 = vmatprep.subr.mxu0 %v533
        %5322 = vmatpush1.msra.mxu0 %v532
        %5323 = vmatprep.subr.mxu0 %v535
        %5324 = vmatpush1.msra.mxu0 %v534
        %5325 = vmatprep.subr.mxu0 %v537
        %5326 = vmatpush1.msra.mxu0 %v536
        %5327 = vmatprep.subr.mxu0 %v539
        %5328 = vmatpush1.msra.mxu0 %v538
        %5329 = vmatprep.subr.mxu0 %v541
        %5330 = vmatpush1.msra.mxu0 %v540
        %5331 = vmatprep.subr.mxu0 %v543
        %5332 = vmatpush1.msra.mxu0 %v542
        %5333 = vmatprep.subr.mxu0 %v545
        %5334 = vmatpush1.msra.mxu0 %v544
        %5335 = vmatprep.subr.mxu0 %v547
        %5336 = vmatpush1.msra.mxu0 %v546
        %5337 = vmatprep.subr.mxu0 0.0
        %5338 = vmatpush1.msra.mxu0 0.0
        %5339 = vmatprep.subr.mxu0 0.0
        %5340 = vmatpush1.msra.mxu0 0.0
        %5341 = vmatprep.subr.mxu0 0.0
        %5342 = vmatpush1.msra.mxu0 0.0
        %5343 = vmatprep.subr.mxu0 0.0
        %5344 = vmatpush1.msra.mxu0 0.0
        %5345 = vmatprep.subr.mxu0 0.0
        %5346 = vmatpush1.msra.mxu0 0.0
        %5347 = vmatprep.subr.mxu0 0.0
        %5348 = vmatpush1.msra.mxu0 0.0
        %5349 = vmatprep.subr.mxu0 0.0
        %5350 = vmatpush1.msra.mxu0 0.0
        %5351 = vmatprep.subr.mxu0 0.0
        %5352 = vmatpush1.msra.mxu0 0.0
        %5353 = vmatprep.subr.mxu0 0.0
        %5354 = vmatpush1.msra.mxu0 0.0
        %5355 = vmatprep.subr.mxu0 0.0
        %5356 = vmatpush1.msra.mxu0 0.0
        %5357 = vmatprep.subr.mxu0 0.0
        %5358 = vmatpush1.msra.mxu0 0.0
        %5359 = vmatprep.subr.mxu0 0.0
        %5360 = vmatpush1.msra.mxu0 0.0
        %5361 = vmatprep.subr.mxu0 0.0
        %5362 = vmatpush1.msra.mxu0 0.0
        %5363 = vmatprep.subr.mxu0 0.0
        %5364 = vmatpush1.msra.mxu0 0.0
        %5365 = vmatprep.subr.mxu0 0.0
        %5366 = vmatpush1.msra.mxu0 0.0
        %5367 = vmatprep.subr.mxu0 0.0
        %5368 = vmatpush1.msra.mxu0 0.0
        %5369 = vmatprep.mubr.f32.mxu0 0.0
        %5370 = vmatmul.mubr.f32.gmra.mrb[0].mxu0 %v5301
        %v5371 = vpop.f32.mrb[0].mxu0
        %v5372 = vadd.f32 0.0, %v5371
        %v5373 = vpop.f32.mrb[0].mxu0
        %v5374 = vadd.f32 0.0, %v5373
        %5375 = vmatprep.mubr.f32.mxu0 0.0
        %5376 = vmatmul.mubr.f32.gmra.mrb[0].mxu0 %v5302
        %v5377 = vpop.f32.mrb[0].mxu0
        %v5378 = vadd.f32 0.0, %v5377
        %v5379 = vpop.f32.mrb[0].mxu0
        %v5380 = vadd.f32 0.0, %v5379
        %5381 = vmatprep.mubr.f32.mxu0 0.0
        %5382 = vmatmul.mubr.f32.gmra.mrb[0].mxu0 %v5303
        %v5383 = vpop.f32.mrb[0].mxu0
        %v5384 = vadd.f32 0.0, %v5383
        %v5385 = vpop.f32.mrb[0].mxu0
        %v5386 = vadd.f32 0.0, %v5385
        %5387 = vmatprep.mubr.f32.mxu0 0.0
        %5388 = vmatmul.mubr.f32.gmra.mrb[0].mxu0 %v5304
        %v5389 = vpop.f32.mrb[0].mxu0
        %v5390 = vadd.f32 0.0, %v5389
        %v5391 = vpop.f32.mrb[0].mxu0
        %v5392 = vadd.f32 0.0, %v5391
        %5393 = vdwg.mxu0
        %v5394 = vmul.f32 %v4309, %v5372
        %v5395 = vmul.f32 %v4311, %v5374
        %v5396 = vmul.f32 %v4315, %v5378
        %v5397 = vmul.f32 %v4317, %v5380
        %v5398 = vmul.f32 %v4321, %v5384
        %v5399 = vmul.f32 %v4323, %v5386
        %v5400 = vmul.f32 %v4327, %v5390
        %v5401 = vmul.f32 %v4329, %v5392
        %5402 = vmatprep.subr.mxu0 0.0
        %5403 = vmatpush1.msra.mxu0 %v548
        %5404 = vmatprep.subr.mxu0 0.0
        %5405 = vmatpush1.msra.mxu0 %v549
        %5406 = vmatprep.subr.mxu0 0.0
        %5407 = vmatpush1.msra.mxu0 %v550
        %5408 = vmatprep.subr.mxu0 0.0
        %5409 = vmatpush1.msra.mxu0 %v551
        %5410 = vmatprep.subr.mxu0 0.0
        %5411 = vmatpush1.msra.mxu0 %v552
        %5412 = vmatprep.subr.mxu0 0.0
        %5413 = vmatpush1.msra.mxu0 %v553
        %5414 = vmatprep.subr.mxu0 0.0
        %5415 = vmatpush1.msra.mxu0 %v554
        %5416 = vmatprep.subr.mxu0 0.0
        %5417 = vmatpush1.msra.mxu0 %v555
        %5418 = vmatprep.subr.mxu0 0.0
        %5419 = vmatpush1.msra.mxu0 %v556
        %5420 = vmatprep.subr.mxu0 0.0
        %5421 = vmatpush1.msra.mxu0 %v557
        %5422 = vmatprep.subr.mxu0 0.0
        %5423 = vmatpush1.msra.mxu0 %v558
        %5424 = vmatprep.subr.mxu0 0.0
        %5425 = vmatpush1.msra.mxu0 %v559
        %5426 = vmatprep.subr.mxu0 0.0
        %5427 = vmatpush1.msra.mxu0 %v560
        %5428 = vmatprep.subr.mxu0 0.0
        %5429 = vmatpush1.msra.mxu0 %v561
        %5430 = vmatprep.subr.mxu0 0.0
        %5431 = vmatpush1.msra.mxu0 %v562
        %5432 = vmatprep.subr.mxu0 0.0
        %5433 = vmatpush1.msra.mxu0 %v563
        %5434 = vmatprep.subr.mxu0 0.0
        %5435 = vmatpush1.msra.mxu0 %v564
        %5436 = vmatprep.subr.mxu0 0.0
        %5437 = vmatpush1.msra.mxu0 %v565
        %5438 = vmatprep.subr.mxu0 0.0
        %5439 = vmatpush1.msra.mxu0 %v566
        %5440 = vmatprep.subr.mxu0 0.0
        %5441 = vmatpush1.msra.mxu0 %v567
        %5442 = vmatprep.subr.mxu0 0.0
        %5443 = vmatpush1.msra.mxu0 %v568
        %5444 = vmatprep.subr.mxu0 0.0
        %5445 = vmatpush1.msra.mxu0 %v569
        %5446 = vmatprep.subr.mxu0 0.0
        %5447 = vmatpush1.msra.mxu0 %v570
        %5448 = vmatprep.subr.mxu0 0.0
        %5449 = vmatpush1.msra.mxu0 %v571
        %5450 = vmatprep.subr.mxu0 0.0
        %5451 = vmatpush1.msra.mxu0 %v572
        %5452 = vmatprep.subr.mxu0 0.0
        %5453 = vmatpush1.msra.mxu0 %v573
        %5454 = vmatprep.subr.mxu0 0.0
        %5455 = vmatpush1.msra.mxu0 %v574
        %5456 = vmatprep.subr.mxu0 0.0
        %5457 = vmatpush1.msra.mxu0 %v575
        %5458 = vmatprep.subr.mxu0 0.0
        %5459 = vmatpush1.msra.mxu0 %v576
        %5460 = vmatprep.subr.mxu0 0.0
        %5461 = vmatpush1.msra.mxu0 %v577
        %5462 = vmatprep.subr.mxu0 0.0
        %5463 = vmatpush1.msra.mxu0 %v578
        %5464 = vmatprep.subr.mxu0 0.0
        %5465 = vmatpush1.msra.mxu0 %v579
        %5466 = vmatprep.mubr.f32.mxu0 %v5395
        %5467 = vmatmul.mubr.f32.gmra.mrb[0].mxu0 %v5394
        %v5468 = vpop.f32.mrb[0].mxu0
        %v5469 = vadd.f32 0.0, %v5468
        %v5470 = vpop.f32.mrb[0].mxu0
        %5471 = vmatprep.mubr.f32.mxu0 %v5397
        %5472 = vmatmul.mubr.f32.gmra.mrb[0].mxu0 %v5396
        %v5473 = vpop.f32.mrb[0].mxu0
        %v5474 = vadd.f32 0.0, %v5473
        %v5475 = vpop.f32.mrb[0].mxu0
        %5476 = vmatprep.mubr.f32.mxu0 %v5399
        %5477 = vmatmul.mubr.f32.gmra.mrb[0].mxu0 %v5398
        %v5478 = vpop.f32.mrb[0].mxu0
        %v5479 = vadd.f32 0.0, %v5478
        %v5480 = vpop.f32.mrb[0].mxu0
        %5481 = vmatprep.mubr.f32.mxu0 %v5401
        %5482 = vmatmul.mubr.f32.gmra.mrb[0].mxu0 %v5400
        %v5483 = vpop.f32.mrb[0].mxu0
        %v5484 = vadd.f32 0.0, %v5483
        %v5485 = vpop.f32.mrb[0].mxu0
        %5486 = vdwg.mxu0
        %v5487 = vmul.f32 %v5469, %v3617
        %v5488 = vmul.f32 %v5474, %v3617
        %v5489 = vmul.f32 %v5479, %v3617
        %v5490 = vmul.f32 %v5484, %v3617
        %v5491 = vadd.f32 %v5297, %v5487
        %v5492 = vadd.f32 %v5298, %v5488
        %v5493 = vadd.f32 %v5299, %v5489
        %v5494 = vadd.f32 %v5300, %v5490
        %v5495 = vmul.f32 %v2274, %v3819
        %v5496 = vmul.f32 %v2279, %v3819
        %v5497 = vmul.f32 %v2284, %v3819
        %v5498 = vmul.f32 %v2289, %v3819
        %5499 = vmatprep.subr.mxu0 %v517
        %5500 = vmatpush1.msra.mxu0 %v516
        %5501 = vmatprep.subr.mxu0 %v519
        %5502 = vmatpush1.msra.mxu0 %v518
        %5503 = vmatprep.subr.mxu0 %v521
        %5504 = vmatpush1.msra.mxu0 %v520
        %5505 = vmatprep.subr.mxu0 %v523
        %5506 = vmatpush1.msra.mxu0 %v522
        %5507 = vmatprep.subr.mxu0 %v525
        %5508 = vmatpush1.msra.mxu0 %v524
        %5509 = vmatprep.subr.mxu0 %v527
        %5510 = vmatpush1.msra.mxu0 %v526
        %5511 = vmatprep.subr.mxu0 %v529
        %5512 = vmatpush1.msra.mxu0 %v528
        %5513 = vmatprep.subr.mxu0 %v531
        %5514 = vmatpush1.msra.mxu0 %v530
        %5515 = vmatprep.subr.mxu0 %v533
        %5516 = vmatpush1.msra.mxu0 %v532
        %5517 = vmatprep.subr.mxu0 %v535
        %5518 = vmatpush1.msra.mxu0 %v534
        %5519 = vmatprep.subr.mxu0 %v537
        %5520 = vmatpush1.msra.mxu0 %v536
        %5521 = vmatprep.subr.mxu0 %v539
        %5522 = vmatpush1.msra.mxu0 %v538
        %5523 = vmatprep.subr.mxu0 %v541
        %5524 = vmatpush1.msra.mxu0 %v540
        %5525 = vmatprep.subr.mxu0 %v543
        %5526 = vmatpush1.msra.mxu0 %v542
        %5527 = vmatprep.subr.mxu0 %v545
        %5528 = vmatpush1.msra.mxu0 %v544
        %5529 = vmatprep.subr.mxu0 %v547
        %5530 = vmatpush1.msra.mxu0 %v546
        %5531 = vmatprep.subr.mxu0 0.0
        %5532 = vmatpush1.msra.mxu0 0.0
        %5533 = vmatprep.subr.mxu0 0.0
        %5534 = vmatpush1.msra.mxu0 0.0
        %5535 = vmatprep.subr.mxu0 0.0
        %5536 = vmatpush1.msra.mxu0 0.0
        %5537 = vmatprep.subr.mxu0 0.0
        %5538 = vmatpush1.msra.mxu0 0.0
        %5539 = vmatprep.subr.mxu0 0.0
        %5540 = vmatpush1.msra.mxu0 0.0
        %5541 = vmatprep.subr.mxu0 0.0
        %5542 = vmatpush1.msra.mxu0 0.0
        %5543 = vmatprep.subr.mxu0 0.0
        %5544 = vmatpush1.msra.mxu0 0.0
        %5545 = vmatprep.subr.mxu0 0.0
        %5546 = vmatpush1.msra.mxu0 0.0
        %5547 = vmatprep.subr.mxu0 0.0
        %5548 = vmatpush1.msra.mxu0 0.0
        %5549 = vmatprep.subr.mxu0 0.0
        %5550 = vmatpush1.msra.mxu0 0.0
        %5551 = vmatprep.subr.mxu0 0.0
        %5552 = vmatpush1.msra.mxu0 0.0
        %5553 = vmatprep.subr.mxu0 0.0
        %5554 = vmatpush1.msra.mxu0 0.0
        %5555 = vmatprep.subr.mxu0 0.0
        %5556 = vmatpush1.msra.mxu0 0.0
        %5557 = vmatprep.subr.mxu0 0.0
        %5558 = vmatpush1.msra.mxu0 0.0
        %5559 = vmatprep.subr.mxu0 0.0
        %5560 = vmatpush1.msra.mxu0 0.0
        %5561 = vmatprep.subr.mxu0 0.0
        %5562 = vmatpush1.msra.mxu0 0.0
        %5563 = vmatprep.mubr.f32.mxu0 0.0
        %5564 = vmatmul.mubr.f32.gmra.mrb[0].mxu0 %v5495
        %v5565 = vpop.f32.mrb[0].mxu0
        %v5566 = vadd.f32 0.0, %v5565
        %v5567 = vpop.f32.mrb[0].mxu0
        %v5568 = vadd.f32 0.0, %v5567
        %5569 = vmatprep.mubr.f32.mxu0 0.0
        %5570 = vmatmul.mubr.f32.gmra.mrb[0].mxu0 %v5496
        %v5571 = vpop.f32.mrb[0].mxu0
        %v5572 = vadd.f32 0.0, %v5571
        %v5573 = vpop.f32.mrb[0].mxu0
        %v5574 = vadd.f32 0.0, %v5573
        %5575 = vmatprep.mubr.f32.mxu0 0.0
        %5576 = vmatmul.mubr.f32.gmra.mrb[0].mxu0 %v5497
        %v5577 = vpop.f32.mrb[0].mxu0
        %v5578 = vadd.f32 0.0, %v5577
        %v5579 = vpop.f32.mrb[0].mxu0
        %v5580 = vadd.f32 0.0, %v5579
        %5581 = vmatprep.mubr.f32.mxu0 0.0
        %5582 = vmatmul.mubr.f32.gmra.mrb[0].mxu0 %v5498
        %v5583 = vpop.f32.mrb[0].mxu0
        %v5584 = vadd.f32 0.0, %v5583
        %v5585 = vpop.f32.mrb[0].mxu0
        %v5586 = vadd.f32 0.0, %v5585
        %5587 = vdwg.mxu0
        %v5588 = vmul.f32 %v4309, %v5566
        %v5589 = vmul.f32 %v4311, %v5568
        %v5590 = vmul.f32 %v4315, %v5572
        %v5591 = vmul.f32 %v4317, %v5574
        %v5592 = vmul.f32 %v4321, %v5578
        %v5593 = vmul.f32 %v4323, %v5580
        %v5594 = vmul.f32 %v4327, %v5584
        %v5595 = vmul.f32 %v4329, %v5586
        %5596 = vmatprep.subr.mxu0 0.0
        %5597 = vmatpush1.msra.mxu0 %v548
        %5598 = vmatprep.subr.mxu0 0.0
        %5599 = vmatpush1.msra.mxu0 %v549
        %5600 = vmatprep.subr.mxu0 0.0
        %5601 = vmatpush1.msra.mxu0 %v550
        %5602 = vmatprep.subr.mxu0 0.0
        %5603 = vmatpush1.msra.mxu0 %v551
        %5604 = vmatprep.subr.mxu0 0.0
        %5605 = vmatpush1.msra.mxu0 %v552
        %5606 = vmatprep.subr.mxu0 0.0
        %5607 = vmatpush1.msra.mxu0 %v553
        %5608 = vmatprep.subr.mxu0 0.0
        %5609 = vmatpush1.msra.mxu0 %v554
        %5610 = vmatprep.subr.mxu0 0.0
        %5611 = vmatpush1.msra.mxu0 %v555
        %5612 = vmatprep.subr.mxu0 0.0
        %5613 = vmatpush1.msra.mxu0 %v556
        %5614 = vmatprep.subr.mxu0 0.0
        %5615 = vmatpush1.msra.mxu0 %v557
        %5616 = vmatprep.subr.mxu0 0.0
        %5617 = vmatpush1.msra.mxu0 %v558
        %5618 = vmatprep.subr.mxu0 0.0
        %5619 = vmatpush1.msra.mxu0 %v559
        %5620 = vmatprep.subr.mxu0 0.0
        %5621 = vmatpush1.msra.mxu0 %v560
        %5622 = vmatprep.subr.mxu0 0.0
        %5623 = vmatpush1.msra.mxu0 %v561
        %5624 = vmatprep.subr.mxu0 0.0
        %5625 = vmatpush1.msra.mxu0 %v562
        %5626 = vmatprep.subr.mxu0 0.0
        %5627 = vmatpush1.msra.mxu0 %v563
        %5628 = vmatprep.subr.mxu0 0.0
        %5629 = vmatpush1.msra.mxu0 %v564
        %5630 = vmatprep.subr.mxu0 0.0
        %5631 = vmatpush1.msra.mxu0 %v565
        %5632 = vmatprep.subr.mxu0 0.0
        %5633 = vmatpush1.msra.mxu0 %v566
        %5634 = vmatprep.subr.mxu0 0.0
        %5635 = vmatpush1.msra.mxu0 %v567
        %5636 = vmatprep.subr.mxu0 0.0
        %5637 = vmatpush1.msra.mxu0 %v568
        %5638 = vmatprep.subr.mxu0 0.0
        %5639 = vmatpush1.msra.mxu0 %v569
        %5640 = vmatprep.subr.mxu0 0.0
        %5641 = vmatpush1.msra.mxu0 %v570
        %5642 = vmatprep.subr.mxu0 0.0
        %5643 = vmatpush1.msra.mxu0 %v571
        %5644 = vmatprep.subr.mxu0 0.0
        %5645 = vmatpush1.msra.mxu0 %v572
        %5646 = vmatprep.subr.mxu0 0.0
        %5647 = vmatpush1.msra.mxu0 %v573
        %5648 = vmatprep.subr.mxu0 0.0
        %5649 = vmatpush1.msra.mxu0 %v574
        %5650 = vmatprep.subr.mxu0 0.0
        %5651 = vmatpush1.msra.mxu0 %v575
        %5652 = vmatprep.subr.mxu0 0.0
        %5653 = vmatpush1.msra.mxu0 %v576
        %5654 = vmatprep.subr.mxu0 0.0
        %5655 = vmatpush1.msra.mxu0 %v577
        %5656 = vmatprep.subr.mxu0 0.0
        %5657 = vmatpush1.msra.mxu0 %v578
        %5658 = vmatprep.subr.mxu0 0.0
        %5659 = vmatpush1.msra.mxu0 %v579
        %5660 = vmatprep.mubr.f32.mxu0 %v5589
        %5661 = vmatmul.mubr.f32.gmra.mrb[0].mxu0 %v5588
        %v5662 = vpop.f32.mrb[0].mxu0
        %v5663 = vadd.f32 0.0, %v5662
        %v5664 = vpop.f32.mrb[0].mxu0
        %5665 = vmatprep.mubr.f32.mxu0 %v5591
        %5666 = vmatmul.mubr.f32.gmra.mrb[0].mxu0 %v5590
        %v5667 = vpop.f32.mrb[0].mxu0
        %v5668 = vadd.f32 0.0, %v5667
        %v5669 = vpop.f32.mrb[0].mxu0
        %5670 = vmatprep.mubr.f32.mxu0 %v5593
        %5671 = vmatmul.mubr.f32.gmra.mrb[0].mxu0 %v5592
        %v5672 = vpop.f32.mrb[0].mxu0
        %v5673 = vadd.f32 0.0, %v5672
        %v5674 = vpop.f32.mrb[0].mxu0
        %5675 = vmatprep.mubr.f32.mxu0 %v5595
        %5676 = vmatmul.mubr.f32.gmra.mrb[0].mxu0 %v5594
        %v5677 = vpop.f32.mrb[0].mxu0
        %v5678 = vadd.f32 0.0, %v5677
        %v5679 = vpop.f32.mrb[0].mxu0
        %5680 = vdwg.mxu0
        %v5681 = vmul.f32 %v5663, %v3819
        %v5682 = vmul.f32 %v5668, %v3819
        %v5683 = vmul.f32 %v5673, %v3819
        %v5684 = vmul.f32 %v5678, %v3819
        %v5685 = vadd.f32 %v5491, %v5681
        %v5686 = vadd.f32 %v5492, %v5682
        %v5687 = vadd.f32 %v5493, %v5683
        %v5688 = vadd.f32 %v5494, %v5684
        %v5689 = vmul.f32 %v2274, %v4021
        %v5690 = vmul.f32 %v2279, %v4021
        %v5691 = vmul.f32 %v2284, %v4021
        %v5692 = vmul.f32 %v2289, %v4021
        %5693 = vmatprep.subr.mxu0 %v517
        %5694 = vmatpush1.msra.mxu0 %v516
        %5695 = vmatprep.subr.mxu0 %v519
        %5696 = vmatpush1.msra.mxu0 %v518
        %5697 = vmatprep.subr.mxu0 %v521
        %5698 = vmatpush1.msra.mxu0 %v520
        %5699 = vmatprep.subr.mxu0 %v523
        %5700 = vmatpush1.msra.mxu0 %v522
        %5701 = vmatprep.subr.mxu0 %v525
        %5702 = vmatpush1.msra.mxu0 %v524
        %5703 = vmatprep.subr.mxu0 %v527
        %5704 = vmatpush1.msra.mxu0 %v526
        %5705 = vmatprep.subr.mxu0 %v529
        %5706 = vmatpush1.msra.mxu0 %v528
        %5707 = vmatprep.subr.mxu0 %v531
        %5708 = vmatpush1.msra.mxu0 %v530
        %5709 = vmatprep.subr.mxu0 %v533
        %5710 = vmatpush1.msra.mxu0 %v532
        %5711 = vmatprep.subr.mxu0 %v535
        %5712 = vmatpush1.msra.mxu0 %v534
        %5713 = vmatprep.subr.mxu0 %v537
        %5714 = vmatpush1.msra.mxu0 %v536
        %5715 = vmatprep.subr.mxu0 %v539
        %5716 = vmatpush1.msra.mxu0 %v538
        %5717 = vmatprep.subr.mxu0 %v541
        %5718 = vmatpush1.msra.mxu0 %v540
        %5719 = vmatprep.subr.mxu0 %v543
        %5720 = vmatpush1.msra.mxu0 %v542
        %5721 = vmatprep.subr.mxu0 %v545
        %5722 = vmatpush1.msra.mxu0 %v544
        %5723 = vmatprep.subr.mxu0 %v547
        %5724 = vmatpush1.msra.mxu0 %v546
        %5725 = vmatprep.subr.mxu0 0.0
        %5726 = vmatpush1.msra.mxu0 0.0
        %5727 = vmatprep.subr.mxu0 0.0
        %5728 = vmatpush1.msra.mxu0 0.0
        %5729 = vmatprep.subr.mxu0 0.0
        %5730 = vmatpush1.msra.mxu0 0.0
        %5731 = vmatprep.subr.mxu0 0.0
        %5732 = vmatpush1.msra.mxu0 0.0
        %5733 = vmatprep.subr.mxu0 0.0
        %5734 = vmatpush1.msra.mxu0 0.0
        %5735 = vmatprep.subr.mxu0 0.0
        %5736 = vmatpush1.msra.mxu0 0.0
        %5737 = vmatprep.subr.mxu0 0.0
        %5738 = vmatpush1.msra.mxu0 0.0
        %5739 = vmatprep.subr.mxu0 0.0
        %5740 = vmatpush1.msra.mxu0 0.0
        %5741 = vmatprep.subr.mxu0 0.0
        %5742 = vmatpush1.msra.mxu0 0.0
        %5743 = vmatprep.subr.mxu0 0.0
        %5744 = vmatpush1.msra.mxu0 0.0
        %5745 = vmatprep.subr.mxu0 0.0
        %5746 = vmatpush1.msra.mxu0 0.0
        %5747 = vmatprep.subr.mxu0 0.0
        %5748 = vmatpush1.msra.mxu0 0.0
        %5749 = vmatprep.subr.mxu0 0.0
        %5750 = vmatpush1.msra.mxu0 0.0
        %5751 = vmatprep.subr.mxu0 0.0
        %5752 = vmatpush1.msra.mxu0 0.0
        %5753 = vmatprep.subr.mxu0 0.0
        %5754 = vmatpush1.msra.mxu0 0.0
        %5755 = vmatprep.subr.mxu0 0.0
        %5756 = vmatpush1.msra.mxu0 0.0
        %5757 = vmatprep.mubr.f32.mxu0 0.0
        %5758 = vmatmul.mubr.f32.gmra.mrb[0].mxu0 %v5689
        %v5759 = vpop.f32.mrb[0].mxu0
        %v5760 = vadd.f32 0.0, %v5759
        %v5761 = vpop.f32.mrb[0].mxu0
        %v5762 = vadd.f32 0.0, %v5761
        %5763 = vmatprep.mubr.f32.mxu0 0.0
        %5764 = vmatmul.mubr.f32.gmra.mrb[0].mxu0 %v5690
        %v5765 = vpop.f32.mrb[0].mxu0
        %v5766 = vadd.f32 0.0, %v5765
        %v5767 = vpop.f32.mrb[0].mxu0
        %v5768 = vadd.f32 0.0, %v5767
        %5769 = vmatprep.mubr.f32.mxu0 0.0
        %5770 = vmatmul.mubr.f32.gmra.mrb[0].mxu0 %v5691
        %v5771 = vpop.f32.mrb[0].mxu0
        %v5772 = vadd.f32 0.0, %v5771
        %v5773 = vpop.f32.mrb[0].mxu0
        %v5774 = vadd.f32 0.0, %v5773
        %5775 = vmatprep.mubr.f32.mxu0 0.0
        %5776 = vmatmul.mubr.f32.gmra.mrb[0].mxu0 %v5692
        %v5777 = vpop.f32.mrb[0].mxu0
        %v5778 = vadd.f32 0.0, %v5777
        %v5779 = vpop.f32.mrb[0].mxu0
        %v5780 = vadd.f32 0.0, %v5779
        %5781 = vdwg.mxu0
        %v5782 = vmul.f32 %v4309, %v5760
        %v5783 = vmul.f32 %v4311, %v5762
        %v5784 = vmul.f32 %v4315, %v5766
        %v5785 = vmul.f32 %v4317, %v5768
        %v5786 = vmul.f32 %v4321, %v5772
        %v5787 = vmul.f32 %v4323, %v5774
        %v5788 = vmul.f32 %v4327, %v5778
        %v5789 = vmul.f32 %v4329, %v5780
        %5790 = vmatprep.subr.mxu0 0.0
        %5791 = vmatpush1.msra.mxu0 %v548
        %5792 = vmatprep.subr.mxu0 0.0
        %5793 = vmatpush1.msra.mxu0 %v549
        %5794 = vmatprep.subr.mxu0 0.0
        %5795 = vmatpush1.msra.mxu0 %v550
        %5796 = vmatprep.subr.mxu0 0.0
        %5797 = vmatpush1.msra.mxu0 %v551
        %5798 = vmatprep.subr.mxu0 0.0
        %5799 = vmatpush1.msra.mxu0 %v552
        %5800 = vmatprep.subr.mxu0 0.0
        %5801 = vmatpush1.msra.mxu0 %v553
        %5802 = vmatprep.subr.mxu0 0.0
        %5803 = vmatpush1.msra.mxu0 %v554
        %5804 = vmatprep.subr.mxu0 0.0
        %5805 = vmatpush1.msra.mxu0 %v555
        %5806 = vmatprep.subr.mxu0 0.0
        %5807 = vmatpush1.msra.mxu0 %v556
        %5808 = vmatprep.subr.mxu0 0.0
        %5809 = vmatpush1.msra.mxu0 %v557
        %5810 = vmatprep.subr.mxu0 0.0
        %5811 = vmatpush1.msra.mxu0 %v558
        %5812 = vmatprep.subr.mxu0 0.0
        %5813 = vmatpush1.msra.mxu0 %v559
        %5814 = vmatprep.subr.mxu0 0.0
        %5815 = vmatpush1.msra.mxu0 %v560
        %5816 = vmatprep.subr.mxu0 0.0
        %5817 = vmatpush1.msra.mxu0 %v561
        %5818 = vmatprep.subr.mxu0 0.0
        %5819 = vmatpush1.msra.mxu0 %v562
        %5820 = vmatprep.subr.mxu0 0.0
        %5821 = vmatpush1.msra.mxu0 %v563
        %5822 = vmatprep.subr.mxu0 0.0
        %5823 = vmatpush1.msra.mxu0 %v564
        %5824 = vmatprep.subr.mxu0 0.0
        %5825 = vmatpush1.msra.mxu0 %v565
        %5826 = vmatprep.subr.mxu0 0.0
        %5827 = vmatpush1.msra.mxu0 %v566
        %5828 = vmatprep.subr.mxu0 0.0
        %5829 = vmatpush1.msra.mxu0 %v567
        %5830 = vmatprep.subr.mxu0 0.0
        %5831 = vmatpush1.msra.mxu0 %v568
        %5832 = vmatprep.subr.mxu0 0.0
        %5833 = vmatpush1.msra.mxu0 %v569
        %5834 = vmatprep.subr.mxu0 0.0
        %5835 = vmatpush1.msra.mxu0 %v570
        %5836 = vmatprep.subr.mxu0 0.0
        %5837 = vmatpush1.msra.mxu0 %v571
        %5838 = vmatprep.subr.mxu0 0.0
        %5839 = vmatpush1.msra.mxu0 %v572
        %5840 = vmatprep.subr.mxu0 0.0
        %5841 = vmatpush1.msra.mxu0 %v573
        %5842 = vmatprep.subr.mxu0 0.0
        %5843 = vmatpush1.msra.mxu0 %v574
        %5844 = vmatprep.subr.mxu0 0.0
        %5845 = vmatpush1.msra.mxu0 %v575
        %5846 = vmatprep.subr.mxu0 0.0
        %5847 = vmatpush1.msra.mxu0 %v576
        %5848 = vmatprep.subr.mxu0 0.0
        %5849 = vmatpush1.msra.mxu0 %v577
        %5850 = vmatprep.subr.mxu0 0.0
        %5851 = vmatpush1.msra.mxu0 %v578
        %5852 = vmatprep.subr.mxu0 0.0
        %5853 = vmatpush1.msra.mxu0 %v579
        %5854 = vmatprep.mubr.f32.mxu0 %v5783
        %5855 = vmatmul.mubr.f32.gmra.mrb[0].mxu0 %v5782
        %v5856 = vpop.f32.mrb[0].mxu0
        %v5857 = vadd.f32 0.0, %v5856
        %v5858 = vpop.f32.mrb[0].mxu0
        %5859 = vmatprep.mubr.f32.mxu0 %v5785
        %5860 = vmatmul.mubr.f32.gmra.mrb[0].mxu0 %v5784
        %v5861 = vpop.f32.mrb[0].mxu0
        %v5862 = vadd.f32 0.0, %v5861
        %v5863 = vpop.f32.mrb[0].mxu0
        %5864 = vmatprep.mubr.f32.mxu0 %v5787
        %5865 = vmatmul.mubr.f32.gmra.mrb[0].mxu0 %v5786
        %v5866 = vpop.f32.mrb[0].mxu0
        %v5867 = vadd.f32 0.0, %v5866
        %v5868 = vpop.f32.mrb[0].mxu0
        %5869 = vmatprep.mubr.f32.mxu0 %v5789
        %5870 = vmatmul.mubr.f32.gmra.mrb[0].mxu0 %v5788
        %v5871 = vpop.f32.mrb[0].mxu0
        %v5872 = vadd.f32 0.0, %v5871
        %v5873 = vpop.f32.mrb[0].mxu0
        %5874 = vdwg.mxu0
        %v5875 = vmul.f32 %v5857, %v4021
        %v5876 = vmul.f32 %v5862, %v4021
        %v5877 = vmul.f32 %v5867, %v4021
        %v5878 = vmul.f32 %v5872, %v4021
        %v5879 = vadd.f32 %v5685, %v5875
        %v5880 = vadd.f32 %v5686, %v5876
        %v5881 = vadd.f32 %v5687, %v5877
        %v5882 = vadd.f32 %v5688, %v5878
        %v5883 = vld [vmem:[%s3 + $0xa0] sm:$0xff]
        %v5884 = vld [vmem:[%s3 + $0xa8] sm:$0xff]
        %v5885 = vld [vmem:[%s3 + $0xb0] sm:$0xff]
        %v5886 = vld [vmem:[%s3 + $0xb8] sm:$0xff]
        %s5887 = scalar_lea.vmem %s5, 128
        %v5888 = vld [vmem:[%s5887] sm:$0xff]
        %v5889 = vld [vmem:[%s5887 + $0x8] sm:$0xff]
        %v5890 = vld [vmem:[%s5887 + $0x10] sm:$0xff]
        %v5891 = vld [vmem:[%s5887 + $0x18] sm:$0xff]
        %v5892 = vld [vmem:[%s5887 + $0x20] sm:$0xff]
        %v5893 = vld [vmem:[%s5887 + $0x28] sm:$0xff]
        %v5894 = vld [vmem:[%s5887 + $0x30] sm:$0xff]
        %v5895 = vld [vmem:[%s5887 + $0x38] sm:$0xff]
        %v5897 = vsel %vm1015, %v5883, 0
        %v5900 = vsel %vm1015, %v5884, 0
        %v5903 = vsel %vm1015, %v5885, 0
        %v5906 = vsel %vm1015, %v5886, 0
        %5908 = vmatprep.subr.mxu0 %v2484
        %5909 = vmatpush1.msra.mxu0 %v2483
        %5910 = vmatprep.subr.mxu0 %v2515
        %5911 = vmatpush1.msra.mxu0 %v2512
        %5912 = vmatprep.subr.mxu0 0.0
        %5913 = vmatpush1.msra.mxu0 0.0
        %5914 = vmatprep.subr.mxu0 0.0
        %5915 = vmatpush1.msra.mxu0 0.0
        %5916 = vmatprep.subr.mxu0 0.0
        %5917 = vmatpush1.msra.mxu0 0.0
        %5918 = vmatprep.subr.mxu0 0.0
        %5919 = vmatpush1.msra.mxu0 0.0
        %5920 = vmatprep.subr.mxu0 0.0
        %5921 = vmatpush1.msra.mxu0 0.0
        %5922 = vmatprep.subr.mxu0 0.0
        %5923 = vmatpush1.msra.mxu0 0.0
        %5924 = vmatprep.subr.mxu0 0.0
        %5925 = vmatpush1.msra.mxu0 0.0
        %5926 = vmatprep.subr.mxu0 0.0
        %5927 = vmatpush1.msra.mxu0 0.0
        %5928 = vmatprep.subr.mxu0 0.0
        %5929 = vmatpush1.msra.mxu0 0.0
        %5930 = vmatprep.subr.mxu0 0.0
        %5931 = vmatpush1.msra.mxu0 0.0
        %5932 = vmatprep.subr.mxu0 0.0
        %5933 = vmatpush1.msra.mxu0 0.0
        %5934 = vmatprep.subr.mxu0 0.0
        %5935 = vmatpush1.msra.mxu0 0.0
        %5936 = vmatprep.subr.mxu0 0.0
        %5937 = vmatpush1.msra.mxu0 0.0
        %5938 = vmatprep.subr.mxu0 0.0
        %5939 = vmatpush1.msra.mxu0 0.0
        %5940 = vmatprep.subr.mxu0 0.0
        %5941 = vmatpush1.msra.mxu0 0.0
        %5942 = vmatprep.subr.mxu0 0.0
        %5943 = vmatpush1.msra.mxu0 0.0
        %5944 = vmatprep.subr.mxu0 0.0
        %5945 = vmatpush1.msra.mxu0 0.0
        %5946 = vmatprep.subr.mxu0 0.0
        %5947 = vmatpush1.msra.mxu0 0.0
        %5948 = vmatprep.subr.mxu0 0.0
        %5949 = vmatpush1.msra.mxu0 0.0
        %5950 = vmatprep.subr.mxu0 0.0
        %5951 = vmatpush1.msra.mxu0 0.0
        %5952 = vmatprep.subr.mxu0 0.0
        %5953 = vmatpush1.msra.mxu0 0.0
        %5954 = vmatprep.subr.mxu0 0.0
        %5955 = vmatpush1.msra.mxu0 0.0
        %5956 = vmatprep.subr.mxu0 0.0
        %5957 = vmatpush1.msra.mxu0 0.0
        %5958 = vmatprep.subr.mxu0 0.0
        %5959 = vmatpush1.msra.mxu0 0.0
        %5960 = vmatprep.subr.mxu0 0.0
        %5961 = vmatpush1.msra.mxu0 0.0
        %5962 = vmatprep.subr.mxu0 0.0
        %5963 = vmatpush1.msra.mxu0 0.0
        %5964 = vmatprep.subr.mxu0 0.0
        %5965 = vmatpush1.msra.mxu0 0.0
        %5966 = vmatprep.subr.mxu0 0.0
        %5967 = vmatpush1.msra.mxu0 0.0
        %5968 = vmatprep.subr.mxu0 0.0
        %5969 = vmatpush1.msra.mxu0 0.0
        %5970 = vmatprep.subr.mxu0 0.0
        %5971 = vmatpush1.msra.mxu0 0.0
        %5972 = vmatprep.mubr.f32.mxu0 0.0
        %5973 = vmatmul.mubr.f32.gmra.mrb[0].mxu0 %v5897
        %v5974 = vpop.f32.mrb[0].mxu0
        %v5975 = vadd.f32 %v5888, %v5974
        %v5976 = vpop.f32.mrb[0].mxu0
        %v5977 = vadd.f32 %v5889, %v5976
        %5978 = vmatprep.mubr.f32.mxu0 0.0
        %5979 = vmatmul.mubr.f32.gmra.mrb[0].mxu0 %v5900
        %v5980 = vpop.f32.mrb[0].mxu0
        %v5981 = vadd.f32 %v5890, %v5980
        %v5982 = vpop.f32.mrb[0].mxu0
        %v5983 = vadd.f32 %v5891, %v5982
        %5984 = vmatprep.mubr.f32.mxu0 0.0
        %5985 = vmatmul.mubr.f32.gmra.mrb[0].mxu0 %v5903
        %v5986 = vpop.f32.mrb[0].mxu0
        %v5987 = vadd.f32 %v5892, %v5986
        %v5988 = vpop.f32.mrb[0].mxu0
        %v5989 = vadd.f32 %v5893, %v5988
        %5990 = vmatprep.mubr.f32.mxu0 0.0
        %5991 = vmatmul.mubr.f32.gmra.mrb[0].mxu0 %v5906
        %v5992 = vpop.f32.mrb[0].mxu0
        %v5993 = vadd.f32 %v5894, %v5992
        %v5994 = vpop.f32.mrb[0].mxu0
        %v5995 = vadd.f32 %v5895, %v5994
        %5996 = vdwg.mxu0
        %v5997 = vmul.f32 %v2294, %v2611
        %v5998 = vmul.f32 %v2299, %v2611
        %v5999 = vmul.f32 %v2304, %v2611
        %v6000 = vmul.f32 %v2309, %v2611
        %6001 = vmatprep.subr.mxu0 %v517
        %6002 = vmatpush1.msra.mxu0 %v516
        %6003 = vmatprep.subr.mxu0 %v519
        %6004 = vmatpush1.msra.mxu0 %v518
        %6005 = vmatprep.subr.mxu0 %v521
        %6006 = vmatpush1.msra.mxu0 %v520
        %6007 = vmatprep.subr.mxu0 %v523
        %6008 = vmatpush1.msra.mxu0 %v522
        %6009 = vmatprep.subr.mxu0 %v525
        %6010 = vmatpush1.msra.mxu0 %v524
        %6011 = vmatprep.subr.mxu0 %v527
        %6012 = vmatpush1.msra.mxu0 %v526
        %6013 = vmatprep.subr.mxu0 %v529
        %6014 = vmatpush1.msra.mxu0 %v528
        %6015 = vmatprep.subr.mxu0 %v531
        %6016 = vmatpush1.msra.mxu0 %v530
        %6017 = vmatprep.subr.mxu0 %v533
        %6018 = vmatpush1.msra.mxu0 %v532
        %6019 = vmatprep.subr.mxu0 %v535
        %6020 = vmatpush1.msra.mxu0 %v534
        %6021 = vmatprep.subr.mxu0 %v537
        %6022 = vmatpush1.msra.mxu0 %v536
        %6023 = vmatprep.subr.mxu0 %v539
        %6024 = vmatpush1.msra.mxu0 %v538
        %6025 = vmatprep.subr.mxu0 %v541
        %6026 = vmatpush1.msra.mxu0 %v540
        %6027 = vmatprep.subr.mxu0 %v543
        %6028 = vmatpush1.msra.mxu0 %v542
        %6029 = vmatprep.subr.mxu0 %v545
        %6030 = vmatpush1.msra.mxu0 %v544
        %6031 = vmatprep.subr.mxu0 %v547
        %6032 = vmatpush1.msra.mxu0 %v546
        %6033 = vmatprep.subr.mxu0 0.0
        %6034 = vmatpush1.msra.mxu0 0.0
        %6035 = vmatprep.subr.mxu0 0.0
        %6036 = vmatpush1.msra.mxu0 0.0
        %6037 = vmatprep.subr.mxu0 0.0
        %6038 = vmatpush1.msra.mxu0 0.0
        %6039 = vmatprep.subr.mxu0 0.0
        %6040 = vmatpush1.msra.mxu0 0.0
        %6041 = vmatprep.subr.mxu0 0.0
        %6042 = vmatpush1.msra.mxu0 0.0
        %6043 = vmatprep.subr.mxu0 0.0
        %6044 = vmatpush1.msra.mxu0 0.0
        %6045 = vmatprep.subr.mxu0 0.0
        %6046 = vmatpush1.msra.mxu0 0.0
        %6047 = vmatprep.subr.mxu0 0.0
        %6048 = vmatpush1.msra.mxu0 0.0
        %6049 = vmatprep.subr.mxu0 0.0
        %6050 = vmatpush1.msra.mxu0 0.0
        %6051 = vmatprep.subr.mxu0 0.0
        %6052 = vmatpush1.msra.mxu0 0.0
        %6053 = vmatprep.subr.mxu0 0.0
        %6054 = vmatpush1.msra.mxu0 0.0
        %6055 = vmatprep.subr.mxu0 0.0
        %6056 = vmatpush1.msra.mxu0 0.0
        %6057 = vmatprep.subr.mxu0 0.0
        %6058 = vmatpush1.msra.mxu0 0.0
        %6059 = vmatprep.subr.mxu0 0.0
        %6060 = vmatpush1.msra.mxu0 0.0
        %6061 = vmatprep.subr.mxu0 0.0
        %6062 = vmatpush1.msra.mxu0 0.0
        %6063 = vmatprep.subr.mxu0 0.0
        %6064 = vmatpush1.msra.mxu0 0.0
        %6065 = vmatprep.mubr.f32.mxu0 0.0
        %6066 = vmatmul.mubr.f32.gmra.mrb[0].mxu0 %v5997
        %v6067 = vpop.f32.mrb[0].mxu0
        %v6068 = vadd.f32 0.0, %v6067
        %v6069 = vpop.f32.mrb[0].mxu0
        %v6070 = vadd.f32 0.0, %v6069
        %6071 = vmatprep.mubr.f32.mxu0 0.0
        %6072 = vmatmul.mubr.f32.gmra.mrb[0].mxu0 %v5998
        %v6073 = vpop.f32.mrb[0].mxu0
        %v6074 = vadd.f32 0.0, %v6073
        %v6075 = vpop.f32.mrb[0].mxu0
        %v6076 = vadd.f32 0.0, %v6075
        %6077 = vmatprep.mubr.f32.mxu0 0.0
        %6078 = vmatmul.mubr.f32.gmra.mrb[0].mxu0 %v5999
        %v6079 = vpop.f32.mrb[0].mxu0
        %v6080 = vadd.f32 0.0, %v6079
        %v6081 = vpop.f32.mrb[0].mxu0
        %v6082 = vadd.f32 0.0, %v6081
        %6083 = vmatprep.mubr.f32.mxu0 0.0
        %6084 = vmatmul.mubr.f32.gmra.mrb[0].mxu0 %v6000
        %v6085 = vpop.f32.mrb[0].mxu0
        %v6086 = vadd.f32 0.0, %v6085
        %v6087 = vpop.f32.mrb[0].mxu0
        %v6088 = vadd.f32 0.0, %v6087
        %6089 = vdwg.mxu0
        %v6090 = vmul.f32 %v5975, %v6068
        %v6091 = vmul.f32 %v5977, %v6070
        %v6092 = vmul.f32 %v5981, %v6074
        %v6093 = vmul.f32 %v5983, %v6076
        %v6094 = vmul.f32 %v5987, %v6080
        %v6095 = vmul.f32 %v5989, %v6082
        %v6096 = vmul.f32 %v5993, %v6086
        %v6097 = vmul.f32 %v5995, %v6088
        %6098 = vmatprep.subr.mxu0 0.0
        %6099 = vmatpush1.msra.mxu0 %v548
        %6100 = vmatprep.subr.mxu0 0.0
        %6101 = vmatpush1.msra.mxu0 %v549
        %6102 = vmatprep.subr.mxu0 0.0
        %6103 = vmatpush1.msra.mxu0 %v550
        %6104 = vmatprep.subr.mxu0 0.0
        %6105 = vmatpush1.msra.mxu0 %v551
        %6106 = vmatprep.subr.mxu0 0.0
        %6107 = vmatpush1.msra.mxu0 %v552
        %6108 = vmatprep.subr.mxu0 0.0
        %6109 = vmatpush1.msra.mxu0 %v553
        %6110 = vmatprep.subr.mxu0 0.0
        %6111 = vmatpush1.msra.mxu0 %v554
        %6112 = vmatprep.subr.mxu0 0.0
        %6113 = vmatpush1.msra.mxu0 %v555
        %6114 = vmatprep.subr.mxu0 0.0
        %6115 = vmatpush1.msra.mxu0 %v556
        %6116 = vmatprep.subr.mxu0 0.0
        %6117 = vmatpush1.msra.mxu0 %v557
        %6118 = vmatprep.subr.mxu0 0.0
        %6119 = vmatpush1.msra.mxu0 %v558
        %6120 = vmatprep.subr.mxu0 0.0
        %6121 = vmatpush1.msra.mxu0 %v559
        %6122 = vmatprep.subr.mxu0 0.0
        %6123 = vmatpush1.msra.mxu0 %v560
        %6124 = vmatprep.subr.mxu0 0.0
        %6125 = vmatpush1.msra.mxu0 %v561
        %6126 = vmatprep.subr.mxu0 0.0
        %6127 = vmatpush1.msra.mxu0 %v562
        %6128 = vmatprep.subr.mxu0 0.0
        %6129 = vmatpush1.msra.mxu0 %v563
        %6130 = vmatprep.subr.mxu0 0.0
        %6131 = vmatpush1.msra.mxu0 %v564
        %6132 = vmatprep.subr.mxu0 0.0
        %6133 = vmatpush1.msra.mxu0 %v565
        %6134 = vmatprep.subr.mxu0 0.0
        %6135 = vmatpush1.msra.mxu0 %v566
        %6136 = vmatprep.subr.mxu0 0.0
        %6137 = vmatpush1.msra.mxu0 %v567
        %6138 = vmatprep.subr.mxu0 0.0
        %6139 = vmatpush1.msra.mxu0 %v568
        %6140 = vmatprep.subr.mxu0 0.0
        %6141 = vmatpush1.msra.mxu0 %v569
        %6142 = vmatprep.subr.mxu0 0.0
        %6143 = vmatpush1.msra.mxu0 %v570
        %6144 = vmatprep.subr.mxu0 0.0
        %6145 = vmatpush1.msra.mxu0 %v571
        %6146 = vmatprep.subr.mxu0 0.0
        %6147 = vmatpush1.msra.mxu0 %v572
        %6148 = vmatprep.subr.mxu0 0.0
        %6149 = vmatpush1.msra.mxu0 %v573
        %6150 = vmatprep.subr.mxu0 0.0
        %6151 = vmatpush1.msra.mxu0 %v574
        %6152 = vmatprep.subr.mxu0 0.0
        %6153 = vmatpush1.msra.mxu0 %v575
        %6154 = vmatprep.subr.mxu0 0.0
        %6155 = vmatpush1.msra.mxu0 %v576
        %6156 = vmatprep.subr.mxu0 0.0
        %6157 = vmatpush1.msra.mxu0 %v577
        %6158 = vmatprep.subr.mxu0 0.0
        %6159 = vmatpush1.msra.mxu0 %v578
        %6160 = vmatprep.subr.mxu0 0.0
        %6161 = vmatpush1.msra.mxu0 %v579
        %6162 = vmatprep.mubr.f32.mxu0 %v6091
        %6163 = vmatmul.mubr.f32.gmra.mrb[0].mxu0 %v6090
        %v6164 = vpop.f32.mrb[0].mxu0
        %v6165 = vadd.f32 0.0, %v6164
        %v6166 = vpop.f32.mrb[0].mxu0
        %6167 = vmatprep.mubr.f32.mxu0 %v6093
        %6168 = vmatmul.mubr.f32.gmra.mrb[0].mxu0 %v6092
        %v6169 = vpop.f32.mrb[0].mxu0
        %v6170 = vadd.f32 0.0, %v6169
        %v6171 = vpop.f32.mrb[0].mxu0
        %6172 = vmatprep.mubr.f32.mxu0 %v6095
        %6173 = vmatmul.mubr.f32.gmra.mrb[0].mxu0 %v6094
        %v6174 = vpop.f32.mrb[0].mxu0
        %v6175 = vadd.f32 0.0, %v6174
        %v6176 = vpop.f32.mrb[0].mxu0
        %6177 = vmatprep.mubr.f32.mxu0 %v6097
        %6178 = vmatmul.mubr.f32.gmra.mrb[0].mxu0 %v6096
        %v6179 = vpop.f32.mrb[0].mxu0
        %v6180 = vadd.f32 0.0, %v6179
        %v6181 = vpop.f32.mrb[0].mxu0
        %6182 = vdwg.mxu0
        %v6183 = vmul.f32 %v6165, %v2611
        %v6184 = vmul.f32 %v6170, %v2611
        %v6185 = vmul.f32 %v6175, %v2611
        %v6186 = vmul.f32 %v6180, %v2611
        %v6187 = vadd.f32 %v5879, %v6183
        %v6188 = vadd.f32 %v5880, %v6184
        %v6189 = vadd.f32 %v5881, %v6185
        %v6190 = vadd.f32 %v5882, %v6186
        %v6191 = vmul.f32 %v2294, %v2809
        %v6192 = vmul.f32 %v2299, %v2809
        %v6193 = vmul.f32 %v2304, %v2809
        %v6194 = vmul.f32 %v2309, %v2809
        %6195 = vmatprep.subr.mxu0 %v517
        %6196 = vmatpush1.msra.mxu0 %v516
        %6197 = vmatprep.subr.mxu0 %v519
        %6198 = vmatpush1.msra.mxu0 %v518
        %6199 = vmatprep.subr.mxu0 %v521
        %6200 = vmatpush1.msra.mxu0 %v520
        %6201 = vmatprep.subr.mxu0 %v523
        %6202 = vmatpush1.msra.mxu0 %v522
        %6203 = vmatprep.subr.mxu0 %v525
        %6204 = vmatpush1.msra.mxu0 %v524
        %6205 = vmatprep.subr.mxu0 %v527
        %6206 = vmatpush1.msra.mxu0 %v526
        %6207 = vmatprep.subr.mxu0 %v529
        %6208 = vmatpush1.msra.mxu0 %v528
        %6209 = vmatprep.subr.mxu0 %v531
        %6210 = vmatpush1.msra.mxu0 %v530
        %6211 = vmatprep.subr.mxu0 %v533
        %6212 = vmatpush1.msra.mxu0 %v532
        %6213 = vmatprep.subr.mxu0 %v535
        %6214 = vmatpush1.msra.mxu0 %v534
        %6215 = vmatprep.subr.mxu0 %v537
        %6216 = vmatpush1.msra.mxu0 %v536
        %6217 = vmatprep.subr.mxu0 %v539
        %6218 = vmatpush1.msra.mxu0 %v538
        %6219 = vmatprep.subr.mxu0 %v541
        %6220 = vmatpush1.msra.mxu0 %v540
        %6221 = vmatprep.subr.mxu0 %v543
        %6222 = vmatpush1.msra.mxu0 %v542
        %6223 = vmatprep.subr.mxu0 %v545
        %6224 = vmatpush1.msra.mxu0 %v544
        %6225 = vmatprep.subr.mxu0 %v547
        %6226 = vmatpush1.msra.mxu0 %v546
        %6227 = vmatprep.subr.mxu0 0.0
        %6228 = vmatpush1.msra.mxu0 0.0
        %6229 = vmatprep.subr.mxu0 0.0
        %6230 = vmatpush1.msra.mxu0 0.0
        %6231 = vmatprep.subr.mxu0 0.0
        %6232 = vmatpush1.msra.mxu0 0.0
        %6233 = vmatprep.subr.mxu0 0.0
        %6234 = vmatpush1.msra.mxu0 0.0
        %6235 = vmatprep.subr.mxu0 0.0
        %6236 = vmatpush1.msra.mxu0 0.0
        %6237 = vmatprep.subr.mxu0 0.0
        %6238 = vmatpush1.msra.mxu0 0.0
        %6239 = vmatprep.subr.mxu0 0.0
        %6240 = vmatpush1.msra.mxu0 0.0
        %6241 = vmatprep.subr.mxu0 0.0
        %6242 = vmatpush1.msra.mxu0 0.0
        %6243 = vmatprep.subr.mxu0 0.0
        %6244 = vmatpush1.msra.mxu0 0.0
        %6245 = vmatprep.subr.mxu0 0.0
        %6246 = vmatpush1.msra.mxu0 0.0
        %6247 = vmatprep.subr.mxu0 0.0
        %6248 = vmatpush1.msra.mxu0 0.0
        %6249 = vmatprep.subr.mxu0 0.0
        %6250 = vmatpush1.msra.mxu0 0.0
        %6251 = vmatprep.subr.mxu0 0.0
        %6252 = vmatpush1.msra.mxu0 0.0
        %6253 = vmatprep.subr.mxu0 0.0
        %6254 = vmatpush1.msra.mxu0 0.0
        %6255 = vmatprep.subr.mxu0 0.0
        %6256 = vmatpush1.msra.mxu0 0.0
        %6257 = vmatprep.subr.mxu0 0.0
        %6258 = vmatpush1.msra.mxu0 0.0
        %6259 = vmatprep.mubr.f32.mxu0 0.0
        %6260 = vmatmul.mubr.f32.gmra.mrb[0].mxu0 %v6191
        %v6261 = vpop.f32.mrb[0].mxu0
        %v6262 = vadd.f32 0.0, %v6261
        %v6263 = vpop.f32.mrb[0].mxu0
        %v6264 = vadd.f32 0.0, %v6263
        %6265 = vmatprep.mubr.f32.mxu0 0.0
        %6266 = vmatmul.mubr.f32.gmra.mrb[0].mxu0 %v6192
        %v6267 = vpop.f32.mrb[0].mxu0
        %v6268 = vadd.f32 0.0, %v6267
        %v6269 = vpop.f32.mrb[0].mxu0
        %v6270 = vadd.f32 0.0, %v6269
        %6271 = vmatprep.mubr.f32.mxu0 0.0
        %6272 = vmatmul.mubr.f32.gmra.mrb[0].mxu0 %v6193
        %v6273 = vpop.f32.mrb[0].mxu0
        %v6274 = vadd.f32 0.0, %v6273
        %v6275 = vpop.f32.mrb[0].mxu0
        %v6276 = vadd.f32 0.0, %v6275
        %6277 = vmatprep.mubr.f32.mxu0 0.0
        %6278 = vmatmul.mubr.f32.gmra.mrb[0].mxu0 %v6194
        %v6279 = vpop.f32.mrb[0].mxu0
        %v6280 = vadd.f32 0.0, %v6279
        %v6281 = vpop.f32.mrb[0].mxu0
        %v6282 = vadd.f32 0.0, %v6281
        %6283 = vdwg.mxu0
        %v6284 = vmul.f32 %v5975, %v6262
        %v6285 = vmul.f32 %v5977, %v6264
        %v6286 = vmul.f32 %v5981, %v6268
        %v6287 = vmul.f32 %v5983, %v6270
        %v6288 = vmul.f32 %v5987, %v6274
        %v6289 = vmul.f32 %v5989, %v6276
        %v6290 = vmul.f32 %v5993, %v6280
        %v6291 = vmul.f32 %v5995, %v6282
        %6292 = vmatprep.subr.mxu0 0.0
        %6293 = vmatpush1.msra.mxu0 %v548
        %6294 = vmatprep.subr.mxu0 0.0
        %6295 = vmatpush1.msra.mxu0 %v549
        %6296 = vmatprep.subr.mxu0 0.0
        %6297 = vmatpush1.msra.mxu0 %v550
        %6298 = vmatprep.subr.mxu0 0.0
        %6299 = vmatpush1.msra.mxu0 %v551
        %6300 = vmatprep.subr.mxu0 0.0
        %6301 = vmatpush1.msra.mxu0 %v552
        %6302 = vmatprep.subr.mxu0 0.0
        %6303 = vmatpush1.msra.mxu0 %v553
        %6304 = vmatprep.subr.mxu0 0.0
        %6305 = vmatpush1.msra.mxu0 %v554
        %6306 = vmatprep.subr.mxu0 0.0
        %6307 = vmatpush1.msra.mxu0 %v555
        %6308 = vmatprep.subr.mxu0 0.0
        %6309 = vmatpush1.msra.mxu0 %v556
        %6310 = vmatprep.subr.mxu0 0.0
        %6311 = vmatpush1.msra.mxu0 %v557
        %6312 = vmatprep.subr.mxu0 0.0
        %6313 = vmatpush1.msra.mxu0 %v558
        %6314 = vmatprep.subr.mxu0 0.0
        %6315 = vmatpush1.msra.mxu0 %v559
        %6316 = vmatprep.subr.mxu0 0.0
        %6317 = vmatpush1.msra.mxu0 %v560
        %6318 = vmatprep.subr.mxu0 0.0
        %6319 = vmatpush1.msra.mxu0 %v561
        %6320 = vmatprep.subr.mxu0 0.0
        %6321 = vmatpush1.msra.mxu0 %v562
        %6322 = vmatprep.subr.mxu0 0.0
        %6323 = vmatpush1.msra.mxu0 %v563
        %6324 = vmatprep.subr.mxu0 0.0
        %6325 = vmatpush1.msra.mxu0 %v564
        %6326 = vmatprep.subr.mxu0 0.0
        %6327 = vmatpush1.msra.mxu0 %v565
        %6328 = vmatprep.subr.mxu0 0.0
        %6329 = vmatpush1.msra.mxu0 %v566
        %6330 = vmatprep.subr.mxu0 0.0
        %6331 = vmatpush1.msra.mxu0 %v567
        %6332 = vmatprep.subr.mxu0 0.0
        %6333 = vmatpush1.msra.mxu0 %v568
        %6334 = vmatprep.subr.mxu0 0.0
        %6335 = vmatpush1.msra.mxu0 %v569
        %6336 = vmatprep.subr.mxu0 0.0
        %6337 = vmatpush1.msra.mxu0 %v570
        %6338 = vmatprep.subr.mxu0 0.0
        %6339 = vmatpush1.msra.mxu0 %v571
        %6340 = vmatprep.subr.mxu0 0.0
        %6341 = vmatpush1.msra.mxu0 %v572
        %6342 = vmatprep.subr.mxu0 0.0
        %6343 = vmatpush1.msra.mxu0 %v573
        %6344 = vmatprep.subr.mxu0 0.0
        %6345 = vmatpush1.msra.mxu0 %v574
        %6346 = vmatprep.subr.mxu0 0.0
        %6347 = vmatpush1.msra.mxu0 %v575
        %6348 = vmatprep.subr.mxu0 0.0
        %6349 = vmatpush1.msra.mxu0 %v576
        %6350 = vmatprep.subr.mxu0 0.0
        %6351 = vmatpush1.msra.mxu0 %v577
        %6352 = vmatprep.subr.mxu0 0.0
        %6353 = vmatpush1.msra.mxu0 %v578
        %6354 = vmatprep.subr.mxu0 0.0
        %6355 = vmatpush1.msra.mxu0 %v579
        %6356 = vmatprep.mubr.f32.mxu0 %v6285
        %6357 = vmatmul.mubr.f32.gmra.mrb[0].mxu0 %v6284
        %v6358 = vpop.f32.mrb[0].mxu0
        %v6359 = vadd.f32 0.0, %v6358
        %v6360 = vpop.f32.mrb[0].mxu0
        %6361 = vmatprep.mubr.f32.mxu0 %v6287
        %6362 = vmatmul.mubr.f32.gmra.mrb[0].mxu0 %v6286
        %v6363 = vpop.f32.mrb[0].mxu0
        %v6364 = vadd.f32 0.0, %v6363
        %v6365 = vpop.f32.mrb[0].mxu0
        %6366 = vmatprep.mubr.f32.mxu0 %v6289
        %6367 = vmatmul.mubr.f32.gmra.mrb[0].mxu0 %v6288
        %v6368 = vpop.f32.mrb[0].mxu0
        %v6369 = vadd.f32 0.0, %v6368
        %v6370 = vpop.f32.mrb[0].mxu0
        %6371 = vmatprep.mubr.f32.mxu0 %v6291
        %6372 = vmatmul.mubr.f32.gmra.mrb[0].mxu0 %v6290
        %v6373 = vpop.f32.mrb[0].mxu0
        %v6374 = vadd.f32 0.0, %v6373
        %v6375 = vpop.f32.mrb[0].mxu0
        %6376 = vdwg.mxu0
        %v6377 = vmul.f32 %v6359, %v2809
        %v6378 = vmul.f32 %v6364, %v2809
        %v6379 = vmul.f32 %v6369, %v2809
        %v6380 = vmul.f32 %v6374, %v2809
        %v6381 = vadd.f32 %v6187, %v6377
        %v6382 = vadd.f32 %v6188, %v6378
        %v6383 = vadd.f32 %v6189, %v6379
        %v6384 = vadd.f32 %v6190, %v6380
        %v6385 = vmul.f32 %v2294, %v3011
        %v6386 = vmul.f32 %v2299, %v3011
        %v6387 = vmul.f32 %v2304, %v3011
        %v6388 = vmul.f32 %v2309, %v3011
        %6389 = vmatprep.subr.mxu0 %v517
        %6390 = vmatpush1.msra.mxu0 %v516
        %6391 = vmatprep.subr.mxu0 %v519
        %6392 = vmatpush1.msra.mxu0 %v518
        %6393 = vmatprep.subr.mxu0 %v521
        %6394 = vmatpush1.msra.mxu0 %v520
        %6395 = vmatprep.subr.mxu0 %v523
        %6396 = vmatpush1.msra.mxu0 %v522
        %6397 = vmatprep.subr.mxu0 %v525
        %6398 = vmatpush1.msra.mxu0 %v524
        %6399 = vmatprep.subr.mxu0 %v527
        %6400 = vmatpush1.msra.mxu0 %v526
        %6401 = vmatprep.subr.mxu0 %v529
        %6402 = vmatpush1.msra.mxu0 %v528
        %6403 = vmatprep.subr.mxu0 %v531
        %6404 = vmatpush1.msra.mxu0 %v530
        %6405 = vmatprep.subr.mxu0 %v533
        %6406 = vmatpush1.msra.mxu0 %v532
        %6407 = vmatprep.subr.mxu0 %v535
        %6408 = vmatpush1.msra.mxu0 %v534
        %6409 = vmatprep.subr.mxu0 %v537
        %6410 = vmatpush1.msra.mxu0 %v536
        %6411 = vmatprep.subr.mxu0 %v539
        %6412 = vmatpush1.msra.mxu0 %v538
        %6413 = vmatprep.subr.mxu0 %v541
        %6414 = vmatpush1.msra.mxu0 %v540
        %6415 = vmatprep.subr.mxu0 %v543
        %6416 = vmatpush1.msra.mxu0 %v542
        %6417 = vmatprep.subr.mxu0 %v545
        %6418 = vmatpush1.msra.mxu0 %v544
        %6419 = vmatprep.subr.mxu0 %v547
        %6420 = vmatpush1.msra.mxu0 %v546
        %6421 = vmatprep.subr.mxu0 0.0
        %6422 = vmatpush1.msra.mxu0 0.0
        %6423 = vmatprep.subr.mxu0 0.0
        %6424 = vmatpush1.msra.mxu0 0.0
        %6425 = vmatprep.subr.mxu0 0.0
        %6426 = vmatpush1.msra.mxu0 0.0
        %6427 = vmatprep.subr.mxu0 0.0
        %6428 = vmatpush1.msra.mxu0 0.0
        %6429 = vmatprep.subr.mxu0 0.0
        %6430 = vmatpush1.msra.mxu0 0.0
        %6431 = vmatprep.subr.mxu0 0.0
        %6432 = vmatpush1.msra.mxu0 0.0
        %6433 = vmatprep.subr.mxu0 0.0
        %6434 = vmatpush1.msra.mxu0 0.0
        %6435 = vmatprep.subr.mxu0 0.0
        %6436 = vmatpush1.msra.mxu0 0.0
        %6437 = vmatprep.subr.mxu0 0.0
        %6438 = vmatpush1.msra.mxu0 0.0
        %6439 = vmatprep.subr.mxu0 0.0
        %6440 = vmatpush1.msra.mxu0 0.0
        %6441 = vmatprep.subr.mxu0 0.0
        %6442 = vmatpush1.msra.mxu0 0.0
        %6443 = vmatprep.subr.mxu0 0.0
        %6444 = vmatpush1.msra.mxu0 0.0
        %6445 = vmatprep.subr.mxu0 0.0
        %6446 = vmatpush1.msra.mxu0 0.0
        %6447 = vmatprep.subr.mxu0 0.0
        %6448 = vmatpush1.msra.mxu0 0.0
        %6449 = vmatprep.subr.mxu0 0.0
        %6450 = vmatpush1.msra.mxu0 0.0
        %6451 = vmatprep.subr.mxu0 0.0
        %6452 = vmatpush1.msra.mxu0 0.0
        %6453 = vmatprep.mubr.f32.mxu0 0.0
        %6454 = vmatmul.mubr.f32.gmra.mrb[0].mxu0 %v6385
        %v6455 = vpop.f32.mrb[0].mxu0
        %v6456 = vadd.f32 0.0, %v6455
        %v6457 = vpop.f32.mrb[0].mxu0
        %v6458 = vadd.f32 0.0, %v6457
        %6459 = vmatprep.mubr.f32.mxu0 0.0
        %6460 = vmatmul.mubr.f32.gmra.mrb[0].mxu0 %v6386
        %v6461 = vpop.f32.mrb[0].mxu0
        %v6462 = vadd.f32 0.0, %v6461
        %v6463 = vpop.f32.mrb[0].mxu0
        %v6464 = vadd.f32 0.0, %v6463
        %6465 = vmatprep.mubr.f32.mxu0 0.0
        %6466 = vmatmul.mubr.f32.gmra.mrb[0].mxu0 %v6387
        %v6467 = vpop.f32.mrb[0].mxu0
        %v6468 = vadd.f32 0.0, %v6467
        %v6469 = vpop.f32.mrb[0].mxu0
        %v6470 = vadd.f32 0.0, %v6469
        %6471 = vmatprep.mubr.f32.mxu0 0.0
        %6472 = vmatmul.mubr.f32.gmra.mrb[0].mxu0 %v6388
        %v6473 = vpop.f32.mrb[0].mxu0
        %v6474 = vadd.f32 0.0, %v6473
        %v6475 = vpop.f32.mrb[0].mxu0
        %v6476 = vadd.f32 0.0, %v6475
        %6477 = vdwg.mxu0
        %v6478 = vmul.f32 %v5975, %v6456
        %v6479 = vmul.f32 %v5977, %v6458
        %v6480 = vmul.f32 %v5981, %v6462
        %v6481 = vmul.f32 %v5983, %v6464
        %v6482 = vmul.f32 %v5987, %v6468
        %v6483 = vmul.f32 %v5989, %v6470
        %v6484 = vmul.f32 %v5993, %v6474
        %v6485 = vmul.f32 %v5995, %v6476
        %6486 = vmatprep.subr.mxu0 0.0
        %6487 = vmatpush1.msra.mxu0 %v548
        %6488 = vmatprep.subr.mxu0 0.0
        %6489 = vmatpush1.msra.mxu0 %v549
        %6490 = vmatprep.subr.mxu0 0.0
        %6491 = vmatpush1.msra.mxu0 %v550
        %6492 = vmatprep.subr.mxu0 0.0
        %6493 = vmatpush1.msra.mxu0 %v551
        %6494 = vmatprep.subr.mxu0 0.0
        %6495 = vmatpush1.msra.mxu0 %v552
        %6496 = vmatprep.subr.mxu0 0.0
        %6497 = vmatpush1.msra.mxu0 %v553
        %6498 = vmatprep.subr.mxu0 0.0
        %6499 = vmatpush1.msra.mxu0 %v554
        %6500 = vmatprep.subr.mxu0 0.0
        %6501 = vmatpush1.msra.mxu0 %v555
        %6502 = vmatprep.subr.mxu0 0.0
        %6503 = vmatpush1.msra.mxu0 %v556
        %6504 = vmatprep.subr.mxu0 0.0
        %6505 = vmatpush1.msra.mxu0 %v557
        %6506 = vmatprep.subr.mxu0 0.0
        %6507 = vmatpush1.msra.mxu0 %v558
        %6508 = vmatprep.subr.mxu0 0.0
        %6509 = vmatpush1.msra.mxu0 %v559
        %6510 = vmatprep.subr.mxu0 0.0
        %6511 = vmatpush1.msra.mxu0 %v560
        %6512 = vmatprep.subr.mxu0 0.0
        %6513 = vmatpush1.msra.mxu0 %v561
        %6514 = vmatprep.subr.mxu0 0.0
        %6515 = vmatpush1.msra.mxu0 %v562
        %6516 = vmatprep.subr.mxu0 0.0
        %6517 = vmatpush1.msra.mxu0 %v563
        %6518 = vmatprep.subr.mxu0 0.0
        %6519 = vmatpush1.msra.mxu0 %v564
        %6520 = vmatprep.subr.mxu0 0.0
        %6521 = vmatpush1.msra.mxu0 %v565
        %6522 = vmatprep.subr.mxu0 0.0
        %6523 = vmatpush1.msra.mxu0 %v566
        %6524 = vmatprep.subr.mxu0 0.0
        %6525 = vmatpush1.msra.mxu0 %v567
        %6526 = vmatprep.subr.mxu0 0.0
        %6527 = vmatpush1.msra.mxu0 %v568
        %6528 = vmatprep.subr.mxu0 0.0
        %6529 = vmatpush1.msra.mxu0 %v569
        %6530 = vmatprep.subr.mxu0 0.0
        %6531 = vmatpush1.msra.mxu0 %v570
        %6532 = vmatprep.subr.mxu0 0.0
        %6533 = vmatpush1.msra.mxu0 %v571
        %6534 = vmatprep.subr.mxu0 0.0
        %6535 = vmatpush1.msra.mxu0 %v572
        %6536 = vmatprep.subr.mxu0 0.0
        %6537 = vmatpush1.msra.mxu0 %v573
        %6538 = vmatprep.subr.mxu0 0.0
        %6539 = vmatpush1.msra.mxu0 %v574
        %6540 = vmatprep.subr.mxu0 0.0
        %6541 = vmatpush1.msra.mxu0 %v575
        %6542 = vmatprep.subr.mxu0 0.0
        %6543 = vmatpush1.msra.mxu0 %v576
        %6544 = vmatprep.subr.mxu0 0.0
        %6545 = vmatpush1.msra.mxu0 %v577
        %6546 = vmatprep.subr.mxu0 0.0
        %6547 = vmatpush1.msra.mxu0 %v578
        %6548 = vmatprep.subr.mxu0 0.0
        %6549 = vmatpush1.msra.mxu0 %v579
        %6550 = vmatprep.mubr.f32.mxu0 %v6479
        %6551 = vmatmul.mubr.f32.gmra.mrb[0].mxu0 %v6478
        %v6552 = vpop.f32.mrb[0].mxu0
        %v6553 = vadd.f32 0.0, %v6552
        %v6554 = vpop.f32.mrb[0].mxu0
        %6555 = vmatprep.mubr.f32.mxu0 %v6481
        %6556 = vmatmul.mubr.f32.gmra.mrb[0].mxu0 %v6480
        %v6557 = vpop.f32.mrb[0].mxu0
        %v6558 = vadd.f32 0.0, %v6557
        %v6559 = vpop.f32.mrb[0].mxu0
        %6560 = vmatprep.mubr.f32.mxu0 %v6483
        %6561 = vmatmul.mubr.f32.gmra.mrb[0].mxu0 %v6482
        %v6562 = vpop.f32.mrb[0].mxu0
        %v6563 = vadd.f32 0.0, %v6562
        %v6564 = vpop.f32.mrb[0].mxu0
        %6565 = vmatprep.mubr.f32.mxu0 %v6485
        %6566 = vmatmul.mubr.f32.gmra.mrb[0].mxu0 %v6484
        %v6567 = vpop.f32.mrb[0].mxu0
        %v6568 = vadd.f32 0.0, %v6567
        %v6569 = vpop.f32.mrb[0].mxu0
        %6570 = vdwg.mxu0
        %v6571 = vmul.f32 %v6553, %v3011
        %v6572 = vmul.f32 %v6558, %v3011
        %v6573 = vmul.f32 %v6563, %v3011
        %v6574 = vmul.f32 %v6568, %v3011
        %v6575 = vadd.f32 %v6381, %v6571
        %v6576 = vadd.f32 %v6382, %v6572
        %v6577 = vadd.f32 %v6383, %v6573
        %v6578 = vadd.f32 %v6384, %v6574
        %v6579 = vmul.f32 %v2294, %v3213
        %v6580 = vmul.f32 %v2299, %v3213
        %v6581 = vmul.f32 %v2304, %v3213
        %v6582 = vmul.f32 %v2309, %v3213
        %6583 = vmatprep.subr.mxu0 %v517
        %6584 = vmatpush1.msra.mxu0 %v516
        %6585 = vmatprep.subr.mxu0 %v519
        %6586 = vmatpush1.msra.mxu0 %v518
        %6587 = vmatprep.subr.mxu0 %v521
        %6588 = vmatpush1.msra.mxu0 %v520
        %6589 = vmatprep.subr.mxu0 %v523
        %6590 = vmatpush1.msra.mxu0 %v522
        %6591 = vmatprep.subr.mxu0 %v525
        %6592 = vmatpush1.msra.mxu0 %v524
        %6593 = vmatprep.subr.mxu0 %v527
        %6594 = vmatpush1.msra.mxu0 %v526
        %6595 = vmatprep.subr.mxu0 %v529
        %6596 = vmatpush1.msra.mxu0 %v528
        %6597 = vmatprep.subr.mxu0 %v531
        %6598 = vmatpush1.msra.mxu0 %v530
        %6599 = vmatprep.subr.mxu0 %v533
        %6600 = vmatpush1.msra.mxu0 %v532
        %6601 = vmatprep.subr.mxu0 %v535
        %6602 = vmatpush1.msra.mxu0 %v534
        %6603 = vmatprep.subr.mxu0 %v537
        %6604 = vmatpush1.msra.mxu0 %v536
        %6605 = vmatprep.subr.mxu0 %v539
        %6606 = vmatpush1.msra.mxu0 %v538
        %6607 = vmatprep.subr.mxu0 %v541
        %6608 = vmatpush1.msra.mxu0 %v540
        %6609 = vmatprep.subr.mxu0 %v543
        %6610 = vmatpush1.msra.mxu0 %v542
        %6611 = vmatprep.subr.mxu0 %v545
        %6612 = vmatpush1.msra.mxu0 %v544
        %6613 = vmatprep.subr.mxu0 %v547
        %6614 = vmatpush1.msra.mxu0 %v546
        %6615 = vmatprep.subr.mxu0 0.0
        %6616 = vmatpush1.msra.mxu0 0.0
        %6617 = vmatprep.subr.mxu0 0.0
        %6618 = vmatpush1.msra.mxu0 0.0
        %6619 = vmatprep.subr.mxu0 0.0
        %6620 = vmatpush1.msra.mxu0 0.0
        %6621 = vmatprep.subr.mxu0 0.0
        %6622 = vmatpush1.msra.mxu0 0.0
        %6623 = vmatprep.subr.mxu0 0.0
        %6624 = vmatpush1.msra.mxu0 0.0
        %6625 = vmatprep.subr.mxu0 0.0
        %6626 = vmatpush1.msra.mxu0 0.0
        %6627 = vmatprep.subr.mxu0 0.0
        %6628 = vmatpush1.msra.mxu0 0.0
        %6629 = vmatprep.subr.mxu0 0.0
        %6630 = vmatpush1.msra.mxu0 0.0
        %6631 = vmatprep.subr.mxu0 0.0
        %6632 = vmatpush1.msra.mxu0 0.0
        %6633 = vmatprep.subr.mxu0 0.0
        %6634 = vmatpush1.msra.mxu0 0.0
        %6635 = vmatprep.subr.mxu0 0.0
        %6636 = vmatpush1.msra.mxu0 0.0
        %6637 = vmatprep.subr.mxu0 0.0
        %6638 = vmatpush1.msra.mxu0 0.0
        %6639 = vmatprep.subr.mxu0 0.0
        %6640 = vmatpush1.msra.mxu0 0.0
        %6641 = vmatprep.subr.mxu0 0.0
        %6642 = vmatpush1.msra.mxu0 0.0
        %6643 = vmatprep.subr.mxu0 0.0
        %6644 = vmatpush1.msra.mxu0 0.0
        %6645 = vmatprep.subr.mxu0 0.0
        %6646 = vmatpush1.msra.mxu0 0.0
        %6647 = vmatprep.mubr.f32.mxu0 0.0
        %6648 = vmatmul.mubr.f32.gmra.mrb[0].mxu0 %v6579
        %v6649 = vpop.f32.mrb[0].mxu0
        %v6650 = vadd.f32 0.0, %v6649
        %v6651 = vpop.f32.mrb[0].mxu0
        %v6652 = vadd.f32 0.0, %v6651
        %6653 = vmatprep.mubr.f32.mxu0 0.0
        %6654 = vmatmul.mubr.f32.gmra.mrb[0].mxu0 %v6580
        %v6655 = vpop.f32.mrb[0].mxu0
        %v6656 = vadd.f32 0.0, %v6655
        %v6657 = vpop.f32.mrb[0].mxu0
        %v6658 = vadd.f32 0.0, %v6657
        %6659 = vmatprep.mubr.f32.mxu0 0.0
        %6660 = vmatmul.mubr.f32.gmra.mrb[0].mxu0 %v6581
        %v6661 = vpop.f32.mrb[0].mxu0
        %v6662 = vadd.f32 0.0, %v6661
        %v6663 = vpop.f32.mrb[0].mxu0
        %v6664 = vadd.f32 0.0, %v6663
        %6665 = vmatprep.mubr.f32.mxu0 0.0
        %6666 = vmatmul.mubr.f32.gmra.mrb[0].mxu0 %v6582
        %v6667 = vpop.f32.mrb[0].mxu0
        %v6668 = vadd.f32 0.0, %v6667
        %v6669 = vpop.f32.mrb[0].mxu0
        %v6670 = vadd.f32 0.0, %v6669
        %6671 = vdwg.mxu0
        %v6672 = vmul.f32 %v5975, %v6650
        %v6673 = vmul.f32 %v5977, %v6652
        %v6674 = vmul.f32 %v5981, %v6656
        %v6675 = vmul.f32 %v5983, %v6658
        %v6676 = vmul.f32 %v5987, %v6662
        %v6677 = vmul.f32 %v5989, %v6664
        %v6678 = vmul.f32 %v5993, %v6668
        %v6679 = vmul.f32 %v5995, %v6670
        %6680 = vmatprep.subr.mxu0 0.0
        %6681 = vmatpush1.msra.mxu0 %v548
        %6682 = vmatprep.subr.mxu0 0.0
        %6683 = vmatpush1.msra.mxu0 %v549
        %6684 = vmatprep.subr.mxu0 0.0
        %6685 = vmatpush1.msra.mxu0 %v550
        %6686 = vmatprep.subr.mxu0 0.0
        %6687 = vmatpush1.msra.mxu0 %v551
        %6688 = vmatprep.subr.mxu0 0.0
        %6689 = vmatpush1.msra.mxu0 %v552
        %6690 = vmatprep.subr.mxu0 0.0
        %6691 = vmatpush1.msra.mxu0 %v553
        %6692 = vmatprep.subr.mxu0 0.0
        %6693 = vmatpush1.msra.mxu0 %v554
        %6694 = vmatprep.subr.mxu0 0.0
        %6695 = vmatpush1.msra.mxu0 %v555
        %6696 = vmatprep.subr.mxu0 0.0
        %6697 = vmatpush1.msra.mxu0 %v556
        %6698 = vmatprep.subr.mxu0 0.0
        %6699 = vmatpush1.msra.mxu0 %v557
        %6700 = vmatprep.subr.mxu0 0.0
        %6701 = vmatpush1.msra.mxu0 %v558
        %6702 = vmatprep.subr.mxu0 0.0
        %6703 = vmatpush1.msra.mxu0 %v559
        %6704 = vmatprep.subr.mxu0 0.0
        %6705 = vmatpush1.msra.mxu0 %v560
        %6706 = vmatprep.subr.mxu0 0.0
        %6707 = vmatpush1.msra.mxu0 %v561
        %6708 = vmatprep.subr.mxu0 0.0
        %6709 = vmatpush1.msra.mxu0 %v562
        %6710 = vmatprep.subr.mxu0 0.0
        %6711 = vmatpush1.msra.mxu0 %v563
        %6712 = vmatprep.subr.mxu0 0.0
        %6713 = vmatpush1.msra.mxu0 %v564
        %6714 = vmatprep.subr.mxu0 0.0
        %6715 = vmatpush1.msra.mxu0 %v565
        %6716 = vmatprep.subr.mxu0 0.0
        %6717 = vmatpush1.msra.mxu0 %v566
        %6718 = vmatprep.subr.mxu0 0.0
        %6719 = vmatpush1.msra.mxu0 %v567
        %6720 = vmatprep.subr.mxu0 0.0
        %6721 = vmatpush1.msra.mxu0 %v568
        %6722 = vmatprep.subr.mxu0 0.0
        %6723 = vmatpush1.msra.mxu0 %v569
        %6724 = vmatprep.subr.mxu0 0.0
        %6725 = vmatpush1.msra.mxu0 %v570
        %6726 = vmatprep.subr.mxu0 0.0
        %6727 = vmatpush1.msra.mxu0 %v571
        %6728 = vmatprep.subr.mxu0 0.0
        %6729 = vmatpush1.msra.mxu0 %v572
        %6730 = vmatprep.subr.mxu0 0.0
        %6731 = vmatpush1.msra.mxu0 %v573
        %6732 = vmatprep.subr.mxu0 0.0
        %6733 = vmatpush1.msra.mxu0 %v574
        %6734 = vmatprep.subr.mxu0 0.0
        %6735 = vmatpush1.msra.mxu0 %v575
        %6736 = vmatprep.subr.mxu0 0.0
        %6737 = vmatpush1.msra.mxu0 %v576
        %6738 = vmatprep.subr.mxu0 0.0
        %6739 = vmatpush1.msra.mxu0 %v577
        %6740 = vmatprep.subr.mxu0 0.0
        %6741 = vmatpush1.msra.mxu0 %v578
        %6742 = vmatprep.subr.mxu0 0.0
        %6743 = vmatpush1.msra.mxu0 %v579
        %6744 = vmatprep.mubr.f32.mxu0 %v6673
        %6745 = vmatmul.mubr.f32.gmra.mrb[0].mxu0 %v6672
        %v6746 = vpop.f32.mrb[0].mxu0
        %v6747 = vadd.f32 0.0, %v6746
        %v6748 = vpop.f32.mrb[0].mxu0
        %6749 = vmatprep.mubr.f32.mxu0 %v6675
        %6750 = vmatmul.mubr.f32.gmra.mrb[0].mxu0 %v6674
        %v6751 = vpop.f32.mrb[0].mxu0
        %v6752 = vadd.f32 0.0, %v6751
        %v6753 = vpop.f32.mrb[0].mxu0
        %6754 = vmatprep.mubr.f32.mxu0 %v6677
        %6755 = vmatmul.mubr.f32.gmra.mrb[0].mxu0 %v6676
        %v6756 = vpop.f32.mrb[0].mxu0
        %v6757 = vadd.f32 0.0, %v6756
        %v6758 = vpop.f32.mrb[0].mxu0
        %6759 = vmatprep.mubr.f32.mxu0 %v6679
        %6760 = vmatmul.mubr.f32.gmra.mrb[0].mxu0 %v6678
        %v6761 = vpop.f32.mrb[0].mxu0
        %v6762 = vadd.f32 0.0, %v6761
        %v6763 = vpop.f32.mrb[0].mxu0
        %6764 = vdwg.mxu0
        %v6765 = vmul.f32 %v6747, %v3213
        %v6766 = vmul.f32 %v6752, %v3213
        %v6767 = vmul.f32 %v6757, %v3213
        %v6768 = vmul.f32 %v6762, %v3213
        %v6769 = vadd.f32 %v6575, %v6765
        %v6770 = vadd.f32 %v6576, %v6766
        %v6771 = vadd.f32 %v6577, %v6767
        %v6772 = vadd.f32 %v6578, %v6768
        %v6773 = vmul.f32 %v2294, %v3415
        %v6774 = vmul.f32 %v2299, %v3415
        %v6775 = vmul.f32 %v2304, %v3415
        %v6776 = vmul.f32 %v2309, %v3415
        %6777 = vmatprep.subr.mxu0 %v517
        %6778 = vmatpush1.msra.mxu0 %v516
        %6779 = vmatprep.subr.mxu0 %v519
        %6780 = vmatpush1.msra.mxu0 %v518
        %6781 = vmatprep.subr.mxu0 %v521
        %6782 = vmatpush1.msra.mxu0 %v520
        %6783 = vmatprep.subr.mxu0 %v523
        %6784 = vmatpush1.msra.mxu0 %v522
        %6785 = vmatprep.subr.mxu0 %v525
        %6786 = vmatpush1.msra.mxu0 %v524
        %6787 = vmatprep.subr.mxu0 %v527
        %6788 = vmatpush1.msra.mxu0 %v526
        %6789 = vmatprep.subr.mxu0 %v529
        %6790 = vmatpush1.msra.mxu0 %v528
        %6791 = vmatprep.subr.mxu0 %v531
        %6792 = vmatpush1.msra.mxu0 %v530
        %6793 = vmatprep.subr.mxu0 %v533
        %6794 = vmatpush1.msra.mxu0 %v532
        %6795 = vmatprep.subr.mxu0 %v535
        %6796 = vmatpush1.msra.mxu0 %v534
        %6797 = vmatprep.subr.mxu0 %v537
        %6798 = vmatpush1.msra.mxu0 %v536
        %6799 = vmatprep.subr.mxu0 %v539
        %6800 = vmatpush1.msra.mxu0 %v538
        %6801 = vmatprep.subr.mxu0 %v541
        %6802 = vmatpush1.msra.mxu0 %v540
        %6803 = vmatprep.subr.mxu0 %v543
        %6804 = vmatpush1.msra.mxu0 %v542
        %6805 = vmatprep.subr.mxu0 %v545
        %6806 = vmatpush1.msra.mxu0 %v544
        %6807 = vmatprep.subr.mxu0 %v547
        %6808 = vmatpush1.msra.mxu0 %v546
        %6809 = vmatprep.subr.mxu0 0.0
        %6810 = vmatpush1.msra.mxu0 0.0
        %6811 = vmatprep.subr.mxu0 0.0
        %6812 = vmatpush1.msra.mxu0 0.0
        %6813 = vmatprep.subr.mxu0 0.0
        %6814 = vmatpush1.msra.mxu0 0.0
        %6815 = vmatprep.subr.mxu0 0.0
        %6816 = vmatpush1.msra.mxu0 0.0
        %6817 = vmatprep.subr.mxu0 0.0
        %6818 = vmatpush1.msra.mxu0 0.0
        %6819 = vmatprep.subr.mxu0 0.0
        %6820 = vmatpush1.msra.mxu0 0.0
        %6821 = vmatprep.subr.mxu0 0.0
        %6822 = vmatpush1.msra.mxu0 0.0
        %6823 = vmatprep.subr.mxu0 0.0
        %6824 = vmatpush1.msra.mxu0 0.0
        %6825 = vmatprep.subr.mxu0 0.0
        %6826 = vmatpush1.msra.mxu0 0.0
        %6827 = vmatprep.subr.mxu0 0.0
        %6828 = vmatpush1.msra.mxu0 0.0
        %6829 = vmatprep.subr.mxu0 0.0
        %6830 = vmatpush1.msra.mxu0 0.0
        %6831 = vmatprep.subr.mxu0 0.0
        %6832 = vmatpush1.msra.mxu0 0.0
        %6833 = vmatprep.subr.mxu0 0.0
        %6834 = vmatpush1.msra.mxu0 0.0
        %6835 = vmatprep.subr.mxu0 0.0
        %6836 = vmatpush1.msra.mxu0 0.0
        %6837 = vmatprep.subr.mxu0 0.0
        %6838 = vmatpush1.msra.mxu0 0.0
        %6839 = vmatprep.subr.mxu0 0.0
        %6840 = vmatpush1.msra.mxu0 0.0
        %6841 = vmatprep.mubr.f32.mxu0 0.0
        %6842 = vmatmul.mubr.f32.gmra.mrb[0].mxu0 %v6773
        %v6843 = vpop.f32.mrb[0].mxu0
        %v6844 = vadd.f32 0.0, %v6843
        %v6845 = vpop.f32.mrb[0].mxu0
        %v6846 = vadd.f32 0.0, %v6845
        %6847 = vmatprep.mubr.f32.mxu0 0.0
        %6848 = vmatmul.mubr.f32.gmra.mrb[0].mxu0 %v6774
        %v6849 = vpop.f32.mrb[0].mxu0
        %v6850 = vadd.f32 0.0, %v6849
        %v6851 = vpop.f32.mrb[0].mxu0
        %v6852 = vadd.f32 0.0, %v6851
        %6853 = vmatprep.mubr.f32.mxu0 0.0
        %6854 = vmatmul.mubr.f32.gmra.mrb[0].mxu0 %v6775
        %v6855 = vpop.f32.mrb[0].mxu0
        %v6856 = vadd.f32 0.0, %v6855
        %v6857 = vpop.f32.mrb[0].mxu0
        %v6858 = vadd.f32 0.0, %v6857
        %6859 = vmatprep.mubr.f32.mxu0 0.0
        %6860 = vmatmul.mubr.f32.gmra.mrb[0].mxu0 %v6776
        %v6861 = vpop.f32.mrb[0].mxu0
        %v6862 = vadd.f32 0.0, %v6861
        %v6863 = vpop.f32.mrb[0].mxu0
        %v6864 = vadd.f32 0.0, %v6863
        %6865 = vdwg.mxu0
        %v6866 = vmul.f32 %v5975, %v6844
        %v6867 = vmul.f32 %v5977, %v6846
        %v6868 = vmul.f32 %v5981, %v6850
        %v6869 = vmul.f32 %v5983, %v6852
        %v6870 = vmul.f32 %v5987, %v6856
        %v6871 = vmul.f32 %v5989, %v6858
        %v6872 = vmul.f32 %v5993, %v6862
        %v6873 = vmul.f32 %v5995, %v6864
        %6874 = vmatprep.subr.mxu0 0.0
        %6875 = vmatpush1.msra.mxu0 %v548
        %6876 = vmatprep.subr.mxu0 0.0
        %6877 = vmatpush1.msra.mxu0 %v549
        %6878 = vmatprep.subr.mxu0 0.0
        %6879 = vmatpush1.msra.mxu0 %v550
        %6880 = vmatprep.subr.mxu0 0.0
        %6881 = vmatpush1.msra.mxu0 %v551
        %6882 = vmatprep.subr.mxu0 0.0
        %6883 = vmatpush1.msra.mxu0 %v552
        %6884 = vmatprep.subr.mxu0 0.0
        %6885 = vmatpush1.msra.mxu0 %v553
        %6886 = vmatprep.subr.mxu0 0.0
        %6887 = vmatpush1.msra.mxu0 %v554
        %6888 = vmatprep.subr.mxu0 0.0
        %6889 = vmatpush1.msra.mxu0 %v555
        %6890 = vmatprep.subr.mxu0 0.0
        %6891 = vmatpush1.msra.mxu0 %v556
        %6892 = vmatprep.subr.mxu0 0.0
        %6893 = vmatpush1.msra.mxu0 %v557
        %6894 = vmatprep.subr.mxu0 0.0
        %6895 = vmatpush1.msra.mxu0 %v558
        %6896 = vmatprep.subr.mxu0 0.0
        %6897 = vmatpush1.msra.mxu0 %v559
        %6898 = vmatprep.subr.mxu0 0.0
        %6899 = vmatpush1.msra.mxu0 %v560
        %6900 = vmatprep.subr.mxu0 0.0
        %6901 = vmatpush1.msra.mxu0 %v561
        %6902 = vmatprep.subr.mxu0 0.0
        %6903 = vmatpush1.msra.mxu0 %v562
        %6904 = vmatprep.subr.mxu0 0.0
        %6905 = vmatpush1.msra.mxu0 %v563
        %6906 = vmatprep.subr.mxu0 0.0
        %6907 = vmatpush1.msra.mxu0 %v564
        %6908 = vmatprep.subr.mxu0 0.0
        %6909 = vmatpush1.msra.mxu0 %v565
        %6910 = vmatprep.subr.mxu0 0.0
        %6911 = vmatpush1.msra.mxu0 %v566
        %6912 = vmatprep.subr.mxu0 0.0
        %6913 = vmatpush1.msra.mxu0 %v567
        %6914 = vmatprep.subr.mxu0 0.0
        %6915 = vmatpush1.msra.mxu0 %v568
        %6916 = vmatprep.subr.mxu0 0.0
        %6917 = vmatpush1.msra.mxu0 %v569
        %6918 = vmatprep.subr.mxu0 0.0
        %6919 = vmatpush1.msra.mxu0 %v570
        %6920 = vmatprep.subr.mxu0 0.0
        %6921 = vmatpush1.msra.mxu0 %v571
        %6922 = vmatprep.subr.mxu0 0.0
        %6923 = vmatpush1.msra.mxu0 %v572
        %6924 = vmatprep.subr.mxu0 0.0
        %6925 = vmatpush1.msra.mxu0 %v573
        %6926 = vmatprep.subr.mxu0 0.0
        %6927 = vmatpush1.msra.mxu0 %v574
        %6928 = vmatprep.subr.mxu0 0.0
        %6929 = vmatpush1.msra.mxu0 %v575
        %6930 = vmatprep.subr.mxu0 0.0
        %6931 = vmatpush1.msra.mxu0 %v576
        %6932 = vmatprep.subr.mxu0 0.0
        %6933 = vmatpush1.msra.mxu0 %v577
        %6934 = vmatprep.subr.mxu0 0.0
        %6935 = vmatpush1.msra.mxu0 %v578
        %6936 = vmatprep.subr.mxu0 0.0
        %6937 = vmatpush1.msra.mxu0 %v579
        %6938 = vmatprep.mubr.f32.mxu0 %v6867
        %6939 = vmatmul.mubr.f32.gmra.mrb[0].mxu0 %v6866
        %v6940 = vpop.f32.mrb[0].mxu0
        %v6941 = vadd.f32 0.0, %v6940
        %v6942 = vpop.f32.mrb[0].mxu0
        %6943 = vmatprep.mubr.f32.mxu0 %v6869
        %6944 = vmatmul.mubr.f32.gmra.mrb[0].mxu0 %v6868
        %v6945 = vpop.f32.mrb[0].mxu0
        %v6946 = vadd.f32 0.0, %v6945
        %v6947 = vpop.f32.mrb[0].mxu0
        %6948 = vmatprep.mubr.f32.mxu0 %v6871
        %6949 = vmatmul.mubr.f32.gmra.mrb[0].mxu0 %v6870
        %v6950 = vpop.f32.mrb[0].mxu0
        %v6951 = vadd.f32 0.0, %v6950
        %v6952 = vpop.f32.mrb[0].mxu0
        %6953 = vmatprep.mubr.f32.mxu0 %v6873
        %6954 = vmatmul.mubr.f32.gmra.mrb[0].mxu0 %v6872
        %v6955 = vpop.f32.mrb[0].mxu0
        %v6956 = vadd.f32 0.0, %v6955
        %v6957 = vpop.f32.mrb[0].mxu0
        %6958 = vdwg.mxu0
        %v6959 = vmul.f32 %v6941, %v3415
        %v6960 = vmul.f32 %v6946, %v3415
        %v6961 = vmul.f32 %v6951, %v3415
        %v6962 = vmul.f32 %v6956, %v3415
        %v6963 = vadd.f32 %v6769, %v6959
        %v6964 = vadd.f32 %v6770, %v6960
        %v6965 = vadd.f32 %v6771, %v6961
        %v6966 = vadd.f32 %v6772, %v6962
        %v6967 = vmul.f32 %v2294, %v3617
        %v6968 = vmul.f32 %v2299, %v3617
        %v6969 = vmul.f32 %v2304, %v3617
        %v6970 = vmul.f32 %v2309, %v3617
        %6971 = vmatprep.subr.mxu0 %v517
        %6972 = vmatpush1.msra.mxu0 %v516
        %6973 = vmatprep.subr.mxu0 %v519
        %6974 = vmatpush1.msra.mxu0 %v518
        %6975 = vmatprep.subr.mxu0 %v521
        %6976 = vmatpush1.msra.mxu0 %v520
        %6977 = vmatprep.subr.mxu0 %v523
        %6978 = vmatpush1.msra.mxu0 %v522
        %6979 = vmatprep.subr.mxu0 %v525
        %6980 = vmatpush1.msra.mxu0 %v524
        %6981 = vmatprep.subr.mxu0 %v527
        %6982 = vmatpush1.msra.mxu0 %v526
        %6983 = vmatprep.subr.mxu0 %v529
        %6984 = vmatpush1.msra.mxu0 %v528
        %6985 = vmatprep.subr.mxu0 %v531
        %6986 = vmatpush1.msra.mxu0 %v530
        %6987 = vmatprep.subr.mxu0 %v533
        %6988 = vmatpush1.msra.mxu0 %v532
        %6989 = vmatprep.subr.mxu0 %v535
        %6990 = vmatpush1.msra.mxu0 %v534
        %6991 = vmatprep.subr.mxu0 %v537
        %6992 = vmatpush1.msra.mxu0 %v536
        %6993 = vmatprep.subr.mxu0 %v539
        %6994 = vmatpush1.msra.mxu0 %v538
        %6995 = vmatprep.subr.mxu0 %v541
        %6996 = vmatpush1.msra.mxu0 %v540
        %6997 = vmatprep.subr.mxu0 %v543
        %6998 = vmatpush1.msra.mxu0 %v542
        %6999 = vmatprep.subr.mxu0 %v545
        %7000 = vmatpush1.msra.mxu0 %v544
        %7001 = vmatprep.subr.mxu0 %v547
        %7002 = vmatpush1.msra.mxu0 %v546
        %7003 = vmatprep.subr.mxu0 0.0
        %7004 = vmatpush1.msra.mxu0 0.0
        %7005 = vmatprep.subr.mxu0 0.0
        %7006 = vmatpush1.msra.mxu0 0.0
        %7007 = vmatprep.subr.mxu0 0.0
        %7008 = vmatpush1.msra.mxu0 0.0
        %7009 = vmatprep.subr.mxu0 0.0
        %7010 = vmatpush1.msra.mxu0 0.0
        %7011 = vmatprep.subr.mxu0 0.0
        %7012 = vmatpush1.msra.mxu0 0.0
        %7013 = vmatprep.subr.mxu0 0.0
        %7014 = vmatpush1.msra.mxu0 0.0
        %7015 = vmatprep.subr.mxu0 0.0
        %7016 = vmatpush1.msra.mxu0 0.0
        %7017 = vmatprep.subr.mxu0 0.0
        %7018 = vmatpush1.msra.mxu0 0.0
        %7019 = vmatprep.subr.mxu0 0.0
        %7020 = vmatpush1.msra.mxu0 0.0
        %7021 = vmatprep.subr.mxu0 0.0
        %7022 = vmatpush1.msra.mxu0 0.0
        %7023 = vmatprep.subr.mxu0 0.0
        %7024 = vmatpush1.msra.mxu0 0.0
        %7025 = vmatprep.subr.mxu0 0.0
        %7026 = vmatpush1.msra.mxu0 0.0
        %7027 = vmatprep.subr.mxu0 0.0
        %7028 = vmatpush1.msra.mxu0 0.0
        %7029 = vmatprep.subr.mxu0 0.0
        %7030 = vmatpush1.msra.mxu0 0.0
        %7031 = vmatprep.subr.mxu0 0.0
        %7032 = vmatpush1.msra.mxu0 0.0
        %7033 = vmatprep.subr.mxu0 0.0
        %7034 = vmatpush1.msra.mxu0 0.0
        %7035 = vmatprep.mubr.f32.mxu0 0.0
        %7036 = vmatmul.mubr.f32.gmra.mrb[0].mxu0 %v6967
        %v7037 = vpop.f32.mrb[0].mxu0
        %v7038 = vadd.f32 0.0, %v7037
        %v7039 = vpop.f32.mrb[0].mxu0
        %v7040 = vadd.f32 0.0, %v7039
        %7041 = vmatprep.mubr.f32.mxu0 0.0
        %7042 = vmatmul.mubr.f32.gmra.mrb[0].mxu0 %v6968
        %v7043 = vpop.f32.mrb[0].mxu0
        %v7044 = vadd.f32 0.0, %v7043
        %v7045 = vpop.f32.mrb[0].mxu0
        %v7046 = vadd.f32 0.0, %v7045
        %7047 = vmatprep.mubr.f32.mxu0 0.0
        %7048 = vmatmul.mubr.f32.gmra.mrb[0].mxu0 %v6969
        %v7049 = vpop.f32.mrb[0].mxu0
        %v7050 = vadd.f32 0.0, %v7049
        %v7051 = vpop.f32.mrb[0].mxu0
        %v7052 = vadd.f32 0.0, %v7051
        %7053 = vmatprep.mubr.f32.mxu0 0.0
        %7054 = vmatmul.mubr.f32.gmra.mrb[0].mxu0 %v6970
        %v7055 = vpop.f32.mrb[0].mxu0
        %v7056 = vadd.f32 0.0, %v7055
        %v7057 = vpop.f32.mrb[0].mxu0
        %v7058 = vadd.f32 0.0, %v7057
        %7059 = vdwg.mxu0
        %v7060 = vmul.f32 %v5975, %v7038
        %v7061 = vmul.f32 %v5977, %v7040
        %v7062 = vmul.f32 %v5981, %v7044
        %v7063 = vmul.f32 %v5983, %v7046
        %v7064 = vmul.f32 %v5987, %v7050
        %v7065 = vmul.f32 %v5989, %v7052
        %v7066 = vmul.f32 %v5993, %v7056
        %v7067 = vmul.f32 %v5995, %v7058
        %7068 = vmatprep.subr.mxu0 0.0
        %7069 = vmatpush1.msra.mxu0 %v548
        %7070 = vmatprep.subr.mxu0 0.0
        %7071 = vmatpush1.msra.mxu0 %v549
        %7072 = vmatprep.subr.mxu0 0.0
        %7073 = vmatpush1.msra.mxu0 %v550
        %7074 = vmatprep.subr.mxu0 0.0
        %7075 = vmatpush1.msra.mxu0 %v551
        %7076 = vmatprep.subr.mxu0 0.0
        %7077 = vmatpush1.msra.mxu0 %v552
        %7078 = vmatprep.subr.mxu0 0.0
        %7079 = vmatpush1.msra.mxu0 %v553
        %7080 = vmatprep.subr.mxu0 0.0
        %7081 = vmatpush1.msra.mxu0 %v554
        %7082 = vmatprep.subr.mxu0 0.0
        %7083 = vmatpush1.msra.mxu0 %v555
        %7084 = vmatprep.subr.mxu0 0.0
        %7085 = vmatpush1.msra.mxu0 %v556
        %7086 = vmatprep.subr.mxu0 0.0
        %7087 = vmatpush1.msra.mxu0 %v557
        %7088 = vmatprep.subr.mxu0 0.0
        %7089 = vmatpush1.msra.mxu0 %v558
        %7090 = vmatprep.subr.mxu0 0.0
        %7091 = vmatpush1.msra.mxu0 %v559
        %7092 = vmatprep.subr.mxu0 0.0
        %7093 = vmatpush1.msra.mxu0 %v560
        %7094 = vmatprep.subr.mxu0 0.0
        %7095 = vmatpush1.msra.mxu0 %v561
        %7096 = vmatprep.subr.mxu0 0.0
        %7097 = vmatpush1.msra.mxu0 %v562
        %7098 = vmatprep.subr.mxu0 0.0
        %7099 = vmatpush1.msra.mxu0 %v563
        %7100 = vmatprep.subr.mxu0 0.0
        %7101 = vmatpush1.msra.mxu0 %v564
        %7102 = vmatprep.subr.mxu0 0.0
        %7103 = vmatpush1.msra.mxu0 %v565
        %7104 = vmatprep.subr.mxu0 0.0
        %7105 = vmatpush1.msra.mxu0 %v566
        %7106 = vmatprep.subr.mxu0 0.0
        %7107 = vmatpush1.msra.mxu0 %v567
        %7108 = vmatprep.subr.mxu0 0.0
        %7109 = vmatpush1.msra.mxu0 %v568
        %7110 = vmatprep.subr.mxu0 0.0
        %7111 = vmatpush1.msra.mxu0 %v569
        %7112 = vmatprep.subr.mxu0 0.0
        %7113 = vmatpush1.msra.mxu0 %v570
        %7114 = vmatprep.subr.mxu0 0.0
        %7115 = vmatpush1.msra.mxu0 %v571
        %7116 = vmatprep.subr.mxu0 0.0
        %7117 = vmatpush1.msra.mxu0 %v572
        %7118 = vmatprep.subr.mxu0 0.0
        %7119 = vmatpush1.msra.mxu0 %v573
        %7120 = vmatprep.subr.mxu0 0.0
        %7121 = vmatpush1.msra.mxu0 %v574
        %7122 = vmatprep.subr.mxu0 0.0
        %7123 = vmatpush1.msra.mxu0 %v575
        %7124 = vmatprep.subr.mxu0 0.0
        %7125 = vmatpush1.msra.mxu0 %v576
        %7126 = vmatprep.subr.mxu0 0.0
        %7127 = vmatpush1.msra.mxu0 %v577
        %7128 = vmatprep.subr.mxu0 0.0
        %7129 = vmatpush1.msra.mxu0 %v578
        %7130 = vmatprep.subr.mxu0 0.0
        %7131 = vmatpush1.msra.mxu0 %v579
        %7132 = vmatprep.mubr.f32.mxu0 %v7061
        %7133 = vmatmul.mubr.f32.gmra.mrb[0].mxu0 %v7060
        %v7134 = vpop.f32.mrb[0].mxu0
        %v7135 = vadd.f32 0.0, %v7134
        %v7136 = vpop.f32.mrb[0].mxu0
        %7137 = vmatprep.mubr.f32.mxu0 %v7063
        %7138 = vmatmul.mubr.f32.gmra.mrb[0].mxu0 %v7062
        %v7139 = vpop.f32.mrb[0].mxu0
        %v7140 = vadd.f32 0.0, %v7139
        %v7141 = vpop.f32.mrb[0].mxu0
        %7142 = vmatprep.mubr.f32.mxu0 %v7065
        %7143 = vmatmul.mubr.f32.gmra.mrb[0].mxu0 %v7064
        %v7144 = vpop.f32.mrb[0].mxu0
        %v7145 = vadd.f32 0.0, %v7144
        %v7146 = vpop.f32.mrb[0].mxu0
        %7147 = vmatprep.mubr.f32.mxu0 %v7067
        %7148 = vmatmul.mubr.f32.gmra.mrb[0].mxu0 %v7066
        %v7149 = vpop.f32.mrb[0].mxu0
        %v7150 = vadd.f32 0.0, %v7149
        %v7151 = vpop.f32.mrb[0].mxu0
        %7152 = vdwg.mxu0
        %v7153 = vmul.f32 %v7135, %v3617
        %v7154 = vmul.f32 %v7140, %v3617
        %v7155 = vmul.f32 %v7145, %v3617
        %v7156 = vmul.f32 %v7150, %v3617
        %v7157 = vadd.f32 %v6963, %v7153
        %v7158 = vadd.f32 %v6964, %v7154
        %v7159 = vadd.f32 %v6965, %v7155
        %v7160 = vadd.f32 %v6966, %v7156
        %v7161 = vmul.f32 %v2294, %v3819
        %v7162 = vmul.f32 %v2299, %v3819
        %v7163 = vmul.f32 %v2304, %v3819
        %v7164 = vmul.f32 %v2309, %v3819
        %7165 = vmatprep.subr.mxu0 %v517
        %7166 = vmatpush1.msra.mxu0 %v516
        %7167 = vmatprep.subr.mxu0 %v519
        %7168 = vmatpush1.msra.mxu0 %v518
        %7169 = vmatprep.subr.mxu0 %v521
        %7170 = vmatpush1.msra.mxu0 %v520
        %7171 = vmatprep.subr.mxu0 %v523
        %7172 = vmatpush1.msra.mxu0 %v522
        %7173 = vmatprep.subr.mxu0 %v525
        %7174 = vmatpush1.msra.mxu0 %v524
        %7175 = vmatprep.subr.mxu0 %v527
        %7176 = vmatpush1.msra.mxu0 %v526
        %7177 = vmatprep.subr.mxu0 %v529
        %7178 = vmatpush1.msra.mxu0 %v528
        %7179 = vmatprep.subr.mxu0 %v531
        %7180 = vmatpush1.msra.mxu0 %v530
        %7181 = vmatprep.subr.mxu0 %v533
        %7182 = vmatpush1.msra.mxu0 %v532
        %7183 = vmatprep.subr.mxu0 %v535
        %7184 = vmatpush1.msra.mxu0 %v534
        %7185 = vmatprep.subr.mxu0 %v537
        %7186 = vmatpush1.msra.mxu0 %v536
        %7187 = vmatprep.subr.mxu0 %v539
        %7188 = vmatpush1.msra.mxu0 %v538
        %7189 = vmatprep.subr.mxu0 %v541
        %7190 = vmatpush1.msra.mxu0 %v540
        %7191 = vmatprep.subr.mxu0 %v543
        %7192 = vmatpush1.msra.mxu0 %v542
        %7193 = vmatprep.subr.mxu0 %v545
        %7194 = vmatpush1.msra.mxu0 %v544
        %7195 = vmatprep.subr.mxu0 %v547
        %7196 = vmatpush1.msra.mxu0 %v546
        %7197 = vmatprep.subr.mxu0 0.0
        %7198 = vmatpush1.msra.mxu0 0.0
        %7199 = vmatprep.subr.mxu0 0.0
        %7200 = vmatpush1.msra.mxu0 0.0
        %7201 = vmatprep.subr.mxu0 0.0
        %7202 = vmatpush1.msra.mxu0 0.0
        %7203 = vmatprep.subr.mxu0 0.0
        %7204 = vmatpush1.msra.mxu0 0.0
        %7205 = vmatprep.subr.mxu0 0.0
        %7206 = vmatpush1.msra.mxu0 0.0
        %7207 = vmatprep.subr.mxu0 0.0
        %7208 = vmatpush1.msra.mxu0 0.0
        %7209 = vmatprep.subr.mxu0 0.0
        %7210 = vmatpush1.msra.mxu0 0.0
        %7211 = vmatprep.subr.mxu0 0.0
        %7212 = vmatpush1.msra.mxu0 0.0
        %7213 = vmatprep.subr.mxu0 0.0
        %7214 = vmatpush1.msra.mxu0 0.0
        %7215 = vmatprep.subr.mxu0 0.0
        %7216 = vmatpush1.msra.mxu0 0.0
        %7217 = vmatprep.subr.mxu0 0.0
        %7218 = vmatpush1.msra.mxu0 0.0
        %7219 = vmatprep.subr.mxu0 0.0
        %7220 = vmatpush1.msra.mxu0 0.0
        %7221 = vmatprep.subr.mxu0 0.0
        %7222 = vmatpush1.msra.mxu0 0.0
        %7223 = vmatprep.subr.mxu0 0.0
        %7224 = vmatpush1.msra.mxu0 0.0
        %7225 = vmatprep.subr.mxu0 0.0
        %7226 = vmatpush1.msra.mxu0 0.0
        %7227 = vmatprep.subr.mxu0 0.0
        %7228 = vmatpush1.msra.mxu0 0.0
        %7229 = vmatprep.mubr.f32.mxu0 0.0
        %7230 = vmatmul.mubr.f32.gmra.mrb[0].mxu0 %v7161
        %v7231 = vpop.f32.mrb[0].mxu0
        %v7232 = vadd.f32 0.0, %v7231
        %v7233 = vpop.f32.mrb[0].mxu0
        %v7234 = vadd.f32 0.0, %v7233
        %7235 = vmatprep.mubr.f32.mxu0 0.0
        %7236 = vmatmul.mubr.f32.gmra.mrb[0].mxu0 %v7162
        %v7237 = vpop.f32.mrb[0].mxu0
        %v7238 = vadd.f32 0.0, %v7237
        %v7239 = vpop.f32.mrb[0].mxu0
        %v7240 = vadd.f32 0.0, %v7239
        %7241 = vmatprep.mubr.f32.mxu0 0.0
        %7242 = vmatmul.mubr.f32.gmra.mrb[0].mxu0 %v7163
        %v7243 = vpop.f32.mrb[0].mxu0
        %v7244 = vadd.f32 0.0, %v7243
        %v7245 = vpop.f32.mrb[0].mxu0
        %v7246 = vadd.f32 0.0, %v7245
        %7247 = vmatprep.mubr.f32.mxu0 0.0
        %7248 = vmatmul.mubr.f32.gmra.mrb[0].mxu0 %v7164
        %v7249 = vpop.f32.mrb[0].mxu0
        %v7250 = vadd.f32 0.0, %v7249
        %v7251 = vpop.f32.mrb[0].mxu0
        %v7252 = vadd.f32 0.0, %v7251
        %7253 = vdwg.mxu0
        %v7254 = vmul.f32 %v5975, %v7232
        %v7255 = vmul.f32 %v5977, %v7234
        %v7256 = vmul.f32 %v5981, %v7238
        %v7257 = vmul.f32 %v5983, %v7240
        %v7258 = vmul.f32 %v5987, %v7244
        %v7259 = vmul.f32 %v5989, %v7246
        %v7260 = vmul.f32 %v5993, %v7250
        %v7261 = vmul.f32 %v5995, %v7252
        %7262 = vmatprep.subr.mxu0 0.0
        %7263 = vmatpush1.msra.mxu0 %v548
        %7264 = vmatprep.subr.mxu0 0.0
        %7265 = vmatpush1.msra.mxu0 %v549
        %7266 = vmatprep.subr.mxu0 0.0
        %7267 = vmatpush1.msra.mxu0 %v550
        %7268 = vmatprep.subr.mxu0 0.0
        %7269 = vmatpush1.msra.mxu0 %v551
        %7270 = vmatprep.subr.mxu0 0.0
        %7271 = vmatpush1.msra.mxu0 %v552
        %7272 = vmatprep.subr.mxu0 0.0
        %7273 = vmatpush1.msra.mxu0 %v553
        %7274 = vmatprep.subr.mxu0 0.0
        %7275 = vmatpush1.msra.mxu0 %v554
        %7276 = vmatprep.subr.mxu0 0.0
        %7277 = vmatpush1.msra.mxu0 %v555
        %7278 = vmatprep.subr.mxu0 0.0
        %7279 = vmatpush1.msra.mxu0 %v556
        %7280 = vmatprep.subr.mxu0 0.0
        %7281 = vmatpush1.msra.mxu0 %v557
        %7282 = vmatprep.subr.mxu0 0.0
        %7283 = vmatpush1.msra.mxu0 %v558
        %7284 = vmatprep.subr.mxu0 0.0
        %7285 = vmatpush1.msra.mxu0 %v559
        %7286 = vmatprep.subr.mxu0 0.0
        %7287 = vmatpush1.msra.mxu0 %v560
        %7288 = vmatprep.subr.mxu0 0.0
        %7289 = vmatpush1.msra.mxu0 %v561
        %7290 = vmatprep.subr.mxu0 0.0
        %7291 = vmatpush1.msra.mxu0 %v562
        %7292 = vmatprep.subr.mxu0 0.0
        %7293 = vmatpush1.msra.mxu0 %v563
        %7294 = vmatprep.subr.mxu0 0.0
        %7295 = vmatpush1.msra.mxu0 %v564
        %7296 = vmatprep.subr.mxu0 0.0
        %7297 = vmatpush1.msra.mxu0 %v565
        %7298 = vmatprep.subr.mxu0 0.0
        %7299 = vmatpush1.msra.mxu0 %v566
        %7300 = vmatprep.subr.mxu0 0.0
        %7301 = vmatpush1.msra.mxu0 %v567
        %7302 = vmatprep.subr.mxu0 0.0
        %7303 = vmatpush1.msra.mxu0 %v568
        %7304 = vmatprep.subr.mxu0 0.0
        %7305 = vmatpush1.msra.mxu0 %v569
        %7306 = vmatprep.subr.mxu0 0.0
        %7307 = vmatpush1.msra.mxu0 %v570
        %7308 = vmatprep.subr.mxu0 0.0
        %7309 = vmatpush1.msra.mxu0 %v571
        %7310 = vmatprep.subr.mxu0 0.0
        %7311 = vmatpush1.msra.mxu0 %v572
        %7312 = vmatprep.subr.mxu0 0.0
        %7313 = vmatpush1.msra.mxu0 %v573
        %7314 = vmatprep.subr.mxu0 0.0
        %7315 = vmatpush1.msra.mxu0 %v574
        %7316 = vmatprep.subr.mxu0 0.0
        %7317 = vmatpush1.msra.mxu0 %v575
        %7318 = vmatprep.subr.mxu0 0.0
        %7319 = vmatpush1.msra.mxu0 %v576
        %7320 = vmatprep.subr.mxu0 0.0
        %7321 = vmatpush1.msra.mxu0 %v577
        %7322 = vmatprep.subr.mxu0 0.0
        %7323 = vmatpush1.msra.mxu0 %v578
        %7324 = vmatprep.subr.mxu0 0.0
        %7325 = vmatpush1.msra.mxu0 %v579
        %7326 = vmatprep.mubr.f32.mxu0 %v7255
        %7327 = vmatmul.mubr.f32.gmra.mrb[0].mxu0 %v7254
        %v7328 = vpop.f32.mrb[0].mxu0
        %v7329 = vadd.f32 0.0, %v7328
        %v7330 = vpop.f32.mrb[0].mxu0
        %7331 = vmatprep.mubr.f32.mxu0 %v7257
        %7332 = vmatmul.mubr.f32.gmra.mrb[0].mxu0 %v7256
        %v7333 = vpop.f32.mrb[0].mxu0
        %v7334 = vadd.f32 0.0, %v7333
        %v7335 = vpop.f32.mrb[0].mxu0
        %7336 = vmatprep.mubr.f32.mxu0 %v7259
        %7337 = vmatmul.mubr.f32.gmra.mrb[0].mxu0 %v7258
        %v7338 = vpop.f32.mrb[0].mxu0
        %v7339 = vadd.f32 0.0, %v7338
        %v7340 = vpop.f32.mrb[0].mxu0
        %7341 = vmatprep.mubr.f32.mxu0 %v7261
        %7342 = vmatmul.mubr.f32.gmra.mrb[0].mxu0 %v7260
        %v7343 = vpop.f32.mrb[0].mxu0
        %v7344 = vadd.f32 0.0, %v7343
        %v7345 = vpop.f32.mrb[0].mxu0
        %7346 = vdwg.mxu0
        %v7347 = vmul.f32 %v7329, %v3819
        %v7348 = vmul.f32 %v7334, %v3819
        %v7349 = vmul.f32 %v7339, %v3819
        %v7350 = vmul.f32 %v7344, %v3819
        %v7351 = vadd.f32 %v7157, %v7347
        %v7352 = vadd.f32 %v7158, %v7348
        %v7353 = vadd.f32 %v7159, %v7349
        %v7354 = vadd.f32 %v7160, %v7350
        %v7355 = vmul.f32 %v2294, %v4021
        %v7356 = vmul.f32 %v2299, %v4021
        %v7357 = vmul.f32 %v2304, %v4021
        %v7358 = vmul.f32 %v2309, %v4021
        %7359 = vmatprep.subr.mxu0 %v517
        %7360 = vmatpush1.msra.mxu0 %v516
        %7361 = vmatprep.subr.mxu0 %v519
        %7362 = vmatpush1.msra.mxu0 %v518
        %7363 = vmatprep.subr.mxu0 %v521
        %7364 = vmatpush1.msra.mxu0 %v520
        %7365 = vmatprep.subr.mxu0 %v523
        %7366 = vmatpush1.msra.mxu0 %v522
        %7367 = vmatprep.subr.mxu0 %v525
        %7368 = vmatpush1.msra.mxu0 %v524
        %7369 = vmatprep.subr.mxu0 %v527
        %7370 = vmatpush1.msra.mxu0 %v526
        %7371 = vmatprep.subr.mxu0 %v529
        %7372 = vmatpush1.msra.mxu0 %v528
        %7373 = vmatprep.subr.mxu0 %v531
        %7374 = vmatpush1.msra.mxu0 %v530
        %7375 = vmatprep.subr.mxu0 %v533
        %7376 = vmatpush1.msra.mxu0 %v532
        %7377 = vmatprep.subr.mxu0 %v535
        %7378 = vmatpush1.msra.mxu0 %v534
        %7379 = vmatprep.subr.mxu0 %v537
        %7380 = vmatpush1.msra.mxu0 %v536
        %7381 = vmatprep.subr.mxu0 %v539
        %7382 = vmatpush1.msra.mxu0 %v538
        %7383 = vmatprep.subr.mxu0 %v541
        %7384 = vmatpush1.msra.mxu0 %v540
        %7385 = vmatprep.subr.mxu0 %v543
        %7386 = vmatpush1.msra.mxu0 %v542
        %7387 = vmatprep.subr.mxu0 %v545
        %7388 = vmatpush1.msra.mxu0 %v544
        %7389 = vmatprep.subr.mxu0 %v547
        %7390 = vmatpush1.msra.mxu0 %v546
        %7391 = vmatprep.subr.mxu0 0.0
        %7392 = vmatpush1.msra.mxu0 0.0
        %7393 = vmatprep.subr.mxu0 0.0
        %7394 = vmatpush1.msra.mxu0 0.0
        %7395 = vmatprep.subr.mxu0 0.0
        %7396 = vmatpush1.msra.mxu0 0.0
        %7397 = vmatprep.subr.mxu0 0.0
        %7398 = vmatpush1.msra.mxu0 0.0
        %7399 = vmatprep.subr.mxu0 0.0
        %7400 = vmatpush1.msra.mxu0 0.0
        %7401 = vmatprep.subr.mxu0 0.0
        %7402 = vmatpush1.msra.mxu0 0.0
        %7403 = vmatprep.subr.mxu0 0.0
        %7404 = vmatpush1.msra.mxu0 0.0
        %7405 = vmatprep.subr.mxu0 0.0
        %7406 = vmatpush1.msra.mxu0 0.0
        %7407 = vmatprep.subr.mxu0 0.0
        %7408 = vmatpush1.msra.mxu0 0.0
        %7409 = vmatprep.subr.mxu0 0.0
        %7410 = vmatpush1.msra.mxu0 0.0
        %7411 = vmatprep.subr.mxu0 0.0
        %7412 = vmatpush1.msra.mxu0 0.0
        %7413 = vmatprep.subr.mxu0 0.0
        %7414 = vmatpush1.msra.mxu0 0.0
        %7415 = vmatprep.subr.mxu0 0.0
        %7416 = vmatpush1.msra.mxu0 0.0
        %7417 = vmatprep.subr.mxu0 0.0
        %7418 = vmatpush1.msra.mxu0 0.0
        %7419 = vmatprep.subr.mxu0 0.0
        %7420 = vmatpush1.msra.mxu0 0.0
        %7421 = vmatprep.subr.mxu0 0.0
        %7422 = vmatpush1.msra.mxu0 0.0
        %7423 = vmatprep.mubr.f32.mxu0 0.0
        %7424 = vmatmul.mubr.f32.gmra.mrb[0].mxu0 %v7355
        %v7425 = vpop.f32.mrb[0].mxu0
        %v7426 = vadd.f32 0.0, %v7425
        %v7427 = vpop.f32.mrb[0].mxu0
        %v7428 = vadd.f32 0.0, %v7427
        %7429 = vmatprep.mubr.f32.mxu0 0.0
        %7430 = vmatmul.mubr.f32.gmra.mrb[0].mxu0 %v7356
        %v7431 = vpop.f32.mrb[0].mxu0
        %v7432 = vadd.f32 0.0, %v7431
        %v7433 = vpop.f32.mrb[0].mxu0
        %v7434 = vadd.f32 0.0, %v7433
        %7435 = vmatprep.mubr.f32.mxu0 0.0
        %7436 = vmatmul.mubr.f32.gmra.mrb[0].mxu0 %v7357
        %v7437 = vpop.f32.mrb[0].mxu0
        %v7438 = vadd.f32 0.0, %v7437
        %v7439 = vpop.f32.mrb[0].mxu0
        %v7440 = vadd.f32 0.0, %v7439
        %7441 = vmatprep.mubr.f32.mxu0 0.0
        %7442 = vmatmul.mubr.f32.gmra.mrb[0].mxu0 %v7358
        %v7443 = vpop.f32.mrb[0].mxu0
        %v7444 = vadd.f32 0.0, %v7443
        %v7445 = vpop.f32.mrb[0].mxu0
        %v7446 = vadd.f32 0.0, %v7445
        %7447 = vdwg.mxu0
        %v7448 = vmul.f32 %v5975, %v7426
        %v7449 = vmul.f32 %v5977, %v7428
        %v7450 = vmul.f32 %v5981, %v7432
        %v7451 = vmul.f32 %v5983, %v7434
        %v7452 = vmul.f32 %v5987, %v7438
        %v7453 = vmul.f32 %v5989, %v7440
        %v7454 = vmul.f32 %v5993, %v7444
        %v7455 = vmul.f32 %v5995, %v7446
        %7456 = vmatprep.subr.mxu0 0.0
        %7457 = vmatpush1.msra.mxu0 %v548
        %7458 = vmatprep.subr.mxu0 0.0
        %7459 = vmatpush1.msra.mxu0 %v549
        %7460 = vmatprep.subr.mxu0 0.0
        %7461 = vmatpush1.msra.mxu0 %v550
        %7462 = vmatprep.subr.mxu0 0.0
        %7463 = vmatpush1.msra.mxu0 %v551
        %7464 = vmatprep.subr.mxu0 0.0
        %7465 = vmatpush1.msra.mxu0 %v552
        %7466 = vmatprep.subr.mxu0 0.0
        %7467 = vmatpush1.msra.mxu0 %v553
        %7468 = vmatprep.subr.mxu0 0.0
        %7469 = vmatpush1.msra.mxu0 %v554
        %7470 = vmatprep.subr.mxu0 0.0
        %7471 = vmatpush1.msra.mxu0 %v555
        %7472 = vmatprep.subr.mxu0 0.0
        %7473 = vmatpush1.msra.mxu0 %v556
        %7474 = vmatprep.subr.mxu0 0.0
        %7475 = vmatpush1.msra.mxu0 %v557
        %7476 = vmatprep.subr.mxu0 0.0
        %7477 = vmatpush1.msra.mxu0 %v558
        %7478 = vmatprep.subr.mxu0 0.0
        %7479 = vmatpush1.msra.mxu0 %v559
        %7480 = vmatprep.subr.mxu0 0.0
        %7481 = vmatpush1.msra.mxu0 %v560
        %7482 = vmatprep.subr.mxu0 0.0
        %7483 = vmatpush1.msra.mxu0 %v561
        %7484 = vmatprep.subr.mxu0 0.0
        %7485 = vmatpush1.msra.mxu0 %v562
        %7486 = vmatprep.subr.mxu0 0.0
        %7487 = vmatpush1.msra.mxu0 %v563
        %7488 = vmatprep.subr.mxu0 0.0
        %7489 = vmatpush1.msra.mxu0 %v564
        %7490 = vmatprep.subr.mxu0 0.0
        %7491 = vmatpush1.msra.mxu0 %v565
        %7492 = vmatprep.subr.mxu0 0.0
        %7493 = vmatpush1.msra.mxu0 %v566
        %7494 = vmatprep.subr.mxu0 0.0
        %7495 = vmatpush1.msra.mxu0 %v567
        %7496 = vmatprep.subr.mxu0 0.0
        %7497 = vmatpush1.msra.mxu0 %v568
        %7498 = vmatprep.subr.mxu0 0.0
        %7499 = vmatpush1.msra.mxu0 %v569
        %7500 = vmatprep.subr.mxu0 0.0
        %7501 = vmatpush1.msra.mxu0 %v570
        %7502 = vmatprep.subr.mxu0 0.0
        %7503 = vmatpush1.msra.mxu0 %v571
        %7504 = vmatprep.subr.mxu0 0.0
        %7505 = vmatpush1.msra.mxu0 %v572
        %7506 = vmatprep.subr.mxu0 0.0
        %7507 = vmatpush1.msra.mxu0 %v573
        %7508 = vmatprep.subr.mxu0 0.0
        %7509 = vmatpush1.msra.mxu0 %v574
        %7510 = vmatprep.subr.mxu0 0.0
        %7511 = vmatpush1.msra.mxu0 %v575
        %7512 = vmatprep.subr.mxu0 0.0
        %7513 = vmatpush1.msra.mxu0 %v576
        %7514 = vmatprep.subr.mxu0 0.0
        %7515 = vmatpush1.msra.mxu0 %v577
        %7516 = vmatprep.subr.mxu0 0.0
        %7517 = vmatpush1.msra.mxu0 %v578
        %7518 = vmatprep.subr.mxu0 0.0
        %7519 = vmatpush1.msra.mxu0 %v579
        %7520 = vmatprep.mubr.f32.mxu0 %v7449
        %7521 = vmatmul.mubr.f32.gmra.mrb[0].mxu0 %v7448
        %v7522 = vpop.f32.mrb[0].mxu0
        %v7523 = vadd.f32 0.0, %v7522
        %v7524 = vpop.f32.mrb[0].mxu0
        %7525 = vmatprep.mubr.f32.mxu0 %v7451
        %7526 = vmatmul.mubr.f32.gmra.mrb[0].mxu0 %v7450
        %v7527 = vpop.f32.mrb[0].mxu0
        %v7528 = vadd.f32 0.0, %v7527
        %v7529 = vpop.f32.mrb[0].mxu0
        %7530 = vmatprep.mubr.f32.mxu0 %v7453
        %7531 = vmatmul.mubr.f32.gmra.mrb[0].mxu0 %v7452
        %v7532 = vpop.f32.mrb[0].mxu0
        %v7533 = vadd.f32 0.0, %v7532
        %v7534 = vpop.f32.mrb[0].mxu0
        %7535 = vmatprep.mubr.f32.mxu0 %v7455
        %7536 = vmatmul.mubr.f32.gmra.mrb[0].mxu0 %v7454
        %v7537 = vpop.f32.mrb[0].mxu0
        %v7538 = vadd.f32 0.0, %v7537
        %v7539 = vpop.f32.mrb[0].mxu0
        %7540 = vdwg.mxu0
        %v7541 = vmul.f32 %v7523, %v4021
        %v7542 = vmul.f32 %v7528, %v4021
        %v7543 = vmul.f32 %v7533, %v4021
        %v7544 = vmul.f32 %v7538, %v4021
        %v7545 = vadd.f32 %v7351, %v7541
        %v7546 = vadd.f32 %v7352, %v7542
        %v7547 = vadd.f32 %v7353, %v7543
        %v7548 = vadd.f32 %v7354, %v7544
        %v7549 = vld [vmem:[%s4 + $0x80] sm:$0xff]
        %v7550 = vld [vmem:[%s4 + $0x88] sm:$0xff]
        %v7551 = vld [vmem:[%s4 + $0x90] sm:$0xff]
        %v7552 = vld [vmem:[%s4 + $0x98] sm:$0xff]
        %7554 = vset.pattern.permute.xlu0 0
        %7555 = vperm.xlu0 %7554, %v7549
        %v7556 = vpop.permute.xlu0 %7555
        %7559 = vset.pattern.permute.xlu0 0
        %7560 = vperm.xlu0 %7559, %v7550
        %v7561 = vpop.permute.xlu0 %7560
        %7564 = vset.pattern.permute.xlu0 0
        %7565 = vperm.xlu0 %7564, %v7551
        %v7566 = vpop.permute.xlu0 %7565
        %7569 = vset.pattern.permute.xlu0 0
        %7570 = vperm.xlu0 %7569, %v7552
        %v7571 = vpop.permute.xlu0 %7570
        %v7573 = vadd.f32 %v7545, %v7556
        %v7574 = vadd.f32 %v7546, %v7561
        %v7575 = vadd.f32 %v7547, %v7566
        %v7576 = vadd.f32 %v7548, %v7571
        %v7577 = vadd.f32 %v7573, %v466
        %v7578 = vadd.f32 %v7574, %v467
        %v7579 = vadd.f32 %v7575, %v468
        %v7580 = vadd.f32 %v7576, %v469
        %v7581 = vmax.f32 %v7577, 0.0
        %v7582 = vmax.f32 %v7578, 0.0
        %v7583 = vmax.f32 %v7579, 0.0
        %v7584 = vmax.f32 %v7580, 0.0
        %7585 = vst [vmem:[%s460] sm:$0xff] %v7581
        %7586 = vst [vmem:[%s460 + $0x8] sm:$0xff] %v7582
        %7587 = vst [vmem:[%s460 + $0x10] sm:$0xff] %v7583
        %7588 = vst [vmem:[%s460 + $0x18] sm:$0xff] %v7584
        %s7589 = sand.u32 %s335, 1
        %s7590 = scalar_lea.sflag [#allocation3], %s7589
        %s7591 = sand.u32 %s335, 1
        %s7592 = smul.addr %s7591, 32
        %s7593 = scalar_lea.vmem [#allocation2], %s7592
        // Predicated region
        $region77: #{tpu_custom_call.1} parent=75 // pred_check
          %p7594 = pneg %p345
        $region78: #{tpu_custom_call.1} parent=75 // pred_check_branch
          %7596 = sbr.rel (%p7594) target = $region80
        $region79: #{tpu_custom_call.1} parent=75 // pred_region
          %s7598 = ssub.s32 512, 512
          %7599 = vsyncadd %s7590, %s7598
          %s7600 = smul.addr %s28, 4
          %s7601 = smul.addr %s7600, 128
          %s7602 = scalar_lea.hbm %s14, %s7601
          %s7603 = sshll.u32 %s7593, 4
          %s7604 = int_to_ptr.vmem [resolvable:$true] %s7603
          %7609 = dma.vmem_to_hbm [thread:$0]  %s7604, 512, %s7602, %s7590, 128, 128, 8
        $region80: #{tpu_custom_call.1} parent=75 // pred_fallthru
          _
      $region76: #{tpu_custom_call.1} parent=5 // pred_fallthru
        _
      %p7610 = scmp.le.s32.totalorder 2, %s23
      // Predicated region
      $region81: #{tpu_custom_call.1} parent=5 // pred_check
        %p7611 = pneg %p7610
      $region82: #{tpu_custom_call.1} parent=5 // pred_check_branch
        %7613 = sbr.rel (%p7611) target = $region84
      $region83: #{tpu_custom_call.1} parent=5 // pred_region
        %s7614 = ssub.s32 %s23, 2
        // Predicated region
        $region85: #{tpu_custom_call.1} parent=83 // pred_check
          %p7615 = pneg %p351
        $region86: #{tpu_custom_call.1} parent=83 // pred_check_branch
          %7617 = sbr.rel (%p7615) target = $region88
        $region87: #{tpu_custom_call.1} parent=83 // pred_region
          %s7618 = sand.u32 %s336, 1
          %s7619 = scalar_lea.sflag [#allocation3], %s7618
          %s7620 = sand.u32 %s336, 1
          %s7621 = smul.addr %s7620, 32
          %s7622 = scalar_lea.vmem [#allocation2], %s7621
          %7623 = dma.done %s7619, 512
        $region88: #{tpu_custom_call.1} parent=83 // pred_fallthru
          _
      $region84: #{tpu_custom_call.1} parent=5 // pred_fallthru
        _
    $region6: #{tpu_custom_call.1} parent=1 // loop_footer
      %s27 = sadd.s32 1, %s23
    $region7: #{tpu_custom_call.1} parent=1 // loop_footer_branch
      %22 = sbr.rel target = $region3
    $region8: #{tpu_custom_call.1} parent=1 // loop_exit
      _
    %7624 = vsyncpa [#allocation3], 1
    %s7625 = scalar_lea.sflag [#allocation3], 1
    %7626 = vsyncpa %s7625, 1

</llo_original>
